<compile_context>
chip_gen: v6e
topology: v6e:2x2x1
jax: 0.10.0
libtpu: 0.0.40
codegen_flags: <defaults>
</compile_context>

<pallas_src>
import jax
import jax.numpy as jnp
import numpy as np
from jax.experimental import pallas as pl
from jax.experimental.pallas import tpu as pltpu


def _w_row(ph, pw, kd, a, b):
    """Row-block index of the (Cin, Cout) tap matrix in the flat weight array."""
    return (((ph * 2 + pw) * 3 + kd) * 2 + a) * 2 + b


def _upsample_conv_kernel(x0_ref, x1_ref, x2_ref, w_ref, b_ref, o_ref):
    """One (n, d_out) grid step of fused nearest-[1,2,2]-upsample + Conv3d.

    x{0,1,2}_ref: (H+2, W+2, C)  zero-haloed channels-last source slabs at
                  padded depths d_out, d_out+1, d_out+2 (the 3 kd taps).
    w_ref       : (48*C, C)  combined phase weights; row block
                  _w_row(ph, pw, kd, a, b) holds the (Cin, Cout) tap matrix.
    b_ref       : (1, C) bias.
    o_ref       : (H, 2, W, 2C) output block, [h, ph, w, pw*C + c]; a plain
                  row-major reshape of the full output array gives NDHWC.
    """
    hh, _, ww, two_c = o_ref.shape
    c = two_c // 2
    slabs = (x0_ref, x1_ref, x2_ref)
    bias = b_ref[...]                                           # (1, C)

    # Hoist the 27 shifted source patches (kd, r0, c0): sliced and flattened
    # to (H*W, Cin) once, then reused by every output phase that needs them.
    patches = {}
    for kd in range(3):
        for r0 in range(3):
            for c0 in range(3):
                patch = slabs[kd][r0:r0 + hh, c0:c0 + ww, :]    # (H, W, C)
                patches[(kd, r0, c0)] = patch.reshape(hh * ww, c)

    # 4 output phases; each accumulates 12 MXU matmuls (3 kd x 2 row x 2 col
    # collapsed taps): (H*W, Cin) @ (Cin, Cout), f32 accumulation, Cout on
    # the lane dim.
    for ph in range(2):
        for pw in range(2):
            acc = jnp.zeros((hh * ww, c), dtype=jnp.float32)
            for kd in range(3):
                for a in range(2):
                    for b in range(2):
                        p = patches[(kd, ph + a, pw + b)]        # (H*W, Cin)
                        row = _w_row(ph, pw, kd, a, b) * c
                        wmat = w_ref[row:row + c, :]             # (Cin, Cout)
                        acc = acc + jnp.dot(
                            p, wmat, preferred_element_type=jnp.float32)
            out = (acc + bias).reshape(hh, ww, c).astype(o_ref.dtype)
            # Lane-dense store: trailing (W, 2C) block; phases are placed so
            # that the NDHWC merge outside the kernel is a free view.
            o_ref[:, ph, :, pw * c:(pw + 1) * c] = out


def _combine_phase_weights(weight):
    """PyTorch (Cout, Cin, 3, 3, 3) conv weights -> sub-pixel phase weights.

    After nearest 2x upsampling adjacent output pixels share source pixels,
    so for each output phase (ph / pw) the 3 kh (kw) taps collapse onto 2
    source rows (cols):
        phase 0: {w0}, {w1+w2}       phase 1: {w0+w1}, {w2}
    Returns a dense (48*Cin, Cout) array (rows grouped by (ph, pw, kd, a, b),
    Cout on the lane dim -> feeds the MXU directly, no tile-padding blowup).
    """
    cout, cin = weight.shape[:2]
    w = jnp.transpose(weight, (2, 3, 4, 1, 0))            # (kd, kh, kw, Ci, Co)
    wh = jnp.stack([
        jnp.stack([w[:, 0], w[:, 1] + w[:, 2]], axis=1),  # ph = 0: a = 0, 1
        jnp.stack([w[:, 0] + w[:, 1], w[:, 2]], axis=1),  # ph = 1
    ], axis=1)                                            # (kd, ph, a, kw, Ci, Co)
    ww = jnp.stack([
        jnp.stack([wh[..., 0, :, :], wh[..., 1, :, :] + wh[..., 2, :, :]], axis=3),  # pw=0
        jnp.stack([wh[..., 0, :, :] + wh[..., 1, :, :], wh[..., 2, :, :]], axis=3),  # pw=1
    ], axis=3)                                            # (kd, ph, a, pw, b, Ci, Co)
    ww = jnp.transpose(ww, (1, 3, 0, 2, 4, 5, 6))         # (ph, pw, kd, a, b, Ci, Co)
    return ww.reshape(2 * 2 * 3 * 2 * 2 * cin, cout)      # (48*Cin, Cout)


def upsample2d_forward(x, weight, bias):
    """x: (N, C, D, H, W) f32; weight: (C, C, 3, 3, 3); bias: (C,)."""
    N, C, D, H, W = x.shape

    # Channels-last + 1-voxel zero halo at SOURCE resolution only (the source
    # tensor is 4x smaller than the output; the upsampled tensor is never
    # materialized in HBM or VMEM).
    x_cl = jnp.transpose(x, (0, 2, 3, 4, 1))                        # (N, D, H, W, C)
    xp = jnp.pad(x_cl, ((0, 0), (1, 1), (1, 1), (1, 1), (0, 0)))    # (N, D+2, H+2, W+2, C)

    wc = _combine_phase_weights(weight)                             # (48*C, C)
    b2 = bias.reshape(1, C)

    def x_spec(kd):
        # Same padded tensor, three depth-offset views -> the kd reduction is
        # folded inside the kernel (no accumulator scratch, no pl.when).
        return pl.BlockSpec((None, None, H + 2, W + 2, C),
                            lambda n, d, kd=kd: (n, d + kd, 0, 0, 0))

    out = pl.pallas_call(
        _upsample_conv_kernel,
        out_shape=jax.ShapeDtypeStruct((N, D, H, 2, W, 2 * C), jnp.float32),
        grid=(N, D),
        in_specs=[
            x_spec(0), x_spec(1), x_spec(2),
            pl.BlockSpec((48 * C, C), lambda n, d: (0, 0)),          # loop-invariant
            pl.BlockSpec((1, C), lambda n, d: (0, 0)),
        ],
        out_specs=pl.BlockSpec((None, None, H, 2, W, 2 * C),
                               lambda n, d: (n, d, 0, 0, 0, 0)),
        compiler_params=pltpu.CompilerParams(
            # batch and output-depth are independent -> megacore / dual-TC
            # sharding on v7x; no reduction axis left in the grid.
            dimension_semantics=("parallel", "parallel"),
            vmem_limit_bytes=48 * 1024 * 1024),
    )(xp, xp, xp, wc, b2)

    # (N, D, H, 2, W, 2C) -> (N, D, 2H, 2W, C) is a free row-major view; the
    # only remaining XLA pass over the 4x-sized output is the NDHWC -> NCDHW
    # transpose demanded by the PyTorch layout (drop it for channels-last
    # consumers).
    out = out.reshape(N, D, 2 * H, 2 * W, C)
    return jnp.transpose(out, (0, 4, 1, 2, 3))


def _reference_forward(x, weight, bias):
    # Pure-JAX reference (same math path as the PyTorch module).
    x = jnp.repeat(x, 2, axis=3)
    x = jnp.repeat(x, 2, axis=4)
    out = jax.lax.conv_general_dilated(
        x, weight,
        window_strides=(1, 1, 1),
        padding=((1, 1), (1, 1), (1, 1)),
        dimension_numbers=("NCDHW", "OIDHW", "NCDHW"),
        precision=jax.lax.Precision.HIGHEST)
    return out + bias.reshape(1, -1, 1, 1, 1)


if __name__ == "__main__":
    key = jax.random.PRNGKey(0)
    k_x, k_w, k_b = jax.random.split(key, 3)

    N, C, D, H, W = 2, 4, 4, 8, 8
    x = jax.random.normal(k_x, (N, C, D, H, W), dtype=jnp.float32)
    fan_in = C * 3 * 3 * 3
    weight = jax.random.uniform(
        k_w, (C, C, 3, 3, 3), dtype=jnp.float32,
        minval=-1.0 / np.sqrt(fan_in), maxval=1.0 / np.sqrt(fan_in))
    bias = jax.random.uniform(
        k_b, (C,), dtype=jnp.float32,
        minval=-1.0 / np.sqrt(fan_in), maxval=1.0 / np.sqrt(fan_in))

    fwd = jax.jit(upsample2d_forward)
    out = jax.block_until_ready(fwd(x, weight, bias))
    ref = jax.block_until_ready(_reference_forward(x, weight, bias))

    assert out.shape == (N, C, D, 2 * H, 2 * W), out.shape
    # The f32 path typically agrees to ~1e-6; the bound is kept loose enough
    # to also cover an MXU lowering that rounds matmul inputs to bf16 passes.
    np.testing.assert_allclose(np.asarray(out), np.asarray(ref),
                               rtol=1e-2, atol=1e-2)
    print("KERNEL_OK")
</pallas_src>

<mosaic_0001>
module attributes {stable_mosaic.version = 11 : i64} {
  func.func @_upsample_conv_kernel(%arg0: i32, %arg1: i32, %arg2: memref<1x1x10x10x4xf32, #tpu.memory_space<vmem>>, %arg3: memref<1x1x10x10x4xf32, #tpu.memory_space<vmem>>, %arg4: memref<1x1x10x10x4xf32, #tpu.memory_space<vmem>>, %arg5: memref<192x4xf32, #tpu.memory_space<vmem>>, %arg6: memref<1x4xf32, #tpu.memory_space<vmem>>, %arg7: memref<1x1x8x2x8x8xf32, #tpu.memory_space<vmem>>) attributes {dimension_semantics = [#tpu.dimension_semantics<parallel>, #tpu.dimension_semantics<parallel>], iteration_bounds = array<i64: 2, 4>, scalar_prefetch = 0 : i64, scratch_operands = 0 : i64, tpu.core_type = #tpu.core_type<tc>, window_params = [{transform_indices = @transform_0, window_bounds = array<i64: 1, 1, 10, 10, 4>}, {transform_indices = @transform_1, window_bounds = array<i64: 1, 1, 10, 10, 4>}, {transform_indices = @transform_2, window_bounds = array<i64: 1, 1, 10, 10, 4>}, {pipeline_mode = #tpu.pipeline_mode<synchronous>, transform_indices = @transform_3, window_bounds = array<i64: 192, 4>}, {pipeline_mode = #tpu.pipeline_mode<synchronous>, transform_indices = @transform_4, window_bounds = array<i64: 1, 4>}, {transform_indices = @transform_5, window_bounds = array<i64: 1, 1, 8, 2, 8, 8>}]} {
    %c0 = arith.constant 0 : index
    %c0_0 = arith.constant 0 : index
    %0 = vector.load %arg6[%c0, %c0_0] : memref<1x4xf32, #tpu.memory_space<vmem>>, vector<1x4xf32>
    %c0_1 = arith.constant 0 : index
    %c0_2 = arith.constant 0 : index
    %c0_3 = arith.constant 0 : index
    %c0_4 = arith.constant 0 : index
    %c0_5 = arith.constant 0 : index
    %1 = vector.load %arg2[%c0_1, %c0_2, %c0_3, %c0_4, %c0_5] : memref<1x1x10x10x4xf32, #tpu.memory_space<vmem>>, vector<1x1x8x8x4xf32>
    %2 = vector.shape_cast %1 : vector<1x1x8x8x4xf32> to vector<8x8x4xf32>
    %3 = vector.shape_cast %2 : vector<8x8x4xf32> to vector<64x4xf32>
    %c0_6 = arith.constant 0 : index
    %c0_7 = arith.constant 0 : index
    %c0_8 = arith.constant 0 : index
    %c1 = arith.constant 1 : index
    %c0_9 = arith.constant 0 : index
    %4 = vector.load %arg2[%c0_6, %c0_7, %c0_8, %c1, %c0_9] : memref<1x1x10x10x4xf32, #tpu.memory_space<vmem>>, vector<1x1x8x8x4xf32>
    %5 = vector.shape_cast %4 : vector<1x1x8x8x4xf32> to vector<8x8x4xf32>
    %6 = vector.shape_cast %5 : vector<8x8x4xf32> to vector<64x4xf32>
    %c0_10 = arith.constant 0 : index
    %c0_11 = arith.constant 0 : index
    %c0_12 = arith.constant 0 : index
    %c2 = arith.constant 2 : index
    %c0_13 = arith.constant 0 : index
    %7 = vector.load %arg2[%c0_10, %c0_11, %c0_12, %c2, %c0_13] : memref<1x1x10x10x4xf32, #tpu.memory_space<vmem>>, vector<1x1x8x8x4xf32>
    %8 = vector.shape_cast %7 : vector<1x1x8x8x4xf32> to vector<8x8x4xf32>
    %9 = vector.shape_cast %8 : vector<8x8x4xf32> to vector<64x4xf32>
    %c0_14 = arith.constant 0 : index
    %c0_15 = arith.constant 0 : index
    %c1_16 = arith.constant 1 : index
    %c0_17 = arith.constant 0 : index
    %c0_18 = arith.constant 0 : index
    %10 = vector.load %arg2[%c0_14, %c0_15, %c1_16, %c0_17, %c0_18] : memref<1x1x10x10x4xf32, #tpu.memory_space<vmem>>, vector<1x1x8x8x4xf32>
    %11 = vector.shape_cast %10 : vector<1x1x8x8x4xf32> to vector<8x8x4xf32>
    %12 = vector.shape_cast %11 : vector<8x8x4xf32> to vector<64x4xf32>
    %c0_19 = arith.constant 0 : index
    %c0_20 = arith.constant 0 : index
    %c1_21 = arith.constant 1 : index
    %c1_22 = arith.constant 1 : index
    %c0_23 = arith.constant 0 : index
    %13 = vector.load %arg2[%c0_19, %c0_20, %c1_21, %c1_22, %c0_23] : memref<1x1x10x10x4xf32, #tpu.memory_space<vmem>>, vector<1x1x8x8x4xf32>
    %14 = vector.shape_cast %13 : vector<1x1x8x8x4xf32> to vector<8x8x4xf32>
    %15 = vector.shape_cast %14 : vector<8x8x4xf32> to vector<64x4xf32>
    %c0_24 = arith.constant 0 : index
    %c0_25 = arith.constant 0 : index
    %c1_26 = arith.constant 1 : index
    %c2_27 = arith.constant 2 : index
    %c0_28 = arith.constant 0 : index
    %16 = vector.load %arg2[%c0_24, %c0_25, %c1_26, %c2_27, %c0_28] : memref<1x1x10x10x4xf32, #tpu.memory_space<vmem>>, vector<1x1x8x8x4xf32>
    %17 = vector.shape_cast %16 : vector<1x1x8x8x4xf32> to vector<8x8x4xf32>
    %18 = vector.shape_cast %17 : vector<8x8x4xf32> to vector<64x4xf32>
    %c0_29 = arith.constant 0 : index
    %c0_30 = arith.constant 0 : index
    %c2_31 = arith.constant 2 : index
    %c0_32 = arith.constant 0 : index
    %c0_33 = arith.constant 0 : index
    %19 = vector.load %arg2[%c0_29, %c0_30, %c2_31, %c0_32, %c0_33] : memref<1x1x10x10x4xf32, #tpu.memory_space<vmem>>, vector<1x1x8x8x4xf32>
    %20 = vector.shape_cast %19 : vector<1x1x8x8x4xf32> to vector<8x8x4xf32>
    %21 = vector.shape_cast %20 : vector<8x8x4xf32> to vector<64x4xf32>
    %c0_34 = arith.constant 0 : index
    %c0_35 = arith.constant 0 : index
    %c2_36 = arith.constant 2 : index
    %c1_37 = arith.constant 1 : index
    %c0_38 = arith.constant 0 : index
    %22 = vector.load %arg2[%c0_34, %c0_35, %c2_36, %c1_37, %c0_38] : memref<1x1x10x10x4xf32, #tpu.memory_space<vmem>>, vector<1x1x8x8x4xf32>
    %23 = vector.shape_cast %22 : vector<1x1x8x8x4xf32> to vector<8x8x4xf32>
    %24 = vector.shape_cast %23 : vector<8x8x4xf32> to vector<64x4xf32>
    %c0_39 = arith.constant 0 : index
    %c0_40 = arith.constant 0 : index
    %c2_41 = arith.constant 2 : index
    %c2_42 = arith.constant 2 : index
    %c0_43 = arith.constant 0 : index
    %25 = vector.load %arg2[%c0_39, %c0_40, %c2_41, %c2_42, %c0_43] : memref<1x1x10x10x4xf32, #tpu.memory_space<vmem>>, vector<1x1x8x8x4xf32>
    %26 = vector.shape_cast %25 : vector<1x1x8x8x4xf32> to vector<8x8x4xf32>
    %27 = vector.shape_cast %26 : vector<8x8x4xf32> to vector<64x4xf32>
    %c0_44 = arith.constant 0 : index
    %c0_45 = arith.constant 0 : index
    %c0_46 = arith.constant 0 : index
    %c0_47 = arith.constant 0 : index
    %c0_48 = arith.constant 0 : index
    %28 = vector.load %arg3[%c0_44, %c0_45, %c0_46, %c0_47, %c0_48] : memref<1x1x10x10x4xf32, #tpu.memory_space<vmem>>, vector<1x1x8x8x4xf32>
    %29 = vector.shape_cast %28 : vector<1x1x8x8x4xf32> to vector<8x8x4xf32>
    %30 = vector.shape_cast %29 : vector<8x8x4xf32> to vector<64x4xf32>
    %c0_49 = arith.constant 0 : index
    %c0_50 = arith.constant 0 : index
    %c0_51 = arith.constant 0 : index
    %c1_52 = arith.constant 1 : index
    %c0_53 = arith.constant 0 : index
    %31 = vector.load %arg3[%c0_49, %c0_50, %c0_51, %c1_52, %c0_53] : memref<1x1x10x10x4xf32, #tpu.memory_space<vmem>>, vector<1x1x8x8x4xf32>
    %32 = vector.shape_cast %31 : vector<1x1x8x8x4xf32> to vector<8x8x4xf32>
    %33 = vector.shape_cast %32 : vector<8x8x4xf32> to vector<64x4xf32>
    %c0_54 = arith.constant 0 : index
    %c0_55 = arith.constant 0 : index
    %c0_56 = arith.constant 0 : index
    %c2_57 = arith.constant 2 : index
    %c0_58 = arith.constant 0 : index
    %34 = vector.load %arg3[%c0_54, %c0_55, %c0_56, %c2_57, %c0_58] : memref<1x1x10x10x4xf32, #tpu.memory_space<vmem>>, vector<1x1x8x8x4xf32>
    %35 = vector.shape_cast %34 : vector<1x1x8x8x4xf32> to vector<8x8x4xf32>
    %36 = vector.shape_cast %35 : vector<8x8x4xf32> to vector<64x4xf32>
    %c0_59 = arith.constant 0 : index
    %c0_60 = arith.constant 0 : index
    %c1_61 = arith.constant 1 : index
    %c0_62 = arith.constant 0 : index
    %c0_63 = arith.constant 0 : index
    %37 = vector.load %arg3[%c0_59, %c0_60, %c1_61, %c0_62, %c0_63] : memref<1x1x10x10x4xf32, #tpu.memory_space<vmem>>, vector<1x1x8x8x4xf32>
    %38 = vector.shape_cast %37 : vector<1x1x8x8x4xf32> to vector<8x8x4xf32>
    %39 = vector.shape_cast %38 : vector<8x8x4xf32> to vector<64x4xf32>
    %c0_64 = arith.constant 0 : index
    %c0_65 = arith.constant 0 : index
    %c1_66 = arith.constant 1 : index
    %c1_67 = arith.constant 1 : index
    %c0_68 = arith.constant 0 : index
    %40 = vector.load %arg3[%c0_64, %c0_65, %c1_66, %c1_67, %c0_68] : memref<1x1x10x10x4xf32, #tpu.memory_space<vmem>>, vector<1x1x8x8x4xf32>
    %41 = vector.shape_cast %40 : vector<1x1x8x8x4xf32> to vector<8x8x4xf32>
    %42 = vector.shape_cast %41 : vector<8x8x4xf32> to vector<64x4xf32>
    %c0_69 = arith.constant 0 : index
    %c0_70 = arith.constant 0 : index
    %c1_71 = arith.constant 1 : index
    %c2_72 = arith.constant 2 : index
    %c0_73 = arith.constant 0 : index
    %43 = vector.load %arg3[%c0_69, %c0_70, %c1_71, %c2_72, %c0_73] : memref<1x1x10x10x4xf32, #tpu.memory_space<vmem>>, vector<1x1x8x8x4xf32>
    %44 = vector.shape_cast %43 : vector<1x1x8x8x4xf32> to vector<8x8x4xf32>
    %45 = vector.shape_cast %44 : vector<8x8x4xf32> to vector<64x4xf32>
    %c0_74 = arith.constant 0 : index
    %c0_75 = arith.constant 0 : index
    %c2_76 = arith.constant 2 : index
    %c0_77 = arith.constant 0 : index
    %c0_78 = arith.constant 0 : index
    %46 = vector.load %arg3[%c0_74, %c0_75, %c2_76, %c0_77, %c0_78] : memref<1x1x10x10x4xf32, #tpu.memory_space<vmem>>, vector<1x1x8x8x4xf32>
    %47 = vector.shape_cast %46 : vector<1x1x8x8x4xf32> to vector<8x8x4xf32>
    %48 = vector.shape_cast %47 : vector<8x8x4xf32> to vector<64x4xf32>
    %c0_79 = arith.constant 0 : index
    %c0_80 = arith.constant 0 : index
    %c2_81 = arith.constant 2 : index
    %c1_82 = arith.constant 1 : index
    %c0_83 = arith.constant 0 : index
    %49 = vector.load %arg3[%c0_79, %c0_80, %c2_81, %c1_82, %c0_83] : memref<1x1x10x10x4xf32, #tpu.memory_space<vmem>>, vector<1x1x8x8x4xf32>
    %50 = vector.shape_cast %49 : vector<1x1x8x8x4xf32> to vector<8x8x4xf32>
    %51 = vector.shape_cast %50 : vector<8x8x4xf32> to vector<64x4xf32>
    %c0_84 = arith.constant 0 : index
    %c0_85 = arith.constant 0 : index
    %c2_86 = arith.constant 2 : index
    %c2_87 = arith.constant 2 : index
    %c0_88 = arith.constant 0 : index
    %52 = vector.load %arg3[%c0_84, %c0_85, %c2_86, %c2_87, %c0_88] : memref<1x1x10x10x4xf32, #tpu.memory_space<vmem>>, vector<1x1x8x8x4xf32>
    %53 = vector.shape_cast %52 : vector<1x1x8x8x4xf32> to vector<8x8x4xf32>
    %54 = vector.shape_cast %53 : vector<8x8x4xf32> to vector<64x4xf32>
    %c0_89 = arith.constant 0 : index
    %c0_90 = arith.constant 0 : index
    %c0_91 = arith.constant 0 : index
    %c0_92 = arith.constant 0 : index
    %c0_93 = arith.constant 0 : index
    %55 = vector.load %arg4[%c0_89, %c0_90, %c0_91, %c0_92, %c0_93] : memref<1x1x10x10x4xf32, #tpu.memory_space<vmem>>, vector<1x1x8x8x4xf32>
    %56 = vector.shape_cast %55 : vector<1x1x8x8x4xf32> to vector<8x8x4xf32>
    %57 = vector.shape_cast %56 : vector<8x8x4xf32> to vector<64x4xf32>
    %c0_94 = arith.constant 0 : index
    %c0_95 = arith.constant 0 : index
    %c0_96 = arith.constant 0 : index
    %c1_97 = arith.constant 1 : index
    %c0_98 = arith.constant 0 : index
    %58 = vector.load %arg4[%c0_94, %c0_95, %c0_96, %c1_97, %c0_98] : memref<1x1x10x10x4xf32, #tpu.memory_space<vmem>>, vector<1x1x8x8x4xf32>
    %59 = vector.shape_cast %58 : vector<1x1x8x8x4xf32> to vector<8x8x4xf32>
    %60 = vector.shape_cast %59 : vector<8x8x4xf32> to vector<64x4xf32>
    %c0_99 = arith.constant 0 : index
    %c0_100 = arith.constant 0 : index
    %c0_101 = arith.constant 0 : index
    %c2_102 = arith.constant 2 : index
    %c0_103 = arith.constant 0 : index
    %61 = vector.load %arg4[%c0_99, %c0_100, %c0_101, %c2_102, %c0_103] : memref<1x1x10x10x4xf32, #tpu.memory_space<vmem>>, vector<1x1x8x8x4xf32>
    %62 = vector.shape_cast %61 : vector<1x1x8x8x4xf32> to vector<8x8x4xf32>
    %63 = vector.shape_cast %62 : vector<8x8x4xf32> to vector<64x4xf32>
    %c0_104 = arith.constant 0 : index
    %c0_105 = arith.constant 0 : index
    %c1_106 = arith.constant 1 : index
    %c0_107 = arith.constant 0 : index
    %c0_108 = arith.constant 0 : index
    %64 = vector.load %arg4[%c0_104, %c0_105, %c1_106, %c0_107, %c0_108] : memref<1x1x10x10x4xf32, #tpu.memory_space<vmem>>, vector<1x1x8x8x4xf32>
    %65 = vector.shape_cast %64 : vector<1x1x8x8x4xf32> to vector<8x8x4xf32>
    %66 = vector.shape_cast %65 : vector<8x8x4xf32> to vector<64x4xf32>
    %c0_109 = arith.constant 0 : index
    %c0_110 = arith.constant 0 : index
    %c1_111 = arith.constant 1 : index
    %c1_112 = arith.constant 1 : index
    %c0_113 = arith.constant 0 : index
    %67 = vector.load %arg4[%c0_109, %c0_110, %c1_111, %c1_112, %c0_113] : memref<1x1x10x10x4xf32, #tpu.memory_space<vmem>>, vector<1x1x8x8x4xf32>
    %68 = vector.shape_cast %67 : vector<1x1x8x8x4xf32> to vector<8x8x4xf32>
    %69 = vector.shape_cast %68 : vector<8x8x4xf32> to vector<64x4xf32>
    %c0_114 = arith.constant 0 : index
    %c0_115 = arith.constant 0 : index
    %c1_116 = arith.constant 1 : index
    %c2_117 = arith.constant 2 : index
    %c0_118 = arith.constant 0 : index
    %70 = vector.load %arg4[%c0_114, %c0_115, %c1_116, %c2_117, %c0_118] : memref<1x1x10x10x4xf32, #tpu.memory_space<vmem>>, vector<1x1x8x8x4xf32>
    %71 = vector.shape_cast %70 : vector<1x1x8x8x4xf32> to vector<8x8x4xf32>
    %72 = vector.shape_cast %71 : vector<8x8x4xf32> to vector<64x4xf32>
    %c0_119 = arith.constant 0 : index
    %c0_120 = arith.constant 0 : index
    %c2_121 = arith.constant 2 : index
    %c0_122 = arith.constant 0 : index
    %c0_123 = arith.constant 0 : index
    %73 = vector.load %arg4[%c0_119, %c0_120, %c2_121, %c0_122, %c0_123] : memref<1x1x10x10x4xf32, #tpu.memory_space<vmem>>, vector<1x1x8x8x4xf32>
    %74 = vector.shape_cast %73 : vector<1x1x8x8x4xf32> to vector<8x8x4xf32>
    %75 = vector.shape_cast %74 : vector<8x8x4xf32> to vector<64x4xf32>
    %c0_124 = arith.constant 0 : index
    %c0_125 = arith.constant 0 : index
    %c2_126 = arith.constant 2 : index
    %c1_127 = arith.constant 1 : index
    %c0_128 = arith.constant 0 : index
    %76 = vector.load %arg4[%c0_124, %c0_125, %c2_126, %c1_127, %c0_128] : memref<1x1x10x10x4xf32, #tpu.memory_space<vmem>>, vector<1x1x8x8x4xf32>
    %77 = vector.shape_cast %76 : vector<1x1x8x8x4xf32> to vector<8x8x4xf32>
    %78 = vector.shape_cast %77 : vector<8x8x4xf32> to vector<64x4xf32>
    %c0_129 = arith.constant 0 : index
    %c0_130 = arith.constant 0 : index
    %c2_131 = arith.constant 2 : index
    %c2_132 = arith.constant 2 : index
    %c0_133 = arith.constant 0 : index
    %79 = vector.load %arg4[%c0_129, %c0_130, %c2_131, %c2_132, %c0_133] : memref<1x1x10x10x4xf32, #tpu.memory_space<vmem>>, vector<1x1x8x8x4xf32>
    %80 = vector.shape_cast %79 : vector<1x1x8x8x4xf32> to vector<8x8x4xf32>
    %81 = vector.shape_cast %80 : vector<8x8x4xf32> to vector<64x4xf32>
    %cst = arith.constant 0.000000e+00 : f32
    %82 = vector.broadcast %cst : f32 to vector<64x4xf32>
    %c0_134 = arith.constant 0 : index
    %c0_135 = arith.constant 0 : index
    %83 = vector.load %arg5[%c0_134, %c0_135] : memref<192x4xf32, #tpu.memory_space<vmem>>, vector<4x4xf32>
    %cst_136 = arith.constant dense<0.000000e+00> : vector<64x4xf32>
    %84 = tpu.matmul %3, %83, %cst_136 {dimension_numbers = #tpu.dot_dimension_numbers<[1], [0], [0], [1], [0, 0, 1, 1], [], []>} : vector<64x4xf32>, vector<4x4xf32>, vector<64x4xf32> -> vector<64x4xf32>
    %85 = arith.addf %82, %84 : vector<64x4xf32>
    %c4 = arith.constant 4 : index
    %c0_137 = arith.constant 0 : index
    %86 = vector.load %arg5[%c4, %c0_137] : memref<192x4xf32, #tpu.memory_space<vmem>>, vector<4x4xf32>
    %cst_138 = arith.constant dense<0.000000e+00> : vector<64x4xf32>
    %87 = tpu.matmul %6, %86, %cst_138 {dimension_numbers = #tpu.dot_dimension_numbers<[1], [0], [0], [1], [0, 0, 1, 1], [], []>} : vector<64x4xf32>, vector<4x4xf32>, vector<64x4xf32> -> vector<64x4xf32>
    %88 = arith.addf %85, %87 : vector<64x4xf32>
    %c8 = arith.constant 8 : index
    %c0_139 = arith.constant 0 : index
    %89 = vector.load %arg5[%c8, %c0_139] : memref<192x4xf32, #tpu.memory_space<vmem>>, vector<4x4xf32>
    %cst_140 = arith.constant dense<0.000000e+00> : vector<64x4xf32>
    %90 = tpu.matmul %12, %89, %cst_140 {dimension_numbers = #tpu.dot_dimension_numbers<[1], [0], [0], [1], [0, 0, 1, 1], [], []>} : vector<64x4xf32>, vector<4x4xf32>, vector<64x4xf32> -> vector<64x4xf32>
    %91 = arith.addf %88, %90 : vector<64x4xf32>
    %c12 = arith.constant 12 : index
    %c0_141 = arith.constant 0 : index
    %92 = vector.load %arg5[%c12, %c0_141] : memref<192x4xf32, #tpu.memory_space<vmem>>, vector<4x4xf32>
    %cst_142 = arith.constant dense<0.000000e+00> : vector<64x4xf32>
    %93 = tpu.matmul %15, %92, %cst_142 {dimension_numbers = #tpu.dot_dimension_numbers<[1], [0], [0], [1], [0, 0, 1, 1], [], []>} : vector<64x4xf32>, vector<4x4xf32>, vector<64x4xf32> -> vector<64x4xf32>
    %94 = arith.addf %91, %93 : vector<64x4xf32>
    %c16 = arith.constant 16 : index
    %c0_143 = arith.constant 0 : index
    %95 = vector.load %arg5[%c16, %c0_143] : memref<192x4xf32, #tpu.memory_space<vmem>>, vector<4x4xf32>
    %cst_144 = arith.constant dense<0.000000e+00> : vector<64x4xf32>
    %96 = tpu.matmul %30, %95, %cst_144 {dimension_numbers = #tpu.dot_dimension_numbers<[1], [0], [0], [1], [0, 0, 1, 1], [], []>} : vector<64x4xf32>, vector<4x4xf32>, vector<64x4xf32> -> vector<64x4xf32>
    %97 = arith.addf %94, %96 : vector<64x4xf32>
    %c20 = arith.constant 20 : index
    %c0_145 = arith.constant 0 : index
    %98 = vector.load %arg5[%c20, %c0_145] : memref<192x4xf32, #tpu.memory_space<vmem>>, vector<4x4xf32>
    %cst_146 = arith.constant dense<0.000000e+00> : vector<64x4xf32>
    %99 = tpu.matmul %33, %98, %cst_146 {dimension_numbers = #tpu.dot_dimension_numbers<[1], [0], [0], [1], [0, 0, 1, 1], [], []>} : vector<64x4xf32>, vector<4x4xf32>, vector<64x4xf32> -> vector<64x4xf32>
    %100 = arith.addf %97, %99 : vector<64x4xf32>
    %c24 = arith.constant 24 : index
    %c0_147 = arith.constant 0 : index
    %101 = vector.load %arg5[%c24, %c0_147] : memref<192x4xf32, #tpu.memory_space<vmem>>, vector<4x4xf32>
    %cst_148 = arith.constant dense<0.000000e+00> : vector<64x4xf32>
    %102 = tpu.matmul %39, %101, %cst_148 {dimension_numbers = #tpu.dot_dimension_numbers<[1], [0], [0], [1], [0, 0, 1, 1], [], []>} : vector<64x4xf32>, vector<4x4xf32>, vector<64x4xf32> -> vector<64x4xf32>
    %103 = arith.addf %100, %102 : vector<64x4xf32>
    %c28 = arith.constant 28 : index
    %c0_149 = arith.constant 0 : index
    %104 = vector.load %arg5[%c28, %c0_149] : memref<192x4xf32, #tpu.memory_space<vmem>>, vector<4x4xf32>
    %cst_150 = arith.constant dense<0.000000e+00> : vector<64x4xf32>
    %105 = tpu.matmul %42, %104, %cst_150 {dimension_numbers = #tpu.dot_dimension_numbers<[1], [0], [0], [1], [0, 0, 1, 1], [], []>} : vector<64x4xf32>, vector<4x4xf32>, vector<64x4xf32> -> vector<64x4xf32>
    %106 = arith.addf %103, %105 : vector<64x4xf32>
    %c32 = arith.constant 32 : index
    %c0_151 = arith.constant 0 : index
    %107 = vector.load %arg5[%c32, %c0_151] : memref<192x4xf32, #tpu.memory_space<vmem>>, vector<4x4xf32>
    %cst_152 = arith.constant dense<0.000000e+00> : vector<64x4xf32>
    %108 = tpu.matmul %57, %107, %cst_152 {dimension_numbers = #tpu.dot_dimension_numbers<[1], [0], [0], [1], [0, 0, 1, 1], [], []>} : vector<64x4xf32>, vector<4x4xf32>, vector<64x4xf32> -> vector<64x4xf32>
    %109 = arith.addf %106, %108 : vector<64x4xf32>
    %c36 = arith.constant 36 : index
    %c0_153 = arith.constant 0 : index
    %110 = vector.load %arg5[%c36, %c0_153] : memref<192x4xf32, #tpu.memory_space<vmem>>, vector<4x4xf32>
    %cst_154 = arith.constant dense<0.000000e+00> : vector<64x4xf32>
    %111 = tpu.matmul %60, %110, %cst_154 {dimension_numbers = #tpu.dot_dimension_numbers<[1], [0], [0], [1], [0, 0, 1, 1], [], []>} : vector<64x4xf32>, vector<4x4xf32>, vector<64x4xf32> -> vector<64x4xf32>
    %112 = arith.addf %109, %111 : vector<64x4xf32>
    %c40 = arith.constant 40 : index
    %c0_155 = arith.constant 0 : index
    %113 = vector.load %arg5[%c40, %c0_155] : memref<192x4xf32, #tpu.memory_space<vmem>>, vector<4x4xf32>
    %cst_156 = arith.constant dense<0.000000e+00> : vector<64x4xf32>
    %114 = tpu.matmul %66, %113, %cst_156 {dimension_numbers = #tpu.dot_dimension_numbers<[1], [0], [0], [1], [0, 0, 1, 1], [], []>} : vector<64x4xf32>, vector<4x4xf32>, vector<64x4xf32> -> vector<64x4xf32>
    %115 = arith.addf %112, %114 : vector<64x4xf32>
    %c44 = arith.constant 44 : index
    %c0_157 = arith.constant 0 : index
    %116 = vector.load %arg5[%c44, %c0_157] : memref<192x4xf32, #tpu.memory_space<vmem>>, vector<4x4xf32>
    %cst_158 = arith.constant dense<0.000000e+00> : vector<64x4xf32>
    %117 = tpu.matmul %69, %116, %cst_158 {dimension_numbers = #tpu.dot_dimension_numbers<[1], [0], [0], [1], [0, 0, 1, 1], [], []>} : vector<64x4xf32>, vector<4x4xf32>, vector<64x4xf32> -> vector<64x4xf32>
    %118 = arith.addf %115, %117 : vector<64x4xf32>
    %119 = vector.broadcast %0 : vector<1x4xf32> to vector<64x4xf32>
    %120 = arith.addf %118, %119 : vector<64x4xf32>
    %121 = vector.shape_cast %120 : vector<64x4xf32> to vector<8x8x4xf32>
    %c0_159 = arith.constant 0 : index
    %c0_160 = arith.constant 0 : index
    %c0_161 = arith.constant 0 : index
    %c0_162 = arith.constant 0 : index
    %c0_163 = arith.constant 0 : index
    %c0_164 = arith.constant 0 : index
    %122 = vector.load %arg7[%c0_159, %c0_160, %c0_161, %c0_162, %c0_163, %c0_164] : memref<1x1x8x2x8x8xf32, #tpu.memory_space<vmem>>, vector<1x1x8x1x8x4xf32>
    %123 = vector.shape_cast %122 : vector<1x1x8x1x8x4xf32> to vector<8x8x4xf32>
    %124 = vector.shape_cast %121 : vector<8x8x4xf32> to vector<1x1x8x1x8x4xf32>
    tpu.vector_store %arg7[%c0_159, %c0_160, %c0_161, %c0_162, %c0_163, %c0_164], %124 {strides = array<i32>} : memref<1x1x8x2x8x8xf32, #tpu.memory_space<vmem>>, vector<1x1x8x1x8x4xf32>,
    %cst_165 = arith.constant 0.000000e+00 : f32
    %125 = vector.broadcast %cst_165 : f32 to vector<64x4xf32>
    %c48 = arith.constant 48 : index
    %c0_166 = arith.constant 0 : index
    %126 = vector.load %arg5[%c48, %c0_166] : memref<192x4xf32, #tpu.memory_space<vmem>>, vector<4x4xf32>
    %cst_167 = arith.constant dense<0.000000e+00> : vector<64x4xf32>
    %127 = tpu.matmul %6, %126, %cst_167 {dimension_numbers = #tpu.dot_dimension_numbers<[1], [0], [0], [1], [0, 0, 1, 1], [], []>} : vector<64x4xf32>, vector<4x4xf32>, vector<64x4xf32> -> vector<64x4xf32>
    %128 = arith.addf %125, %127 : vector<64x4xf32>
    %c52 = arith.constant 52 : index
    %c0_168 = arith.constant 0 : index
    %129 = vector.load %arg5[%c52, %c0_168] : memref<192x4xf32, #tpu.memory_space<vmem>>, vector<4x4xf32>
    %cst_169 = arith.constant dense<0.000000e+00> : vector<64x4xf32>
    %130 = tpu.matmul %9, %129, %cst_169 {dimension_numbers = #tpu.dot_dimension_numbers<[1], [0], [0], [1], [0, 0, 1, 1], [], []>} : vector<64x4xf32>, vector<4x4xf32>, vector<64x4xf32> -> vector<64x4xf32>
    %131 = arith.addf %128, %130 : vector<64x4xf32>
    %c56 = arith.constant 56 : index
    %c0_170 = arith.constant 0 : index
    %132 = vector.load %arg5[%c56, %c0_170] : memref<192x4xf32, #tpu.memory_space<vmem>>, vector<4x4xf32>
    %cst_171 = arith.constant dense<0.000000e+00> : vector<64x4xf32>
    %133 = tpu.matmul %15, %132, %cst_171 {dimension_numbers = #tpu.dot_dimension_numbers<[1], [0], [0], [1], [0, 0, 1, 1], [], []>} : vector<64x4xf32>, vector<4x4xf32>, vector<64x4xf32> -> vector<64x4xf32>
    %134 = arith.addf %131, %133 : vector<64x4xf32>
    %c60 = arith.constant 60 : index
    %c0_172 = arith.constant 0 : index
    %135 = vector.load %arg5[%c60, %c0_172] : memref<192x4xf32, #tpu.memory_space<vmem>>, vector<4x4xf32>
    %cst_173 = arith.constant dense<0.000000e+00> : vector<64x4xf32>
    %136 = tpu.matmul %18, %135, %cst_173 {dimension_numbers = #tpu.dot_dimension_numbers<[1], [0], [0], [1], [0, 0, 1, 1], [], []>} : vector<64x4xf32>, vector<4x4xf32>, vector<64x4xf32> -> vector<64x4xf32>
    %137 = arith.addf %134, %136 : vector<64x4xf32>
    %c64 = arith.constant 64 : index
    %c0_174 = arith.constant 0 : index
    %138 = vector.load %arg5[%c64, %c0_174] : memref<192x4xf32, #tpu.memory_space<vmem>>, vector<4x4xf32>
    %cst_175 = arith.constant dense<0.000000e+00> : vector<64x4xf32>
    %139 = tpu.matmul %33, %138, %cst_175 {dimension_numbers = #tpu.dot_dimension_numbers<[1], [0], [0], [1], [0, 0, 1, 1], [], []>} : vector<64x4xf32>, vector<4x4xf32>, vector<64x4xf32> -> vector<64x4xf32>
    %140 = arith.addf %137, %139 : vector<64x4xf32>
    %c68 = arith.constant 68 : index
    %c0_176 = arith.constant 0 : index
    %141 = vector.load %arg5[%c68, %c0_176] : memref<192x4xf32, #tpu.memory_space<vmem>>, vector<4x4xf32>
    %cst_177 = arith.constant dense<0.000000e+00> : vector<64x4xf32>
    %142 = tpu.matmul %36, %141, %cst_177 {dimension_numbers = #tpu.dot_dimension_numbers<[1], [0], [0], [1], [0, 0, 1, 1], [], []>} : vector<64x4xf32>, vector<4x4xf32>, vector<64x4xf32> -> vector<64x4xf32>
    %143 = arith.addf %140, %142 : vector<64x4xf32>
    %c72 = arith.constant 72 : index
    %c0_178 = arith.constant 0 : index
    %144 = vector.load %arg5[%c72, %c0_178] : memref<192x4xf32, #tpu.memory_space<vmem>>, vector<4x4xf32>
    %cst_179 = arith.constant dense<0.000000e+00> : vector<64x4xf32>
    %145 = tpu.matmul %42, %144, %cst_179 {dimension_numbers = #tpu.dot_dimension_numbers<[1], [0], [0], [1], [0, 0, 1, 1], [], []>} : vector<64x4xf32>, vector<4x4xf32>, vector<64x4xf32> -> vector<64x4xf32>
    %146 = arith.addf %143, %145 : vector<64x4xf32>
    %c76 = arith.constant 76 : index
    %c0_180 = arith.constant 0 : index
    %147 = vector.load %arg5[%c76, %c0_180] : memref<192x4xf32, #tpu.memory_space<vmem>>, vector<4x4xf32>
    %cst_181 = arith.constant dense<0.000000e+00> : vector<64x4xf32>
    %148 = tpu.matmul %45, %147, %cst_181 {dimension_numbers = #tpu.dot_dimension_numbers<[1], [0], [0], [1], [0, 0, 1, 1], [], []>} : vector<64x4xf32>, vector<4x4xf32>, vector<64x4xf32> -> vector<64x4xf32>
    %149 = arith.addf %146, %148 : vector<64x4xf32>
    %c80 = arith.constant 80 : index
    %c0_182 = arith.constant 0 : index
    %150 = vector.load %arg5[%c80, %c0_182] : memref<192x4xf32, #tpu.memory_space<vmem>>, vector<4x4xf32>
    %cst_183 = arith.constant dense<0.000000e+00> : vector<64x4xf32>
    %151 = tpu.matmul %60, %150, %cst_183 {dimension_numbers = #tpu.dot_dimension_numbers<[1], [0], [0], [1], [0, 0, 1, 1], [], []>} : vector<64x4xf32>, vector<4x4xf32>, vector<64x4xf32> -> vector<64x4xf32>
    %152 = arith.addf %149, %151 : vector<64x4xf32>
    %c84 = arith.constant 84 : index
    %c0_184 = arith.constant 0 : index
    %153 = vector.load %arg5[%c84, %c0_184] : memref<192x4xf32, #tpu.memory_space<vmem>>, vector<4x4xf32>
    %cst_185 = arith.constant dense<0.000000e+00> : vector<64x4xf32>
    %154 = tpu.matmul %63, %153, %cst_185 {dimension_numbers = #tpu.dot_dimension_numbers<[1], [0], [0], [1], [0, 0, 1, 1], [], []>} : vector<64x4xf32>, vector<4x4xf32>, vector<64x4xf32> -> vector<64x4xf32>
    %155 = arith.addf %152, %154 : vector<64x4xf32>
    %c88 = arith.constant 88 : index
    %c0_186 = arith.constant 0 : index
    %156 = vector.load %arg5[%c88, %c0_186] : memref<192x4xf32, #tpu.memory_space<vmem>>, vector<4x4xf32>
    %cst_187 = arith.constant dense<0.000000e+00> : vector<64x4xf32>
    %157 = tpu.matmul %69, %156, %cst_187 {dimension_numbers = #tpu.dot_dimension_numbers<[1], [0], [0], [1], [0, 0, 1, 1], [], []>} : vector<64x4xf32>, vector<4x4xf32>, vector<64x4xf32> -> vector<64x4xf32>
    %158 = arith.addf %155, %157 : vector<64x4xf32>
    %c92 = arith.constant 92 : index
    %c0_188 = arith.constant 0 : index
    %159 = vector.load %arg5[%c92, %c0_188] : memref<192x4xf32, #tpu.memory_space<vmem>>, vector<4x4xf32>
    %cst_189 = arith.constant dense<0.000000e+00> : vector<64x4xf32>
    %160 = tpu.matmul %72, %159, %cst_189 {dimension_numbers = #tpu.dot_dimension_numbers<[1], [0], [0], [1], [0, 0, 1, 1], [], []>} : vector<64x4xf32>, vector<4x4xf32>, vector<64x4xf32> -> vector<64x4xf32>
    %161 = arith.addf %158, %160 : vector<64x4xf32>
    %162 = vector.broadcast %0 : vector<1x4xf32> to vector<64x4xf32>
    %163 = arith.addf %161, %162 : vector<64x4xf32>
    %164 = vector.shape_cast %163 : vector<64x4xf32> to vector<8x8x4xf32>
    %c0_190 = arith.constant 0 : index
    %c0_191 = arith.constant 0 : index
    %c0_192 = arith.constant 0 : index
    %c0_193 = arith.constant 0 : index
    %c0_194 = arith.constant 0 : index
    %c4_195 = arith.constant 4 : index
    %165 = vector.load %arg7[%c0_190, %c0_191, %c0_192, %c0_193, %c0_194, %c4_195] : memref<1x1x8x2x8x8xf32, #tpu.memory_space<vmem>>, vector<1x1x8x1x8x4xf32>
    %166 = vector.shape_cast %165 : vector<1x1x8x1x8x4xf32> to vector<8x8x4xf32>
    %167 = vector.shape_cast %164 : vector<8x8x4xf32> to vector<1x1x8x1x8x4xf32>
    tpu.vector_store %arg7[%c0_190, %c0_191, %c0_192, %c0_193, %c0_194, %c4_195], %167 {strides = array<i32>} : memref<1x1x8x2x8x8xf32, #tpu.memory_space<vmem>>, vector<1x1x8x1x8x4xf32>,
    %cst_196 = arith.constant 0.000000e+00 : f32
    %168 = vector.broadcast %cst_196 : f32 to vector<64x4xf32>
    %c96 = arith.constant 96 : index
    %c0_197 = arith.constant 0 : index
    %169 = vector.load %arg5[%c96, %c0_197] : memref<192x4xf32, #tpu.memory_space<vmem>>, vector<4x4xf32>
    %cst_198 = arith.constant dense<0.000000e+00> : vector<64x4xf32>
    %170 = tpu.matmul %12, %169, %cst_198 {dimension_numbers = #tpu.dot_dimension_numbers<[1], [0], [0], [1], [0, 0, 1, 1], [], []>} : vector<64x4xf32>, vector<4x4xf32>, vector<64x4xf32> -> vector<64x4xf32>
    %171 = arith.addf %168, %170 : vector<64x4xf32>
    %c100 = arith.constant 100 : index
    %c0_199 = arith.constant 0 : index
    %172 = vector.load %arg5[%c100, %c0_199] : memref<192x4xf32, #tpu.memory_space<vmem>>, vector<4x4xf32>
    %cst_200 = arith.constant dense<0.000000e+00> : vector<64x4xf32>
    %173 = tpu.matmul %15, %172, %cst_200 {dimension_numbers = #tpu.dot_dimension_numbers<[1], [0], [0], [1], [0, 0, 1, 1], [], []>} : vector<64x4xf32>, vector<4x4xf32>, vector<64x4xf32> -> vector<64x4xf32>
    %174 = arith.addf %171, %173 : vector<64x4xf32>
    %c104 = arith.constant 104 : index
    %c0_201 = arith.constant 0 : index
    %175 = vector.load %arg5[%c104, %c0_201] : memref<192x4xf32, #tpu.memory_space<vmem>>, vector<4x4xf32>
    %cst_202 = arith.constant dense<0.000000e+00> : vector<64x4xf32>
    %176 = tpu.matmul %21, %175, %cst_202 {dimension_numbers = #tpu.dot_dimension_numbers<[1], [0], [0], [1], [0, 0, 1, 1], [], []>} : vector<64x4xf32>, vector<4x4xf32>, vector<64x4xf32> -> vector<64x4xf32>
    %177 = arith.addf %174, %176 : vector<64x4xf32>
    %c108 = arith.constant 108 : index
    %c0_203 = arith.constant 0 : index
    %178 = vector.load %arg5[%c108, %c0_203] : memref<192x4xf32, #tpu.memory_space<vmem>>, vector<4x4xf32>
    %cst_204 = arith.constant dense<0.000000e+00> : vector<64x4xf32>
    %179 = tpu.matmul %24, %178, %cst_204 {dimension_numbers = #tpu.dot_dimension_numbers<[1], [0], [0], [1], [0, 0, 1, 1], [], []>} : vector<64x4xf32>, vector<4x4xf32>, vector<64x4xf32> -> vector<64x4xf32>
    %180 = arith.addf %177, %179 : vector<64x4xf32>
    %c112 = arith.constant 112 : index
    %c0_205 = arith.constant 0 : index
    %181 = vector.load %arg5[%c112, %c0_205] : memref<192x4xf32, #tpu.memory_space<vmem>>, vector<4x4xf32>
    %cst_206 = arith.constant dense<0.000000e+00> : vector<64x4xf32>
    %182 = tpu.matmul %39, %181, %cst_206 {dimension_numbers = #tpu.dot_dimension_numbers<[1], [0], [0], [1], [0, 0, 1, 1], [], []>} : vector<64x4xf32>, vector<4x4xf32>, vector<64x4xf32> -> vector<64x4xf32>
    %183 = arith.addf %180, %182 : vector<64x4xf32>
    %c116 = arith.constant 116 : index
    %c0_207 = arith.constant 0 : index
    %184 = vector.load %arg5[%c116, %c0_207] : memref<192x4xf32, #tpu.memory_space<vmem>>, vector<4x4xf32>
    %cst_208 = arith.constant dense<0.000000e+00> : vector<64x4xf32>
    %185 = tpu.matmul %42, %184, %cst_208 {dimension_numbers = #tpu.dot_dimension_numbers<[1], [0], [0], [1], [0, 0, 1, 1], [], []>} : vector<64x4xf32>, vector<4x4xf32>, vector<64x4xf32> -> vector<64x4xf32>
    %186 = arith.addf %183, %185 : vector<64x4xf32>
    %c120 = arith.constant 120 : index
    %c0_209 = arith.constant 0 : index
    %187 = vector.load %arg5[%c120, %c0_209] : memref<192x4xf32, #tpu.memory_space<vmem>>, vector<4x4xf32>
    %cst_210 = arith.constant dense<0.000000e+00> : vector<64x4xf32>
    %188 = tpu.matmul %48, %187, %cst_210 {dimension_numbers = #tpu.dot_dimension_numbers<[1], [0], [0], [1], [0, 0, 1, 1], [], []>} : vector<64x4xf32>, vector<4x4xf32>, vector<64x4xf32> -> vector<64x4xf32>
    %189 = arith.addf %186, %188 : vector<64x4xf32>
    %c124 = arith.constant 124 : index
    %c0_211 = arith.constant 0 : index
    %190 = vector.load %arg5[%c124, %c0_211] : memref<192x4xf32, #tpu.memory_space<vmem>>, vector<4x4xf32>
    %cst_212 = arith.constant dense<0.000000e+00> : vector<64x4xf32>
    %191 = tpu.matmul %51, %190, %cst_212 {dimension_numbers = #tpu.dot_dimension_numbers<[1], [0], [0], [1], [0, 0, 1, 1], [], []>} : vector<64x4xf32>, vector<4x4xf32>, vector<64x4xf32> -> vector<64x4xf32>
    %192 = arith.addf %189, %191 : vector<64x4xf32>
    %c128 = arith.constant 128 : index
    %c0_213 = arith.constant 0 : index
    %193 = vector.load %arg5[%c128, %c0_213] : memref<192x4xf32, #tpu.memory_space<vmem>>, vector<4x4xf32>
    %cst_214 = arith.constant dense<0.000000e+00> : vector<64x4xf32>
    %194 = tpu.matmul %66, %193, %cst_214 {dimension_numbers = #tpu.dot_dimension_numbers<[1], [0], [0], [1], [0, 0, 1, 1], [], []>} : vector<64x4xf32>, vector<4x4xf32>, vector<64x4xf32> -> vector<64x4xf32>
    %195 = arith.addf %192, %194 : vector<64x4xf32>
    %c132 = arith.constant 132 : index
    %c0_215 = arith.constant 0 : index
    %196 = vector.load %arg5[%c132, %c0_215] : memref<192x4xf32, #tpu.memory_space<vmem>>, vector<4x4xf32>
    %cst_216 = arith.constant dense<0.000000e+00> : vector<64x4xf32>
    %197 = tpu.matmul %69, %196, %cst_216 {dimension_numbers = #tpu.dot_dimension_numbers<[1], [0], [0], [1], [0, 0, 1, 1], [], []>} : vector<64x4xf32>, vector<4x4xf32>, vector<64x4xf32> -> vector<64x4xf32>
    %198 = arith.addf %195, %197 : vector<64x4xf32>
    %c136 = arith.constant 136 : index
    %c0_217 = arith.constant 0 : index
    %199 = vector.load %arg5[%c136, %c0_217] : memref<192x4xf32, #tpu.memory_space<vmem>>, vector<4x4xf32>
    %cst_218 = arith.constant dense<0.000000e+00> : vector<64x4xf32>
    %200 = tpu.matmul %75, %199, %cst_218 {dimension_numbers = #tpu.dot_dimension_numbers<[1], [0], [0], [1], [0, 0, 1, 1], [], []>} : vector<64x4xf32>, vector<4x4xf32>, vector<64x4xf32> -> vector<64x4xf32>
    %201 = arith.addf %198, %200 : vector<64x4xf32>
    %c140 = arith.constant 140 : index
    %c0_219 = arith.constant 0 : index
    %202 = vector.load %arg5[%c140, %c0_219] : memref<192x4xf32, #tpu.memory_space<vmem>>, vector<4x4xf32>
    %cst_220 = arith.constant dense<0.000000e+00> : vector<64x4xf32>
    %203 = tpu.matmul %78, %202, %cst_220 {dimension_numbers = #tpu.dot_dimension_numbers<[1], [0], [0], [1], [0, 0, 1, 1], [], []>} : vector<64x4xf32>, vector<4x4xf32>, vector<64x4xf32> -> vector<64x4xf32>
    %204 = arith.addf %201, %203 : vector<64x4xf32>
    %205 = vector.broadcast %0 : vector<1x4xf32> to vector<64x4xf32>
    %206 = arith.addf %204, %205 : vector<64x4xf32>
    %207 = vector.shape_cast %206 : vector<64x4xf32> to vector<8x8x4xf32>
    %c0_221 = arith.constant 0 : index
    %c0_222 = arith.constant 0 : index
    %c0_223 = arith.constant 0 : index
    %c1_224 = arith.constant 1 : index
    %c0_225 = arith.constant 0 : index
    %c0_226 = arith.constant 0 : index
    %208 = vector.load %arg7[%c0_221, %c0_222, %c0_223, %c1_224, %c0_225, %c0_226] : memref<1x1x8x2x8x8xf32, #tpu.memory_space<vmem>>, vector<1x1x8x1x8x4xf32>
    %209 = vector.shape_cast %208 : vector<1x1x8x1x8x4xf32> to vector<8x8x4xf32>
    %210 = vector.shape_cast %207 : vector<8x8x4xf32> to vector<1x1x8x1x8x4xf32>
    tpu.vector_store %arg7[%c0_221, %c0_222, %c0_223, %c1_224, %c0_225, %c0_226], %210 {strides = array<i32>} : memref<1x1x8x2x8x8xf32, #tpu.memory_space<vmem>>, vector<1x1x8x1x8x4xf32>,
    %cst_227 = arith.constant 0.000000e+00 : f32
    %211 = vector.broadcast %cst_227 : f32 to vector<64x4xf32>
    %c144 = arith.constant 144 : index
    %c0_228 = arith.constant 0 : index
    %212 = vector.load %arg5[%c144, %c0_228] : memref<192x4xf32, #tpu.memory_space<vmem>>, vector<4x4xf32>
    %cst_229 = arith.constant dense<0.000000e+00> : vector<64x4xf32>
    %213 = tpu.matmul %15, %212, %cst_229 {dimension_numbers = #tpu.dot_dimension_numbers<[1], [0], [0], [1], [0, 0, 1, 1], [], []>} : vector<64x4xf32>, vector<4x4xf32>, vector<64x4xf32> -> vector<64x4xf32>
    %214 = arith.addf %211, %213 : vector<64x4xf32>
    %c148 = arith.constant 148 : index
    %c0_230 = arith.constant 0 : index
    %215 = vector.load %arg5[%c148, %c0_230] : memref<192x4xf32, #tpu.memory_space<vmem>>, vector<4x4xf32>
    %cst_231 = arith.constant dense<0.000000e+00> : vector<64x4xf32>
    %216 = tpu.matmul %18, %215, %cst_231 {dimension_numbers = #tpu.dot_dimension_numbers<[1], [0], [0], [1], [0, 0, 1, 1], [], []>} : vector<64x4xf32>, vector<4x4xf32>, vector<64x4xf32> -> vector<64x4xf32>
    %217 = arith.addf %214, %216 : vector<64x4xf32>
    %c152 = arith.constant 152 : index
    %c0_232 = arith.constant 0 : index
    %218 = vector.load %arg5[%c152, %c0_232] : memref<192x4xf32, #tpu.memory_space<vmem>>, vector<4x4xf32>
    %cst_233 = arith.constant dense<0.000000e+00> : vector<64x4xf32>
    %219 = tpu.matmul %24, %218, %cst_233 {dimension_numbers = #tpu.dot_dimension_numbers<[1], [0], [0], [1], [0, 0, 1, 1], [], []>} : vector<64x4xf32>, vector<4x4xf32>, vector<64x4xf32> -> vector<64x4xf32>
    %220 = arith.addf %217, %219 : vector<64x4xf32>
    %c156 = arith.constant 156 : index
    %c0_234 = arith.constant 0 : index
    %221 = vector.load %arg5[%c156, %c0_234] : memref<192x4xf32, #tpu.memory_space<vmem>>, vector<4x4xf32>
    %cst_235 = arith.constant dense<0.000000e+00> : vector<64x4xf32>
    %222 = tpu.matmul %27, %221, %cst_235 {dimension_numbers = #tpu.dot_dimension_numbers<[1], [0], [0], [1], [0, 0, 1, 1], [], []>} : vector<64x4xf32>, vector<4x4xf32>, vector<64x4xf32> -> vector<64x4xf32>
    %223 = arith.addf %220, %222 : vector<64x4xf32>
    %c160 = arith.constant 160 : index
    %c0_236 = arith.constant 0 : index
    %224 = vector.load %arg5[%c160, %c0_236] : memref<192x4xf32, #tpu.memory_space<vmem>>, vector<4x4xf32>
    %cst_237 = arith.constant dense<0.000000e+00> : vector<64x4xf32>
    %225 = tpu.matmul %42, %224, %cst_237 {dimension_numbers = #tpu.dot_dimension_numbers<[1], [0], [0], [1], [0, 0, 1, 1], [], []>} : vector<64x4xf32>, vector<4x4xf32>, vector<64x4xf32> -> vector<64x4xf32>
    %226 = arith.addf %223, %225 : vector<64x4xf32>
    %c164 = arith.constant 164 : index
    %c0_238 = arith.constant 0 : index
    %227 = vector.load %arg5[%c164, %c0_238] : memref<192x4xf32, #tpu.memory_space<vmem>>, vector<4x4xf32>
    %cst_239 = arith.constant dense<0.000000e+00> : vector<64x4xf32>
    %228 = tpu.matmul %45, %227, %cst_239 {dimension_numbers = #tpu.dot_dimension_numbers<[1], [0], [0], [1], [0, 0, 1, 1], [], []>} : vector<64x4xf32>, vector<4x4xf32>, vector<64x4xf32> -> vector<64x4xf32>
    %229 = arith.addf %226, %228 : vector<64x4xf32>
    %c168 = arith.constant 168 : index
    %c0_240 = arith.constant 0 : index
    %230 = vector.load %arg5[%c168, %c0_240] : memref<192x4xf32, #tpu.memory_space<vmem>>, vector<4x4xf32>
    %cst_241 = arith.constant dense<0.000000e+00> : vector<64x4xf32>
    %231 = tpu.matmul %51, %230, %cst_241 {dimension_numbers = #tpu.dot_dimension_numbers<[1], [0], [0], [1], [0, 0, 1, 1], [], []>} : vector<64x4xf32>, vector<4x4xf32>, vector<64x4xf32> -> vector<64x4xf32>
    %232 = arith.addf %229, %231 : vector<64x4xf32>
    %c172 = arith.constant 172 : index
    %c0_242 = arith.constant 0 : index
    %233 = vector.load %arg5[%c172, %c0_242] : memref<192x4xf32, #tpu.memory_space<vmem>>, vector<4x4xf32>
    %cst_243 = arith.constant dense<0.000000e+00> : vector<64x4xf32>
    %234 = tpu.matmul %54, %233, %cst_243 {dimension_numbers = #tpu.dot_dimension_numbers<[1], [0], [0], [1], [0, 0, 1, 1], [], []>} : vector<64x4xf32>, vector<4x4xf32>, vector<64x4xf32> -> vector<64x4xf32>
    %235 = arith.addf %232, %234 : vector<64x4xf32>
    %c176 = arith.constant 176 : index
    %c0_244 = arith.constant 0 : index
    %236 = vector.load %arg5[%c176, %c0_244] : memref<192x4xf32, #tpu.memory_space<vmem>>, vector<4x4xf32>
    %cst_245 = arith.constant dense<0.000000e+00> : vector<64x4xf32>
    %237 = tpu.matmul %69, %236, %cst_245 {dimension_numbers = #tpu.dot_dimension_numbers<[1], [0], [0], [1], [0, 0, 1, 1], [], []>} : vector<64x4xf32>, vector<4x4xf32>, vector<64x4xf32> -> vector<64x4xf32>
    %238 = arith.addf %235, %237 : vector<64x4xf32>
    %c180 = arith.constant 180 : index
    %c0_246 = arith.constant 0 : index
    %239 = vector.load %arg5[%c180, %c0_246] : memref<192x4xf32, #tpu.memory_space<vmem>>, vector<4x4xf32>
    %cst_247 = arith.constant dense<0.000000e+00> : vector<64x4xf32>
    %240 = tpu.matmul %72, %239, %cst_247 {dimension_numbers = #tpu.dot_dimension_numbers<[1], [0], [0], [1], [0, 0, 1, 1], [], []>} : vector<64x4xf32>, vector<4x4xf32>, vector<64x4xf32> -> vector<64x4xf32>
    %241 = arith.addf %238, %240 : vector<64x4xf32>
    %c184 = arith.constant 184 : index
    %c0_248 = arith.constant 0 : index
    %242 = vector.load %arg5[%c184, %c0_248] : memref<192x4xf32, #tpu.memory_space<vmem>>, vector<4x4xf32>
    %cst_249 = arith.constant dense<0.000000e+00> : vector<64x4xf32>
    %243 = tpu.matmul %78, %242, %cst_249 {dimension_numbers = #tpu.dot_dimension_numbers<[1], [0], [0], [1], [0, 0, 1, 1], [], []>} : vector<64x4xf32>, vector<4x4xf32>, vector<64x4xf32> -> vector<64x4xf32>
    %244 = arith.addf %241, %243 : vector<64x4xf32>
    %c188 = arith.constant 188 : index
    %c0_250 = arith.constant 0 : index
    %245 = vector.load %arg5[%c188, %c0_250] : memref<192x4xf32, #tpu.memory_space<vmem>>, vector<4x4xf32>
    %cst_251 = arith.constant dense<0.000000e+00> : vector<64x4xf32>
    %246 = tpu.matmul %81, %245, %cst_251 {dimension_numbers = #tpu.dot_dimension_numbers<[1], [0], [0], [1], [0, 0, 1, 1], [], []>} : vector<64x4xf32>, vector<4x4xf32>, vector<64x4xf32> -> vector<64x4xf32>
    %247 = arith.addf %244, %246 : vector<64x4xf32>
    %248 = vector.broadcast %0 : vector<1x4xf32> to vector<64x4xf32>
    %249 = arith.addf %247, %248 : vector<64x4xf32>
    %250 = vector.shape_cast %249 : vector<64x4xf32> to vector<8x8x4xf32>
    %c0_252 = arith.constant 0 : index
    %c0_253 = arith.constant 0 : index
    %c0_254 = arith.constant 0 : index
    %c1_255 = arith.constant 1 : index
    %c0_256 = arith.constant 0 : index
    %c4_257 = arith.constant 4 : index
    %251 = vector.load %arg7[%c0_252, %c0_253, %c0_254, %c1_255, %c0_256, %c4_257] : memref<1x1x8x2x8x8xf32, #tpu.memory_space<vmem>>, vector<1x1x8x1x8x4xf32>
    %252 = vector.shape_cast %251 : vector<1x1x8x1x8x4xf32> to vector<8x8x4xf32>
    %253 = vector.shape_cast %250 : vector<8x8x4xf32> to vector<1x1x8x1x8x4xf32>
    tpu.vector_store %arg7[%c0_252, %c0_253, %c0_254, %c1_255, %c0_256, %c4_257], %253 {strides = array<i32>} : memref<1x1x8x2x8x8xf32, #tpu.memory_space<vmem>>, vector<1x1x8x1x8x4xf32>,
    return
  }
  func.func @transform_0(%arg0: i32, %arg1: i32) -> (i32, i32, i32, i32, i32) {
    %c0_i32 = arith.constant 0 : i32
    %0 = arith.addi %arg1, %c0_i32 : i32
    %c0_i32_0 = arith.constant 0 : i32
    %c0_i32_1 = arith.constant 0 : i32
    %c0_i32_2 = arith.constant 0 : i32
    %c0_i32_3 = arith.constant 0 : i32
    return %arg0, %0, %c0_i32_0, %c0_i32_1, %c0_i32_2 : i32, i32, i32, i32, i32
  }
  func.func @transform_1(%arg0: i32, %arg1: i32) -> (i32, i32, i32, i32, i32) {
    %c1_i32 = arith.constant 1 : i32
    %0 = arith.addi %arg1, %c1_i32 : i32
    %c0_i32 = arith.constant 0 : i32
    %c0_i32_0 = arith.constant 0 : i32
    %c0_i32_1 = arith.constant 0 : i32
    %c0_i32_2 = arith.constant 0 : i32
    return %arg0, %0, %c0_i32, %c0_i32_0, %c0_i32_1 : i32, i32, i32, i32, i32
  }
  func.func @transform_2(%arg0: i32, %arg1: i32) -> (i32, i32, i32, i32, i32) {
    %c2_i32 = arith.constant 2 : i32
    %0 = arith.addi %arg1, %c2_i32 : i32
    %c0_i32 = arith.constant 0 : i32
    %c0_i32_0 = arith.constant 0 : i32
    %c0_i32_1 = arith.constant 0 : i32
    %c0_i32_2 = arith.constant 0 : i32
    return %arg0, %0, %c0_i32, %c0_i32_0, %c0_i32_1 : i32, i32, i32, i32, i32
  }
  func.func @transform_3(%arg0: i32, %arg1: i32) -> (i32, i32) {
    %c0_i32 = arith.constant 0 : i32
    %c0_i32_0 = arith.constant 0 : i32
    %c0_i32_1 = arith.constant 0 : i32
    return %c0_i32, %c0_i32_0 : i32, i32
  }
  func.func @transform_4(%arg0: i32, %arg1: i32) -> (i32, i32) {
    %c0_i32 = arith.constant 0 : i32
    %c0_i32_0 = arith.constant 0 : i32
    %c0_i32_1 = arith.constant 0 : i32
    return %c0_i32, %c0_i32_0 : i32, i32
  }
  func.func @transform_5(%arg0: i32, %arg1: i32) -> (i32, i32, i32, i32, i32, i32) {
    %c0_i32 = arith.constant 0 : i32
    %c0_i32_0 = arith.constant 0 : i32
    %c0_i32_1 = arith.constant 0 : i32
    %c0_i32_2 = arith.constant 0 : i32
    %c0_i32_3 = arith.constant 0 : i32
    return %arg0, %arg1, %c0_i32, %c0_i32_0, %c0_i32_1, %c0_i32_2 : i32, i32, i32, i32, i32, i32
  }
}

</mosaic_0001>

<llo_original>
// kernel: upsample2d_forward.1
$region0: #{upsample2d_forward.1}
  #allocation0 [shape = 'u32[]', space=smem, size = 0x4, offset = 0x4, fixed_abs, tag = 'smem constant byte address 0x4 - core index']
  #allocation1 [shape = 'u32[144,128]{1,0:T(1,128)}', space=vmem, size = 0x12000, scoped, tag = 'internal scratch']
  %s0 = inlined_call_operand.vmem [shape: f32[2,6,10,10,4], index: 0, kind: input, shape index: {}, may-alias: {0,1,2}]
  %s1 = inlined_call_operand.vmem [shape: f32[2,6,10,10,4], index: 1, kind: input, shape index: {}, may-alias: {0,1,2}]
  %s2 = inlined_call_operand.vmem [shape: f32[2,6,10,10,4], index: 2, kind: input, shape index: {}, may-alias: {0,1,2}]
  %s3 = inlined_call_operand.vmem [shape: f32[192,4], index: 3, kind: input, shape index: {}]
  %s4 = inlined_call_operand.vmem [shape: f32[1,4], index: 4, kind: input, shape index: {}]
  %s5 = inlined_call_operand.vmem [shape: f32[2,4,8,2,8,8], index: 5, kind: output, shape index: {}]
  %s6 = sld [smem:[#allocation0]]
  $region53: #{upsample2d_forward.1} parent=0
    _
  %s8 = ssub.s32 1, %s6
  %s9 = scalar_select 0, %s8, %s6
  loop: start=0, step=1, limit=10
  $region2: #{upsample2d_forward.1} parent=0 // loop_pre_header
    _
  $region3: #{upsample2d_forward.1} parent=0 // loop_header
    %s11 = sphi 0, %s15
    %p12 = scmp.ge.s32.totalorder %s11, 10
    %s18 = sphi 0, %s30
    %s19 = sphi 0, %s26
    %s20 = sphi 0, %s18
    %s21 = sphi 0, %s19
    %s22 = sphi 0, %s20
    %s23 = sphi 0, %s21
    %s35 = sphi 0, %s37
    %s38 = sphi 0, %s35
    %s39 = sphi 0, %s38
    %s55 = sphi 0, %s39
    %s65 = sphi 0, %s67
    %s68 = sphi 0, %s65
    %s69 = sphi 0, %s68
    %s85 = sphi 0, %s69
    %s95 = sphi 0, %s97
    %s98 = sphi 0, %s95
    %s99 = sphi 0, %s98
    %s115 = sphi 0, %s99
    %s119 = sphi 0, %s119
    %s121 = sphi 0, %s119
    %s122 = sphi 0, %s121
    %s136 = sphi 0, %s122
    %s140 = sphi 0, %s140
    %s142 = sphi 0, %s140
    %s143 = sphi 0, %s142
    %s157 = sphi 0, %s143
    %s165 = sphi 0, %s167
    %s168 = sphi 0, %s165
    %s169 = sphi 0, %s168
    %s185 = sphi 0, %s169
  $region4: #{upsample2d_forward.1} parent=0 // loop_header_branch
    %14 = sbr.rel (%p12) target = $region8
  $region5: #{upsample2d_forward.1} parent=0 // loop_body
    %s16 = ssub.s32 %s11, 1
    %s17 = ssub.s32 %s11, 2
    %s24 = sadd.s32 1, %s19
    %p25 = scmp.ge.s32.totalorder %s24, 4
    %s26 = scalar_select %p25, 0, %s24
    %s27 = sadd.s32 1, %s18
    %s28 = scalar_select %p25, %s27, %s18
    %p29 = scmp.ge.s32.totalorder %s28, 2
    %s30 = scalar_select %p29, 0, %s28
    %s31 = ssub.s32 %s18, %s30
    %s32 = ssub.s32 %s19, %s26
    %s33 = sor.u32 %s31, %s32
    %p34 = scmp.eq.s32.totalorder %s33, 0
    %s36 = sadd.s32 %s35, 1
    %s37 = scalar_select %p34, %s35, %s36
    %p40 = pneg %p34
    %p41 = scmp.eq.s32.totalorder %s11, 7
    %p42 = por %p40, %p41
    %p43 = scmp.ne.s32.totalorder %s35, %s38
    %p44 = scmp.eq.s32.totalorder %s11, 0
    %p45 = por %p43, %p44
    %p46 = scmp.ne.s32.totalorder %s35, %s38
    %p47 = scmp.eq.s32.totalorder %s16, 7
    %p48 = por %p46, %p47
    %p49 = scmp.ne.s32.totalorder %s38, %s39
    %p50 = scmp.eq.s32.totalorder %s16, 0
    %p51 = por %p49, %p50
    %p52 = scmp.ne.s32.totalorder %s38, %s39
    %p53 = scmp.eq.s32.totalorder %s17, 7
    %p54 = por %p52, %p53
    %p56 = scmp.ne.s32.totalorder %s39, %s55
    %p57 = scmp.eq.s32.totalorder %s17, 0
    %p58 = por %p56, %p57
    %s59 = sadd.s32 %s19, 1
    %s60 = sadd.s32 %s26, 1
    %s61 = ssub.s32 %s18, %s30
    %s62 = ssub.s32 %s59, %s60
    %s63 = sor.u32 %s61, %s62
    %p64 = scmp.eq.s32.totalorder %s63, 0
    %s66 = sadd.s32 %s65, 1
    %s67 = scalar_select %p64, %s65, %s66
    %p70 = pneg %p64
    %p71 = scmp.eq.s32.totalorder %s11, 7
    %p72 = por %p70, %p71
    %p73 = scmp.ne.s32.totalorder %s65, %s68
    %p74 = scmp.eq.s32.totalorder %s11, 0
    %p75 = por %p73, %p74
    %p76 = scmp.ne.s32.totalorder %s65, %s68
    %p77 = scmp.eq.s32.totalorder %s16, 7
    %p78 = por %p76, %p77
    %p79 = scmp.ne.s32.totalorder %s68, %s69
    %p80 = scmp.eq.s32.totalorder %s16, 0
    %p81 = por %p79, %p80
    %p82 = scmp.ne.s32.totalorder %s68, %s69
    %p83 = scmp.eq.s32.totalorder %s17, 7
    %p84 = por %p82, %p83
    %p86 = scmp.ne.s32.totalorder %s69, %s85
    %p87 = scmp.eq.s32.totalorder %s17, 0
    %p88 = por %p86, %p87
    %s89 = sadd.s32 %s19, 2
    %s90 = sadd.s32 %s26, 2
    %s91 = ssub.s32 %s18, %s30
    %s92 = ssub.s32 %s89, %s90
    %s93 = sor.u32 %s91, %s92
    %p94 = scmp.eq.s32.totalorder %s93, 0
    %s96 = sadd.s32 %s95, 1
    %s97 = scalar_select %p94, %s95, %s96
    %p100 = pneg %p94
    %p101 = scmp.eq.s32.totalorder %s11, 7
    %p102 = por %p100, %p101
    %p103 = scmp.ne.s32.totalorder %s95, %s98
    %p104 = scmp.eq.s32.totalorder %s11, 0
    %p105 = por %p103, %p104
    %p106 = scmp.ne.s32.totalorder %s95, %s98
    %p107 = scmp.eq.s32.totalorder %s16, 7
    %p108 = por %p106, %p107
    %p109 = scmp.ne.s32.totalorder %s98, %s99
    %p110 = scmp.eq.s32.totalorder %s16, 0
    %p111 = por %p109, %p110
    %p112 = scmp.ne.s32.totalorder %s98, %s99
    %p113 = scmp.eq.s32.totalorder %s17, 7
    %p114 = por %p112, %p113
    %p116 = scmp.ne.s32.totalorder %s99, %s115
    %p117 = scmp.eq.s32.totalorder %s17, 0
    %p118 = por %p116, %p117
    %s120 = sadd.s32 %s119, 1
    %p123 = scmp.eq.s32.totalorder %s11, 7
    %p124 = scmp.ne.s32.totalorder %s119, %s121
    %p125 = scmp.eq.s32.totalorder %s11, 0
    %p126 = por %p124, %p125
    %p127 = scmp.ne.s32.totalorder %s119, %s121
    %p128 = scmp.eq.s32.totalorder %s16, 7
    %p129 = por %p127, %p128
    %p130 = scmp.ne.s32.totalorder %s121, %s122
    %p131 = scmp.eq.s32.totalorder %s16, 0
    %p132 = por %p130, %p131
    %p133 = scmp.ne.s32.totalorder %s121, %s122
    %p134 = scmp.eq.s32.totalorder %s17, 7
    %p135 = por %p133, %p134
    %p137 = scmp.ne.s32.totalorder %s122, %s136
    %p138 = scmp.eq.s32.totalorder %s17, 0
    %p139 = por %p137, %p138
    %s141 = sadd.s32 %s140, 1
    %p144 = scmp.eq.s32.totalorder %s11, 7
    %p145 = scmp.ne.s32.totalorder %s140, %s142
    %p146 = scmp.eq.s32.totalorder %s11, 0
    %p147 = por %p145, %p146
    %p148 = scmp.ne.s32.totalorder %s140, %s142
    %p149 = scmp.eq.s32.totalorder %s16, 7
    %p150 = por %p148, %p149
    %p151 = scmp.ne.s32.totalorder %s142, %s143
    %p152 = scmp.eq.s32.totalorder %s16, 0
    %p153 = por %p151, %p152
    %p154 = scmp.ne.s32.totalorder %s142, %s143
    %p155 = scmp.eq.s32.totalorder %s17, 7
    %p156 = por %p154, %p155
    %p158 = scmp.ne.s32.totalorder %s143, %s157
    %p159 = scmp.eq.s32.totalorder %s17, 0
    %p160 = por %p158, %p159
    %s161 = ssub.s32 %s18, %s30
    %s162 = ssub.s32 %s19, %s26
    %s163 = sor.u32 %s161, %s162
    %p164 = scmp.eq.s32.totalorder %s163, 0
    %s166 = sadd.s32 %s165, 1
    %s167 = scalar_select %p164, %s165, %s166
    %p170 = pneg %p164
    %p171 = scmp.eq.s32.totalorder %s11, 7
    %p172 = por %p170, %p171
    %p173 = scmp.ne.s32.totalorder %s165, %s168
    %p174 = scmp.eq.s32.totalorder %s11, 0
    %p175 = por %p173, %p174
    %p176 = scmp.ne.s32.totalorder %s165, %s168
    %p177 = scmp.eq.s32.totalorder %s16, 7
    %p178 = por %p176, %p177
    %p179 = scmp.ne.s32.totalorder %s168, %s169
    %p180 = scmp.eq.s32.totalorder %s16, 0
    %p181 = por %p179, %p180
    %p182 = scmp.ne.s32.totalorder %s168, %s169
    %p183 = scmp.eq.s32.totalorder %s17, 7
    %p184 = por %p182, %p183
    %p186 = scmp.ne.s32.totalorder %s169, %s185
    %p187 = scmp.eq.s32.totalorder %s17, 0
    %p188 = por %p186, %p187
    %p189 = scmp.le.s32.totalorder 1, %s11
    %p190 = scmp.lt.s32.totalorder %s11, 9
    %p191 = pnand %p189, %p190
    %p192 = pneg %p191
    // Predicated region
    $region9: #{upsample2d_forward.1} parent=5 // pred_check
      _
    $region10: #{upsample2d_forward.1} parent=5 // pred_check_branch
      %194 = sbr.rel (%p191) target = $region12
    $region11: #{upsample2d_forward.1} parent=5 // pred_region
      %s195 = ssub.s32 %s11, 1
      // Predicated region
      $region13: #{upsample2d_forward.1} parent=11 // pred_check
        %p196 = pneg %p132
      $region14: #{upsample2d_forward.1} parent=11 // pred_check_branch
        %198 = sbr.rel (%p196) target = $region16
      $region15: #{upsample2d_forward.1} parent=11 // pred_region
        _
      $region16: #{upsample2d_forward.1} parent=11 // pred_fallthru
        _
      // Predicated region
      $region17: #{upsample2d_forward.1} parent=11 // pred_check
        %p199 = pneg %p153
      $region18: #{upsample2d_forward.1} parent=11 // pred_check_branch
        %201 = sbr.rel (%p199) target = $region20
      $region19: #{upsample2d_forward.1} parent=11 // pred_region
        _
      $region20: #{upsample2d_forward.1} parent=11 // pred_fallthru
        _
    $region12: #{upsample2d_forward.1} parent=5 // pred_fallthru
      _
    %p202 = scmp.lt.s32.totalorder %s11, 8
    // Predicated region
    $region21: #{upsample2d_forward.1} parent=5 // pred_check
      %p203 = pneg %p202
    $region22: #{upsample2d_forward.1} parent=5 // pred_check_branch
      %205 = sbr.rel (%p203) target = $region24
    $region23: #{upsample2d_forward.1} parent=5 // pred_region
      // Predicated region
      $region25: #{upsample2d_forward.1} parent=23 // pred_check
        %p206 = pneg %p45
      $region26: #{upsample2d_forward.1} parent=23 // pred_check_branch
        %208 = sbr.rel (%p206) target = $region28
      $region27: #{upsample2d_forward.1} parent=23 // pred_region
        %p209 = scmp.lt.s32.totalorder %s18, 1
        %s210 = scalar_select %p209, %s18, 1
        %p211 = scmp.lt.s32.totalorder %s19, 5
        %s212 = scalar_select %p211, %s19, 5
        %s213 = smul.addr %s212, 20
        %s214 = smul.addr %s210, 120
        %s215 = sadd.s32 %s213, %s214
        %s216 = smul.addr %s215, 8
        %s217 = scalar_lea.vmem %s0, %s216
      $region28: #{upsample2d_forward.1} parent=23 // pred_fallthru
        _
      // Predicated region
      $region29: #{upsample2d_forward.1} parent=23 // pred_check
        %p218 = pneg %p75
      $region30: #{upsample2d_forward.1} parent=23 // pred_check_branch
        %220 = sbr.rel (%p218) target = $region32
      $region31: #{upsample2d_forward.1} parent=23 // pred_region
        %s221 = sadd.s32 %s19, 1
        %p222 = scmp.lt.s32.totalorder %s18, 1
        %s223 = scalar_select %p222, %s18, 1
        %p224 = scmp.lt.s32.totalorder %s221, 5
        %s225 = scalar_select %p224, %s221, 5
        %s226 = smul.addr %s225, 20
        %s227 = smul.addr %s223, 120
        %s228 = sadd.s32 %s226, %s227
        %s229 = smul.addr %s228, 8
        %s230 = scalar_lea.vmem %s1, %s229
        %s231 = sadd.s32 %s19, 1
      $region32: #{upsample2d_forward.1} parent=23 // pred_fallthru
        _
      // Predicated region
      $region33: #{upsample2d_forward.1} parent=23 // pred_check
        %p232 = pneg %p105
      $region34: #{upsample2d_forward.1} parent=23 // pred_check_branch
        %234 = sbr.rel (%p232) target = $region36
      $region35: #{upsample2d_forward.1} parent=23 // pred_region
        %s235 = sadd.s32 %s19, 2
        %p236 = scmp.lt.s32.totalorder %s18, 1
        %s237 = scalar_select %p236, %s18, 1
        %p238 = scmp.lt.s32.totalorder %s235, 5
        %s239 = scalar_select %p238, %s235, 5
        %s240 = smul.addr %s239, 20
        %s241 = smul.addr %s237, 120
        %s242 = sadd.s32 %s240, %s241
        %s243 = smul.addr %s242, 8
        %s244 = scalar_lea.vmem %s2, %s243
        %s245 = sadd.s32 %s19, 2
      $region36: #{upsample2d_forward.1} parent=23 // pred_fallthru
        _
    $region24: #{upsample2d_forward.1} parent=5 // pred_fallthru
      _
    %p246 = scmp.le.s32.totalorder 1, %s11
    %p247 = scmp.lt.s32.totalorder %s11, 9
    %p248 = pnand %p246, %p247
    %p249 = pneg %p248
    // Predicated region
    $region37: #{upsample2d_forward.1} parent=5 // pred_check
      _
    $region38: #{upsample2d_forward.1} parent=5 // pred_check_branch
      %251 = sbr.rel (%p248) target = $region40
    $region39: #{upsample2d_forward.1} parent=5 // pred_region
      %s252 = ssub.s32 %s11, 1
      %p253 = scmp.lt.s32.totalorder %s20, 1
      %s254 = scalar_select %p253, %s20, 1
      %p255 = scmp.lt.s32.totalorder %s21, 5
      %s256 = scalar_select %p255, %s21, 5
      %s257 = smul.addr %s256, 20
      %s258 = smul.addr %s254, 120
      %s259 = sadd.s32 %s257, %s258
      %s260 = smul.addr %s259, 8
      %s261 = scalar_lea.vmem %s0, %s260
      %p262 = pneg %p51
      %p263 = pneg %p48
      %s264 = sadd.s32 %s21, 1
      %p265 = scmp.lt.s32.totalorder %s20, 1
      %s266 = scalar_select %p265, %s20, 1
      %p267 = scmp.lt.s32.totalorder %s264, 5
      %s268 = scalar_select %p267, %s264, 5
      %s269 = smul.addr %s268, 20
      %s270 = smul.addr %s266, 120
      %s271 = sadd.s32 %s269, %s270
      %s272 = smul.addr %s271, 8
      %s273 = scalar_lea.vmem %s1, %s272
      %p274 = pneg %p81
      %p275 = pneg %p78
      %s276 = sadd.s32 %s21, 2
      %p277 = scmp.lt.s32.totalorder %s20, 1
      %s278 = scalar_select %p277, %s20, 1
      %p279 = scmp.lt.s32.totalorder %s276, 5
      %s280 = scalar_select %p279, %s276, 5
      %s281 = smul.addr %s280, 20
      %s282 = smul.addr %s278, 120
      %s283 = sadd.s32 %s281, %s282
      %s284 = smul.addr %s283, 8
      %s285 = scalar_lea.vmem %s2, %s284
      %p286 = pneg %p111
      %p287 = pneg %p108
      %p288 = pneg %p132
      %p289 = pneg %p129
      %p290 = pneg %p153
      %p291 = pneg %p150
      %p292 = pneg %p181
      %p293 = pneg %p178
      %p294 = scmp.lt.s32.totalorder %s20, 1
      %s295 = scalar_select %p294, %s20, 1
      %p296 = scmp.lt.s32.totalorder %s21, 3
      %s297 = scalar_select %p296, %s21, 3
      %s298 = smul.addr %s297, 16
      %s299 = smul.addr %s295, 64
      %s300 = sadd.s32 %s298, %s299
      %s301 = smul.addr %s300, 8
      %s302 = scalar_lea.vmem %s5, %s301
      %p303 = scmp.lt.s32.totalorder %s20, 1
      %s304 = scalar_select %p303, %s20, 1
      %p305 = scmp.lt.s32.totalorder %s21, 5
      %s306 = scalar_select %p305, %s21, 5
      %s307 = smul.addr %s306, 20
      %s308 = smul.addr %s304, 120
      %s309 = sadd.s32 %s307, %s308
      %s310 = smul.addr %s309, 8
      %s311 = scalar_lea.vmem %s0, %s310
      %s312 = sadd.s32 %s21, 1
      %p313 = scmp.lt.s32.totalorder %s20, 1
      %s314 = scalar_select %p313, %s20, 1
      %p315 = scmp.lt.s32.totalorder %s312, 5
      %s316 = scalar_select %p315, %s312, 5
      %s317 = smul.addr %s316, 20
      %s318 = smul.addr %s314, 120
      %s319 = sadd.s32 %s317, %s318
      %s320 = smul.addr %s319, 8
      %s321 = scalar_lea.vmem %s1, %s320
      %s322 = sadd.s32 %s21, 1
      %s323 = sadd.s32 %s21, 2
      %p324 = scmp.lt.s32.totalorder %s20, 1
      %s325 = scalar_select %p324, %s20, 1
      %p326 = scmp.lt.s32.totalorder %s323, 5
      %s327 = scalar_select %p326, %s323, 5
      %s328 = smul.addr %s327, 20
      %s329 = smul.addr %s325, 120
      %s330 = sadd.s32 %s328, %s329
      %s331 = smul.addr %s330, 8
      %s332 = scalar_lea.vmem %s2, %s331
      %s333 = sadd.s32 %s21, 2
      %p334 = scmp.lt.s32.totalorder %s20, 1
      %s335 = scalar_select %p334, %s20, 1
      %p336 = scmp.lt.s32.totalorder %s21, 3
      %s337 = scalar_select %p336, %s21, 3
      %s338 = smul.addr %s337, 16
      %s339 = smul.addr %s335, 64
      %s340 = sadd.s32 %s338, %s339
      %s341 = smul.addr %s340, 8
      %s342 = scalar_lea.vmem %s5, %s341
      %v343 = vld [vmem:[%s4] sm:$0x1]
      %v344 = vld [vmem:[%s311] sm:$0xff]
      %v345 = vld [vmem:[%s311 + $0x10] sm:$0xff]
      %v346 = vld [vmem:[%s311 + $0x20] sm:$0xff]
      %v347 = vld [vmem:[%s311 + $0x30] sm:$0xff]
      %v348 = vld [vmem:[%s311 + $0x40] sm:$0xff]
      %v349 = vld [vmem:[%s311 + $0x50] sm:$0xff]
      %v350 = vld [vmem:[%s311 + $0x60] sm:$0xff]
      %v351 = vld [vmem:[%s311 + $0x70] sm:$0xff]
      %v352 = vld [vmem:[%s311 + $0x1] sm:$0xff]
      %v353 = vld [vmem:[%s311 + $0x11] sm:$0xff]
      %v354 = vld [vmem:[%s311 + $0x21] sm:$0xff]
      %v355 = vld [vmem:[%s311 + $0x31] sm:$0xff]
      %v356 = vld [vmem:[%s311 + $0x41] sm:$0xff]
      %v357 = vld [vmem:[%s311 + $0x51] sm:$0xff]
      %v358 = vld [vmem:[%s311 + $0x61] sm:$0xff]
      %v359 = vld [vmem:[%s311 + $0x71] sm:$0xff]
      %v360 = vld [vmem:[%s311 + $0x2] sm:$0xff]
      %v361 = vld [vmem:[%s311 + $0x12] sm:$0xff]
      %v362 = vld [vmem:[%s311 + $0x22] sm:$0xff]
      %v363 = vld [vmem:[%s311 + $0x32] sm:$0xff]
      %v364 = vld [vmem:[%s311 + $0x42] sm:$0xff]
      %v365 = vld [vmem:[%s311 + $0x52] sm:$0xff]
      %v366 = vld [vmem:[%s311 + $0x62] sm:$0xff]
      %v367 = vld [vmem:[%s311 + $0x72] sm:$0xff]
      %s368 = scalar_lea.vmem %s311, 16
      %v369 = vld [vmem:[%s368] sm:$0xff]
      %v370 = vld [vmem:[%s368 + $0x10] sm:$0xff]
      %v371 = vld [vmem:[%s368 + $0x20] sm:$0xff]
      %v372 = vld [vmem:[%s368 + $0x30] sm:$0xff]
      %v373 = vld [vmem:[%s368 + $0x40] sm:$0xff]
      %v374 = vld [vmem:[%s368 + $0x50] sm:$0xff]
      %v375 = vld [vmem:[%s368 + $0x60] sm:$0xff]
      %v376 = vld [vmem:[%s368 + $0x70] sm:$0xff]
      %v377 = vld [vmem:[%s368 + $0x1] sm:$0xff]
      %v378 = vld [vmem:[%s368 + $0x11] sm:$0xff]
      %v379 = vld [vmem:[%s368 + $0x21] sm:$0xff]
      %v380 = vld [vmem:[%s368 + $0x31] sm:$0xff]
      %v381 = vld [vmem:[%s368 + $0x41] sm:$0xff]
      %v382 = vld [vmem:[%s368 + $0x51] sm:$0xff]
      %v383 = vld [vmem:[%s368 + $0x61] sm:$0xff]
      %v384 = vld [vmem:[%s368 + $0x71] sm:$0xff]
      %v385 = vld [vmem:[%s368 + $0x2] sm:$0xff]
      %v386 = vld [vmem:[%s368 + $0x12] sm:$0xff]
      %v387 = vld [vmem:[%s368 + $0x22] sm:$0xff]
      %v388 = vld [vmem:[%s368 + $0x32] sm:$0xff]
      %v389 = vld [vmem:[%s368 + $0x42] sm:$0xff]
      %v390 = vld [vmem:[%s368 + $0x52] sm:$0xff]
      %v391 = vld [vmem:[%s368 + $0x62] sm:$0xff]
      %v392 = vld [vmem:[%s368 + $0x72] sm:$0xff]
      %s393 = scalar_lea.vmem %s311, 32
      %v394 = vld [vmem:[%s393] sm:$0xff]
      %v395 = vld [vmem:[%s393 + $0x10] sm:$0xff]
      %v396 = vld [vmem:[%s393 + $0x20] sm:$0xff]
      %v397 = vld [vmem:[%s393 + $0x30] sm:$0xff]
      %v398 = vld [vmem:[%s393 + $0x40] sm:$0xff]
      %v399 = vld [vmem:[%s393 + $0x50] sm:$0xff]
      %v400 = vld [vmem:[%s393 + $0x60] sm:$0xff]
      %v401 = vld [vmem:[%s393 + $0x70] sm:$0xff]
      %v402 = vld [vmem:[%s393 + $0x1] sm:$0xff]
      %v403 = vld [vmem:[%s393 + $0x11] sm:$0xff]
      %v404 = vld [vmem:[%s393 + $0x21] sm:$0xff]
      %v405 = vld [vmem:[%s393 + $0x31] sm:$0xff]
      %v406 = vld [vmem:[%s393 + $0x41] sm:$0xff]
      %v407 = vld [vmem:[%s393 + $0x51] sm:$0xff]
      %v408 = vld [vmem:[%s393 + $0x61] sm:$0xff]
      %v409 = vld [vmem:[%s393 + $0x71] sm:$0xff]
      %v410 = vld [vmem:[%s393 + $0x2] sm:$0xff]
      %v411 = vld [vmem:[%s393 + $0x12] sm:$0xff]
      %v412 = vld [vmem:[%s393 + $0x22] sm:$0xff]
      %v413 = vld [vmem:[%s393 + $0x32] sm:$0xff]
      %v414 = vld [vmem:[%s393 + $0x42] sm:$0xff]
      %v415 = vld [vmem:[%s393 + $0x52] sm:$0xff]
      %v416 = vld [vmem:[%s393 + $0x62] sm:$0xff]
      %v417 = vld [vmem:[%s393 + $0x72] sm:$0xff]
      %v418 = vld [vmem:[%s321] sm:$0xff]
      %v419 = vld [vmem:[%s321 + $0x10] sm:$0xff]
      %v420 = vld [vmem:[%s321 + $0x20] sm:$0xff]
      %v421 = vld [vmem:[%s321 + $0x30] sm:$0xff]
      %v422 = vld [vmem:[%s321 + $0x40] sm:$0xff]
      %v423 = vld [vmem:[%s321 + $0x50] sm:$0xff]
      %v424 = vld [vmem:[%s321 + $0x60] sm:$0xff]
      %v425 = vld [vmem:[%s321 + $0x70] sm:$0xff]
      %v426 = vld [vmem:[%s321 + $0x1] sm:$0xff]
      %v427 = vld [vmem:[%s321 + $0x11] sm:$0xff]
      %v428 = vld [vmem:[%s321 + $0x21] sm:$0xff]
      %v429 = vld [vmem:[%s321 + $0x31] sm:$0xff]
      %v430 = vld [vmem:[%s321 + $0x41] sm:$0xff]
      %v431 = vld [vmem:[%s321 + $0x51] sm:$0xff]
      %v432 = vld [vmem:[%s321 + $0x61] sm:$0xff]
      %v433 = vld [vmem:[%s321 + $0x71] sm:$0xff]
      %v434 = vld [vmem:[%s321 + $0x2] sm:$0xff]
      %v435 = vld [vmem:[%s321 + $0x12] sm:$0xff]
      %v436 = vld [vmem:[%s321 + $0x22] sm:$0xff]
      %v437 = vld [vmem:[%s321 + $0x32] sm:$0xff]
      %v438 = vld [vmem:[%s321 + $0x42] sm:$0xff]
      %v439 = vld [vmem:[%s321 + $0x52] sm:$0xff]
      %v440 = vld [vmem:[%s321 + $0x62] sm:$0xff]
      %v441 = vld [vmem:[%s321 + $0x72] sm:$0xff]
      %s442 = scalar_lea.vmem %s321, 16
      %v443 = vld [vmem:[%s442] sm:$0xff]
      %v444 = vld [vmem:[%s442 + $0x10] sm:$0xff]
      %v445 = vld [vmem:[%s442 + $0x20] sm:$0xff]
      %v446 = vld [vmem:[%s442 + $0x30] sm:$0xff]
      %v447 = vld [vmem:[%s442 + $0x40] sm:$0xff]
      %v448 = vld [vmem:[%s442 + $0x50] sm:$0xff]
      %v449 = vld [vmem:[%s442 + $0x60] sm:$0xff]
      %v450 = vld [vmem:[%s442 + $0x70] sm:$0xff]
      %v451 = vld [vmem:[%s442 + $0x1] sm:$0xff]
      %v452 = vld [vmem:[%s442 + $0x11] sm:$0xff]
      %v453 = vld [vmem:[%s442 + $0x21] sm:$0xff]
      %v454 = vld [vmem:[%s442 + $0x31] sm:$0xff]
      %v455 = vld [vmem:[%s442 + $0x41] sm:$0xff]
      %v456 = vld [vmem:[%s442 + $0x51] sm:$0xff]
      %v457 = vld [vmem:[%s442 + $0x61] sm:$0xff]
      %v458 = vld [vmem:[%s442 + $0x71] sm:$0xff]
      %v459 = vld [vmem:[%s442 + $0x2] sm:$0xff]
      %v460 = vld [vmem:[%s442 + $0x12] sm:$0xff]
      %v461 = vld [vmem:[%s442 + $0x22] sm:$0xff]
      %v462 = vld [vmem:[%s442 + $0x32] sm:$0xff]
      %v463 = vld [vmem:[%s442 + $0x42] sm:$0xff]
      %v464 = vld [vmem:[%s442 + $0x52] sm:$0xff]
      %v465 = vld [vmem:[%s442 + $0x62] sm:$0xff]
      %v466 = vld [vmem:[%s442 + $0x72] sm:$0xff]
      %s467 = scalar_lea.vmem %s321, 32
      %v468 = vld [vmem:[%s467] sm:$0xff]
      %v469 = vld [vmem:[%s467 + $0x10] sm:$0xff]
      %v470 = vld [vmem:[%s467 + $0x20] sm:$0xff]
      %v471 = vld [vmem:[%s467 + $0x30] sm:$0xff]
      %v472 = vld [vmem:[%s467 + $0x40] sm:$0xff]
      %v473 = vld [vmem:[%s467 + $0x50] sm:$0xff]
      %v474 = vld [vmem:[%s467 + $0x60] sm:$0xff]
      %v475 = vld [vmem:[%s467 + $0x70] sm:$0xff]
      %v476 = vld [vmem:[%s467 + $0x1] sm:$0xff]
      %v477 = vld [vmem:[%s467 + $0x11] sm:$0xff]
      %v478 = vld [vmem:[%s467 + $0x21] sm:$0xff]
      %v479 = vld [vmem:[%s467 + $0x31] sm:$0xff]
      %v480 = vld [vmem:[%s467 + $0x41] sm:$0xff]
      %v481 = vld [vmem:[%s467 + $0x51] sm:$0xff]
      %v482 = vld [vmem:[%s467 + $0x61] sm:$0xff]
      %v483 = vld [vmem:[%s467 + $0x71] sm:$0xff]
      %v484 = vld [vmem:[%s467 + $0x2] sm:$0xff]
      %v485 = vld [vmem:[%s467 + $0x12] sm:$0xff]
      %v486 = vld [vmem:[%s467 + $0x22] sm:$0xff]
      %v487 = vld [vmem:[%s467 + $0x32] sm:$0xff]
      %v488 = vld [vmem:[%s467 + $0x42] sm:$0xff]
      %v489 = vld [vmem:[%s467 + $0x52] sm:$0xff]
      %v490 = vld [vmem:[%s467 + $0x62] sm:$0xff]
      %v491 = vld [vmem:[%s467 + $0x72] sm:$0xff]
      %v492 = vld [vmem:[%s332] sm:$0xff]
      %v493 = vld [vmem:[%s332 + $0x10] sm:$0xff]
      %v494 = vld [vmem:[%s332 + $0x20] sm:$0xff]
      %v495 = vld [vmem:[%s332 + $0x30] sm:$0xff]
      %v496 = vld [vmem:[%s332 + $0x40] sm:$0xff]
      %v497 = vld [vmem:[%s332 + $0x50] sm:$0xff]
      %v498 = vld [vmem:[%s332 + $0x60] sm:$0xff]
      %v499 = vld [vmem:[%s332 + $0x70] sm:$0xff]
      %v500 = vld [vmem:[%s332 + $0x1] sm:$0xff]
      %v501 = vld [vmem:[%s332 + $0x11] sm:$0xff]
      %v502 = vld [vmem:[%s332 + $0x21] sm:$0xff]
      %v503 = vld [vmem:[%s332 + $0x31] sm:$0xff]
      %v504 = vld [vmem:[%s332 + $0x41] sm:$0xff]
      %v505 = vld [vmem:[%s332 + $0x51] sm:$0xff]
      %v506 = vld [vmem:[%s332 + $0x61] sm:$0xff]
      %v507 = vld [vmem:[%s332 + $0x71] sm:$0xff]
      %v508 = vld [vmem:[%s332 + $0x2] sm:$0xff]
      %v509 = vld [vmem:[%s332 + $0x12] sm:$0xff]
      %v510 = vld [vmem:[%s332 + $0x22] sm:$0xff]
      %v511 = vld [vmem:[%s332 + $0x32] sm:$0xff]
      %v512 = vld [vmem:[%s332 + $0x42] sm:$0xff]
      %v513 = vld [vmem:[%s332 + $0x52] sm:$0xff]
      %v514 = vld [vmem:[%s332 + $0x62] sm:$0xff]
      %v515 = vld [vmem:[%s332 + $0x72] sm:$0xff]
      %s516 = scalar_lea.vmem %s332, 16
      %v517 = vld [vmem:[%s516] sm:$0xff]
      %v518 = vld [vmem:[%s516 + $0x10] sm:$0xff]
      %v519 = vld [vmem:[%s516 + $0x20] sm:$0xff]
      %v520 = vld [vmem:[%s516 + $0x30] sm:$0xff]
      %v521 = vld [vmem:[%s516 + $0x40] sm:$0xff]
      %v522 = vld [vmem:[%s516 + $0x50] sm:$0xff]
      %v523 = vld [vmem:[%s516 + $0x60] sm:$0xff]
      %v524 = vld [vmem:[%s516 + $0x70] sm:$0xff]
      %v525 = vld [vmem:[%s516 + $0x1] sm:$0xff]
      %v526 = vld [vmem:[%s516 + $0x11] sm:$0xff]
      %v527 = vld [vmem:[%s516 + $0x21] sm:$0xff]
      %v528 = vld [vmem:[%s516 + $0x31] sm:$0xff]
      %v529 = vld [vmem:[%s516 + $0x41] sm:$0xff]
      %v530 = vld [vmem:[%s516 + $0x51] sm:$0xff]
      %v531 = vld [vmem:[%s516 + $0x61] sm:$0xff]
      %v532 = vld [vmem:[%s516 + $0x71] sm:$0xff]
      %v533 = vld [vmem:[%s516 + $0x2] sm:$0xff]
      %v534 = vld [vmem:[%s516 + $0x12] sm:$0xff]
      %v535 = vld [vmem:[%s516 + $0x22] sm:$0xff]
      %v536 = vld [vmem:[%s516 + $0x32] sm:$0xff]
      %v537 = vld [vmem:[%s516 + $0x42] sm:$0xff]
      %v538 = vld [vmem:[%s516 + $0x52] sm:$0xff]
      %v539 = vld [vmem:[%s516 + $0x62] sm:$0xff]
      %v540 = vld [vmem:[%s516 + $0x72] sm:$0xff]
      %s541 = scalar_lea.vmem %s332, 32
      %v542 = vld [vmem:[%s541] sm:$0xff]
      %v543 = vld [vmem:[%s541 + $0x10] sm:$0xff]
      %v544 = vld [vmem:[%s541 + $0x20] sm:$0xff]
      %v545 = vld [vmem:[%s541 + $0x30] sm:$0xff]
      %v546 = vld [vmem:[%s541 + $0x40] sm:$0xff]
      %v547 = vld [vmem:[%s541 + $0x50] sm:$0xff]
      %v548 = vld [vmem:[%s541 + $0x60] sm:$0xff]
      %v549 = vld [vmem:[%s541 + $0x70] sm:$0xff]
      %v550 = vld [vmem:[%s541 + $0x1] sm:$0xff]
      %v551 = vld [vmem:[%s541 + $0x11] sm:$0xff]
      %v552 = vld [vmem:[%s541 + $0x21] sm:$0xff]
      %v553 = vld [vmem:[%s541 + $0x31] sm:$0xff]
      %v554 = vld [vmem:[%s541 + $0x41] sm:$0xff]
      %v555 = vld [vmem:[%s541 + $0x51] sm:$0xff]
      %v556 = vld [vmem:[%s541 + $0x61] sm:$0xff]
      %v557 = vld [vmem:[%s541 + $0x71] sm:$0xff]
      %v558 = vld [vmem:[%s541 + $0x2] sm:$0xff]
      %v559 = vld [vmem:[%s541 + $0x12] sm:$0xff]
      %v560 = vld [vmem:[%s541 + $0x22] sm:$0xff]
      %v561 = vld [vmem:[%s541 + $0x32] sm:$0xff]
      %v562 = vld [vmem:[%s541 + $0x42] sm:$0xff]
      %v563 = vld [vmem:[%s541 + $0x52] sm:$0xff]
      %v564 = vld [vmem:[%s541 + $0x62] sm:$0xff]
      %v565 = vld [vmem:[%s541 + $0x72] sm:$0xff]
      %v566 = vld [vmem:[%s3] sm:$0xf]
      %v567 = vld [vmem:[%s3 + $0x4] sm:$0xf]
      %vm568 = vcmask 31744
      %v570 = vsel %vm568, %v352, 0
      %v573 = vsel %vm568, %v353, 0
      %v576 = vsel %vm568, %v354, 0
      %v579 = vsel %vm568, %v355, 0
      %v582 = vsel %vm568, %v356, 0
      %v585 = vsel %vm568, %v357, 0
      %v588 = vsel %vm568, %v358, 0
      %v591 = vsel %vm568, %v359, 0
      %vm593 = vcmask 1043456
      %v595 = vsel %vm593, %v567, 0
      %597 = vmatprep.subr.mxu0 0.0
      %598 = vmatpush1.msra.mxu0 0.0
      %599 = vmatprep.subr.mxu0 0.0
      %600 = vmatpush1.msra.mxu0 0.0
      %601 = vmatprep.subr.mxu0 0.0
      %602 = vmatpush1.msra.mxu0 0.0
      %603 = vmatprep.subr.mxu0 0.0
      %604 = vmatpush1.msra.mxu0 0.0
      %605 = vmatprep.subr.mxu0 0.0
      %606 = vmatpush1.msra.mxu0 0.0
      %607 = vmatprep.subr.mxu0 0.0
      %608 = vmatpush1.msra.mxu0 0.0
      %609 = vmatprep.subr.mxu0 0.0
      %610 = vmatpush1.msra.mxu0 0.0
      %611 = vmatprep.subr.mxu0 0.0
      %612 = vmatpush1.msra.mxu0 0.0
      %613 = vmatprep.subr.mxu0 0.0
      %614 = vmatpush1.msra.mxu0 0.0
      %615 = vmatprep.subr.mxu0 0.0
      %616 = vmatpush1.msra.mxu0 0.0
      %617 = vmatprep.subr.mxu0 0.0
      %618 = vmatpush1.msra.mxu0 0.0
      %619 = vmatprep.subr.mxu0 0.0
      %620 = vmatpush1.msra.mxu0 0.0
      %621 = vmatprep.subr.mxu0 0.0
      %622 = vmatpush1.msra.mxu0 0.0
      %623 = vmatprep.subr.mxu0 0.0
      %624 = vmatpush1.msra.mxu0 0.0
      %625 = vmatprep.subr.mxu0 0.0
      %626 = vmatpush1.msra.mxu0 0.0
      %627 = vmatprep.subr.mxu0 0.0
      %628 = vmatpush1.msra.mxu0 %v595
      %629 = vmatprep.subr.mxu0 0.0
      %630 = vmatpush2.msra.mxu0 0.0
      %631 = vmatprep.subr.mxu0 0.0
      %632 = vmatpush2.msra.mxu0 0.0
      %633 = vmatprep.subr.mxu0 0.0
      %634 = vmatpush2.msra.mxu0 0.0
      %635 = vmatprep.subr.mxu0 0.0
      %636 = vmatpush2.msra.mxu0 0.0
      %637 = vmatprep.subr.mxu0 0.0
      %638 = vmatpush2.msra.mxu0 0.0
      %639 = vmatprep.subr.mxu0 0.0
      %640 = vmatpush2.msra.mxu0 0.0
      %641 = vmatprep.subr.mxu0 0.0
      %642 = vmatpush2.msra.mxu0 0.0
      %643 = vmatprep.subr.mxu0 0.0
      %644 = vmatpush2.msra.mxu0 0.0
      %645 = vmatprep.subr.mxu0 0.0
      %646 = vmatpush2.msra.mxu0 0.0
      %647 = vmatprep.subr.mxu0 0.0
      %648 = vmatpush2.msra.mxu0 0.0
      %649 = vmatprep.subr.mxu0 0.0
      %650 = vmatpush2.msra.mxu0 0.0
      %651 = vmatprep.subr.mxu0 0.0
      %652 = vmatpush2.msra.mxu0 0.0
      %653 = vmatprep.subr.mxu0 0.0
      %654 = vmatpush2.msra.mxu0 0.0
      %655 = vmatprep.subr.mxu0 0.0
      %656 = vmatpush2.msra.mxu0 0.0
      %657 = vmatprep.subr.mxu0 0.0
      %658 = vmatpush2.msra.mxu0 0.0
      %659 = vmatprep.subr.mxu0 0.0
      %660 = vmatpush2.msra.mxu0 0.0
      %661 = vmatprep.mubr.f32.mxu0 0.0
      %662 = vmatmul.mubr.f32.gmra.mxu0 %v570
      %v663 = vpop.f32.mrf.mxu0
      %v664 = vadd.f32 0.0, %v663
      %v665 = vpop.f32.mrf.mxu0
      %666 = vmatprep.mubr.f32.mxu0 0.0
      %667 = vmatmul.mubr.f32.gmra.mxu0 %v573
      %v668 = vpop.f32.mrf.mxu0
      %v669 = vadd.f32 0.0, %v668
      %v670 = vpop.f32.mrf.mxu0
      %671 = vmatprep.mubr.f32.mxu0 0.0
      %672 = vmatmul.mubr.f32.gmra.mxu0 %v576
      %v673 = vpop.f32.mrf.mxu0
      %v674 = vadd.f32 0.0, %v673
      %v675 = vpop.f32.mrf.mxu0
      %676 = vmatprep.mubr.f32.mxu0 0.0
      %677 = vmatmul.mubr.f32.gmra.mxu0 %v579
      %v678 = vpop.f32.mrf.mxu0
      %v679 = vadd.f32 0.0, %v678
      %v680 = vpop.f32.mrf.mxu0
      %681 = vmatprep.mubr.f32.mxu0 0.0
      %682 = vmatmul.mubr.f32.gmra.mxu0 %v582
      %v683 = vpop.f32.mrf.mxu0
      %v684 = vadd.f32 0.0, %v683
      %v685 = vpop.f32.mrf.mxu0
      %686 = vmatprep.mubr.f32.mxu0 0.0
      %687 = vmatmul.mubr.f32.gmra.mxu0 %v585
      %v688 = vpop.f32.mrf.mxu0
      %v689 = vadd.f32 0.0, %v688
      %v690 = vpop.f32.mrf.mxu0
      %691 = vmatprep.mubr.f32.mxu0 0.0
      %692 = vmatmul.mubr.f32.gmra.mxu0 %v588
      %v693 = vpop.f32.mrf.mxu0
      %v694 = vadd.f32 0.0, %v693
      %v695 = vpop.f32.mrf.mxu0
      %696 = vmatprep.mubr.f32.mxu0 0.0
      %697 = vmatmul.mubr.f32.gmra.mxu0 %v591
      %v698 = vpop.f32.mrf.mxu0
      %v699 = vadd.f32 0.0, %v698
      %v700 = vpop.f32.mrf.mxu0
      %701 = vdwg.mxu0
      %v703 = vsel %vm568, %v344, 0
      %v706 = vsel %vm568, %v345, 0
      %v709 = vsel %vm568, %v346, 0
      %v712 = vsel %vm568, %v347, 0
      %v715 = vsel %vm568, %v348, 0
      %v718 = vsel %vm568, %v349, 0
      %v721 = vsel %vm568, %v350, 0
      %v724 = vsel %vm568, %v351, 0
      %v727 = vsel %vm593, %v566, 0
      %729 = vmatprep.subr.mxu0 0.0
      %730 = vmatpush1.msra.mxu0 0.0
      %731 = vmatprep.subr.mxu0 0.0
      %732 = vmatpush1.msra.mxu0 0.0
      %733 = vmatprep.subr.mxu0 0.0
      %734 = vmatpush1.msra.mxu0 0.0
      %735 = vmatprep.subr.mxu0 0.0
      %736 = vmatpush1.msra.mxu0 0.0
      %737 = vmatprep.subr.mxu0 0.0
      %738 = vmatpush1.msra.mxu0 0.0
      %739 = vmatprep.subr.mxu0 0.0
      %740 = vmatpush1.msra.mxu0 0.0
      %741 = vmatprep.subr.mxu0 0.0
      %742 = vmatpush1.msra.mxu0 0.0
      %743 = vmatprep.subr.mxu0 0.0
      %744 = vmatpush1.msra.mxu0 0.0
      %745 = vmatprep.subr.mxu0 0.0
      %746 = vmatpush1.msra.mxu0 0.0
      %747 = vmatprep.subr.mxu0 0.0
      %748 = vmatpush1.msra.mxu0 0.0
      %749 = vmatprep.subr.mxu0 0.0
      %750 = vmatpush1.msra.mxu0 0.0
      %751 = vmatprep.subr.mxu0 0.0
      %752 = vmatpush1.msra.mxu0 0.0
      %753 = vmatprep.subr.mxu0 0.0
      %754 = vmatpush1.msra.mxu0 0.0
      %755 = vmatprep.subr.mxu0 0.0
      %756 = vmatpush1.msra.mxu0 0.0
      %757 = vmatprep.subr.mxu0 0.0
      %758 = vmatpush1.msra.mxu0 0.0
      %759 = vmatprep.subr.mxu0 0.0
      %760 = vmatpush1.msra.mxu0 %v727
      %761 = vmatprep.subr.mxu0 0.0
      %762 = vmatpush2.msra.mxu0 0.0
      %763 = vmatprep.subr.mxu0 0.0
      %764 = vmatpush2.msra.mxu0 0.0
      %765 = vmatprep.subr.mxu0 0.0
      %766 = vmatpush2.msra.mxu0 0.0
      %767 = vmatprep.subr.mxu0 0.0
      %768 = vmatpush2.msra.mxu0 0.0
      %769 = vmatprep.subr.mxu0 0.0
      %770 = vmatpush2.msra.mxu0 0.0
      %771 = vmatprep.subr.mxu0 0.0
      %772 = vmatpush2.msra.mxu0 0.0
      %773 = vmatprep.subr.mxu0 0.0
      %774 = vmatpush2.msra.mxu0 0.0
      %775 = vmatprep.subr.mxu0 0.0
      %776 = vmatpush2.msra.mxu0 0.0
      %777 = vmatprep.subr.mxu0 0.0
      %778 = vmatpush2.msra.mxu0 0.0
      %779 = vmatprep.subr.mxu0 0.0
      %780 = vmatpush2.msra.mxu0 0.0
      %781 = vmatprep.subr.mxu0 0.0
      %782 = vmatpush2.msra.mxu0 0.0
      %783 = vmatprep.subr.mxu0 0.0
      %784 = vmatpush2.msra.mxu0 0.0
      %785 = vmatprep.subr.mxu0 0.0
      %786 = vmatpush2.msra.mxu0 0.0
      %787 = vmatprep.subr.mxu0 0.0
      %788 = vmatpush2.msra.mxu0 0.0
      %789 = vmatprep.subr.mxu0 0.0
      %790 = vmatpush2.msra.mxu0 0.0
      %791 = vmatprep.subr.mxu0 0.0
      %792 = vmatpush2.msra.mxu0 0.0
      %793 = vmatprep.mubr.f32.mxu0 0.0
      %794 = vmatmul.mubr.f32.gmra.mxu0 %v703
      %v795 = vpop.f32.mrf.mxu0
      %v796 = vadd.f32 %v664, %v795
      %v797 = vpop.f32.mrf.mxu0
      %798 = vmatprep.mubr.f32.mxu0 0.0
      %799 = vmatmul.mubr.f32.gmra.mxu0 %v706
      %v800 = vpop.f32.mrf.mxu0
      %v801 = vadd.f32 %v669, %v800
      %v802 = vpop.f32.mrf.mxu0
      %803 = vmatprep.mubr.f32.mxu0 0.0
      %804 = vmatmul.mubr.f32.gmra.mxu0 %v709
      %v805 = vpop.f32.mrf.mxu0
      %v806 = vadd.f32 %v674, %v805
      %v807 = vpop.f32.mrf.mxu0
      %808 = vmatprep.mubr.f32.mxu0 0.0
      %809 = vmatmul.mubr.f32.gmra.mxu0 %v712
      %v810 = vpop.f32.mrf.mxu0
      %v811 = vadd.f32 %v679, %v810
      %v812 = vpop.f32.mrf.mxu0
      %813 = vmatprep.mubr.f32.mxu0 0.0
      %814 = vmatmul.mubr.f32.gmra.mxu0 %v715
      %v815 = vpop.f32.mrf.mxu0
      %v816 = vadd.f32 %v684, %v815
      %v817 = vpop.f32.mrf.mxu0
      %818 = vmatprep.mubr.f32.mxu0 0.0
      %819 = vmatmul.mubr.f32.gmra.mxu0 %v718
      %v820 = vpop.f32.mrf.mxu0
      %v821 = vadd.f32 %v689, %v820
      %v822 = vpop.f32.mrf.mxu0
      %823 = vmatprep.mubr.f32.mxu0 0.0
      %824 = vmatmul.mubr.f32.gmra.mxu0 %v721
      %v825 = vpop.f32.mrf.mxu0
      %v826 = vadd.f32 %v694, %v825
      %v827 = vpop.f32.mrf.mxu0
      %828 = vmatprep.mubr.f32.mxu0 0.0
      %829 = vmatmul.mubr.f32.gmra.mxu0 %v724
      %v830 = vpop.f32.mrf.mxu0
      %v831 = vadd.f32 %v699, %v830
      %v832 = vpop.f32.mrf.mxu0
      %833 = vdwg.mxu0
      %v834 = vld [vmem:[%s3 + $0x8] sm:$0xf]
      %v836 = vsel %vm568, %v369, 0
      %v839 = vsel %vm568, %v370, 0
      %v842 = vsel %vm568, %v371, 0
      %v845 = vsel %vm568, %v372, 0
      %v848 = vsel %vm568, %v373, 0
      %v851 = vsel %vm568, %v374, 0
      %v854 = vsel %vm568, %v375, 0
      %v857 = vsel %vm568, %v376, 0
      %v860 = vsel %vm593, %v834, 0
      %862 = vmatprep.subr.mxu0 0.0
      %863 = vmatpush1.msra.mxu0 0.0
      %864 = vmatprep.subr.mxu0 0.0
      %865 = vmatpush1.msra.mxu0 0.0
      %866 = vmatprep.subr.mxu0 0.0
      %867 = vmatpush1.msra.mxu0 0.0
      %868 = vmatprep.subr.mxu0 0.0
      %869 = vmatpush1.msra.mxu0 0.0
      %870 = vmatprep.subr.mxu0 0.0
      %871 = vmatpush1.msra.mxu0 0.0
      %872 = vmatprep.subr.mxu0 0.0
      %873 = vmatpush1.msra.mxu0 0.0
      %874 = vmatprep.subr.mxu0 0.0
      %875 = vmatpush1.msra.mxu0 0.0
      %876 = vmatprep.subr.mxu0 0.0
      %877 = vmatpush1.msra.mxu0 0.0
      %878 = vmatprep.subr.mxu0 0.0
      %879 = vmatpush1.msra.mxu0 0.0
      %880 = vmatprep.subr.mxu0 0.0
      %881 = vmatpush1.msra.mxu0 0.0
      %882 = vmatprep.subr.mxu0 0.0
      %883 = vmatpush1.msra.mxu0 0.0
      %884 = vmatprep.subr.mxu0 0.0
      %885 = vmatpush1.msra.mxu0 0.0
      %886 = vmatprep.subr.mxu0 0.0
      %887 = vmatpush1.msra.mxu0 0.0
      %888 = vmatprep.subr.mxu0 0.0
      %889 = vmatpush1.msra.mxu0 0.0
      %890 = vmatprep.subr.mxu0 0.0
      %891 = vmatpush1.msra.mxu0 0.0
      %892 = vmatprep.subr.mxu0 0.0
      %893 = vmatpush1.msra.mxu0 %v860
      %894 = vmatprep.subr.mxu0 0.0
      %895 = vmatpush2.msra.mxu0 0.0
      %896 = vmatprep.subr.mxu0 0.0
      %897 = vmatpush2.msra.mxu0 0.0
      %898 = vmatprep.subr.mxu0 0.0
      %899 = vmatpush2.msra.mxu0 0.0
      %900 = vmatprep.subr.mxu0 0.0
      %901 = vmatpush2.msra.mxu0 0.0
      %902 = vmatprep.subr.mxu0 0.0
      %903 = vmatpush2.msra.mxu0 0.0
      %904 = vmatprep.subr.mxu0 0.0
      %905 = vmatpush2.msra.mxu0 0.0
      %906 = vmatprep.subr.mxu0 0.0
      %907 = vmatpush2.msra.mxu0 0.0
      %908 = vmatprep.subr.mxu0 0.0
      %909 = vmatpush2.msra.mxu0 0.0
      %910 = vmatprep.subr.mxu0 0.0
      %911 = vmatpush2.msra.mxu0 0.0
      %912 = vmatprep.subr.mxu0 0.0
      %913 = vmatpush2.msra.mxu0 0.0
      %914 = vmatprep.subr.mxu0 0.0
      %915 = vmatpush2.msra.mxu0 0.0
      %916 = vmatprep.subr.mxu0 0.0
      %917 = vmatpush2.msra.mxu0 0.0
      %918 = vmatprep.subr.mxu0 0.0
      %919 = vmatpush2.msra.mxu0 0.0
      %920 = vmatprep.subr.mxu0 0.0
      %921 = vmatpush2.msra.mxu0 0.0
      %922 = vmatprep.subr.mxu0 0.0
      %923 = vmatpush2.msra.mxu0 0.0
      %924 = vmatprep.subr.mxu0 0.0
      %925 = vmatpush2.msra.mxu0 0.0
      %926 = vmatprep.mubr.f32.mxu0 0.0
      %927 = vmatmul.mubr.f32.gmra.mxu0 %v836
      %v928 = vpop.f32.mrf.mxu0
      %v929 = vadd.f32 0.0, %v928
      %v930 = vpop.f32.mrf.mxu0
      %931 = vmatprep.mubr.f32.mxu0 0.0
      %932 = vmatmul.mubr.f32.gmra.mxu0 %v839
      %v933 = vpop.f32.mrf.mxu0
      %v934 = vadd.f32 0.0, %v933
      %v935 = vpop.f32.mrf.mxu0
      %936 = vmatprep.mubr.f32.mxu0 0.0
      %937 = vmatmul.mubr.f32.gmra.mxu0 %v842
      %v938 = vpop.f32.mrf.mxu0
      %v939 = vadd.f32 0.0, %v938
      %v940 = vpop.f32.mrf.mxu0
      %941 = vmatprep.mubr.f32.mxu0 0.0
      %942 = vmatmul.mubr.f32.gmra.mxu0 %v845
      %v943 = vpop.f32.mrf.mxu0
      %v944 = vadd.f32 0.0, %v943
      %v945 = vpop.f32.mrf.mxu0
      %946 = vmatprep.mubr.f32.mxu0 0.0
      %947 = vmatmul.mubr.f32.gmra.mxu0 %v848
      %v948 = vpop.f32.mrf.mxu0
      %v949 = vadd.f32 0.0, %v948
      %v950 = vpop.f32.mrf.mxu0
      %951 = vmatprep.mubr.f32.mxu0 0.0
      %952 = vmatmul.mubr.f32.gmra.mxu0 %v851
      %v953 = vpop.f32.mrf.mxu0
      %v954 = vadd.f32 0.0, %v953
      %v955 = vpop.f32.mrf.mxu0
      %956 = vmatprep.mubr.f32.mxu0 0.0
      %957 = vmatmul.mubr.f32.gmra.mxu0 %v854
      %v958 = vpop.f32.mrf.mxu0
      %v959 = vadd.f32 0.0, %v958
      %v960 = vpop.f32.mrf.mxu0
      %961 = vmatprep.mubr.f32.mxu0 0.0
      %962 = vmatmul.mubr.f32.gmra.mxu0 %v857
      %v963 = vpop.f32.mrf.mxu0
      %v964 = vadd.f32 0.0, %v963
      %v965 = vpop.f32.mrf.mxu0
      %966 = vdwg.mxu0
      %v967 = vadd.f32 %v796, %v929
      %v968 = vadd.f32 %v801, %v934
      %v969 = vadd.f32 %v806, %v939
      %v970 = vadd.f32 %v811, %v944
      %v971 = vadd.f32 %v816, %v949
      %v972 = vadd.f32 %v821, %v954
      %v973 = vadd.f32 %v826, %v959
      %v974 = vadd.f32 %v831, %v964
      %v975 = vld [vmem:[%s3 + $0xc] sm:$0xf]
      %v977 = vsel %vm568, %v377, 0
      %v980 = vsel %vm568, %v378, 0
      %v983 = vsel %vm568, %v379, 0
      %v986 = vsel %vm568, %v380, 0
      %v989 = vsel %vm568, %v381, 0
      %v992 = vsel %vm568, %v382, 0
      %v995 = vsel %vm568, %v383, 0
      %v998 = vsel %vm568, %v384, 0
      %v1001 = vsel %vm593, %v975, 0
      %1003 = vmatprep.subr.mxu0 0.0
      %1004 = vmatpush1.msra.mxu0 0.0
      %1005 = vmatprep.subr.mxu0 0.0
      %1006 = vmatpush1.msra.mxu0 0.0
      %1007 = vmatprep.subr.mxu0 0.0
      %1008 = vmatpush1.msra.mxu0 0.0
      %1009 = vmatprep.subr.mxu0 0.0
      %1010 = vmatpush1.msra.mxu0 0.0
      %1011 = vmatprep.subr.mxu0 0.0
      %1012 = vmatpush1.msra.mxu0 0.0
      %1013 = vmatprep.subr.mxu0 0.0
      %1014 = vmatpush1.msra.mxu0 0.0
      %1015 = vmatprep.subr.mxu0 0.0
      %1016 = vmatpush1.msra.mxu0 0.0
      %1017 = vmatprep.subr.mxu0 0.0
      %1018 = vmatpush1.msra.mxu0 0.0
      %1019 = vmatprep.subr.mxu0 0.0
      %1020 = vmatpush1.msra.mxu0 0.0
      %1021 = vmatprep.subr.mxu0 0.0
      %1022 = vmatpush1.msra.mxu0 0.0
      %1023 = vmatprep.subr.mxu0 0.0
      %1024 = vmatpush1.msra.mxu0 0.0
      %1025 = vmatprep.subr.mxu0 0.0
      %1026 = vmatpush1.msra.mxu0 0.0
      %1027 = vmatprep.subr.mxu0 0.0
      %1028 = vmatpush1.msra.mxu0 0.0
      %1029 = vmatprep.subr.mxu0 0.0
      %1030 = vmatpush1.msra.mxu0 0.0
      %1031 = vmatprep.subr.mxu0 0.0
      %1032 = vmatpush1.msra.mxu0 0.0
      %1033 = vmatprep.subr.mxu0 0.0
      %1034 = vmatpush1.msra.mxu0 %v1001
      %1035 = vmatprep.subr.mxu0 0.0
      %1036 = vmatpush2.msra.mxu0 0.0
      %1037 = vmatprep.subr.mxu0 0.0
      %1038 = vmatpush2.msra.mxu0 0.0
      %1039 = vmatprep.subr.mxu0 0.0
      %1040 = vmatpush2.msra.mxu0 0.0
      %1041 = vmatprep.subr.mxu0 0.0
      %1042 = vmatpush2.msra.mxu0 0.0
      %1043 = vmatprep.subr.mxu0 0.0
      %1044 = vmatpush2.msra.mxu0 0.0
      %1045 = vmatprep.subr.mxu0 0.0
      %1046 = vmatpush2.msra.mxu0 0.0
      %1047 = vmatprep.subr.mxu0 0.0
      %1048 = vmatpush2.msra.mxu0 0.0
      %1049 = vmatprep.subr.mxu0 0.0
      %1050 = vmatpush2.msra.mxu0 0.0
      %1051 = vmatprep.subr.mxu0 0.0
      %1052 = vmatpush2.msra.mxu0 0.0
      %1053 = vmatprep.subr.mxu0 0.0
      %1054 = vmatpush2.msra.mxu0 0.0
      %1055 = vmatprep.subr.mxu0 0.0
      %1056 = vmatpush2.msra.mxu0 0.0
      %1057 = vmatprep.subr.mxu0 0.0
      %1058 = vmatpush2.msra.mxu0 0.0
      %1059 = vmatprep.subr.mxu0 0.0
      %1060 = vmatpush2.msra.mxu0 0.0
      %1061 = vmatprep.subr.mxu0 0.0
      %1062 = vmatpush2.msra.mxu0 0.0
      %1063 = vmatprep.subr.mxu0 0.0
      %1064 = vmatpush2.msra.mxu0 0.0
      %1065 = vmatprep.subr.mxu0 0.0
      %1066 = vmatpush2.msra.mxu0 0.0
      %1067 = vmatprep.mubr.f32.mxu0 0.0
      %1068 = vmatmul.mubr.f32.gmra.mxu0 %v977
      %v1069 = vpop.f32.mrf.mxu0
      %v1070 = vadd.f32 0.0, %v1069
      %v1071 = vpop.f32.mrf.mxu0
      %1072 = vmatprep.mubr.f32.mxu0 0.0
      %1073 = vmatmul.mubr.f32.gmra.mxu0 %v980
      %v1074 = vpop.f32.mrf.mxu0
      %v1075 = vadd.f32 0.0, %v1074
      %v1076 = vpop.f32.mrf.mxu0
      %1077 = vmatprep.mubr.f32.mxu0 0.0
      %1078 = vmatmul.mubr.f32.gmra.mxu0 %v983
      %v1079 = vpop.f32.mrf.mxu0
      %v1080 = vadd.f32 0.0, %v1079
      %v1081 = vpop.f32.mrf.mxu0
      %1082 = vmatprep.mubr.f32.mxu0 0.0
      %1083 = vmatmul.mubr.f32.gmra.mxu0 %v986
      %v1084 = vpop.f32.mrf.mxu0
      %v1085 = vadd.f32 0.0, %v1084
      %v1086 = vpop.f32.mrf.mxu0
      %1087 = vmatprep.mubr.f32.mxu0 0.0
      %1088 = vmatmul.mubr.f32.gmra.mxu0 %v989
      %v1089 = vpop.f32.mrf.mxu0
      %v1090 = vadd.f32 0.0, %v1089
      %v1091 = vpop.f32.mrf.mxu0
      %1092 = vmatprep.mubr.f32.mxu0 0.0
      %1093 = vmatmul.mubr.f32.gmra.mxu0 %v992
      %v1094 = vpop.f32.mrf.mxu0
      %v1095 = vadd.f32 0.0, %v1094
      %v1096 = vpop.f32.mrf.mxu0
      %1097 = vmatprep.mubr.f32.mxu0 0.0
      %1098 = vmatmul.mubr.f32.gmra.mxu0 %v995
      %v1099 = vpop.f32.mrf.mxu0
      %v1100 = vadd.f32 0.0, %v1099
      %v1101 = vpop.f32.mrf.mxu0
      %1102 = vmatprep.mubr.f32.mxu0 0.0
      %1103 = vmatmul.mubr.f32.gmra.mxu0 %v998
      %v1104 = vpop.f32.mrf.mxu0
      %v1105 = vadd.f32 0.0, %v1104
      %v1106 = vpop.f32.mrf.mxu0
      %1107 = vdwg.mxu0
      %v1108 = vadd.f32 %v967, %v1070
      %v1109 = vadd.f32 %v968, %v1075
      %v1110 = vadd.f32 %v969, %v1080
      %v1111 = vadd.f32 %v970, %v1085
      %v1112 = vadd.f32 %v971, %v1090
      %v1113 = vadd.f32 %v972, %v1095
      %v1114 = vadd.f32 %v973, %v1100
      %v1115 = vadd.f32 %v974, %v1105
      %v1116 = vld [vmem:[%s3 + $0x10] sm:$0xf]
      %v1118 = vsel %vm568, %v418, 0
      %v1121 = vsel %vm568, %v419, 0
      %v1124 = vsel %vm568, %v420, 0
      %v1127 = vsel %vm568, %v421, 0
      %v1130 = vsel %vm568, %v422, 0
      %v1133 = vsel %vm568, %v423, 0
      %v1136 = vsel %vm568, %v424, 0
      %v1139 = vsel %vm568, %v425, 0
      %v1142 = vsel %vm593, %v1116, 0
      %1144 = vmatprep.subr.mxu0 0.0
      %1145 = vmatpush1.msra.mxu0 0.0
      %1146 = vmatprep.subr.mxu0 0.0
      %1147 = vmatpush1.msra.mxu0 0.0
      %1148 = vmatprep.subr.mxu0 0.0
      %1149 = vmatpush1.msra.mxu0 0.0
      %1150 = vmatprep.subr.mxu0 0.0
      %1151 = vmatpush1.msra.mxu0 0.0
      %1152 = vmatprep.subr.mxu0 0.0
      %1153 = vmatpush1.msra.mxu0 0.0
      %1154 = vmatprep.subr.mxu0 0.0
      %1155 = vmatpush1.msra.mxu0 0.0
      %1156 = vmatprep.subr.mxu0 0.0
      %1157 = vmatpush1.msra.mxu0 0.0
      %1158 = vmatprep.subr.mxu0 0.0
      %1159 = vmatpush1.msra.mxu0 0.0
      %1160 = vmatprep.subr.mxu0 0.0
      %1161 = vmatpush1.msra.mxu0 0.0
      %1162 = vmatprep.subr.mxu0 0.0
      %1163 = vmatpush1.msra.mxu0 0.0
      %1164 = vmatprep.subr.mxu0 0.0
      %1165 = vmatpush1.msra.mxu0 0.0
      %1166 = vmatprep.subr.mxu0 0.0
      %1167 = vmatpush1.msra.mxu0 0.0
      %1168 = vmatprep.subr.mxu0 0.0
      %1169 = vmatpush1.msra.mxu0 0.0
      %1170 = vmatprep.subr.mxu0 0.0
      %1171 = vmatpush1.msra.mxu0 0.0
      %1172 = vmatprep.subr.mxu0 0.0
      %1173 = vmatpush1.msra.mxu0 0.0
      %1174 = vmatprep.subr.mxu0 0.0
      %1175 = vmatpush1.msra.mxu0 %v1142
      %1176 = vmatprep.subr.mxu0 0.0
      %1177 = vmatpush2.msra.mxu0 0.0
      %1178 = vmatprep.subr.mxu0 0.0
      %1179 = vmatpush2.msra.mxu0 0.0
      %1180 = vmatprep.subr.mxu0 0.0
      %1181 = vmatpush2.msra.mxu0 0.0
      %1182 = vmatprep.subr.mxu0 0.0
      %1183 = vmatpush2.msra.mxu0 0.0
      %1184 = vmatprep.subr.mxu0 0.0
      %1185 = vmatpush2.msra.mxu0 0.0
      %1186 = vmatprep.subr.mxu0 0.0
      %1187 = vmatpush2.msra.mxu0 0.0
      %1188 = vmatprep.subr.mxu0 0.0
      %1189 = vmatpush2.msra.mxu0 0.0
      %1190 = vmatprep.subr.mxu0 0.0
      %1191 = vmatpush2.msra.mxu0 0.0
      %1192 = vmatprep.subr.mxu0 0.0
      %1193 = vmatpush2.msra.mxu0 0.0
      %1194 = vmatprep.subr.mxu0 0.0
      %1195 = vmatpush2.msra.mxu0 0.0
      %1196 = vmatprep.subr.mxu0 0.0
      %1197 = vmatpush2.msra.mxu0 0.0
      %1198 = vmatprep.subr.mxu0 0.0
      %1199 = vmatpush2.msra.mxu0 0.0
      %1200 = vmatprep.subr.mxu0 0.0
      %1201 = vmatpush2.msra.mxu0 0.0
      %1202 = vmatprep.subr.mxu0 0.0
      %1203 = vmatpush2.msra.mxu0 0.0
      %1204 = vmatprep.subr.mxu0 0.0
      %1205 = vmatpush2.msra.mxu0 0.0
      %1206 = vmatprep.subr.mxu0 0.0
      %1207 = vmatpush2.msra.mxu0 0.0
      %1208 = vmatprep.mubr.f32.mxu0 0.0
      %1209 = vmatmul.mubr.f32.gmra.mxu0 %v1118
      %v1210 = vpop.f32.mrf.mxu0
      %v1211 = vadd.f32 0.0, %v1210
      %v1212 = vpop.f32.mrf.mxu0
      %1213 = vmatprep.mubr.f32.mxu0 0.0
      %1214 = vmatmul.mubr.f32.gmra.mxu0 %v1121
      %v1215 = vpop.f32.mrf.mxu0
      %v1216 = vadd.f32 0.0, %v1215
      %v1217 = vpop.f32.mrf.mxu0
      %1218 = vmatprep.mubr.f32.mxu0 0.0
      %1219 = vmatmul.mubr.f32.gmra.mxu0 %v1124
      %v1220 = vpop.f32.mrf.mxu0
      %v1221 = vadd.f32 0.0, %v1220
      %v1222 = vpop.f32.mrf.mxu0
      %1223 = vmatprep.mubr.f32.mxu0 0.0
      %1224 = vmatmul.mubr.f32.gmra.mxu0 %v1127
      %v1225 = vpop.f32.mrf.mxu0
      %v1226 = vadd.f32 0.0, %v1225
      %v1227 = vpop.f32.mrf.mxu0
      %1228 = vmatprep.mubr.f32.mxu0 0.0
      %1229 = vmatmul.mubr.f32.gmra.mxu0 %v1130
      %v1230 = vpop.f32.mrf.mxu0
      %v1231 = vadd.f32 0.0, %v1230
      %v1232 = vpop.f32.mrf.mxu0
      %1233 = vmatprep.mubr.f32.mxu0 0.0
      %1234 = vmatmul.mubr.f32.gmra.mxu0 %v1133
      %v1235 = vpop.f32.mrf.mxu0
      %v1236 = vadd.f32 0.0, %v1235
      %v1237 = vpop.f32.mrf.mxu0
      %1238 = vmatprep.mubr.f32.mxu0 0.0
      %1239 = vmatmul.mubr.f32.gmra.mxu0 %v1136
      %v1240 = vpop.f32.mrf.mxu0
      %v1241 = vadd.f32 0.0, %v1240
      %v1242 = vpop.f32.mrf.mxu0
      %1243 = vmatprep.mubr.f32.mxu0 0.0
      %1244 = vmatmul.mubr.f32.gmra.mxu0 %v1139
      %v1245 = vpop.f32.mrf.mxu0
      %v1246 = vadd.f32 0.0, %v1245
      %v1247 = vpop.f32.mrf.mxu0
      %1248 = vdwg.mxu0
      %v1249 = vadd.f32 %v1108, %v1211
      %v1250 = vadd.f32 %v1109, %v1216
      %v1251 = vadd.f32 %v1110, %v1221
      %v1252 = vadd.f32 %v1111, %v1226
      %v1253 = vadd.f32 %v1112, %v1231
      %v1254 = vadd.f32 %v1113, %v1236
      %v1255 = vadd.f32 %v1114, %v1241
      %v1256 = vadd.f32 %v1115, %v1246
      %v1257 = vld [vmem:[%s3 + $0x14] sm:$0xf]
      %v1259 = vsel %vm568, %v426, 0
      %v1262 = vsel %vm568, %v427, 0
      %v1265 = vsel %vm568, %v428, 0
      %v1268 = vsel %vm568, %v429, 0
      %v1271 = vsel %vm568, %v430, 0
      %v1274 = vsel %vm568, %v431, 0
      %v1277 = vsel %vm568, %v432, 0
      %v1280 = vsel %vm568, %v433, 0
      %v1283 = vsel %vm593, %v1257, 0
      %1285 = vmatprep.subr.mxu0 0.0
      %1286 = vmatpush1.msra.mxu0 0.0
      %1287 = vmatprep.subr.mxu0 0.0
      %1288 = vmatpush1.msra.mxu0 0.0
      %1289 = vmatprep.subr.mxu0 0.0
      %1290 = vmatpush1.msra.mxu0 0.0
      %1291 = vmatprep.subr.mxu0 0.0
      %1292 = vmatpush1.msra.mxu0 0.0
      %1293 = vmatprep.subr.mxu0 0.0
      %1294 = vmatpush1.msra.mxu0 0.0
      %1295 = vmatprep.subr.mxu0 0.0
      %1296 = vmatpush1.msra.mxu0 0.0
      %1297 = vmatprep.subr.mxu0 0.0
      %1298 = vmatpush1.msra.mxu0 0.0
      %1299 = vmatprep.subr.mxu0 0.0
      %1300 = vmatpush1.msra.mxu0 0.0
      %1301 = vmatprep.subr.mxu0 0.0
      %1302 = vmatpush1.msra.mxu0 0.0
      %1303 = vmatprep.subr.mxu0 0.0
      %1304 = vmatpush1.msra.mxu0 0.0
      %1305 = vmatprep.subr.mxu0 0.0
      %1306 = vmatpush1.msra.mxu0 0.0
      %1307 = vmatprep.subr.mxu0 0.0
      %1308 = vmatpush1.msra.mxu0 0.0
      %1309 = vmatprep.subr.mxu0 0.0
      %1310 = vmatpush1.msra.mxu0 0.0
      %1311 = vmatprep.subr.mxu0 0.0
      %1312 = vmatpush1.msra.mxu0 0.0
      %1313 = vmatprep.subr.mxu0 0.0
      %1314 = vmatpush1.msra.mxu0 0.0
      %1315 = vmatprep.subr.mxu0 0.0
      %1316 = vmatpush1.msra.mxu0 %v1283
      %1317 = vmatprep.subr.mxu0 0.0
      %1318 = vmatpush2.msra.mxu0 0.0
      %1319 = vmatprep.subr.mxu0 0.0
      %1320 = vmatpush2.msra.mxu0 0.0
      %1321 = vmatprep.subr.mxu0 0.0
      %1322 = vmatpush2.msra.mxu0 0.0
      %1323 = vmatprep.subr.mxu0 0.0
      %1324 = vmatpush2.msra.mxu0 0.0
      %1325 = vmatprep.subr.mxu0 0.0
      %1326 = vmatpush2.msra.mxu0 0.0
      %1327 = vmatprep.subr.mxu0 0.0
      %1328 = vmatpush2.msra.mxu0 0.0
      %1329 = vmatprep.subr.mxu0 0.0
      %1330 = vmatpush2.msra.mxu0 0.0
      %1331 = vmatprep.subr.mxu0 0.0
      %1332 = vmatpush2.msra.mxu0 0.0
      %1333 = vmatprep.subr.mxu0 0.0
      %1334 = vmatpush2.msra.mxu0 0.0
      %1335 = vmatprep.subr.mxu0 0.0
      %1336 = vmatpush2.msra.mxu0 0.0
      %1337 = vmatprep.subr.mxu0 0.0
      %1338 = vmatpush2.msra.mxu0 0.0
      %1339 = vmatprep.subr.mxu0 0.0
      %1340 = vmatpush2.msra.mxu0 0.0
      %1341 = vmatprep.subr.mxu0 0.0
      %1342 = vmatpush2.msra.mxu0 0.0
      %1343 = vmatprep.subr.mxu0 0.0
      %1344 = vmatpush2.msra.mxu0 0.0
      %1345 = vmatprep.subr.mxu0 0.0
      %1346 = vmatpush2.msra.mxu0 0.0
      %1347 = vmatprep.subr.mxu0 0.0
      %1348 = vmatpush2.msra.mxu0 0.0
      %1349 = vmatprep.mubr.f32.mxu0 0.0
      %1350 = vmatmul.mubr.f32.gmra.mxu0 %v1259
      %v1351 = vpop.f32.mrf.mxu0
      %v1352 = vadd.f32 0.0, %v1351
      %v1353 = vpop.f32.mrf.mxu0
      %1354 = vmatprep.mubr.f32.mxu0 0.0
      %1355 = vmatmul.mubr.f32.gmra.mxu0 %v1262
      %v1356 = vpop.f32.mrf.mxu0
      %v1357 = vadd.f32 0.0, %v1356
      %v1358 = vpop.f32.mrf.mxu0
      %1359 = vmatprep.mubr.f32.mxu0 0.0
      %1360 = vmatmul.mubr.f32.gmra.mxu0 %v1265
      %v1361 = vpop.f32.mrf.mxu0
      %v1362 = vadd.f32 0.0, %v1361
      %v1363 = vpop.f32.mrf.mxu0
      %1364 = vmatprep.mubr.f32.mxu0 0.0
      %1365 = vmatmul.mubr.f32.gmra.mxu0 %v1268
      %v1366 = vpop.f32.mrf.mxu0
      %v1367 = vadd.f32 0.0, %v1366
      %v1368 = vpop.f32.mrf.mxu0
      %1369 = vmatprep.mubr.f32.mxu0 0.0
      %1370 = vmatmul.mubr.f32.gmra.mxu0 %v1271
      %v1371 = vpop.f32.mrf.mxu0
      %v1372 = vadd.f32 0.0, %v1371
      %v1373 = vpop.f32.mrf.mxu0
      %1374 = vmatprep.mubr.f32.mxu0 0.0
      %1375 = vmatmul.mubr.f32.gmra.mxu0 %v1274
      %v1376 = vpop.f32.mrf.mxu0
      %v1377 = vadd.f32 0.0, %v1376
      %v1378 = vpop.f32.mrf.mxu0
      %1379 = vmatprep.mubr.f32.mxu0 0.0
      %1380 = vmatmul.mubr.f32.gmra.mxu0 %v1277
      %v1381 = vpop.f32.mrf.mxu0
      %v1382 = vadd.f32 0.0, %v1381
      %v1383 = vpop.f32.mrf.mxu0
      %1384 = vmatprep.mubr.f32.mxu0 0.0
      %1385 = vmatmul.mubr.f32.gmra.mxu0 %v1280
      %v1386 = vpop.f32.mrf.mxu0
      %v1387 = vadd.f32 0.0, %v1386
      %v1388 = vpop.f32.mrf.mxu0
      %1389 = vdwg.mxu0
      %v1390 = vadd.f32 %v1249, %v1352
      %v1391 = vadd.f32 %v1250, %v1357
      %v1392 = vadd.f32 %v1251, %v1362
      %v1393 = vadd.f32 %v1252, %v1367
      %v1394 = vadd.f32 %v1253, %v1372
      %v1395 = vadd.f32 %v1254, %v1377
      %v1396 = vadd.f32 %v1255, %v1382
      %v1397 = vadd.f32 %v1256, %v1387
      %v1398 = vld [vmem:[%s3 + $0x18] sm:$0xf]
      %v1400 = vsel %vm568, %v443, 0
      %v1403 = vsel %vm568, %v444, 0
      %v1406 = vsel %vm568, %v445, 0
      %v1409 = vsel %vm568, %v446, 0
      %v1412 = vsel %vm568, %v447, 0
      %v1415 = vsel %vm568, %v448, 0
      %v1418 = vsel %vm568, %v449, 0
      %v1421 = vsel %vm568, %v450, 0
      %v1424 = vsel %vm593, %v1398, 0
      %1426 = vmatprep.subr.mxu0 0.0
      %1427 = vmatpush1.msra.mxu0 0.0
      %1428 = vmatprep.subr.mxu0 0.0
      %1429 = vmatpush1.msra.mxu0 0.0
      %1430 = vmatprep.subr.mxu0 0.0
      %1431 = vmatpush1.msra.mxu0 0.0
      %1432 = vmatprep.subr.mxu0 0.0
      %1433 = vmatpush1.msra.mxu0 0.0
      %1434 = vmatprep.subr.mxu0 0.0
      %1435 = vmatpush1.msra.mxu0 0.0
      %1436 = vmatprep.subr.mxu0 0.0
      %1437 = vmatpush1.msra.mxu0 0.0
      %1438 = vmatprep.subr.mxu0 0.0
      %1439 = vmatpush1.msra.mxu0 0.0
      %1440 = vmatprep.subr.mxu0 0.0
      %1441 = vmatpush1.msra.mxu0 0.0
      %1442 = vmatprep.subr.mxu0 0.0
      %1443 = vmatpush1.msra.mxu0 0.0
      %1444 = vmatprep.subr.mxu0 0.0
      %1445 = vmatpush1.msra.mxu0 0.0
      %1446 = vmatprep.subr.mxu0 0.0
      %1447 = vmatpush1.msra.mxu0 0.0
      %1448 = vmatprep.subr.mxu0 0.0
      %1449 = vmatpush1.msra.mxu0 0.0
      %1450 = vmatprep.subr.mxu0 0.0
      %1451 = vmatpush1.msra.mxu0 0.0
      %1452 = vmatprep.subr.mxu0 0.0
      %1453 = vmatpush1.msra.mxu0 0.0
      %1454 = vmatprep.subr.mxu0 0.0
      %1455 = vmatpush1.msra.mxu0 0.0
      %1456 = vmatprep.subr.mxu0 0.0
      %1457 = vmatpush1.msra.mxu0 %v1424
      %1458 = vmatprep.subr.mxu0 0.0
      %1459 = vmatpush2.msra.mxu0 0.0
      %1460 = vmatprep.subr.mxu0 0.0
      %1461 = vmatpush2.msra.mxu0 0.0
      %1462 = vmatprep.subr.mxu0 0.0
      %1463 = vmatpush2.msra.mxu0 0.0
      %1464 = vmatprep.subr.mxu0 0.0
      %1465 = vmatpush2.msra.mxu0 0.0
      %1466 = vmatprep.subr.mxu0 0.0
      %1467 = vmatpush2.msra.mxu0 0.0
      %1468 = vmatprep.subr.mxu0 0.0
      %1469 = vmatpush2.msra.mxu0 0.0
      %1470 = vmatprep.subr.mxu0 0.0
      %1471 = vmatpush2.msra.mxu0 0.0
      %1472 = vmatprep.subr.mxu0 0.0
      %1473 = vmatpush2.msra.mxu0 0.0
      %1474 = vmatprep.subr.mxu0 0.0
      %1475 = vmatpush2.msra.mxu0 0.0
      %1476 = vmatprep.subr.mxu0 0.0
      %1477 = vmatpush2.msra.mxu0 0.0
      %1478 = vmatprep.subr.mxu0 0.0
      %1479 = vmatpush2.msra.mxu0 0.0
      %1480 = vmatprep.subr.mxu0 0.0
      %1481 = vmatpush2.msra.mxu0 0.0
      %1482 = vmatprep.subr.mxu0 0.0
      %1483 = vmatpush2.msra.mxu0 0.0
      %1484 = vmatprep.subr.mxu0 0.0
      %1485 = vmatpush2.msra.mxu0 0.0
      %1486 = vmatprep.subr.mxu0 0.0
      %1487 = vmatpush2.msra.mxu0 0.0
      %1488 = vmatprep.subr.mxu0 0.0
      %1489 = vmatpush2.msra.mxu0 0.0
      %1490 = vmatprep.mubr.f32.mxu0 0.0
      %1491 = vmatmul.mubr.f32.gmra.mxu0 %v1400
      %v1492 = vpop.f32.mrf.mxu0
      %v1493 = vadd.f32 0.0, %v1492
      %v1494 = vpop.f32.mrf.mxu0
      %1495 = vmatprep.mubr.f32.mxu0 0.0
      %1496 = vmatmul.mubr.f32.gmra.mxu0 %v1403
      %v1497 = vpop.f32.mrf.mxu0
      %v1498 = vadd.f32 0.0, %v1497
      %v1499 = vpop.f32.mrf.mxu0
      %1500 = vmatprep.mubr.f32.mxu0 0.0
      %1501 = vmatmul.mubr.f32.gmra.mxu0 %v1406
      %v1502 = vpop.f32.mrf.mxu0
      %v1503 = vadd.f32 0.0, %v1502
      %v1504 = vpop.f32.mrf.mxu0
      %1505 = vmatprep.mubr.f32.mxu0 0.0
      %1506 = vmatmul.mubr.f32.gmra.mxu0 %v1409
      %v1507 = vpop.f32.mrf.mxu0
      %v1508 = vadd.f32 0.0, %v1507
      %v1509 = vpop.f32.mrf.mxu0
      %1510 = vmatprep.mubr.f32.mxu0 0.0
      %1511 = vmatmul.mubr.f32.gmra.mxu0 %v1412
      %v1512 = vpop.f32.mrf.mxu0
      %v1513 = vadd.f32 0.0, %v1512
      %v1514 = vpop.f32.mrf.mxu0
      %1515 = vmatprep.mubr.f32.mxu0 0.0
      %1516 = vmatmul.mubr.f32.gmra.mxu0 %v1415
      %v1517 = vpop.f32.mrf.mxu0
      %v1518 = vadd.f32 0.0, %v1517
      %v1519 = vpop.f32.mrf.mxu0
      %1520 = vmatprep.mubr.f32.mxu0 0.0
      %1521 = vmatmul.mubr.f32.gmra.mxu0 %v1418
      %v1522 = vpop.f32.mrf.mxu0
      %v1523 = vadd.f32 0.0, %v1522
      %v1524 = vpop.f32.mrf.mxu0
      %1525 = vmatprep.mubr.f32.mxu0 0.0
      %1526 = vmatmul.mubr.f32.gmra.mxu0 %v1421
      %v1527 = vpop.f32.mrf.mxu0
      %v1528 = vadd.f32 0.0, %v1527
      %v1529 = vpop.f32.mrf.mxu0
      %1530 = vdwg.mxu0
      %v1531 = vadd.f32 %v1390, %v1493
      %v1532 = vadd.f32 %v1391, %v1498
      %v1533 = vadd.f32 %v1392, %v1503
      %v1534 = vadd.f32 %v1393, %v1508
      %v1535 = vadd.f32 %v1394, %v1513
      %v1536 = vadd.f32 %v1395, %v1518
      %v1537 = vadd.f32 %v1396, %v1523
      %v1538 = vadd.f32 %v1397, %v1528
      %v1539 = vld [vmem:[%s3 + $0x1c] sm:$0xf]
      %v1541 = vsel %vm568, %v451, 0
      %v1544 = vsel %vm568, %v452, 0
      %v1547 = vsel %vm568, %v453, 0
      %v1550 = vsel %vm568, %v454, 0
      %v1553 = vsel %vm568, %v455, 0
      %v1556 = vsel %vm568, %v456, 0
      %v1559 = vsel %vm568, %v457, 0
      %v1562 = vsel %vm568, %v458, 0
      %v1565 = vsel %vm593, %v1539, 0
      %1567 = vmatprep.subr.mxu0 0.0
      %1568 = vmatpush1.msra.mxu0 0.0
      %1569 = vmatprep.subr.mxu0 0.0
      %1570 = vmatpush1.msra.mxu0 0.0
      %1571 = vmatprep.subr.mxu0 0.0
      %1572 = vmatpush1.msra.mxu0 0.0
      %1573 = vmatprep.subr.mxu0 0.0
      %1574 = vmatpush1.msra.mxu0 0.0
      %1575 = vmatprep.subr.mxu0 0.0
      %1576 = vmatpush1.msra.mxu0 0.0
      %1577 = vmatprep.subr.mxu0 0.0
      %1578 = vmatpush1.msra.mxu0 0.0
      %1579 = vmatprep.subr.mxu0 0.0
      %1580 = vmatpush1.msra.mxu0 0.0
      %1581 = vmatprep.subr.mxu0 0.0
      %1582 = vmatpush1.msra.mxu0 0.0
      %1583 = vmatprep.subr.mxu0 0.0
      %1584 = vmatpush1.msra.mxu0 0.0
      %1585 = vmatprep.subr.mxu0 0.0
      %1586 = vmatpush1.msra.mxu0 0.0
      %1587 = vmatprep.subr.mxu0 0.0
      %1588 = vmatpush1.msra.mxu0 0.0
      %1589 = vmatprep.subr.mxu0 0.0
      %1590 = vmatpush1.msra.mxu0 0.0
      %1591 = vmatprep.subr.mxu0 0.0
      %1592 = vmatpush1.msra.mxu0 0.0
      %1593 = vmatprep.subr.mxu0 0.0
      %1594 = vmatpush1.msra.mxu0 0.0
      %1595 = vmatprep.subr.mxu0 0.0
      %1596 = vmatpush1.msra.mxu0 0.0
      %1597 = vmatprep.subr.mxu0 0.0
      %1598 = vmatpush1.msra.mxu0 %v1565
      %1599 = vmatprep.subr.mxu0 0.0
      %1600 = vmatpush2.msra.mxu0 0.0
      %1601 = vmatprep.subr.mxu0 0.0
      %1602 = vmatpush2.msra.mxu0 0.0
      %1603 = vmatprep.subr.mxu0 0.0
      %1604 = vmatpush2.msra.mxu0 0.0
      %1605 = vmatprep.subr.mxu0 0.0
      %1606 = vmatpush2.msra.mxu0 0.0
      %1607 = vmatprep.subr.mxu0 0.0
      %1608 = vmatpush2.msra.mxu0 0.0
      %1609 = vmatprep.subr.mxu0 0.0
      %1610 = vmatpush2.msra.mxu0 0.0
      %1611 = vmatprep.subr.mxu0 0.0
      %1612 = vmatpush2.msra.mxu0 0.0
      %1613 = vmatprep.subr.mxu0 0.0
      %1614 = vmatpush2.msra.mxu0 0.0
      %1615 = vmatprep.subr.mxu0 0.0
      %1616 = vmatpush2.msra.mxu0 0.0
      %1617 = vmatprep.subr.mxu0 0.0
      %1618 = vmatpush2.msra.mxu0 0.0
      %1619 = vmatprep.subr.mxu0 0.0
      %1620 = vmatpush2.msra.mxu0 0.0
      %1621 = vmatprep.subr.mxu0 0.0
      %1622 = vmatpush2.msra.mxu0 0.0
      %1623 = vmatprep.subr.mxu0 0.0
      %1624 = vmatpush2.msra.mxu0 0.0
      %1625 = vmatprep.subr.mxu0 0.0
      %1626 = vmatpush2.msra.mxu0 0.0
      %1627 = vmatprep.subr.mxu0 0.0
      %1628 = vmatpush2.msra.mxu0 0.0
      %1629 = vmatprep.subr.mxu0 0.0
      %1630 = vmatpush2.msra.mxu0 0.0
      %1631 = vmatprep.mubr.f32.mxu0 0.0
      %1632 = vmatmul.mubr.f32.gmra.mxu0 %v1541
      %v1633 = vpop.f32.mrf.mxu0
      %v1634 = vadd.f32 0.0, %v1633
      %v1635 = vpop.f32.mrf.mxu0
      %1636 = vmatprep.mubr.f32.mxu0 0.0
      %1637 = vmatmul.mubr.f32.gmra.mxu0 %v1544
      %v1638 = vpop.f32.mrf.mxu0
      %v1639 = vadd.f32 0.0, %v1638
      %v1640 = vpop.f32.mrf.mxu0
      %1641 = vmatprep.mubr.f32.mxu0 0.0
      %1642 = vmatmul.mubr.f32.gmra.mxu0 %v1547
      %v1643 = vpop.f32.mrf.mxu0
      %v1644 = vadd.f32 0.0, %v1643
      %v1645 = vpop.f32.mrf.mxu0
      %1646 = vmatprep.mubr.f32.mxu0 0.0
      %1647 = vmatmul.mubr.f32.gmra.mxu0 %v1550
      %v1648 = vpop.f32.mrf.mxu0
      %v1649 = vadd.f32 0.0, %v1648
      %v1650 = vpop.f32.mrf.mxu0
      %1651 = vmatprep.mubr.f32.mxu0 0.0
      %1652 = vmatmul.mubr.f32.gmra.mxu0 %v1553
      %v1653 = vpop.f32.mrf.mxu0
      %v1654 = vadd.f32 0.0, %v1653
      %v1655 = vpop.f32.mrf.mxu0
      %1656 = vmatprep.mubr.f32.mxu0 0.0
      %1657 = vmatmul.mubr.f32.gmra.mxu0 %v1556
      %v1658 = vpop.f32.mrf.mxu0
      %v1659 = vadd.f32 0.0, %v1658
      %v1660 = vpop.f32.mrf.mxu0
      %1661 = vmatprep.mubr.f32.mxu0 0.0
      %1662 = vmatmul.mubr.f32.gmra.mxu0 %v1559
      %v1663 = vpop.f32.mrf.mxu0
      %v1664 = vadd.f32 0.0, %v1663
      %v1665 = vpop.f32.mrf.mxu0
      %1666 = vmatprep.mubr.f32.mxu0 0.0
      %1667 = vmatmul.mubr.f32.gmra.mxu0 %v1562
      %v1668 = vpop.f32.mrf.mxu0
      %v1669 = vadd.f32 0.0, %v1668
      %v1670 = vpop.f32.mrf.mxu0
      %1671 = vdwg.mxu0
      %v1672 = vadd.f32 %v1531, %v1634
      %v1673 = vadd.f32 %v1532, %v1639
      %v1674 = vadd.f32 %v1533, %v1644
      %v1675 = vadd.f32 %v1534, %v1649
      %v1676 = vadd.f32 %v1535, %v1654
      %v1677 = vadd.f32 %v1536, %v1659
      %v1678 = vadd.f32 %v1537, %v1664
      %v1679 = vadd.f32 %v1538, %v1669
      %v1680 = vld [vmem:[%s3 + $0x20] sm:$0xf]
      %v1682 = vsel %vm568, %v492, 0
      %v1685 = vsel %vm568, %v493, 0
      %v1688 = vsel %vm568, %v494, 0
      %v1691 = vsel %vm568, %v495, 0
      %v1694 = vsel %vm568, %v496, 0
      %v1697 = vsel %vm568, %v497, 0
      %v1700 = vsel %vm568, %v498, 0
      %v1703 = vsel %vm568, %v499, 0
      %v1706 = vsel %vm593, %v1680, 0
      %1708 = vmatprep.subr.mxu0 0.0
      %1709 = vmatpush1.msra.mxu0 0.0
      %1710 = vmatprep.subr.mxu0 0.0
      %1711 = vmatpush1.msra.mxu0 0.0
      %1712 = vmatprep.subr.mxu0 0.0
      %1713 = vmatpush1.msra.mxu0 0.0
      %1714 = vmatprep.subr.mxu0 0.0
      %1715 = vmatpush1.msra.mxu0 0.0
      %1716 = vmatprep.subr.mxu0 0.0
      %1717 = vmatpush1.msra.mxu0 0.0
      %1718 = vmatprep.subr.mxu0 0.0
      %1719 = vmatpush1.msra.mxu0 0.0
      %1720 = vmatprep.subr.mxu0 0.0
      %1721 = vmatpush1.msra.mxu0 0.0
      %1722 = vmatprep.subr.mxu0 0.0
      %1723 = vmatpush1.msra.mxu0 0.0
      %1724 = vmatprep.subr.mxu0 0.0
      %1725 = vmatpush1.msra.mxu0 0.0
      %1726 = vmatprep.subr.mxu0 0.0
      %1727 = vmatpush1.msra.mxu0 0.0
      %1728 = vmatprep.subr.mxu0 0.0
      %1729 = vmatpush1.msra.mxu0 0.0
      %1730 = vmatprep.subr.mxu0 0.0
      %1731 = vmatpush1.msra.mxu0 0.0
      %1732 = vmatprep.subr.mxu0 0.0
      %1733 = vmatpush1.msra.mxu0 0.0
      %1734 = vmatprep.subr.mxu0 0.0
      %1735 = vmatpush1.msra.mxu0 0.0
      %1736 = vmatprep.subr.mxu0 0.0
      %1737 = vmatpush1.msra.mxu0 0.0
      %1738 = vmatprep.subr.mxu0 0.0
      %1739 = vmatpush1.msra.mxu0 %v1706
      %1740 = vmatprep.subr.mxu0 0.0
      %1741 = vmatpush2.msra.mxu0 0.0
      %1742 = vmatprep.subr.mxu0 0.0
      %1743 = vmatpush2.msra.mxu0 0.0
      %1744 = vmatprep.subr.mxu0 0.0
      %1745 = vmatpush2.msra.mxu0 0.0
      %1746 = vmatprep.subr.mxu0 0.0
      %1747 = vmatpush2.msra.mxu0 0.0
      %1748 = vmatprep.subr.mxu0 0.0
      %1749 = vmatpush2.msra.mxu0 0.0
      %1750 = vmatprep.subr.mxu0 0.0
      %1751 = vmatpush2.msra.mxu0 0.0
      %1752 = vmatprep.subr.mxu0 0.0
      %1753 = vmatpush2.msra.mxu0 0.0
      %1754 = vmatprep.subr.mxu0 0.0
      %1755 = vmatpush2.msra.mxu0 0.0
      %1756 = vmatprep.subr.mxu0 0.0
      %1757 = vmatpush2.msra.mxu0 0.0
      %1758 = vmatprep.subr.mxu0 0.0
      %1759 = vmatpush2.msra.mxu0 0.0
      %1760 = vmatprep.subr.mxu0 0.0
      %1761 = vmatpush2.msra.mxu0 0.0
      %1762 = vmatprep.subr.mxu0 0.0
      %1763 = vmatpush2.msra.mxu0 0.0
      %1764 = vmatprep.subr.mxu0 0.0
      %1765 = vmatpush2.msra.mxu0 0.0
      %1766 = vmatprep.subr.mxu0 0.0
      %1767 = vmatpush2.msra.mxu0 0.0
      %1768 = vmatprep.subr.mxu0 0.0
      %1769 = vmatpush2.msra.mxu0 0.0
      %1770 = vmatprep.subr.mxu0 0.0
      %1771 = vmatpush2.msra.mxu0 0.0
      %1772 = vmatprep.mubr.f32.mxu0 0.0
      %1773 = vmatmul.mubr.f32.gmra.mxu0 %v1682
      %v1774 = vpop.f32.mrf.mxu0
      %v1775 = vadd.f32 0.0, %v1774
      %v1776 = vpop.f32.mrf.mxu0
      %1777 = vmatprep.mubr.f32.mxu0 0.0
      %1778 = vmatmul.mubr.f32.gmra.mxu0 %v1685
      %v1779 = vpop.f32.mrf.mxu0
      %v1780 = vadd.f32 0.0, %v1779
      %v1781 = vpop.f32.mrf.mxu0
      %1782 = vmatprep.mubr.f32.mxu0 0.0
      %1783 = vmatmul.mubr.f32.gmra.mxu0 %v1688
      %v1784 = vpop.f32.mrf.mxu0
      %v1785 = vadd.f32 0.0, %v1784
      %v1786 = vpop.f32.mrf.mxu0
      %1787 = vmatprep.mubr.f32.mxu0 0.0
      %1788 = vmatmul.mubr.f32.gmra.mxu0 %v1691
      %v1789 = vpop.f32.mrf.mxu0
      %v1790 = vadd.f32 0.0, %v1789
      %v1791 = vpop.f32.mrf.mxu0
      %1792 = vmatprep.mubr.f32.mxu0 0.0
      %1793 = vmatmul.mubr.f32.gmra.mxu0 %v1694
      %v1794 = vpop.f32.mrf.mxu0
      %v1795 = vadd.f32 0.0, %v1794
      %v1796 = vpop.f32.mrf.mxu0
      %1797 = vmatprep.mubr.f32.mxu0 0.0
      %1798 = vmatmul.mubr.f32.gmra.mxu0 %v1697
      %v1799 = vpop.f32.mrf.mxu0
      %v1800 = vadd.f32 0.0, %v1799
      %v1801 = vpop.f32.mrf.mxu0
      %1802 = vmatprep.mubr.f32.mxu0 0.0
      %1803 = vmatmul.mubr.f32.gmra.mxu0 %v1700
      %v1804 = vpop.f32.mrf.mxu0
      %v1805 = vadd.f32 0.0, %v1804
      %v1806 = vpop.f32.mrf.mxu0
      %1807 = vmatprep.mubr.f32.mxu0 0.0
      %1808 = vmatmul.mubr.f32.gmra.mxu0 %v1703
      %v1809 = vpop.f32.mrf.mxu0
      %v1810 = vadd.f32 0.0, %v1809
      %v1811 = vpop.f32.mrf.mxu0
      %1812 = vdwg.mxu0
      %v1813 = vadd.f32 %v1672, %v1775
      %v1814 = vadd.f32 %v1673, %v1780
      %v1815 = vadd.f32 %v1674, %v1785
      %v1816 = vadd.f32 %v1675, %v1790
      %v1817 = vadd.f32 %v1676, %v1795
      %v1818 = vadd.f32 %v1677, %v1800
      %v1819 = vadd.f32 %v1678, %v1805
      %v1820 = vadd.f32 %v1679, %v1810
      %v1821 = vld [vmem:[%s3 + $0x24] sm:$0xf]
      %v1823 = vsel %vm568, %v500, 0
      %v1826 = vsel %vm568, %v501, 0
      %v1829 = vsel %vm568, %v502, 0
      %v1832 = vsel %vm568, %v503, 0
      %v1835 = vsel %vm568, %v504, 0
      %v1838 = vsel %vm568, %v505, 0
      %v1841 = vsel %vm568, %v506, 0
      %v1844 = vsel %vm568, %v507, 0
      %v1847 = vsel %vm593, %v1821, 0
      %1849 = vmatprep.subr.mxu0 0.0
      %1850 = vmatpush1.msra.mxu0 0.0
      %1851 = vmatprep.subr.mxu0 0.0
      %1852 = vmatpush1.msra.mxu0 0.0
      %1853 = vmatprep.subr.mxu0 0.0
      %1854 = vmatpush1.msra.mxu0 0.0
      %1855 = vmatprep.subr.mxu0 0.0
      %1856 = vmatpush1.msra.mxu0 0.0
      %1857 = vmatprep.subr.mxu0 0.0
      %1858 = vmatpush1.msra.mxu0 0.0
      %1859 = vmatprep.subr.mxu0 0.0
      %1860 = vmatpush1.msra.mxu0 0.0
      %1861 = vmatprep.subr.mxu0 0.0
      %1862 = vmatpush1.msra.mxu0 0.0
      %1863 = vmatprep.subr.mxu0 0.0
      %1864 = vmatpush1.msra.mxu0 0.0
      %1865 = vmatprep.subr.mxu0 0.0
      %1866 = vmatpush1.msra.mxu0 0.0
      %1867 = vmatprep.subr.mxu0 0.0
      %1868 = vmatpush1.msra.mxu0 0.0
      %1869 = vmatprep.subr.mxu0 0.0
      %1870 = vmatpush1.msra.mxu0 0.0
      %1871 = vmatprep.subr.mxu0 0.0
      %1872 = vmatpush1.msra.mxu0 0.0
      %1873 = vmatprep.subr.mxu0 0.0
      %1874 = vmatpush1.msra.mxu0 0.0
      %1875 = vmatprep.subr.mxu0 0.0
      %1876 = vmatpush1.msra.mxu0 0.0
      %1877 = vmatprep.subr.mxu0 0.0
      %1878 = vmatpush1.msra.mxu0 0.0
      %1879 = vmatprep.subr.mxu0 0.0
      %1880 = vmatpush1.msra.mxu0 %v1847
      %1881 = vmatprep.subr.mxu0 0.0
      %1882 = vmatpush2.msra.mxu0 0.0
      %1883 = vmatprep.subr.mxu0 0.0
      %1884 = vmatpush2.msra.mxu0 0.0
      %1885 = vmatprep.subr.mxu0 0.0
      %1886 = vmatpush2.msra.mxu0 0.0
      %1887 = vmatprep.subr.mxu0 0.0
      %1888 = vmatpush2.msra.mxu0 0.0
      %1889 = vmatprep.subr.mxu0 0.0
      %1890 = vmatpush2.msra.mxu0 0.0
      %1891 = vmatprep.subr.mxu0 0.0
      %1892 = vmatpush2.msra.mxu0 0.0
      %1893 = vmatprep.subr.mxu0 0.0
      %1894 = vmatpush2.msra.mxu0 0.0
      %1895 = vmatprep.subr.mxu0 0.0
      %1896 = vmatpush2.msra.mxu0 0.0
      %1897 = vmatprep.subr.mxu0 0.0
      %1898 = vmatpush2.msra.mxu0 0.0
      %1899 = vmatprep.subr.mxu0 0.0
      %1900 = vmatpush2.msra.mxu0 0.0
      %1901 = vmatprep.subr.mxu0 0.0
      %1902 = vmatpush2.msra.mxu0 0.0
      %1903 = vmatprep.subr.mxu0 0.0
      %1904 = vmatpush2.msra.mxu0 0.0
      %1905 = vmatprep.subr.mxu0 0.0
      %1906 = vmatpush2.msra.mxu0 0.0
      %1907 = vmatprep.subr.mxu0 0.0
      %1908 = vmatpush2.msra.mxu0 0.0
      %1909 = vmatprep.subr.mxu0 0.0
      %1910 = vmatpush2.msra.mxu0 0.0
      %1911 = vmatprep.subr.mxu0 0.0
      %1912 = vmatpush2.msra.mxu0 0.0
      %1913 = vmatprep.mubr.f32.mxu0 0.0
      %1914 = vmatmul.mubr.f32.gmra.mxu0 %v1823
      %v1915 = vpop.f32.mrf.mxu0
      %v1916 = vadd.f32 0.0, %v1915
      %v1917 = vpop.f32.mrf.mxu0
      %1918 = vmatprep.mubr.f32.mxu0 0.0
      %1919 = vmatmul.mubr.f32.gmra.mxu0 %v1826
      %v1920 = vpop.f32.mrf.mxu0
      %v1921 = vadd.f32 0.0, %v1920
      %v1922 = vpop.f32.mrf.mxu0
      %1923 = vmatprep.mubr.f32.mxu0 0.0
      %1924 = vmatmul.mubr.f32.gmra.mxu0 %v1829
      %v1925 = vpop.f32.mrf.mxu0
      %v1926 = vadd.f32 0.0, %v1925
      %v1927 = vpop.f32.mrf.mxu0
      %1928 = vmatprep.mubr.f32.mxu0 0.0
      %1929 = vmatmul.mubr.f32.gmra.mxu0 %v1832
      %v1930 = vpop.f32.mrf.mxu0
      %v1931 = vadd.f32 0.0, %v1930
      %v1932 = vpop.f32.mrf.mxu0
      %1933 = vmatprep.mubr.f32.mxu0 0.0
      %1934 = vmatmul.mubr.f32.gmra.mxu0 %v1835
      %v1935 = vpop.f32.mrf.mxu0
      %v1936 = vadd.f32 0.0, %v1935
      %v1937 = vpop.f32.mrf.mxu0
      %1938 = vmatprep.mubr.f32.mxu0 0.0
      %1939 = vmatmul.mubr.f32.gmra.mxu0 %v1838
      %v1940 = vpop.f32.mrf.mxu0
      %v1941 = vadd.f32 0.0, %v1940
      %v1942 = vpop.f32.mrf.mxu0
      %1943 = vmatprep.mubr.f32.mxu0 0.0
      %1944 = vmatmul.mubr.f32.gmra.mxu0 %v1841
      %v1945 = vpop.f32.mrf.mxu0
      %v1946 = vadd.f32 0.0, %v1945
      %v1947 = vpop.f32.mrf.mxu0
      %1948 = vmatprep.mubr.f32.mxu0 0.0
      %1949 = vmatmul.mubr.f32.gmra.mxu0 %v1844
      %v1950 = vpop.f32.mrf.mxu0
      %v1951 = vadd.f32 0.0, %v1950
      %v1952 = vpop.f32.mrf.mxu0
      %1953 = vdwg.mxu0
      %v1954 = vadd.f32 %v1813, %v1916
      %v1955 = vadd.f32 %v1814, %v1921
      %v1956 = vadd.f32 %v1815, %v1926
      %v1957 = vadd.f32 %v1816, %v1931
      %v1958 = vadd.f32 %v1817, %v1936
      %v1959 = vadd.f32 %v1818, %v1941
      %v1960 = vadd.f32 %v1819, %v1946
      %v1961 = vadd.f32 %v1820, %v1951
      %v1962 = vld [vmem:[%s3 + $0x28] sm:$0xf]
      %v1964 = vsel %vm568, %v517, 0
      %v1967 = vsel %vm568, %v518, 0
      %v1970 = vsel %vm568, %v519, 0
      %v1973 = vsel %vm568, %v520, 0
      %v1976 = vsel %vm568, %v521, 0
      %v1979 = vsel %vm568, %v522, 0
      %v1982 = vsel %vm568, %v523, 0
      %v1985 = vsel %vm568, %v524, 0
      %v1988 = vsel %vm593, %v1962, 0
      %1990 = vmatprep.subr.mxu0 0.0
      %1991 = vmatpush1.msra.mxu0 0.0
      %1992 = vmatprep.subr.mxu0 0.0
      %1993 = vmatpush1.msra.mxu0 0.0
      %1994 = vmatprep.subr.mxu0 0.0
      %1995 = vmatpush1.msra.mxu0 0.0
      %1996 = vmatprep.subr.mxu0 0.0
      %1997 = vmatpush1.msra.mxu0 0.0
      %1998 = vmatprep.subr.mxu0 0.0
      %1999 = vmatpush1.msra.mxu0 0.0
      %2000 = vmatprep.subr.mxu0 0.0
      %2001 = vmatpush1.msra.mxu0 0.0
      %2002 = vmatprep.subr.mxu0 0.0
      %2003 = vmatpush1.msra.mxu0 0.0
      %2004 = vmatprep.subr.mxu0 0.0
      %2005 = vmatpush1.msra.mxu0 0.0
      %2006 = vmatprep.subr.mxu0 0.0
      %2007 = vmatpush1.msra.mxu0 0.0
      %2008 = vmatprep.subr.mxu0 0.0
      %2009 = vmatpush1.msra.mxu0 0.0
      %2010 = vmatprep.subr.mxu0 0.0
      %2011 = vmatpush1.msra.mxu0 0.0
      %2012 = vmatprep.subr.mxu0 0.0
      %2013 = vmatpush1.msra.mxu0 0.0
      %2014 = vmatprep.subr.mxu0 0.0
      %2015 = vmatpush1.msra.mxu0 0.0
      %2016 = vmatprep.subr.mxu0 0.0
      %2017 = vmatpush1.msra.mxu0 0.0
      %2018 = vmatprep.subr.mxu0 0.0
      %2019 = vmatpush1.msra.mxu0 0.0
      %2020 = vmatprep.subr.mxu0 0.0
      %2021 = vmatpush1.msra.mxu0 %v1988
      %2022 = vmatprep.subr.mxu0 0.0
      %2023 = vmatpush2.msra.mxu0 0.0
      %2024 = vmatprep.subr.mxu0 0.0
      %2025 = vmatpush2.msra.mxu0 0.0
      %2026 = vmatprep.subr.mxu0 0.0
      %2027 = vmatpush2.msra.mxu0 0.0
      %2028 = vmatprep.subr.mxu0 0.0
      %2029 = vmatpush2.msra.mxu0 0.0
      %2030 = vmatprep.subr.mxu0 0.0
      %2031 = vmatpush2.msra.mxu0 0.0
      %2032 = vmatprep.subr.mxu0 0.0
      %2033 = vmatpush2.msra.mxu0 0.0
      %2034 = vmatprep.subr.mxu0 0.0
      %2035 = vmatpush2.msra.mxu0 0.0
      %2036 = vmatprep.subr.mxu0 0.0
      %2037 = vmatpush2.msra.mxu0 0.0
      %2038 = vmatprep.subr.mxu0 0.0
      %2039 = vmatpush2.msra.mxu0 0.0
      %2040 = vmatprep.subr.mxu0 0.0
      %2041 = vmatpush2.msra.mxu0 0.0
      %2042 = vmatprep.subr.mxu0 0.0
      %2043 = vmatpush2.msra.mxu0 0.0
      %2044 = vmatprep.subr.mxu0 0.0
      %2045 = vmatpush2.msra.mxu0 0.0
      %2046 = vmatprep.subr.mxu0 0.0
      %2047 = vmatpush2.msra.mxu0 0.0
      %2048 = vmatprep.subr.mxu0 0.0
      %2049 = vmatpush2.msra.mxu0 0.0
      %2050 = vmatprep.subr.mxu0 0.0
      %2051 = vmatpush2.msra.mxu0 0.0
      %2052 = vmatprep.subr.mxu0 0.0
      %2053 = vmatpush2.msra.mxu0 0.0
      %2054 = vmatprep.mubr.f32.mxu0 0.0
      %2055 = vmatmul.mubr.f32.gmra.mxu0 %v1964
      %v2056 = vpop.f32.mrf.mxu0
      %v2057 = vadd.f32 0.0, %v2056
      %v2058 = vpop.f32.mrf.mxu0
      %2059 = vmatprep.mubr.f32.mxu0 0.0
      %2060 = vmatmul.mubr.f32.gmra.mxu0 %v1967
      %v2061 = vpop.f32.mrf.mxu0
      %v2062 = vadd.f32 0.0, %v2061
      %v2063 = vpop.f32.mrf.mxu0
      %2064 = vmatprep.mubr.f32.mxu0 0.0
      %2065 = vmatmul.mubr.f32.gmra.mxu0 %v1970
      %v2066 = vpop.f32.mrf.mxu0
      %v2067 = vadd.f32 0.0, %v2066
      %v2068 = vpop.f32.mrf.mxu0
      %2069 = vmatprep.mubr.f32.mxu0 0.0
      %2070 = vmatmul.mubr.f32.gmra.mxu0 %v1973
      %v2071 = vpop.f32.mrf.mxu0
      %v2072 = vadd.f32 0.0, %v2071
      %v2073 = vpop.f32.mrf.mxu0
      %2074 = vmatprep.mubr.f32.mxu0 0.0
      %2075 = vmatmul.mubr.f32.gmra.mxu0 %v1976
      %v2076 = vpop.f32.mrf.mxu0
      %v2077 = vadd.f32 0.0, %v2076
      %v2078 = vpop.f32.mrf.mxu0
      %2079 = vmatprep.mubr.f32.mxu0 0.0
      %2080 = vmatmul.mubr.f32.gmra.mxu0 %v1979
      %v2081 = vpop.f32.mrf.mxu0
      %v2082 = vadd.f32 0.0, %v2081
      %v2083 = vpop.f32.mrf.mxu0
      %2084 = vmatprep.mubr.f32.mxu0 0.0
      %2085 = vmatmul.mubr.f32.gmra.mxu0 %v1982
      %v2086 = vpop.f32.mrf.mxu0
      %v2087 = vadd.f32 0.0, %v2086
      %v2088 = vpop.f32.mrf.mxu0
      %2089 = vmatprep.mubr.f32.mxu0 0.0
      %2090 = vmatmul.mubr.f32.gmra.mxu0 %v1985
      %v2091 = vpop.f32.mrf.mxu0
      %v2092 = vadd.f32 0.0, %v2091
      %v2093 = vpop.f32.mrf.mxu0
      %2094 = vdwg.mxu0
      %v2095 = vadd.f32 %v1954, %v2057
      %v2096 = vadd.f32 %v1955, %v2062
      %v2097 = vadd.f32 %v1956, %v2067
      %v2098 = vadd.f32 %v1957, %v2072
      %v2099 = vadd.f32 %v1958, %v2077
      %v2100 = vadd.f32 %v1959, %v2082
      %v2101 = vadd.f32 %v1960, %v2087
      %v2102 = vadd.f32 %v1961, %v2092
      %v2103 = vld [vmem:[%s3 + $0x2c] sm:$0xf]
      %v2105 = vsel %vm568, %v525, 0
      %v2108 = vsel %vm568, %v526, 0
      %v2111 = vsel %vm568, %v527, 0
      %v2114 = vsel %vm568, %v528, 0
      %v2117 = vsel %vm568, %v529, 0
      %v2120 = vsel %vm568, %v530, 0
      %v2123 = vsel %vm568, %v531, 0
      %v2126 = vsel %vm568, %v532, 0
      %v2129 = vsel %vm593, %v2103, 0
      %2131 = vmatprep.subr.mxu0 0.0
      %2132 = vmatpush1.msra.mxu0 0.0
      %2133 = vmatprep.subr.mxu0 0.0
      %2134 = vmatpush1.msra.mxu0 0.0
      %2135 = vmatprep.subr.mxu0 0.0
      %2136 = vmatpush1.msra.mxu0 0.0
      %2137 = vmatprep.subr.mxu0 0.0
      %2138 = vmatpush1.msra.mxu0 0.0
      %2139 = vmatprep.subr.mxu0 0.0
      %2140 = vmatpush1.msra.mxu0 0.0
      %2141 = vmatprep.subr.mxu0 0.0
      %2142 = vmatpush1.msra.mxu0 0.0
      %2143 = vmatprep.subr.mxu0 0.0
      %2144 = vmatpush1.msra.mxu0 0.0
      %2145 = vmatprep.subr.mxu0 0.0
      %2146 = vmatpush1.msra.mxu0 0.0
      %2147 = vmatprep.subr.mxu0 0.0
      %2148 = vmatpush1.msra.mxu0 0.0
      %2149 = vmatprep.subr.mxu0 0.0
      %2150 = vmatpush1.msra.mxu0 0.0
      %2151 = vmatprep.subr.mxu0 0.0
      %2152 = vmatpush1.msra.mxu0 0.0
      %2153 = vmatprep.subr.mxu0 0.0
      %2154 = vmatpush1.msra.mxu0 0.0
      %2155 = vmatprep.subr.mxu0 0.0
      %2156 = vmatpush1.msra.mxu0 0.0
      %2157 = vmatprep.subr.mxu0 0.0
      %2158 = vmatpush1.msra.mxu0 0.0
      %2159 = vmatprep.subr.mxu0 0.0
      %2160 = vmatpush1.msra.mxu0 0.0
      %2161 = vmatprep.subr.mxu0 0.0
      %2162 = vmatpush1.msra.mxu0 %v2129
      %2163 = vmatprep.subr.mxu0 0.0
      %2164 = vmatpush2.msra.mxu0 0.0
      %2165 = vmatprep.subr.mxu0 0.0
      %2166 = vmatpush2.msra.mxu0 0.0
      %2167 = vmatprep.subr.mxu0 0.0
      %2168 = vmatpush2.msra.mxu0 0.0
      %2169 = vmatprep.subr.mxu0 0.0
      %2170 = vmatpush2.msra.mxu0 0.0
      %2171 = vmatprep.subr.mxu0 0.0
      %2172 = vmatpush2.msra.mxu0 0.0
      %2173 = vmatprep.subr.mxu0 0.0
      %2174 = vmatpush2.msra.mxu0 0.0
      %2175 = vmatprep.subr.mxu0 0.0
      %2176 = vmatpush2.msra.mxu0 0.0
      %2177 = vmatprep.subr.mxu0 0.0
      %2178 = vmatpush2.msra.mxu0 0.0
      %2179 = vmatprep.subr.mxu0 0.0
      %2180 = vmatpush2.msra.mxu0 0.0
      %2181 = vmatprep.subr.mxu0 0.0
      %2182 = vmatpush2.msra.mxu0 0.0
      %2183 = vmatprep.subr.mxu0 0.0
      %2184 = vmatpush2.msra.mxu0 0.0
      %2185 = vmatprep.subr.mxu0 0.0
      %2186 = vmatpush2.msra.mxu0 0.0
      %2187 = vmatprep.subr.mxu0 0.0
      %2188 = vmatpush2.msra.mxu0 0.0
      %2189 = vmatprep.subr.mxu0 0.0
      %2190 = vmatpush2.msra.mxu0 0.0
      %2191 = vmatprep.subr.mxu0 0.0
      %2192 = vmatpush2.msra.mxu0 0.0
      %2193 = vmatprep.subr.mxu0 0.0
      %2194 = vmatpush2.msra.mxu0 0.0
      %2195 = vmatprep.mubr.f32.mxu0 0.0
      %2196 = vmatmul.mubr.f32.gmra.mxu0 %v2105
      %v2197 = vpop.f32.mrf.mxu0
      %v2198 = vadd.f32 0.0, %v2197
      %v2199 = vpop.f32.mrf.mxu0
      %2200 = vmatprep.mubr.f32.mxu0 0.0
      %2201 = vmatmul.mubr.f32.gmra.mxu0 %v2108
      %v2202 = vpop.f32.mrf.mxu0
      %v2203 = vadd.f32 0.0, %v2202
      %v2204 = vpop.f32.mrf.mxu0
      %2205 = vmatprep.mubr.f32.mxu0 0.0
      %2206 = vmatmul.mubr.f32.gmra.mxu0 %v2111
      %v2207 = vpop.f32.mrf.mxu0
      %v2208 = vadd.f32 0.0, %v2207
      %v2209 = vpop.f32.mrf.mxu0
      %2210 = vmatprep.mubr.f32.mxu0 0.0
      %2211 = vmatmul.mubr.f32.gmra.mxu0 %v2114
      %v2212 = vpop.f32.mrf.mxu0
      %v2213 = vadd.f32 0.0, %v2212
      %v2214 = vpop.f32.mrf.mxu0
      %2215 = vmatprep.mubr.f32.mxu0 0.0
      %2216 = vmatmul.mubr.f32.gmra.mxu0 %v2117
      %v2217 = vpop.f32.mrf.mxu0
      %v2218 = vadd.f32 0.0, %v2217
      %v2219 = vpop.f32.mrf.mxu0
      %2220 = vmatprep.mubr.f32.mxu0 0.0
      %2221 = vmatmul.mubr.f32.gmra.mxu0 %v2120
      %v2222 = vpop.f32.mrf.mxu0
      %v2223 = vadd.f32 0.0, %v2222
      %v2224 = vpop.f32.mrf.mxu0
      %2225 = vmatprep.mubr.f32.mxu0 0.0
      %2226 = vmatmul.mubr.f32.gmra.mxu0 %v2123
      %v2227 = vpop.f32.mrf.mxu0
      %v2228 = vadd.f32 0.0, %v2227
      %v2229 = vpop.f32.mrf.mxu0
      %2230 = vmatprep.mubr.f32.mxu0 0.0
      %2231 = vmatmul.mubr.f32.gmra.mxu0 %v2126
      %v2232 = vpop.f32.mrf.mxu0
      %v2233 = vadd.f32 0.0, %v2232
      %v2234 = vpop.f32.mrf.mxu0
      %2235 = vdwg.mxu0
      %v2236 = vadd.f32 %v2095, %v2198
      %v2237 = vadd.f32 %v2096, %v2203
      %v2238 = vadd.f32 %v2097, %v2208
      %v2239 = vadd.f32 %v2098, %v2213
      %v2240 = vadd.f32 %v2099, %v2218
      %v2241 = vadd.f32 %v2100, %v2223
      %v2242 = vadd.f32 %v2101, %v2228
      %v2243 = vadd.f32 %v2102, %v2233
      %v2245 = vlaneseq
      %v2246 = vshrl.u32 %v2245, 7
      %v2247 = vsub.s32 0, %v2246
      %v2248 = vrot.slane %v343, %v2247
      %v2250 = vadd.f32 %v2236, %v2248
      %v2251 = vadd.f32 %v2237, %v2248
      %v2252 = vadd.f32 %v2238, %v2248
      %v2253 = vadd.f32 %v2239, %v2248
      %v2254 = vadd.f32 %v2240, %v2248
      %v2255 = vadd.f32 %v2241, %v2248
      %v2256 = vadd.f32 %v2242, %v2248
      %v2257 = vadd.f32 %v2243, %v2248
      %2258 = vst.msk [vmem:[%s342] sm:$0xff] %vm568, %v2250
      %2259 = vst.msk [vmem:[%s342 + $0x10] sm:$0xff] %vm568, %v2251
      %2260 = vst.msk [vmem:[%s342 + $0x20] sm:$0xff] %vm568, %v2252
      %2261 = vst.msk [vmem:[%s342 + $0x30] sm:$0xff] %vm568, %v2253
      %2262 = vst.msk [vmem:[%s342 + $0x40] sm:$0xff] %vm568, %v2254
      %2263 = vst.msk [vmem:[%s342 + $0x50] sm:$0xff] %vm568, %v2255
      %2264 = vst.msk [vmem:[%s342 + $0x60] sm:$0xff] %vm568, %v2256
      %2265 = vst.msk [vmem:[%s342 + $0x70] sm:$0xff] %vm568, %v2257
      %v2266 = vld [vmem:[%s3 + $0x30] sm:$0xf]
      %v2267 = vld [vmem:[%s3 + $0x34] sm:$0xf]
      %v2269 = vsel %vm568, %v360, 0
      %v2272 = vsel %vm568, %v361, 0
      %v2275 = vsel %vm568, %v362, 0
      %v2278 = vsel %vm568, %v363, 0
      %v2281 = vsel %vm568, %v364, 0
      %v2284 = vsel %vm568, %v365, 0
      %v2287 = vsel %vm568, %v366, 0
      %v2290 = vsel %vm568, %v367, 0
      %v2293 = vsel %vm593, %v2267, 0
      %2295 = vmatprep.subr.mxu0 0.0
      %2296 = vmatpush1.msra.mxu0 0.0
      %2297 = vmatprep.subr.mxu0 0.0
      %2298 = vmatpush1.msra.mxu0 0.0
      %2299 = vmatprep.subr.mxu0 0.0
      %2300 = vmatpush1.msra.mxu0 0.0
      %2301 = vmatprep.subr.mxu0 0.0
      %2302 = vmatpush1.msra.mxu0 0.0
      %2303 = vmatprep.subr.mxu0 0.0
      %2304 = vmatpush1.msra.mxu0 0.0
      %2305 = vmatprep.subr.mxu0 0.0
      %2306 = vmatpush1.msra.mxu0 0.0
      %2307 = vmatprep.subr.mxu0 0.0
      %2308 = vmatpush1.msra.mxu0 0.0
      %2309 = vmatprep.subr.mxu0 0.0
      %2310 = vmatpush1.msra.mxu0 0.0
      %2311 = vmatprep.subr.mxu0 0.0
      %2312 = vmatpush1.msra.mxu0 0.0
      %2313 = vmatprep.subr.mxu0 0.0
      %2314 = vmatpush1.msra.mxu0 0.0
      %2315 = vmatprep.subr.mxu0 0.0
      %2316 = vmatpush1.msra.mxu0 0.0
      %2317 = vmatprep.subr.mxu0 0.0
      %2318 = vmatpush1.msra.mxu0 0.0
      %2319 = vmatprep.subr.mxu0 0.0
      %2320 = vmatpush1.msra.mxu0 0.0
      %2321 = vmatprep.subr.mxu0 0.0
      %2322 = vmatpush1.msra.mxu0 0.0
      %2323 = vmatprep.subr.mxu0 0.0
      %2324 = vmatpush1.msra.mxu0 0.0
      %2325 = vmatprep.subr.mxu0 0.0
      %2326 = vmatpush1.msra.mxu0 %v2293
      %2327 = vmatprep.subr.mxu0 0.0
      %2328 = vmatpush2.msra.mxu0 0.0
      %2329 = vmatprep.subr.mxu0 0.0
      %2330 = vmatpush2.msra.mxu0 0.0
      %2331 = vmatprep.subr.mxu0 0.0
      %2332 = vmatpush2.msra.mxu0 0.0
      %2333 = vmatprep.subr.mxu0 0.0
      %2334 = vmatpush2.msra.mxu0 0.0
      %2335 = vmatprep.subr.mxu0 0.0
      %2336 = vmatpush2.msra.mxu0 0.0
      %2337 = vmatprep.subr.mxu0 0.0
      %2338 = vmatpush2.msra.mxu0 0.0
      %2339 = vmatprep.subr.mxu0 0.0
      %2340 = vmatpush2.msra.mxu0 0.0
      %2341 = vmatprep.subr.mxu0 0.0
      %2342 = vmatpush2.msra.mxu0 0.0
      %2343 = vmatprep.subr.mxu0 0.0
      %2344 = vmatpush2.msra.mxu0 0.0
      %2345 = vmatprep.subr.mxu0 0.0
      %2346 = vmatpush2.msra.mxu0 0.0
      %2347 = vmatprep.subr.mxu0 0.0
      %2348 = vmatpush2.msra.mxu0 0.0
      %2349 = vmatprep.subr.mxu0 0.0
      %2350 = vmatpush2.msra.mxu0 0.0
      %2351 = vmatprep.subr.mxu0 0.0
      %2352 = vmatpush2.msra.mxu0 0.0
      %2353 = vmatprep.subr.mxu0 0.0
      %2354 = vmatpush2.msra.mxu0 0.0
      %2355 = vmatprep.subr.mxu0 0.0
      %2356 = vmatpush2.msra.mxu0 0.0
      %2357 = vmatprep.subr.mxu0 0.0
      %2358 = vmatpush2.msra.mxu0 0.0
      %2359 = vmatprep.mubr.f32.mxu0 0.0
      %2360 = vmatmul.mubr.f32.gmra.mxu0 %v2269
      %v2361 = vpop.f32.mrf.mxu0
      %v2362 = vadd.f32 0.0, %v2361
      %v2363 = vpop.f32.mrf.mxu0
      %2364 = vmatprep.mubr.f32.mxu0 0.0
      %2365 = vmatmul.mubr.f32.gmra.mxu0 %v2272
      %v2366 = vpop.f32.mrf.mxu0
      %v2367 = vadd.f32 0.0, %v2366
      %v2368 = vpop.f32.mrf.mxu0
      %2369 = vmatprep.mubr.f32.mxu0 0.0
      %2370 = vmatmul.mubr.f32.gmra.mxu0 %v2275
      %v2371 = vpop.f32.mrf.mxu0
      %v2372 = vadd.f32 0.0, %v2371
      %v2373 = vpop.f32.mrf.mxu0
      %2374 = vmatprep.mubr.f32.mxu0 0.0
      %2375 = vmatmul.mubr.f32.gmra.mxu0 %v2278
      %v2376 = vpop.f32.mrf.mxu0
      %v2377 = vadd.f32 0.0, %v2376
      %v2378 = vpop.f32.mrf.mxu0
      %2379 = vmatprep.mubr.f32.mxu0 0.0
      %2380 = vmatmul.mubr.f32.gmra.mxu0 %v2281
      %v2381 = vpop.f32.mrf.mxu0
      %v2382 = vadd.f32 0.0, %v2381
      %v2383 = vpop.f32.mrf.mxu0
      %2384 = vmatprep.mubr.f32.mxu0 0.0
      %2385 = vmatmul.mubr.f32.gmra.mxu0 %v2284
      %v2386 = vpop.f32.mrf.mxu0
      %v2387 = vadd.f32 0.0, %v2386
      %v2388 = vpop.f32.mrf.mxu0
      %2389 = vmatprep.mubr.f32.mxu0 0.0
      %2390 = vmatmul.mubr.f32.gmra.mxu0 %v2287
      %v2391 = vpop.f32.mrf.mxu0
      %v2392 = vadd.f32 0.0, %v2391
      %v2393 = vpop.f32.mrf.mxu0
      %2394 = vmatprep.mubr.f32.mxu0 0.0
      %2395 = vmatmul.mubr.f32.gmra.mxu0 %v2290
      %v2396 = vpop.f32.mrf.mxu0
      %v2397 = vadd.f32 0.0, %v2396
      %v2398 = vpop.f32.mrf.mxu0
      %2399 = vdwg.mxu0
      %v2401 = vsel %vm593, %v2266, 0
      %2403 = vmatprep.subr.mxu0 0.0
      %2404 = vmatpush1.msra.mxu0 0.0
      %2405 = vmatprep.subr.mxu0 0.0
      %2406 = vmatpush1.msra.mxu0 0.0
      %2407 = vmatprep.subr.mxu0 0.0
      %2408 = vmatpush1.msra.mxu0 0.0
      %2409 = vmatprep.subr.mxu0 0.0
      %2410 = vmatpush1.msra.mxu0 0.0
      %2411 = vmatprep.subr.mxu0 0.0
      %2412 = vmatpush1.msra.mxu0 0.0
      %2413 = vmatprep.subr.mxu0 0.0
      %2414 = vmatpush1.msra.mxu0 0.0
      %2415 = vmatprep.subr.mxu0 0.0
      %2416 = vmatpush1.msra.mxu0 0.0
      %2417 = vmatprep.subr.mxu0 0.0
      %2418 = vmatpush1.msra.mxu0 0.0
      %2419 = vmatprep.subr.mxu0 0.0
      %2420 = vmatpush1.msra.mxu0 0.0
      %2421 = vmatprep.subr.mxu0 0.0
      %2422 = vmatpush1.msra.mxu0 0.0
      %2423 = vmatprep.subr.mxu0 0.0
      %2424 = vmatpush1.msra.mxu0 0.0
      %2425 = vmatprep.subr.mxu0 0.0
      %2426 = vmatpush1.msra.mxu0 0.0
      %2427 = vmatprep.subr.mxu0 0.0
      %2428 = vmatpush1.msra.mxu0 0.0
      %2429 = vmatprep.subr.mxu0 0.0
      %2430 = vmatpush1.msra.mxu0 0.0
      %2431 = vmatprep.subr.mxu0 0.0
      %2432 = vmatpush1.msra.mxu0 0.0
      %2433 = vmatprep.subr.mxu0 0.0
      %2434 = vmatpush1.msra.mxu0 %v2401
      %2435 = vmatprep.subr.mxu0 0.0
      %2436 = vmatpush2.msra.mxu0 0.0
      %2437 = vmatprep.subr.mxu0 0.0
      %2438 = vmatpush2.msra.mxu0 0.0
      %2439 = vmatprep.subr.mxu0 0.0
      %2440 = vmatpush2.msra.mxu0 0.0
      %2441 = vmatprep.subr.mxu0 0.0
      %2442 = vmatpush2.msra.mxu0 0.0
      %2443 = vmatprep.subr.mxu0 0.0
      %2444 = vmatpush2.msra.mxu0 0.0
      %2445 = vmatprep.subr.mxu0 0.0
      %2446 = vmatpush2.msra.mxu0 0.0
      %2447 = vmatprep.subr.mxu0 0.0
      %2448 = vmatpush2.msra.mxu0 0.0
      %2449 = vmatprep.subr.mxu0 0.0
      %2450 = vmatpush2.msra.mxu0 0.0
      %2451 = vmatprep.subr.mxu0 0.0
      %2452 = vmatpush2.msra.mxu0 0.0
      %2453 = vmatprep.subr.mxu0 0.0
      %2454 = vmatpush2.msra.mxu0 0.0
      %2455 = vmatprep.subr.mxu0 0.0
      %2456 = vmatpush2.msra.mxu0 0.0
      %2457 = vmatprep.subr.mxu0 0.0
      %2458 = vmatpush2.msra.mxu0 0.0
      %2459 = vmatprep.subr.mxu0 0.0
      %2460 = vmatpush2.msra.mxu0 0.0
      %2461 = vmatprep.subr.mxu0 0.0
      %2462 = vmatpush2.msra.mxu0 0.0
      %2463 = vmatprep.subr.mxu0 0.0
      %2464 = vmatpush2.msra.mxu0 0.0
      %2465 = vmatprep.subr.mxu0 0.0
      %2466 = vmatpush2.msra.mxu0 0.0
      %2467 = vmatprep.mubr.f32.mxu0 0.0
      %2468 = vmatmul.mubr.f32.gmra.mxu0 %v570
      %v2469 = vpop.f32.mrf.mxu0
      %v2470 = vadd.f32 %v2362, %v2469
      %v2471 = vpop.f32.mrf.mxu0
      %2472 = vmatprep.mubr.f32.mxu0 0.0
      %2473 = vmatmul.mubr.f32.gmra.mxu0 %v573
      %v2474 = vpop.f32.mrf.mxu0
      %v2475 = vadd.f32 %v2367, %v2474
      %v2476 = vpop.f32.mrf.mxu0
      %2477 = vmatprep.mubr.f32.mxu0 0.0
      %2478 = vmatmul.mubr.f32.gmra.mxu0 %v576
      %v2479 = vpop.f32.mrf.mxu0
      %v2480 = vadd.f32 %v2372, %v2479
      %v2481 = vpop.f32.mrf.mxu0
      %2482 = vmatprep.mubr.f32.mxu0 0.0
      %2483 = vmatmul.mubr.f32.gmra.mxu0 %v579
      %v2484 = vpop.f32.mrf.mxu0
      %v2485 = vadd.f32 %v2377, %v2484
      %v2486 = vpop.f32.mrf.mxu0
      %2487 = vmatprep.mubr.f32.mxu0 0.0
      %2488 = vmatmul.mubr.f32.gmra.mxu0 %v582
      %v2489 = vpop.f32.mrf.mxu0
      %v2490 = vadd.f32 %v2382, %v2489
      %v2491 = vpop.f32.mrf.mxu0
      %2492 = vmatprep.mubr.f32.mxu0 0.0
      %2493 = vmatmul.mubr.f32.gmra.mxu0 %v585
      %v2494 = vpop.f32.mrf.mxu0
      %v2495 = vadd.f32 %v2387, %v2494
      %v2496 = vpop.f32.mrf.mxu0
      %2497 = vmatprep.mubr.f32.mxu0 0.0
      %2498 = vmatmul.mubr.f32.gmra.mxu0 %v588
      %v2499 = vpop.f32.mrf.mxu0
      %v2500 = vadd.f32 %v2392, %v2499
      %v2501 = vpop.f32.mrf.mxu0
      %2502 = vmatprep.mubr.f32.mxu0 0.0
      %2503 = vmatmul.mubr.f32.gmra.mxu0 %v591
      %v2504 = vpop.f32.mrf.mxu0
      %v2505 = vadd.f32 %v2397, %v2504
      %v2506 = vpop.f32.mrf.mxu0
      %2507 = vdwg.mxu0
      %v2508 = vld [vmem:[%s3 + $0x38] sm:$0xf]
      %v2510 = vsel %vm593, %v2508, 0
      %2512 = vmatprep.subr.mxu0 0.0
      %2513 = vmatpush1.msra.mxu0 0.0
      %2514 = vmatprep.subr.mxu0 0.0
      %2515 = vmatpush1.msra.mxu0 0.0
      %2516 = vmatprep.subr.mxu0 0.0
      %2517 = vmatpush1.msra.mxu0 0.0
      %2518 = vmatprep.subr.mxu0 0.0
      %2519 = vmatpush1.msra.mxu0 0.0
      %2520 = vmatprep.subr.mxu0 0.0
      %2521 = vmatpush1.msra.mxu0 0.0
      %2522 = vmatprep.subr.mxu0 0.0
      %2523 = vmatpush1.msra.mxu0 0.0
      %2524 = vmatprep.subr.mxu0 0.0
      %2525 = vmatpush1.msra.mxu0 0.0
      %2526 = vmatprep.subr.mxu0 0.0
      %2527 = vmatpush1.msra.mxu0 0.0
      %2528 = vmatprep.subr.mxu0 0.0
      %2529 = vmatpush1.msra.mxu0 0.0
      %2530 = vmatprep.subr.mxu0 0.0
      %2531 = vmatpush1.msra.mxu0 0.0
      %2532 = vmatprep.subr.mxu0 0.0
      %2533 = vmatpush1.msra.mxu0 0.0
      %2534 = vmatprep.subr.mxu0 0.0
      %2535 = vmatpush1.msra.mxu0 0.0
      %2536 = vmatprep.subr.mxu0 0.0
      %2537 = vmatpush1.msra.mxu0 0.0
      %2538 = vmatprep.subr.mxu0 0.0
      %2539 = vmatpush1.msra.mxu0 0.0
      %2540 = vmatprep.subr.mxu0 0.0
      %2541 = vmatpush1.msra.mxu0 0.0
      %2542 = vmatprep.subr.mxu0 0.0
      %2543 = vmatpush1.msra.mxu0 %v2510
      %2544 = vmatprep.subr.mxu0 0.0
      %2545 = vmatpush2.msra.mxu0 0.0
      %2546 = vmatprep.subr.mxu0 0.0
      %2547 = vmatpush2.msra.mxu0 0.0
      %2548 = vmatprep.subr.mxu0 0.0
      %2549 = vmatpush2.msra.mxu0 0.0
      %2550 = vmatprep.subr.mxu0 0.0
      %2551 = vmatpush2.msra.mxu0 0.0
      %2552 = vmatprep.subr.mxu0 0.0
      %2553 = vmatpush2.msra.mxu0 0.0
      %2554 = vmatprep.subr.mxu0 0.0
      %2555 = vmatpush2.msra.mxu0 0.0
      %2556 = vmatprep.subr.mxu0 0.0
      %2557 = vmatpush2.msra.mxu0 0.0
      %2558 = vmatprep.subr.mxu0 0.0
      %2559 = vmatpush2.msra.mxu0 0.0
      %2560 = vmatprep.subr.mxu0 0.0
      %2561 = vmatpush2.msra.mxu0 0.0
      %2562 = vmatprep.subr.mxu0 0.0
      %2563 = vmatpush2.msra.mxu0 0.0
      %2564 = vmatprep.subr.mxu0 0.0
      %2565 = vmatpush2.msra.mxu0 0.0
      %2566 = vmatprep.subr.mxu0 0.0
      %2567 = vmatpush2.msra.mxu0 0.0
      %2568 = vmatprep.subr.mxu0 0.0
      %2569 = vmatpush2.msra.mxu0 0.0
      %2570 = vmatprep.subr.mxu0 0.0
      %2571 = vmatpush2.msra.mxu0 0.0
      %2572 = vmatprep.subr.mxu0 0.0
      %2573 = vmatpush2.msra.mxu0 0.0
      %2574 = vmatprep.subr.mxu0 0.0
      %2575 = vmatpush2.msra.mxu0 0.0
      %2576 = vmatprep.mubr.f32.mxu0 0.0
      %2577 = vmatmul.mubr.f32.gmra.mxu0 %v977
      %v2578 = vpop.f32.mrf.mxu0
      %v2579 = vadd.f32 0.0, %v2578
      %v2580 = vpop.f32.mrf.mxu0
      %2581 = vmatprep.mubr.f32.mxu0 0.0
      %2582 = vmatmul.mubr.f32.gmra.mxu0 %v980
      %v2583 = vpop.f32.mrf.mxu0
      %v2584 = vadd.f32 0.0, %v2583
      %v2585 = vpop.f32.mrf.mxu0
      %2586 = vmatprep.mubr.f32.mxu0 0.0
      %2587 = vmatmul.mubr.f32.gmra.mxu0 %v983
      %v2588 = vpop.f32.mrf.mxu0
      %v2589 = vadd.f32 0.0, %v2588
      %v2590 = vpop.f32.mrf.mxu0
      %2591 = vmatprep.mubr.f32.mxu0 0.0
      %2592 = vmatmul.mubr.f32.gmra.mxu0 %v986
      %v2593 = vpop.f32.mrf.mxu0
      %v2594 = vadd.f32 0.0, %v2593
      %v2595 = vpop.f32.mrf.mxu0
      %2596 = vmatprep.mubr.f32.mxu0 0.0
      %2597 = vmatmul.mubr.f32.gmra.mxu0 %v989
      %v2598 = vpop.f32.mrf.mxu0
      %v2599 = vadd.f32 0.0, %v2598
      %v2600 = vpop.f32.mrf.mxu0
      %2601 = vmatprep.mubr.f32.mxu0 0.0
      %2602 = vmatmul.mubr.f32.gmra.mxu0 %v992
      %v2603 = vpop.f32.mrf.mxu0
      %v2604 = vadd.f32 0.0, %v2603
      %v2605 = vpop.f32.mrf.mxu0
      %2606 = vmatprep.mubr.f32.mxu0 0.0
      %2607 = vmatmul.mubr.f32.gmra.mxu0 %v995
      %v2608 = vpop.f32.mrf.mxu0
      %v2609 = vadd.f32 0.0, %v2608
      %v2610 = vpop.f32.mrf.mxu0
      %2611 = vmatprep.mubr.f32.mxu0 0.0
      %2612 = vmatmul.mubr.f32.gmra.mxu0 %v998
      %v2613 = vpop.f32.mrf.mxu0
      %v2614 = vadd.f32 0.0, %v2613
      %v2615 = vpop.f32.mrf.mxu0
      %2616 = vdwg.mxu0
      %v2617 = vadd.f32 %v2470, %v2579
      %v2618 = vadd.f32 %v2475, %v2584
      %v2619 = vadd.f32 %v2480, %v2589
      %v2620 = vadd.f32 %v2485, %v2594
      %v2621 = vadd.f32 %v2490, %v2599
      %v2622 = vadd.f32 %v2495, %v2604
      %v2623 = vadd.f32 %v2500, %v2609
      %v2624 = vadd.f32 %v2505, %v2614
      %v2625 = vld [vmem:[%s3 + $0x3c] sm:$0xf]
      %v2627 = vsel %vm568, %v385, 0
      %v2630 = vsel %vm568, %v386, 0
      %v2633 = vsel %vm568, %v387, 0
      %v2636 = vsel %vm568, %v388, 0
      %v2639 = vsel %vm568, %v389, 0
      %v2642 = vsel %vm568, %v390, 0
      %v2645 = vsel %vm568, %v391, 0
      %v2648 = vsel %vm568, %v392, 0
      %v2651 = vsel %vm593, %v2625, 0
      %2653 = vmatprep.subr.mxu0 0.0
      %2654 = vmatpush1.msra.mxu0 0.0
      %2655 = vmatprep.subr.mxu0 0.0
      %2656 = vmatpush1.msra.mxu0 0.0
      %2657 = vmatprep.subr.mxu0 0.0
      %2658 = vmatpush1.msra.mxu0 0.0
      %2659 = vmatprep.subr.mxu0 0.0
      %2660 = vmatpush1.msra.mxu0 0.0
      %2661 = vmatprep.subr.mxu0 0.0
      %2662 = vmatpush1.msra.mxu0 0.0
      %2663 = vmatprep.subr.mxu0 0.0
      %2664 = vmatpush1.msra.mxu0 0.0
      %2665 = vmatprep.subr.mxu0 0.0
      %2666 = vmatpush1.msra.mxu0 0.0
      %2667 = vmatprep.subr.mxu0 0.0
      %2668 = vmatpush1.msra.mxu0 0.0
      %2669 = vmatprep.subr.mxu0 0.0
      %2670 = vmatpush1.msra.mxu0 0.0
      %2671 = vmatprep.subr.mxu0 0.0
      %2672 = vmatpush1.msra.mxu0 0.0
      %2673 = vmatprep.subr.mxu0 0.0
      %2674 = vmatpush1.msra.mxu0 0.0
      %2675 = vmatprep.subr.mxu0 0.0
      %2676 = vmatpush1.msra.mxu0 0.0
      %2677 = vmatprep.subr.mxu0 0.0
      %2678 = vmatpush1.msra.mxu0 0.0
      %2679 = vmatprep.subr.mxu0 0.0
      %2680 = vmatpush1.msra.mxu0 0.0
      %2681 = vmatprep.subr.mxu0 0.0
      %2682 = vmatpush1.msra.mxu0 0.0
      %2683 = vmatprep.subr.mxu0 0.0
      %2684 = vmatpush1.msra.mxu0 %v2651
      %2685 = vmatprep.subr.mxu0 0.0
      %2686 = vmatpush2.msra.mxu0 0.0
      %2687 = vmatprep.subr.mxu0 0.0
      %2688 = vmatpush2.msra.mxu0 0.0
      %2689 = vmatprep.subr.mxu0 0.0
      %2690 = vmatpush2.msra.mxu0 0.0
      %2691 = vmatprep.subr.mxu0 0.0
      %2692 = vmatpush2.msra.mxu0 0.0
      %2693 = vmatprep.subr.mxu0 0.0
      %2694 = vmatpush2.msra.mxu0 0.0
      %2695 = vmatprep.subr.mxu0 0.0
      %2696 = vmatpush2.msra.mxu0 0.0
      %2697 = vmatprep.subr.mxu0 0.0
      %2698 = vmatpush2.msra.mxu0 0.0
      %2699 = vmatprep.subr.mxu0 0.0
      %2700 = vmatpush2.msra.mxu0 0.0
      %2701 = vmatprep.subr.mxu0 0.0
      %2702 = vmatpush2.msra.mxu0 0.0
      %2703 = vmatprep.subr.mxu0 0.0
      %2704 = vmatpush2.msra.mxu0 0.0
      %2705 = vmatprep.subr.mxu0 0.0
      %2706 = vmatpush2.msra.mxu0 0.0
      %2707 = vmatprep.subr.mxu0 0.0
      %2708 = vmatpush2.msra.mxu0 0.0
      %2709 = vmatprep.subr.mxu0 0.0
      %2710 = vmatpush2.msra.mxu0 0.0
      %2711 = vmatprep.subr.mxu0 0.0
      %2712 = vmatpush2.msra.mxu0 0.0
      %2713 = vmatprep.subr.mxu0 0.0
      %2714 = vmatpush2.msra.mxu0 0.0
      %2715 = vmatprep.subr.mxu0 0.0
      %2716 = vmatpush2.msra.mxu0 0.0
      %2717 = vmatprep.mubr.f32.mxu0 0.0
      %2718 = vmatmul.mubr.f32.gmra.mxu0 %v2627
      %v2719 = vpop.f32.mrf.mxu0
      %v2720 = vadd.f32 0.0, %v2719
      %v2721 = vpop.f32.mrf.mxu0
      %2722 = vmatprep.mubr.f32.mxu0 0.0
      %2723 = vmatmul.mubr.f32.gmra.mxu0 %v2630
      %v2724 = vpop.f32.mrf.mxu0
      %v2725 = vadd.f32 0.0, %v2724
      %v2726 = vpop.f32.mrf.mxu0
      %2727 = vmatprep.mubr.f32.mxu0 0.0
      %2728 = vmatmul.mubr.f32.gmra.mxu0 %v2633
      %v2729 = vpop.f32.mrf.mxu0
      %v2730 = vadd.f32 0.0, %v2729
      %v2731 = vpop.f32.mrf.mxu0
      %2732 = vmatprep.mubr.f32.mxu0 0.0
      %2733 = vmatmul.mubr.f32.gmra.mxu0 %v2636
      %v2734 = vpop.f32.mrf.mxu0
      %v2735 = vadd.f32 0.0, %v2734
      %v2736 = vpop.f32.mrf.mxu0
      %2737 = vmatprep.mubr.f32.mxu0 0.0
      %2738 = vmatmul.mubr.f32.gmra.mxu0 %v2639
      %v2739 = vpop.f32.mrf.mxu0
      %v2740 = vadd.f32 0.0, %v2739
      %v2741 = vpop.f32.mrf.mxu0
      %2742 = vmatprep.mubr.f32.mxu0 0.0
      %2743 = vmatmul.mubr.f32.gmra.mxu0 %v2642
      %v2744 = vpop.f32.mrf.mxu0
      %v2745 = vadd.f32 0.0, %v2744
      %v2746 = vpop.f32.mrf.mxu0
      %2747 = vmatprep.mubr.f32.mxu0 0.0
      %2748 = vmatmul.mubr.f32.gmra.mxu0 %v2645
      %v2749 = vpop.f32.mrf.mxu0
      %v2750 = vadd.f32 0.0, %v2749
      %v2751 = vpop.f32.mrf.mxu0
      %2752 = vmatprep.mubr.f32.mxu0 0.0
      %2753 = vmatmul.mubr.f32.gmra.mxu0 %v2648
      %v2754 = vpop.f32.mrf.mxu0
      %v2755 = vadd.f32 0.0, %v2754
      %v2756 = vpop.f32.mrf.mxu0
      %2757 = vdwg.mxu0
      %v2758 = vadd.f32 %v2617, %v2720
      %v2759 = vadd.f32 %v2618, %v2725
      %v2760 = vadd.f32 %v2619, %v2730
      %v2761 = vadd.f32 %v2620, %v2735
      %v2762 = vadd.f32 %v2621, %v2740
      %v2763 = vadd.f32 %v2622, %v2745
      %v2764 = vadd.f32 %v2623, %v2750
      %v2765 = vadd.f32 %v2624, %v2755
      %v2766 = vld [vmem:[%s3 + $0x40] sm:$0xf]
      %v2768 = vsel %vm593, %v2766, 0
      %2770 = vmatprep.subr.mxu0 0.0
      %2771 = vmatpush1.msra.mxu0 0.0
      %2772 = vmatprep.subr.mxu0 0.0
      %2773 = vmatpush1.msra.mxu0 0.0
      %2774 = vmatprep.subr.mxu0 0.0
      %2775 = vmatpush1.msra.mxu0 0.0
      %2776 = vmatprep.subr.mxu0 0.0
      %2777 = vmatpush1.msra.mxu0 0.0
      %2778 = vmatprep.subr.mxu0 0.0
      %2779 = vmatpush1.msra.mxu0 0.0
      %2780 = vmatprep.subr.mxu0 0.0
      %2781 = vmatpush1.msra.mxu0 0.0
      %2782 = vmatprep.subr.mxu0 0.0
      %2783 = vmatpush1.msra.mxu0 0.0
      %2784 = vmatprep.subr.mxu0 0.0
      %2785 = vmatpush1.msra.mxu0 0.0
      %2786 = vmatprep.subr.mxu0 0.0
      %2787 = vmatpush1.msra.mxu0 0.0
      %2788 = vmatprep.subr.mxu0 0.0
      %2789 = vmatpush1.msra.mxu0 0.0
      %2790 = vmatprep.subr.mxu0 0.0
      %2791 = vmatpush1.msra.mxu0 0.0
      %2792 = vmatprep.subr.mxu0 0.0
      %2793 = vmatpush1.msra.mxu0 0.0
      %2794 = vmatprep.subr.mxu0 0.0
      %2795 = vmatpush1.msra.mxu0 0.0
      %2796 = vmatprep.subr.mxu0 0.0
      %2797 = vmatpush1.msra.mxu0 0.0
      %2798 = vmatprep.subr.mxu0 0.0
      %2799 = vmatpush1.msra.mxu0 0.0
      %2800 = vmatprep.subr.mxu0 0.0
      %2801 = vmatpush1.msra.mxu0 %v2768
      %2802 = vmatprep.subr.mxu0 0.0
      %2803 = vmatpush2.msra.mxu0 0.0
      %2804 = vmatprep.subr.mxu0 0.0
      %2805 = vmatpush2.msra.mxu0 0.0
      %2806 = vmatprep.subr.mxu0 0.0
      %2807 = vmatpush2.msra.mxu0 0.0
      %2808 = vmatprep.subr.mxu0 0.0
      %2809 = vmatpush2.msra.mxu0 0.0
      %2810 = vmatprep.subr.mxu0 0.0
      %2811 = vmatpush2.msra.mxu0 0.0
      %2812 = vmatprep.subr.mxu0 0.0
      %2813 = vmatpush2.msra.mxu0 0.0
      %2814 = vmatprep.subr.mxu0 0.0
      %2815 = vmatpush2.msra.mxu0 0.0
      %2816 = vmatprep.subr.mxu0 0.0
      %2817 = vmatpush2.msra.mxu0 0.0
      %2818 = vmatprep.subr.mxu0 0.0
      %2819 = vmatpush2.msra.mxu0 0.0
      %2820 = vmatprep.subr.mxu0 0.0
      %2821 = vmatpush2.msra.mxu0 0.0
      %2822 = vmatprep.subr.mxu0 0.0
      %2823 = vmatpush2.msra.mxu0 0.0
      %2824 = vmatprep.subr.mxu0 0.0
      %2825 = vmatpush2.msra.mxu0 0.0
      %2826 = vmatprep.subr.mxu0 0.0
      %2827 = vmatpush2.msra.mxu0 0.0
      %2828 = vmatprep.subr.mxu0 0.0
      %2829 = vmatpush2.msra.mxu0 0.0
      %2830 = vmatprep.subr.mxu0 0.0
      %2831 = vmatpush2.msra.mxu0 0.0
      %2832 = vmatprep.subr.mxu0 0.0
      %2833 = vmatpush2.msra.mxu0 0.0
      %2834 = vmatprep.mubr.f32.mxu0 0.0
      %2835 = vmatmul.mubr.f32.gmra.mxu0 %v1259
      %v2836 = vpop.f32.mrf.mxu0
      %v2837 = vadd.f32 0.0, %v2836
      %v2838 = vpop.f32.mrf.mxu0
      %2839 = vmatprep.mubr.f32.mxu0 0.0
      %2840 = vmatmul.mubr.f32.gmra.mxu0 %v1262
      %v2841 = vpop.f32.mrf.mxu0
      %v2842 = vadd.f32 0.0, %v2841
      %v2843 = vpop.f32.mrf.mxu0
      %2844 = vmatprep.mubr.f32.mxu0 0.0
      %2845 = vmatmul.mubr.f32.gmra.mxu0 %v1265
      %v2846 = vpop.f32.mrf.mxu0
      %v2847 = vadd.f32 0.0, %v2846
      %v2848 = vpop.f32.mrf.mxu0
      %2849 = vmatprep.mubr.f32.mxu0 0.0
      %2850 = vmatmul.mubr.f32.gmra.mxu0 %v1268
      %v2851 = vpop.f32.mrf.mxu0
      %v2852 = vadd.f32 0.0, %v2851
      %v2853 = vpop.f32.mrf.mxu0
      %2854 = vmatprep.mubr.f32.mxu0 0.0
      %2855 = vmatmul.mubr.f32.gmra.mxu0 %v1271
      %v2856 = vpop.f32.mrf.mxu0
      %v2857 = vadd.f32 0.0, %v2856
      %v2858 = vpop.f32.mrf.mxu0
      %2859 = vmatprep.mubr.f32.mxu0 0.0
      %2860 = vmatmul.mubr.f32.gmra.mxu0 %v1274
      %v2861 = vpop.f32.mrf.mxu0
      %v2862 = vadd.f32 0.0, %v2861
      %v2863 = vpop.f32.mrf.mxu0
      %2864 = vmatprep.mubr.f32.mxu0 0.0
      %2865 = vmatmul.mubr.f32.gmra.mxu0 %v1277
      %v2866 = vpop.f32.mrf.mxu0
      %v2867 = vadd.f32 0.0, %v2866
      %v2868 = vpop.f32.mrf.mxu0
      %2869 = vmatprep.mubr.f32.mxu0 0.0
      %2870 = vmatmul.mubr.f32.gmra.mxu0 %v1280
      %v2871 = vpop.f32.mrf.mxu0
      %v2872 = vadd.f32 0.0, %v2871
      %v2873 = vpop.f32.mrf.mxu0
      %2874 = vdwg.mxu0
      %v2875 = vadd.f32 %v2758, %v2837
      %v2876 = vadd.f32 %v2759, %v2842
      %v2877 = vadd.f32 %v2760, %v2847
      %v2878 = vadd.f32 %v2761, %v2852
      %v2879 = vadd.f32 %v2762, %v2857
      %v2880 = vadd.f32 %v2763, %v2862
      %v2881 = vadd.f32 %v2764, %v2867
      %v2882 = vadd.f32 %v2765, %v2872
      %v2883 = vld [vmem:[%s3 + $0x44] sm:$0xf]
      %v2885 = vsel %vm568, %v434, 0
      %v2888 = vsel %vm568, %v435, 0
      %v2891 = vsel %vm568, %v436, 0
      %v2894 = vsel %vm568, %v437, 0
      %v2897 = vsel %vm568, %v438, 0
      %v2900 = vsel %vm568, %v439, 0
      %v2903 = vsel %vm568, %v440, 0
      %v2906 = vsel %vm568, %v441, 0
      %v2909 = vsel %vm593, %v2883, 0
      %2911 = vmatprep.subr.mxu0 0.0
      %2912 = vmatpush1.msra.mxu0 0.0
      %2913 = vmatprep.subr.mxu0 0.0
      %2914 = vmatpush1.msra.mxu0 0.0
      %2915 = vmatprep.subr.mxu0 0.0
      %2916 = vmatpush1.msra.mxu0 0.0
      %2917 = vmatprep.subr.mxu0 0.0
      %2918 = vmatpush1.msra.mxu0 0.0
      %2919 = vmatprep.subr.mxu0 0.0
      %2920 = vmatpush1.msra.mxu0 0.0
      %2921 = vmatprep.subr.mxu0 0.0
      %2922 = vmatpush1.msra.mxu0 0.0
      %2923 = vmatprep.subr.mxu0 0.0
      %2924 = vmatpush1.msra.mxu0 0.0
      %2925 = vmatprep.subr.mxu0 0.0
      %2926 = vmatpush1.msra.mxu0 0.0
      %2927 = vmatprep.subr.mxu0 0.0
      %2928 = vmatpush1.msra.mxu0 0.0
      %2929 = vmatprep.subr.mxu0 0.0
      %2930 = vmatpush1.msra.mxu0 0.0
      %2931 = vmatprep.subr.mxu0 0.0
      %2932 = vmatpush1.msra.mxu0 0.0
      %2933 = vmatprep.subr.mxu0 0.0
      %2934 = vmatpush1.msra.mxu0 0.0
      %2935 = vmatprep.subr.mxu0 0.0
      %2936 = vmatpush1.msra.mxu0 0.0
      %2937 = vmatprep.subr.mxu0 0.0
      %2938 = vmatpush1.msra.mxu0 0.0
      %2939 = vmatprep.subr.mxu0 0.0
      %2940 = vmatpush1.msra.mxu0 0.0
      %2941 = vmatprep.subr.mxu0 0.0
      %2942 = vmatpush1.msra.mxu0 %v2909
      %2943 = vmatprep.subr.mxu0 0.0
      %2944 = vmatpush2.msra.mxu0 0.0
      %2945 = vmatprep.subr.mxu0 0.0
      %2946 = vmatpush2.msra.mxu0 0.0
      %2947 = vmatprep.subr.mxu0 0.0
      %2948 = vmatpush2.msra.mxu0 0.0
      %2949 = vmatprep.subr.mxu0 0.0
      %2950 = vmatpush2.msra.mxu0 0.0
      %2951 = vmatprep.subr.mxu0 0.0
      %2952 = vmatpush2.msra.mxu0 0.0
      %2953 = vmatprep.subr.mxu0 0.0
      %2954 = vmatpush2.msra.mxu0 0.0
      %2955 = vmatprep.subr.mxu0 0.0
      %2956 = vmatpush2.msra.mxu0 0.0
      %2957 = vmatprep.subr.mxu0 0.0
      %2958 = vmatpush2.msra.mxu0 0.0
      %2959 = vmatprep.subr.mxu0 0.0
      %2960 = vmatpush2.msra.mxu0 0.0
      %2961 = vmatprep.subr.mxu0 0.0
      %2962 = vmatpush2.msra.mxu0 0.0
      %2963 = vmatprep.subr.mxu0 0.0
      %2964 = vmatpush2.msra.mxu0 0.0
      %2965 = vmatprep.subr.mxu0 0.0
      %2966 = vmatpush2.msra.mxu0 0.0
      %2967 = vmatprep.subr.mxu0 0.0
      %2968 = vmatpush2.msra.mxu0 0.0
      %2969 = vmatprep.subr.mxu0 0.0
      %2970 = vmatpush2.msra.mxu0 0.0
      %2971 = vmatprep.subr.mxu0 0.0
      %2972 = vmatpush2.msra.mxu0 0.0
      %2973 = vmatprep.subr.mxu0 0.0
      %2974 = vmatpush2.msra.mxu0 0.0
      %2975 = vmatprep.mubr.f32.mxu0 0.0
      %2976 = vmatmul.mubr.f32.gmra.mxu0 %v2885
      %v2977 = vpop.f32.mrf.mxu0
      %v2978 = vadd.f32 0.0, %v2977
      %v2979 = vpop.f32.mrf.mxu0
      %2980 = vmatprep.mubr.f32.mxu0 0.0
      %2981 = vmatmul.mubr.f32.gmra.mxu0 %v2888
      %v2982 = vpop.f32.mrf.mxu0
      %v2983 = vadd.f32 0.0, %v2982
      %v2984 = vpop.f32.mrf.mxu0
      %2985 = vmatprep.mubr.f32.mxu0 0.0
      %2986 = vmatmul.mubr.f32.gmra.mxu0 %v2891
      %v2987 = vpop.f32.mrf.mxu0
      %v2988 = vadd.f32 0.0, %v2987
      %v2989 = vpop.f32.mrf.mxu0
      %2990 = vmatprep.mubr.f32.mxu0 0.0
      %2991 = vmatmul.mubr.f32.gmra.mxu0 %v2894
      %v2992 = vpop.f32.mrf.mxu0
      %v2993 = vadd.f32 0.0, %v2992
      %v2994 = vpop.f32.mrf.mxu0
      %2995 = vmatprep.mubr.f32.mxu0 0.0
      %2996 = vmatmul.mubr.f32.gmra.mxu0 %v2897
      %v2997 = vpop.f32.mrf.mxu0
      %v2998 = vadd.f32 0.0, %v2997
      %v2999 = vpop.f32.mrf.mxu0
      %3000 = vmatprep.mubr.f32.mxu0 0.0
      %3001 = vmatmul.mubr.f32.gmra.mxu0 %v2900
      %v3002 = vpop.f32.mrf.mxu0
      %v3003 = vadd.f32 0.0, %v3002
      %v3004 = vpop.f32.mrf.mxu0
      %3005 = vmatprep.mubr.f32.mxu0 0.0
      %3006 = vmatmul.mubr.f32.gmra.mxu0 %v2903
      %v3007 = vpop.f32.mrf.mxu0
      %v3008 = vadd.f32 0.0, %v3007
      %v3009 = vpop.f32.mrf.mxu0
      %3010 = vmatprep.mubr.f32.mxu0 0.0
      %3011 = vmatmul.mubr.f32.gmra.mxu0 %v2906
      %v3012 = vpop.f32.mrf.mxu0
      %v3013 = vadd.f32 0.0, %v3012
      %v3014 = vpop.f32.mrf.mxu0
      %3015 = vdwg.mxu0
      %v3016 = vadd.f32 %v2875, %v2978
      %v3017 = vadd.f32 %v2876, %v2983
      %v3018 = vadd.f32 %v2877, %v2988
      %v3019 = vadd.f32 %v2878, %v2993
      %v3020 = vadd.f32 %v2879, %v2998
      %v3021 = vadd.f32 %v2880, %v3003
      %v3022 = vadd.f32 %v2881, %v3008
      %v3023 = vadd.f32 %v2882, %v3013
      %v3024 = vld [vmem:[%s3 + $0x48] sm:$0xf]
      %v3026 = vsel %vm593, %v3024, 0
      %3028 = vmatprep.subr.mxu0 0.0
      %3029 = vmatpush1.msra.mxu0 0.0
      %3030 = vmatprep.subr.mxu0 0.0
      %3031 = vmatpush1.msra.mxu0 0.0
      %3032 = vmatprep.subr.mxu0 0.0
      %3033 = vmatpush1.msra.mxu0 0.0
      %3034 = vmatprep.subr.mxu0 0.0
      %3035 = vmatpush1.msra.mxu0 0.0
      %3036 = vmatprep.subr.mxu0 0.0
      %3037 = vmatpush1.msra.mxu0 0.0
      %3038 = vmatprep.subr.mxu0 0.0
      %3039 = vmatpush1.msra.mxu0 0.0
      %3040 = vmatprep.subr.mxu0 0.0
      %3041 = vmatpush1.msra.mxu0 0.0
      %3042 = vmatprep.subr.mxu0 0.0
      %3043 = vmatpush1.msra.mxu0 0.0
      %3044 = vmatprep.subr.mxu0 0.0
      %3045 = vmatpush1.msra.mxu0 0.0
      %3046 = vmatprep.subr.mxu0 0.0
      %3047 = vmatpush1.msra.mxu0 0.0
      %3048 = vmatprep.subr.mxu0 0.0
      %3049 = vmatpush1.msra.mxu0 0.0
      %3050 = vmatprep.subr.mxu0 0.0
      %3051 = vmatpush1.msra.mxu0 0.0
      %3052 = vmatprep.subr.mxu0 0.0
      %3053 = vmatpush1.msra.mxu0 0.0
      %3054 = vmatprep.subr.mxu0 0.0
      %3055 = vmatpush1.msra.mxu0 0.0
      %3056 = vmatprep.subr.mxu0 0.0
      %3057 = vmatpush1.msra.mxu0 0.0
      %3058 = vmatprep.subr.mxu0 0.0
      %3059 = vmatpush1.msra.mxu0 %v3026
      %3060 = vmatprep.subr.mxu0 0.0
      %3061 = vmatpush2.msra.mxu0 0.0
      %3062 = vmatprep.subr.mxu0 0.0
      %3063 = vmatpush2.msra.mxu0 0.0
      %3064 = vmatprep.subr.mxu0 0.0
      %3065 = vmatpush2.msra.mxu0 0.0
      %3066 = vmatprep.subr.mxu0 0.0
      %3067 = vmatpush2.msra.mxu0 0.0
      %3068 = vmatprep.subr.mxu0 0.0
      %3069 = vmatpush2.msra.mxu0 0.0
      %3070 = vmatprep.subr.mxu0 0.0
      %3071 = vmatpush2.msra.mxu0 0.0
      %3072 = vmatprep.subr.mxu0 0.0
      %3073 = vmatpush2.msra.mxu0 0.0
      %3074 = vmatprep.subr.mxu0 0.0
      %3075 = vmatpush2.msra.mxu0 0.0
      %3076 = vmatprep.subr.mxu0 0.0
      %3077 = vmatpush2.msra.mxu0 0.0
      %3078 = vmatprep.subr.mxu0 0.0
      %3079 = vmatpush2.msra.mxu0 0.0
      %3080 = vmatprep.subr.mxu0 0.0
      %3081 = vmatpush2.msra.mxu0 0.0
      %3082 = vmatprep.subr.mxu0 0.0
      %3083 = vmatpush2.msra.mxu0 0.0
      %3084 = vmatprep.subr.mxu0 0.0
      %3085 = vmatpush2.msra.mxu0 0.0
      %3086 = vmatprep.subr.mxu0 0.0
      %3087 = vmatpush2.msra.mxu0 0.0
      %3088 = vmatprep.subr.mxu0 0.0
      %3089 = vmatpush2.msra.mxu0 0.0
      %3090 = vmatprep.subr.mxu0 0.0
      %3091 = vmatpush2.msra.mxu0 0.0
      %3092 = vmatprep.mubr.f32.mxu0 0.0
      %3093 = vmatmul.mubr.f32.gmra.mxu0 %v1541
      %v3094 = vpop.f32.mrf.mxu0
      %v3095 = vadd.f32 0.0, %v3094
      %v3096 = vpop.f32.mrf.mxu0
      %3097 = vmatprep.mubr.f32.mxu0 0.0
      %3098 = vmatmul.mubr.f32.gmra.mxu0 %v1544
      %v3099 = vpop.f32.mrf.mxu0
      %v3100 = vadd.f32 0.0, %v3099
      %v3101 = vpop.f32.mrf.mxu0
      %3102 = vmatprep.mubr.f32.mxu0 0.0
      %3103 = vmatmul.mubr.f32.gmra.mxu0 %v1547
      %v3104 = vpop.f32.mrf.mxu0
      %v3105 = vadd.f32 0.0, %v3104
      %v3106 = vpop.f32.mrf.mxu0
      %3107 = vmatprep.mubr.f32.mxu0 0.0
      %3108 = vmatmul.mubr.f32.gmra.mxu0 %v1550
      %v3109 = vpop.f32.mrf.mxu0
      %v3110 = vadd.f32 0.0, %v3109
      %v3111 = vpop.f32.mrf.mxu0
      %3112 = vmatprep.mubr.f32.mxu0 0.0
      %3113 = vmatmul.mubr.f32.gmra.mxu0 %v1553
      %v3114 = vpop.f32.mrf.mxu0
      %v3115 = vadd.f32 0.0, %v3114
      %v3116 = vpop.f32.mrf.mxu0
      %3117 = vmatprep.mubr.f32.mxu0 0.0
      %3118 = vmatmul.mubr.f32.gmra.mxu0 %v1556
      %v3119 = vpop.f32.mrf.mxu0
      %v3120 = vadd.f32 0.0, %v3119
      %v3121 = vpop.f32.mrf.mxu0
      %3122 = vmatprep.mubr.f32.mxu0 0.0
      %3123 = vmatmul.mubr.f32.gmra.mxu0 %v1559
      %v3124 = vpop.f32.mrf.mxu0
      %v3125 = vadd.f32 0.0, %v3124
      %v3126 = vpop.f32.mrf.mxu0
      %3127 = vmatprep.mubr.f32.mxu0 0.0
      %3128 = vmatmul.mubr.f32.gmra.mxu0 %v1562
      %v3129 = vpop.f32.mrf.mxu0
      %v3130 = vadd.f32 0.0, %v3129
      %v3131 = vpop.f32.mrf.mxu0
      %3132 = vdwg.mxu0
      %v3133 = vadd.f32 %v3016, %v3095
      %v3134 = vadd.f32 %v3017, %v3100
      %v3135 = vadd.f32 %v3018, %v3105
      %v3136 = vadd.f32 %v3019, %v3110
      %v3137 = vadd.f32 %v3020, %v3115
      %v3138 = vadd.f32 %v3021, %v3120
      %v3139 = vadd.f32 %v3022, %v3125
      %v3140 = vadd.f32 %v3023, %v3130
      %v3141 = vld [vmem:[%s3 + $0x4c] sm:$0xf]
      %v3143 = vsel %vm568, %v459, 0
      %v3146 = vsel %vm568, %v460, 0
      %v3149 = vsel %vm568, %v461, 0
      %v3152 = vsel %vm568, %v462, 0
      %v3155 = vsel %vm568, %v463, 0
      %v3158 = vsel %vm568, %v464, 0
      %v3161 = vsel %vm568, %v465, 0
      %v3164 = vsel %vm568, %v466, 0
      %v3167 = vsel %vm593, %v3141, 0
      %3169 = vmatprep.subr.mxu0 0.0
      %3170 = vmatpush1.msra.mxu0 0.0
      %3171 = vmatprep.subr.mxu0 0.0
      %3172 = vmatpush1.msra.mxu0 0.0
      %3173 = vmatprep.subr.mxu0 0.0
      %3174 = vmatpush1.msra.mxu0 0.0
      %3175 = vmatprep.subr.mxu0 0.0
      %3176 = vmatpush1.msra.mxu0 0.0
      %3177 = vmatprep.subr.mxu0 0.0
      %3178 = vmatpush1.msra.mxu0 0.0
      %3179 = vmatprep.subr.mxu0 0.0
      %3180 = vmatpush1.msra.mxu0 0.0
      %3181 = vmatprep.subr.mxu0 0.0
      %3182 = vmatpush1.msra.mxu0 0.0
      %3183 = vmatprep.subr.mxu0 0.0
      %3184 = vmatpush1.msra.mxu0 0.0
      %3185 = vmatprep.subr.mxu0 0.0
      %3186 = vmatpush1.msra.mxu0 0.0
      %3187 = vmatprep.subr.mxu0 0.0
      %3188 = vmatpush1.msra.mxu0 0.0
      %3189 = vmatprep.subr.mxu0 0.0
      %3190 = vmatpush1.msra.mxu0 0.0
      %3191 = vmatprep.subr.mxu0 0.0
      %3192 = vmatpush1.msra.mxu0 0.0
      %3193 = vmatprep.subr.mxu0 0.0
      %3194 = vmatpush1.msra.mxu0 0.0
      %3195 = vmatprep.subr.mxu0 0.0
      %3196 = vmatpush1.msra.mxu0 0.0
      %3197 = vmatprep.subr.mxu0 0.0
      %3198 = vmatpush1.msra.mxu0 0.0
      %3199 = vmatprep.subr.mxu0 0.0
      %3200 = vmatpush1.msra.mxu0 %v3167
      %3201 = vmatprep.subr.mxu0 0.0
      %3202 = vmatpush2.msra.mxu0 0.0
      %3203 = vmatprep.subr.mxu0 0.0
      %3204 = vmatpush2.msra.mxu0 0.0
      %3205 = vmatprep.subr.mxu0 0.0
      %3206 = vmatpush2.msra.mxu0 0.0
      %3207 = vmatprep.subr.mxu0 0.0
      %3208 = vmatpush2.msra.mxu0 0.0
      %3209 = vmatprep.subr.mxu0 0.0
      %3210 = vmatpush2.msra.mxu0 0.0
      %3211 = vmatprep.subr.mxu0 0.0
      %3212 = vmatpush2.msra.mxu0 0.0
      %3213 = vmatprep.subr.mxu0 0.0
      %3214 = vmatpush2.msra.mxu0 0.0
      %3215 = vmatprep.subr.mxu0 0.0
      %3216 = vmatpush2.msra.mxu0 0.0
      %3217 = vmatprep.subr.mxu0 0.0
      %3218 = vmatpush2.msra.mxu0 0.0
      %3219 = vmatprep.subr.mxu0 0.0
      %3220 = vmatpush2.msra.mxu0 0.0
      %3221 = vmatprep.subr.mxu0 0.0
      %3222 = vmatpush2.msra.mxu0 0.0
      %3223 = vmatprep.subr.mxu0 0.0
      %3224 = vmatpush2.msra.mxu0 0.0
      %3225 = vmatprep.subr.mxu0 0.0
      %3226 = vmatpush2.msra.mxu0 0.0
      %3227 = vmatprep.subr.mxu0 0.0
      %3228 = vmatpush2.msra.mxu0 0.0
      %3229 = vmatprep.subr.mxu0 0.0
      %3230 = vmatpush2.msra.mxu0 0.0
      %3231 = vmatprep.subr.mxu0 0.0
      %3232 = vmatpush2.msra.mxu0 0.0
      %3233 = vmatprep.mubr.f32.mxu0 0.0
      %3234 = vmatmul.mubr.f32.gmra.mxu0 %v3143
      %v3235 = vpop.f32.mrf.mxu0
      %v3236 = vadd.f32 0.0, %v3235
      %v3237 = vpop.f32.mrf.mxu0
      %3238 = vmatprep.mubr.f32.mxu0 0.0
      %3239 = vmatmul.mubr.f32.gmra.mxu0 %v3146
      %v3240 = vpop.f32.mrf.mxu0
      %v3241 = vadd.f32 0.0, %v3240
      %v3242 = vpop.f32.mrf.mxu0
      %3243 = vmatprep.mubr.f32.mxu0 0.0
      %3244 = vmatmul.mubr.f32.gmra.mxu0 %v3149
      %v3245 = vpop.f32.mrf.mxu0
      %v3246 = vadd.f32 0.0, %v3245
      %v3247 = vpop.f32.mrf.mxu0
      %3248 = vmatprep.mubr.f32.mxu0 0.0
      %3249 = vmatmul.mubr.f32.gmra.mxu0 %v3152
      %v3250 = vpop.f32.mrf.mxu0
      %v3251 = vadd.f32 0.0, %v3250
      %v3252 = vpop.f32.mrf.mxu0
      %3253 = vmatprep.mubr.f32.mxu0 0.0
      %3254 = vmatmul.mubr.f32.gmra.mxu0 %v3155
      %v3255 = vpop.f32.mrf.mxu0
      %v3256 = vadd.f32 0.0, %v3255
      %v3257 = vpop.f32.mrf.mxu0
      %3258 = vmatprep.mubr.f32.mxu0 0.0
      %3259 = vmatmul.mubr.f32.gmra.mxu0 %v3158
      %v3260 = vpop.f32.mrf.mxu0
      %v3261 = vadd.f32 0.0, %v3260
      %v3262 = vpop.f32.mrf.mxu0
      %3263 = vmatprep.mubr.f32.mxu0 0.0
      %3264 = vmatmul.mubr.f32.gmra.mxu0 %v3161
      %v3265 = vpop.f32.mrf.mxu0
      %v3266 = vadd.f32 0.0, %v3265
      %v3267 = vpop.f32.mrf.mxu0
      %3268 = vmatprep.mubr.f32.mxu0 0.0
      %3269 = vmatmul.mubr.f32.gmra.mxu0 %v3164
      %v3270 = vpop.f32.mrf.mxu0
      %v3271 = vadd.f32 0.0, %v3270
      %v3272 = vpop.f32.mrf.mxu0
      %3273 = vdwg.mxu0
      %v3274 = vadd.f32 %v3133, %v3236
      %v3275 = vadd.f32 %v3134, %v3241
      %v3276 = vadd.f32 %v3135, %v3246
      %v3277 = vadd.f32 %v3136, %v3251
      %v3278 = vadd.f32 %v3137, %v3256
      %v3279 = vadd.f32 %v3138, %v3261
      %v3280 = vadd.f32 %v3139, %v3266
      %v3281 = vadd.f32 %v3140, %v3271
      %v3282 = vld [vmem:[%s3 + $0x50] sm:$0xf]
      %v3284 = vsel %vm593, %v3282, 0
      %3286 = vmatprep.subr.mxu0 0.0
      %3287 = vmatpush1.msra.mxu0 0.0
      %3288 = vmatprep.subr.mxu0 0.0
      %3289 = vmatpush1.msra.mxu0 0.0
      %3290 = vmatprep.subr.mxu0 0.0
      %3291 = vmatpush1.msra.mxu0 0.0
      %3292 = vmatprep.subr.mxu0 0.0
      %3293 = vmatpush1.msra.mxu0 0.0
      %3294 = vmatprep.subr.mxu0 0.0
      %3295 = vmatpush1.msra.mxu0 0.0
      %3296 = vmatprep.subr.mxu0 0.0
      %3297 = vmatpush1.msra.mxu0 0.0
      %3298 = vmatprep.subr.mxu0 0.0
      %3299 = vmatpush1.msra.mxu0 0.0
      %3300 = vmatprep.subr.mxu0 0.0
      %3301 = vmatpush1.msra.mxu0 0.0
      %3302 = vmatprep.subr.mxu0 0.0
      %3303 = vmatpush1.msra.mxu0 0.0
      %3304 = vmatprep.subr.mxu0 0.0
      %3305 = vmatpush1.msra.mxu0 0.0
      %3306 = vmatprep.subr.mxu0 0.0
      %3307 = vmatpush1.msra.mxu0 0.0
      %3308 = vmatprep.subr.mxu0 0.0
      %3309 = vmatpush1.msra.mxu0 0.0
      %3310 = vmatprep.subr.mxu0 0.0
      %3311 = vmatpush1.msra.mxu0 0.0
      %3312 = vmatprep.subr.mxu0 0.0
      %3313 = vmatpush1.msra.mxu0 0.0
      %3314 = vmatprep.subr.mxu0 0.0
      %3315 = vmatpush1.msra.mxu0 0.0
      %3316 = vmatprep.subr.mxu0 0.0
      %3317 = vmatpush1.msra.mxu0 %v3284
      %3318 = vmatprep.subr.mxu0 0.0
      %3319 = vmatpush2.msra.mxu0 0.0
      %3320 = vmatprep.subr.mxu0 0.0
      %3321 = vmatpush2.msra.mxu0 0.0
      %3322 = vmatprep.subr.mxu0 0.0
      %3323 = vmatpush2.msra.mxu0 0.0
      %3324 = vmatprep.subr.mxu0 0.0
      %3325 = vmatpush2.msra.mxu0 0.0
      %3326 = vmatprep.subr.mxu0 0.0
      %3327 = vmatpush2.msra.mxu0 0.0
      %3328 = vmatprep.subr.mxu0 0.0
      %3329 = vmatpush2.msra.mxu0 0.0
      %3330 = vmatprep.subr.mxu0 0.0
      %3331 = vmatpush2.msra.mxu0 0.0
      %3332 = vmatprep.subr.mxu0 0.0
      %3333 = vmatpush2.msra.mxu0 0.0
      %3334 = vmatprep.subr.mxu0 0.0
      %3335 = vmatpush2.msra.mxu0 0.0
      %3336 = vmatprep.subr.mxu0 0.0
      %3337 = vmatpush2.msra.mxu0 0.0
      %3338 = vmatprep.subr.mxu0 0.0
      %3339 = vmatpush2.msra.mxu0 0.0
      %3340 = vmatprep.subr.mxu0 0.0
      %3341 = vmatpush2.msra.mxu0 0.0
      %3342 = vmatprep.subr.mxu0 0.0
      %3343 = vmatpush2.msra.mxu0 0.0
      %3344 = vmatprep.subr.mxu0 0.0
      %3345 = vmatpush2.msra.mxu0 0.0
      %3346 = vmatprep.subr.mxu0 0.0
      %3347 = vmatpush2.msra.mxu0 0.0
      %3348 = vmatprep.subr.mxu0 0.0
      %3349 = vmatpush2.msra.mxu0 0.0
      %3350 = vmatprep.mubr.f32.mxu0 0.0
      %3351 = vmatmul.mubr.f32.gmra.mxu0 %v1823
      %v3352 = vpop.f32.mrf.mxu0
      %v3353 = vadd.f32 0.0, %v3352
      %v3354 = vpop.f32.mrf.mxu0
      %3355 = vmatprep.mubr.f32.mxu0 0.0
      %3356 = vmatmul.mubr.f32.gmra.mxu0 %v1826
      %v3357 = vpop.f32.mrf.mxu0
      %v3358 = vadd.f32 0.0, %v3357
      %v3359 = vpop.f32.mrf.mxu0
      %3360 = vmatprep.mubr.f32.mxu0 0.0
      %3361 = vmatmul.mubr.f32.gmra.mxu0 %v1829
      %v3362 = vpop.f32.mrf.mxu0
      %v3363 = vadd.f32 0.0, %v3362
      %v3364 = vpop.f32.mrf.mxu0
      %3365 = vmatprep.mubr.f32.mxu0 0.0
      %3366 = vmatmul.mubr.f32.gmra.mxu0 %v1832
      %v3367 = vpop.f32.mrf.mxu0
      %v3368 = vadd.f32 0.0, %v3367
      %v3369 = vpop.f32.mrf.mxu0
      %3370 = vmatprep.mubr.f32.mxu0 0.0
      %3371 = vmatmul.mubr.f32.gmra.mxu0 %v1835
      %v3372 = vpop.f32.mrf.mxu0
      %v3373 = vadd.f32 0.0, %v3372
      %v3374 = vpop.f32.mrf.mxu0
      %3375 = vmatprep.mubr.f32.mxu0 0.0
      %3376 = vmatmul.mubr.f32.gmra.mxu0 %v1838
      %v3377 = vpop.f32.mrf.mxu0
      %v3378 = vadd.f32 0.0, %v3377
      %v3379 = vpop.f32.mrf.mxu0
      %3380 = vmatprep.mubr.f32.mxu0 0.0
      %3381 = vmatmul.mubr.f32.gmra.mxu0 %v1841
      %v3382 = vpop.f32.mrf.mxu0
      %v3383 = vadd.f32 0.0, %v3382
      %v3384 = vpop.f32.mrf.mxu0
      %3385 = vmatprep.mubr.f32.mxu0 0.0
      %3386 = vmatmul.mubr.f32.gmra.mxu0 %v1844
      %v3387 = vpop.f32.mrf.mxu0
      %v3388 = vadd.f32 0.0, %v3387
      %v3389 = vpop.f32.mrf.mxu0
      %3390 = vdwg.mxu0
      %v3391 = vadd.f32 %v3274, %v3353
      %v3392 = vadd.f32 %v3275, %v3358
      %v3393 = vadd.f32 %v3276, %v3363
      %v3394 = vadd.f32 %v3277, %v3368
      %v3395 = vadd.f32 %v3278, %v3373
      %v3396 = vadd.f32 %v3279, %v3378
      %v3397 = vadd.f32 %v3280, %v3383
      %v3398 = vadd.f32 %v3281, %v3388
      %v3399 = vld [vmem:[%s3 + $0x54] sm:$0xf]
      %v3401 = vsel %vm568, %v508, 0
      %v3404 = vsel %vm568, %v509, 0
      %v3407 = vsel %vm568, %v510, 0
      %v3410 = vsel %vm568, %v511, 0
      %v3413 = vsel %vm568, %v512, 0
      %v3416 = vsel %vm568, %v513, 0
      %v3419 = vsel %vm568, %v514, 0
      %v3422 = vsel %vm568, %v515, 0
      %v3425 = vsel %vm593, %v3399, 0
      %3427 = vmatprep.subr.mxu0 0.0
      %3428 = vmatpush1.msra.mxu0 0.0
      %3429 = vmatprep.subr.mxu0 0.0
      %3430 = vmatpush1.msra.mxu0 0.0
      %3431 = vmatprep.subr.mxu0 0.0
      %3432 = vmatpush1.msra.mxu0 0.0
      %3433 = vmatprep.subr.mxu0 0.0
      %3434 = vmatpush1.msra.mxu0 0.0
      %3435 = vmatprep.subr.mxu0 0.0
      %3436 = vmatpush1.msra.mxu0 0.0
      %3437 = vmatprep.subr.mxu0 0.0
      %3438 = vmatpush1.msra.mxu0 0.0
      %3439 = vmatprep.subr.mxu0 0.0
      %3440 = vmatpush1.msra.mxu0 0.0
      %3441 = vmatprep.subr.mxu0 0.0
      %3442 = vmatpush1.msra.mxu0 0.0
      %3443 = vmatprep.subr.mxu0 0.0
      %3444 = vmatpush1.msra.mxu0 0.0
      %3445 = vmatprep.subr.mxu0 0.0
      %3446 = vmatpush1.msra.mxu0 0.0
      %3447 = vmatprep.subr.mxu0 0.0
      %3448 = vmatpush1.msra.mxu0 0.0
      %3449 = vmatprep.subr.mxu0 0.0
      %3450 = vmatpush1.msra.mxu0 0.0
      %3451 = vmatprep.subr.mxu0 0.0
      %3452 = vmatpush1.msra.mxu0 0.0
      %3453 = vmatprep.subr.mxu0 0.0
      %3454 = vmatpush1.msra.mxu0 0.0
      %3455 = vmatprep.subr.mxu0 0.0
      %3456 = vmatpush1.msra.mxu0 0.0
      %3457 = vmatprep.subr.mxu0 0.0
      %3458 = vmatpush1.msra.mxu0 %v3425
      %3459 = vmatprep.subr.mxu0 0.0
      %3460 = vmatpush2.msra.mxu0 0.0
      %3461 = vmatprep.subr.mxu0 0.0
      %3462 = vmatpush2.msra.mxu0 0.0
      %3463 = vmatprep.subr.mxu0 0.0
      %3464 = vmatpush2.msra.mxu0 0.0
      %3465 = vmatprep.subr.mxu0 0.0
      %3466 = vmatpush2.msra.mxu0 0.0
      %3467 = vmatprep.subr.mxu0 0.0
      %3468 = vmatpush2.msra.mxu0 0.0
      %3469 = vmatprep.subr.mxu0 0.0
      %3470 = vmatpush2.msra.mxu0 0.0
      %3471 = vmatprep.subr.mxu0 0.0
      %3472 = vmatpush2.msra.mxu0 0.0
      %3473 = vmatprep.subr.mxu0 0.0
      %3474 = vmatpush2.msra.mxu0 0.0
      %3475 = vmatprep.subr.mxu0 0.0
      %3476 = vmatpush2.msra.mxu0 0.0
      %3477 = vmatprep.subr.mxu0 0.0
      %3478 = vmatpush2.msra.mxu0 0.0
      %3479 = vmatprep.subr.mxu0 0.0
      %3480 = vmatpush2.msra.mxu0 0.0
      %3481 = vmatprep.subr.mxu0 0.0
      %3482 = vmatpush2.msra.mxu0 0.0
      %3483 = vmatprep.subr.mxu0 0.0
      %3484 = vmatpush2.msra.mxu0 0.0
      %3485 = vmatprep.subr.mxu0 0.0
      %3486 = vmatpush2.msra.mxu0 0.0
      %3487 = vmatprep.subr.mxu0 0.0
      %3488 = vmatpush2.msra.mxu0 0.0
      %3489 = vmatprep.subr.mxu0 0.0
      %3490 = vmatpush2.msra.mxu0 0.0
      %3491 = vmatprep.mubr.f32.mxu0 0.0
      %3492 = vmatmul.mubr.f32.gmra.mxu0 %v3401
      %v3493 = vpop.f32.mrf.mxu0
      %v3494 = vadd.f32 0.0, %v3493
      %v3495 = vpop.f32.mrf.mxu0
      %3496 = vmatprep.mubr.f32.mxu0 0.0
      %3497 = vmatmul.mubr.f32.gmra.mxu0 %v3404
      %v3498 = vpop.f32.mrf.mxu0
      %v3499 = vadd.f32 0.0, %v3498
      %v3500 = vpop.f32.mrf.mxu0
      %3501 = vmatprep.mubr.f32.mxu0 0.0
      %3502 = vmatmul.mubr.f32.gmra.mxu0 %v3407
      %v3503 = vpop.f32.mrf.mxu0
      %v3504 = vadd.f32 0.0, %v3503
      %v3505 = vpop.f32.mrf.mxu0
      %3506 = vmatprep.mubr.f32.mxu0 0.0
      %3507 = vmatmul.mubr.f32.gmra.mxu0 %v3410
      %v3508 = vpop.f32.mrf.mxu0
      %v3509 = vadd.f32 0.0, %v3508
      %v3510 = vpop.f32.mrf.mxu0
      %3511 = vmatprep.mubr.f32.mxu0 0.0
      %3512 = vmatmul.mubr.f32.gmra.mxu0 %v3413
      %v3513 = vpop.f32.mrf.mxu0
      %v3514 = vadd.f32 0.0, %v3513
      %v3515 = vpop.f32.mrf.mxu0
      %3516 = vmatprep.mubr.f32.mxu0 0.0
      %3517 = vmatmul.mubr.f32.gmra.mxu0 %v3416
      %v3518 = vpop.f32.mrf.mxu0
      %v3519 = vadd.f32 0.0, %v3518
      %v3520 = vpop.f32.mrf.mxu0
      %3521 = vmatprep.mubr.f32.mxu0 0.0
      %3522 = vmatmul.mubr.f32.gmra.mxu0 %v3419
      %v3523 = vpop.f32.mrf.mxu0
      %v3524 = vadd.f32 0.0, %v3523
      %v3525 = vpop.f32.mrf.mxu0
      %3526 = vmatprep.mubr.f32.mxu0 0.0
      %3527 = vmatmul.mubr.f32.gmra.mxu0 %v3422
      %v3528 = vpop.f32.mrf.mxu0
      %v3529 = vadd.f32 0.0, %v3528
      %v3530 = vpop.f32.mrf.mxu0
      %3531 = vdwg.mxu0
      %v3532 = vadd.f32 %v3391, %v3494
      %v3533 = vadd.f32 %v3392, %v3499
      %v3534 = vadd.f32 %v3393, %v3504
      %v3535 = vadd.f32 %v3394, %v3509
      %v3536 = vadd.f32 %v3395, %v3514
      %v3537 = vadd.f32 %v3396, %v3519
      %v3538 = vadd.f32 %v3397, %v3524
      %v3539 = vadd.f32 %v3398, %v3529
      %v3540 = vld [vmem:[%s3 + $0x58] sm:$0xf]
      %v3542 = vsel %vm593, %v3540, 0
      %3544 = vmatprep.subr.mxu0 0.0
      %3545 = vmatpush1.msra.mxu0 0.0
      %3546 = vmatprep.subr.mxu0 0.0
      %3547 = vmatpush1.msra.mxu0 0.0
      %3548 = vmatprep.subr.mxu0 0.0
      %3549 = vmatpush1.msra.mxu0 0.0
      %3550 = vmatprep.subr.mxu0 0.0
      %3551 = vmatpush1.msra.mxu0 0.0
      %3552 = vmatprep.subr.mxu0 0.0
      %3553 = vmatpush1.msra.mxu0 0.0
      %3554 = vmatprep.subr.mxu0 0.0
      %3555 = vmatpush1.msra.mxu0 0.0
      %3556 = vmatprep.subr.mxu0 0.0
      %3557 = vmatpush1.msra.mxu0 0.0
      %3558 = vmatprep.subr.mxu0 0.0
      %3559 = vmatpush1.msra.mxu0 0.0
      %3560 = vmatprep.subr.mxu0 0.0
      %3561 = vmatpush1.msra.mxu0 0.0
      %3562 = vmatprep.subr.mxu0 0.0
      %3563 = vmatpush1.msra.mxu0 0.0
      %3564 = vmatprep.subr.mxu0 0.0
      %3565 = vmatpush1.msra.mxu0 0.0
      %3566 = vmatprep.subr.mxu0 0.0
      %3567 = vmatpush1.msra.mxu0 0.0
      %3568 = vmatprep.subr.mxu0 0.0
      %3569 = vmatpush1.msra.mxu0 0.0
      %3570 = vmatprep.subr.mxu0 0.0
      %3571 = vmatpush1.msra.mxu0 0.0
      %3572 = vmatprep.subr.mxu0 0.0
      %3573 = vmatpush1.msra.mxu0 0.0
      %3574 = vmatprep.subr.mxu0 0.0
      %3575 = vmatpush1.msra.mxu0 %v3542
      %3576 = vmatprep.subr.mxu0 0.0
      %3577 = vmatpush2.msra.mxu0 0.0
      %3578 = vmatprep.subr.mxu0 0.0
      %3579 = vmatpush2.msra.mxu0 0.0
      %3580 = vmatprep.subr.mxu0 0.0
      %3581 = vmatpush2.msra.mxu0 0.0
      %3582 = vmatprep.subr.mxu0 0.0
      %3583 = vmatpush2.msra.mxu0 0.0
      %3584 = vmatprep.subr.mxu0 0.0
      %3585 = vmatpush2.msra.mxu0 0.0
      %3586 = vmatprep.subr.mxu0 0.0
      %3587 = vmatpush2.msra.mxu0 0.0
      %3588 = vmatprep.subr.mxu0 0.0
      %3589 = vmatpush2.msra.mxu0 0.0
      %3590 = vmatprep.subr.mxu0 0.0
      %3591 = vmatpush2.msra.mxu0 0.0
      %3592 = vmatprep.subr.mxu0 0.0
      %3593 = vmatpush2.msra.mxu0 0.0
      %3594 = vmatprep.subr.mxu0 0.0
      %3595 = vmatpush2.msra.mxu0 0.0
      %3596 = vmatprep.subr.mxu0 0.0
      %3597 = vmatpush2.msra.mxu0 0.0
      %3598 = vmatprep.subr.mxu0 0.0
      %3599 = vmatpush2.msra.mxu0 0.0
      %3600 = vmatprep.subr.mxu0 0.0
      %3601 = vmatpush2.msra.mxu0 0.0
      %3602 = vmatprep.subr.mxu0 0.0
      %3603 = vmatpush2.msra.mxu0 0.0
      %3604 = vmatprep.subr.mxu0 0.0
      %3605 = vmatpush2.msra.mxu0 0.0
      %3606 = vmatprep.subr.mxu0 0.0
      %3607 = vmatpush2.msra.mxu0 0.0
      %3608 = vmatprep.mubr.f32.mxu0 0.0
      %3609 = vmatmul.mubr.f32.gmra.mxu0 %v2105
      %v3610 = vpop.f32.mrf.mxu0
      %v3611 = vadd.f32 0.0, %v3610
      %v3612 = vpop.f32.mrf.mxu0
      %3613 = vmatprep.mubr.f32.mxu0 0.0
      %3614 = vmatmul.mubr.f32.gmra.mxu0 %v2108
      %v3615 = vpop.f32.mrf.mxu0
      %v3616 = vadd.f32 0.0, %v3615
      %v3617 = vpop.f32.mrf.mxu0
      %3618 = vmatprep.mubr.f32.mxu0 0.0
      %3619 = vmatmul.mubr.f32.gmra.mxu0 %v2111
      %v3620 = vpop.f32.mrf.mxu0
      %v3621 = vadd.f32 0.0, %v3620
      %v3622 = vpop.f32.mrf.mxu0
      %3623 = vmatprep.mubr.f32.mxu0 0.0
      %3624 = vmatmul.mubr.f32.gmra.mxu0 %v2114
      %v3625 = vpop.f32.mrf.mxu0
      %v3626 = vadd.f32 0.0, %v3625
      %v3627 = vpop.f32.mrf.mxu0
      %3628 = vmatprep.mubr.f32.mxu0 0.0
      %3629 = vmatmul.mubr.f32.gmra.mxu0 %v2117
      %v3630 = vpop.f32.mrf.mxu0
      %v3631 = vadd.f32 0.0, %v3630
      %v3632 = vpop.f32.mrf.mxu0
      %3633 = vmatprep.mubr.f32.mxu0 0.0
      %3634 = vmatmul.mubr.f32.gmra.mxu0 %v2120
      %v3635 = vpop.f32.mrf.mxu0
      %v3636 = vadd.f32 0.0, %v3635
      %v3637 = vpop.f32.mrf.mxu0
      %3638 = vmatprep.mubr.f32.mxu0 0.0
      %3639 = vmatmul.mubr.f32.gmra.mxu0 %v2123
      %v3640 = vpop.f32.mrf.mxu0
      %v3641 = vadd.f32 0.0, %v3640
      %v3642 = vpop.f32.mrf.mxu0
      %3643 = vmatprep.mubr.f32.mxu0 0.0
      %3644 = vmatmul.mubr.f32.gmra.mxu0 %v2126
      %v3645 = vpop.f32.mrf.mxu0
      %v3646 = vadd.f32 0.0, %v3645
      %v3647 = vpop.f32.mrf.mxu0
      %3648 = vdwg.mxu0
      %v3649 = vadd.f32 %v3532, %v3611
      %v3650 = vadd.f32 %v3533, %v3616
      %v3651 = vadd.f32 %v3534, %v3621
      %v3652 = vadd.f32 %v3535, %v3626
      %v3653 = vadd.f32 %v3536, %v3631
      %v3654 = vadd.f32 %v3537, %v3636
      %v3655 = vadd.f32 %v3538, %v3641
      %v3656 = vadd.f32 %v3539, %v3646
      %v3657 = vld [vmem:[%s3 + $0x5c] sm:$0xf]
      %v3659 = vsel %vm568, %v533, 0
      %v3662 = vsel %vm568, %v534, 0
      %v3665 = vsel %vm568, %v535, 0
      %v3668 = vsel %vm568, %v536, 0
      %v3671 = vsel %vm568, %v537, 0
      %v3674 = vsel %vm568, %v538, 0
      %v3677 = vsel %vm568, %v539, 0
      %v3680 = vsel %vm568, %v540, 0
      %v3683 = vsel %vm593, %v3657, 0
      %3685 = vmatprep.subr.mxu0 0.0
      %3686 = vmatpush1.msra.mxu0 0.0
      %3687 = vmatprep.subr.mxu0 0.0
      %3688 = vmatpush1.msra.mxu0 0.0
      %3689 = vmatprep.subr.mxu0 0.0
      %3690 = vmatpush1.msra.mxu0 0.0
      %3691 = vmatprep.subr.mxu0 0.0
      %3692 = vmatpush1.msra.mxu0 0.0
      %3693 = vmatprep.subr.mxu0 0.0
      %3694 = vmatpush1.msra.mxu0 0.0
      %3695 = vmatprep.subr.mxu0 0.0
      %3696 = vmatpush1.msra.mxu0 0.0
      %3697 = vmatprep.subr.mxu0 0.0
      %3698 = vmatpush1.msra.mxu0 0.0
      %3699 = vmatprep.subr.mxu0 0.0
      %3700 = vmatpush1.msra.mxu0 0.0
      %3701 = vmatprep.subr.mxu0 0.0
      %3702 = vmatpush1.msra.mxu0 0.0
      %3703 = vmatprep.subr.mxu0 0.0
      %3704 = vmatpush1.msra.mxu0 0.0
      %3705 = vmatprep.subr.mxu0 0.0
      %3706 = vmatpush1.msra.mxu0 0.0
      %3707 = vmatprep.subr.mxu0 0.0
      %3708 = vmatpush1.msra.mxu0 0.0
      %3709 = vmatprep.subr.mxu0 0.0
      %3710 = vmatpush1.msra.mxu0 0.0
      %3711 = vmatprep.subr.mxu0 0.0
      %3712 = vmatpush1.msra.mxu0 0.0
      %3713 = vmatprep.subr.mxu0 0.0
      %3714 = vmatpush1.msra.mxu0 0.0
      %3715 = vmatprep.subr.mxu0 0.0
      %3716 = vmatpush1.msra.mxu0 %v3683
      %3717 = vmatprep.subr.mxu0 0.0
      %3718 = vmatpush2.msra.mxu0 0.0
      %3719 = vmatprep.subr.mxu0 0.0
      %3720 = vmatpush2.msra.mxu0 0.0
      %3721 = vmatprep.subr.mxu0 0.0
      %3722 = vmatpush2.msra.mxu0 0.0
      %3723 = vmatprep.subr.mxu0 0.0
      %3724 = vmatpush2.msra.mxu0 0.0
      %3725 = vmatprep.subr.mxu0 0.0
      %3726 = vmatpush2.msra.mxu0 0.0
      %3727 = vmatprep.subr.mxu0 0.0
      %3728 = vmatpush2.msra.mxu0 0.0
      %3729 = vmatprep.subr.mxu0 0.0
      %3730 = vmatpush2.msra.mxu0 0.0
      %3731 = vmatprep.subr.mxu0 0.0
      %3732 = vmatpush2.msra.mxu0 0.0
      %3733 = vmatprep.subr.mxu0 0.0
      %3734 = vmatpush2.msra.mxu0 0.0
      %3735 = vmatprep.subr.mxu0 0.0
      %3736 = vmatpush2.msra.mxu0 0.0
      %3737 = vmatprep.subr.mxu0 0.0
      %3738 = vmatpush2.msra.mxu0 0.0
      %3739 = vmatprep.subr.mxu0 0.0
      %3740 = vmatpush2.msra.mxu0 0.0
      %3741 = vmatprep.subr.mxu0 0.0
      %3742 = vmatpush2.msra.mxu0 0.0
      %3743 = vmatprep.subr.mxu0 0.0
      %3744 = vmatpush2.msra.mxu0 0.0
      %3745 = vmatprep.subr.mxu0 0.0
      %3746 = vmatpush2.msra.mxu0 0.0
      %3747 = vmatprep.subr.mxu0 0.0
      %3748 = vmatpush2.msra.mxu0 0.0
      %3749 = vmatprep.mubr.f32.mxu0 0.0
      %3750 = vmatmul.mubr.f32.gmra.mxu0 %v3659
      %v3751 = vpop.f32.mrf.mxu0
      %v3752 = vadd.f32 0.0, %v3751
      %v3753 = vpop.f32.mrf.mxu0
      %3754 = vmatprep.mubr.f32.mxu0 0.0
      %3755 = vmatmul.mubr.f32.gmra.mxu0 %v3662
      %v3756 = vpop.f32.mrf.mxu0
      %v3757 = vadd.f32 0.0, %v3756
      %v3758 = vpop.f32.mrf.mxu0
      %3759 = vmatprep.mubr.f32.mxu0 0.0
      %3760 = vmatmul.mubr.f32.gmra.mxu0 %v3665
      %v3761 = vpop.f32.mrf.mxu0
      %v3762 = vadd.f32 0.0, %v3761
      %v3763 = vpop.f32.mrf.mxu0
      %3764 = vmatprep.mubr.f32.mxu0 0.0
      %3765 = vmatmul.mubr.f32.gmra.mxu0 %v3668
      %v3766 = vpop.f32.mrf.mxu0
      %v3767 = vadd.f32 0.0, %v3766
      %v3768 = vpop.f32.mrf.mxu0
      %3769 = vmatprep.mubr.f32.mxu0 0.0
      %3770 = vmatmul.mubr.f32.gmra.mxu0 %v3671
      %v3771 = vpop.f32.mrf.mxu0
      %v3772 = vadd.f32 0.0, %v3771
      %v3773 = vpop.f32.mrf.mxu0
      %3774 = vmatprep.mubr.f32.mxu0 0.0
      %3775 = vmatmul.mubr.f32.gmra.mxu0 %v3674
      %v3776 = vpop.f32.mrf.mxu0
      %v3777 = vadd.f32 0.0, %v3776
      %v3778 = vpop.f32.mrf.mxu0
      %3779 = vmatprep.mubr.f32.mxu0 0.0
      %3780 = vmatmul.mubr.f32.gmra.mxu0 %v3677
      %v3781 = vpop.f32.mrf.mxu0
      %v3782 = vadd.f32 0.0, %v3781
      %v3783 = vpop.f32.mrf.mxu0
      %3784 = vmatprep.mubr.f32.mxu0 0.0
      %3785 = vmatmul.mubr.f32.gmra.mxu0 %v3680
      %v3786 = vpop.f32.mrf.mxu0
      %v3787 = vadd.f32 0.0, %v3786
      %v3788 = vpop.f32.mrf.mxu0
      %3789 = vdwg.mxu0
      %v3790 = vadd.f32 %v3649, %v3752
      %v3791 = vadd.f32 %v3650, %v3757
      %v3792 = vadd.f32 %v3651, %v3762
      %v3793 = vadd.f32 %v3652, %v3767
      %v3794 = vadd.f32 %v3653, %v3772
      %v3795 = vadd.f32 %v3654, %v3777
      %v3796 = vadd.f32 %v3655, %v3782
      %v3797 = vadd.f32 %v3656, %v3787
      %v3798 = vadd.f32 %v3790, %v2248
      %v3799 = vadd.f32 %v3791, %v2248
      %v3800 = vadd.f32 %v3792, %v2248
      %v3801 = vadd.f32 %v3793, %v2248
      %v3802 = vadd.f32 %v3794, %v2248
      %v3803 = vadd.f32 %v3795, %v2248
      %v3804 = vadd.f32 %v3796, %v2248
      %v3805 = vadd.f32 %v3797, %v2248
      %3814 = vrot.lane.b32.xlu0 %v3798, 4
      %v3815 = vpop.permute.xlu0 %3814
      %3816 = vrot.lane.b32.xlu0 %v3799, 4
      %v3817 = vpop.permute.xlu0 %3816
      %3818 = vrot.lane.b32.xlu0 %v3800, 4
      %v3819 = vpop.permute.xlu0 %3818
      %3820 = vrot.lane.b32.xlu0 %v3801, 4
      %v3821 = vpop.permute.xlu0 %3820
      %3822 = vrot.lane.b32.xlu0 %v3802, 4
      %v3823 = vpop.permute.xlu0 %3822
      %3824 = vrot.lane.b32.xlu0 %v3803, 4
      %v3825 = vpop.permute.xlu0 %3824
      %3826 = vrot.lane.b32.xlu0 %v3804, 4
      %v3827 = vpop.permute.xlu0 %3826
      %3828 = vrot.lane.b32.xlu0 %v3805, 4
      %v3829 = vpop.permute.xlu0 %3828
      %vm3838 = vcmask 64544
      %3839 = vst.msk [vmem:[%s342] sm:$0xff] %vm3838, %v3815
      %3840 = vst.msk [vmem:[%s342 + $0x10] sm:$0xff] %vm3838, %v3817
      %3841 = vst.msk [vmem:[%s342 + $0x20] sm:$0xff] %vm3838, %v3819
      %3842 = vst.msk [vmem:[%s342 + $0x30] sm:$0xff] %vm3838, %v3821
      %3843 = vst.msk [vmem:[%s342 + $0x40] sm:$0xff] %vm3838, %v3823
      %3844 = vst.msk [vmem:[%s342 + $0x50] sm:$0xff] %vm3838, %v3825
      %3845 = vst.msk [vmem:[%s342 + $0x60] sm:$0xff] %vm3838, %v3827
      %3846 = vst.msk [vmem:[%s342 + $0x70] sm:$0xff] %vm3838, %v3829
      %v3847 = vld [vmem:[%s3 + $0x60] sm:$0xf]
      %v3848 = vld [vmem:[%s3 + $0x64] sm:$0xf]
      %v3850 = vsel %vm593, %v3848, 0
      %3852 = vmatprep.subr.mxu0 0.0
      %3853 = vmatpush1.msra.mxu0 0.0
      %3854 = vmatprep.subr.mxu0 0.0
      %3855 = vmatpush1.msra.mxu0 0.0
      %3856 = vmatprep.subr.mxu0 0.0
      %3857 = vmatpush1.msra.mxu0 0.0
      %3858 = vmatprep.subr.mxu0 0.0
      %3859 = vmatpush1.msra.mxu0 0.0
      %3860 = vmatprep.subr.mxu0 0.0
      %3861 = vmatpush1.msra.mxu0 0.0
      %3862 = vmatprep.subr.mxu0 0.0
      %3863 = vmatpush1.msra.mxu0 0.0
      %3864 = vmatprep.subr.mxu0 0.0
      %3865 = vmatpush1.msra.mxu0 0.0
      %3866 = vmatprep.subr.mxu0 0.0
      %3867 = vmatpush1.msra.mxu0 0.0
      %3868 = vmatprep.subr.mxu0 0.0
      %3869 = vmatpush1.msra.mxu0 0.0
      %3870 = vmatprep.subr.mxu0 0.0
      %3871 = vmatpush1.msra.mxu0 0.0
      %3872 = vmatprep.subr.mxu0 0.0
      %3873 = vmatpush1.msra.mxu0 0.0
      %3874 = vmatprep.subr.mxu0 0.0
      %3875 = vmatpush1.msra.mxu0 0.0
      %3876 = vmatprep.subr.mxu0 0.0
      %3877 = vmatpush1.msra.mxu0 0.0
      %3878 = vmatprep.subr.mxu0 0.0
      %3879 = vmatpush1.msra.mxu0 0.0
      %3880 = vmatprep.subr.mxu0 0.0
      %3881 = vmatpush1.msra.mxu0 0.0
      %3882 = vmatprep.subr.mxu0 0.0
      %3883 = vmatpush1.msra.mxu0 %v3850
      %3884 = vmatprep.subr.mxu0 0.0
      %3885 = vmatpush2.msra.mxu0 0.0
      %3886 = vmatprep.subr.mxu0 0.0
      %3887 = vmatpush2.msra.mxu0 0.0
      %3888 = vmatprep.subr.mxu0 0.0
      %3889 = vmatpush2.msra.mxu0 0.0
      %3890 = vmatprep.subr.mxu0 0.0
      %3891 = vmatpush2.msra.mxu0 0.0
      %3892 = vmatprep.subr.mxu0 0.0
      %3893 = vmatpush2.msra.mxu0 0.0
      %3894 = vmatprep.subr.mxu0 0.0
      %3895 = vmatpush2.msra.mxu0 0.0
      %3896 = vmatprep.subr.mxu0 0.0
      %3897 = vmatpush2.msra.mxu0 0.0
      %3898 = vmatprep.subr.mxu0 0.0
      %3899 = vmatpush2.msra.mxu0 0.0
      %3900 = vmatprep.subr.mxu0 0.0
      %3901 = vmatpush2.msra.mxu0 0.0
      %3902 = vmatprep.subr.mxu0 0.0
      %3903 = vmatpush2.msra.mxu0 0.0
      %3904 = vmatprep.subr.mxu0 0.0
      %3905 = vmatpush2.msra.mxu0 0.0
      %3906 = vmatprep.subr.mxu0 0.0
      %3907 = vmatpush2.msra.mxu0 0.0
      %3908 = vmatprep.subr.mxu0 0.0
      %3909 = vmatpush2.msra.mxu0 0.0
      %3910 = vmatprep.subr.mxu0 0.0
      %3911 = vmatpush2.msra.mxu0 0.0
      %3912 = vmatprep.subr.mxu0 0.0
      %3913 = vmatpush2.msra.mxu0 0.0
      %3914 = vmatprep.subr.mxu0 0.0
      %3915 = vmatpush2.msra.mxu0 0.0
      %3916 = vmatprep.mubr.f32.mxu0 0.0
      %3917 = vmatmul.mubr.f32.gmra.mxu0 %v977
      %v3918 = vpop.f32.mrf.mxu0
      %v3919 = vadd.f32 0.0, %v3918
      %v3920 = vpop.f32.mrf.mxu0
      %3921 = vmatprep.mubr.f32.mxu0 0.0
      %3922 = vmatmul.mubr.f32.gmra.mxu0 %v980
      %v3923 = vpop.f32.mrf.mxu0
      %v3924 = vadd.f32 0.0, %v3923
      %v3925 = vpop.f32.mrf.mxu0
      %3926 = vmatprep.mubr.f32.mxu0 0.0
      %3927 = vmatmul.mubr.f32.gmra.mxu0 %v983
      %v3928 = vpop.f32.mrf.mxu0
      %v3929 = vadd.f32 0.0, %v3928
      %v3930 = vpop.f32.mrf.mxu0
      %3931 = vmatprep.mubr.f32.mxu0 0.0
      %3932 = vmatmul.mubr.f32.gmra.mxu0 %v986
      %v3933 = vpop.f32.mrf.mxu0
      %v3934 = vadd.f32 0.0, %v3933
      %v3935 = vpop.f32.mrf.mxu0
      %3936 = vmatprep.mubr.f32.mxu0 0.0
      %3937 = vmatmul.mubr.f32.gmra.mxu0 %v989
      %v3938 = vpop.f32.mrf.mxu0
      %v3939 = vadd.f32 0.0, %v3938
      %v3940 = vpop.f32.mrf.mxu0
      %3941 = vmatprep.mubr.f32.mxu0 0.0
      %3942 = vmatmul.mubr.f32.gmra.mxu0 %v992
      %v3943 = vpop.f32.mrf.mxu0
      %v3944 = vadd.f32 0.0, %v3943
      %v3945 = vpop.f32.mrf.mxu0
      %3946 = vmatprep.mubr.f32.mxu0 0.0
      %3947 = vmatmul.mubr.f32.gmra.mxu0 %v995
      %v3948 = vpop.f32.mrf.mxu0
      %v3949 = vadd.f32 0.0, %v3948
      %v3950 = vpop.f32.mrf.mxu0
      %3951 = vmatprep.mubr.f32.mxu0 0.0
      %3952 = vmatmul.mubr.f32.gmra.mxu0 %v998
      %v3953 = vpop.f32.mrf.mxu0
      %v3954 = vadd.f32 0.0, %v3953
      %v3955 = vpop.f32.mrf.mxu0
      %3956 = vdwg.mxu0
      %v3958 = vsel %vm593, %v3847, 0
      %3960 = vmatprep.subr.mxu0 0.0
      %3961 = vmatpush1.msra.mxu0 0.0
      %3962 = vmatprep.subr.mxu0 0.0
      %3963 = vmatpush1.msra.mxu0 0.0
      %3964 = vmatprep.subr.mxu0 0.0
      %3965 = vmatpush1.msra.mxu0 0.0
      %3966 = vmatprep.subr.mxu0 0.0
      %3967 = vmatpush1.msra.mxu0 0.0
      %3968 = vmatprep.subr.mxu0 0.0
      %3969 = vmatpush1.msra.mxu0 0.0
      %3970 = vmatprep.subr.mxu0 0.0
      %3971 = vmatpush1.msra.mxu0 0.0
      %3972 = vmatprep.subr.mxu0 0.0
      %3973 = vmatpush1.msra.mxu0 0.0
      %3974 = vmatprep.subr.mxu0 0.0
      %3975 = vmatpush1.msra.mxu0 0.0
      %3976 = vmatprep.subr.mxu0 0.0
      %3977 = vmatpush1.msra.mxu0 0.0
      %3978 = vmatprep.subr.mxu0 0.0
      %3979 = vmatpush1.msra.mxu0 0.0
      %3980 = vmatprep.subr.mxu0 0.0
      %3981 = vmatpush1.msra.mxu0 0.0
      %3982 = vmatprep.subr.mxu0 0.0
      %3983 = vmatpush1.msra.mxu0 0.0
      %3984 = vmatprep.subr.mxu0 0.0
      %3985 = vmatpush1.msra.mxu0 0.0
      %3986 = vmatprep.subr.mxu0 0.0
      %3987 = vmatpush1.msra.mxu0 0.0
      %3988 = vmatprep.subr.mxu0 0.0
      %3989 = vmatpush1.msra.mxu0 0.0
      %3990 = vmatprep.subr.mxu0 0.0
      %3991 = vmatpush1.msra.mxu0 %v3958
      %3992 = vmatprep.subr.mxu0 0.0
      %3993 = vmatpush2.msra.mxu0 0.0
      %3994 = vmatprep.subr.mxu0 0.0
      %3995 = vmatpush2.msra.mxu0 0.0
      %3996 = vmatprep.subr.mxu0 0.0
      %3997 = vmatpush2.msra.mxu0 0.0
      %3998 = vmatprep.subr.mxu0 0.0
      %3999 = vmatpush2.msra.mxu0 0.0
      %4000 = vmatprep.subr.mxu0 0.0
      %4001 = vmatpush2.msra.mxu0 0.0
      %4002 = vmatprep.subr.mxu0 0.0
      %4003 = vmatpush2.msra.mxu0 0.0
      %4004 = vmatprep.subr.mxu0 0.0
      %4005 = vmatpush2.msra.mxu0 0.0
      %4006 = vmatprep.subr.mxu0 0.0
      %4007 = vmatpush2.msra.mxu0 0.0
      %4008 = vmatprep.subr.mxu0 0.0
      %4009 = vmatpush2.msra.mxu0 0.0
      %4010 = vmatprep.subr.mxu0 0.0
      %4011 = vmatpush2.msra.mxu0 0.0
      %4012 = vmatprep.subr.mxu0 0.0
      %4013 = vmatpush2.msra.mxu0 0.0
      %4014 = vmatprep.subr.mxu0 0.0
      %4015 = vmatpush2.msra.mxu0 0.0
      %4016 = vmatprep.subr.mxu0 0.0
      %4017 = vmatpush2.msra.mxu0 0.0
      %4018 = vmatprep.subr.mxu0 0.0
      %4019 = vmatpush2.msra.mxu0 0.0
      %4020 = vmatprep.subr.mxu0 0.0
      %4021 = vmatpush2.msra.mxu0 0.0
      %4022 = vmatprep.subr.mxu0 0.0
      %4023 = vmatpush2.msra.mxu0 0.0
      %4024 = vmatprep.mubr.f32.mxu0 0.0
      %4025 = vmatmul.mubr.f32.gmra.mxu0 %v836
      %v4026 = vpop.f32.mrf.mxu0
      %v4027 = vadd.f32 %v3919, %v4026
      %v4028 = vpop.f32.mrf.mxu0
      %4029 = vmatprep.mubr.f32.mxu0 0.0
      %4030 = vmatmul.mubr.f32.gmra.mxu0 %v839
      %v4031 = vpop.f32.mrf.mxu0
      %v4032 = vadd.f32 %v3924, %v4031
      %v4033 = vpop.f32.mrf.mxu0
      %4034 = vmatprep.mubr.f32.mxu0 0.0
      %4035 = vmatmul.mubr.f32.gmra.mxu0 %v842
      %v4036 = vpop.f32.mrf.mxu0
      %v4037 = vadd.f32 %v3929, %v4036
      %v4038 = vpop.f32.mrf.mxu0
      %4039 = vmatprep.mubr.f32.mxu0 0.0
      %4040 = vmatmul.mubr.f32.gmra.mxu0 %v845
      %v4041 = vpop.f32.mrf.mxu0
      %v4042 = vadd.f32 %v3934, %v4041
      %v4043 = vpop.f32.mrf.mxu0
      %4044 = vmatprep.mubr.f32.mxu0 0.0
      %4045 = vmatmul.mubr.f32.gmra.mxu0 %v848
      %v4046 = vpop.f32.mrf.mxu0
      %v4047 = vadd.f32 %v3939, %v4046
      %v4048 = vpop.f32.mrf.mxu0
      %4049 = vmatprep.mubr.f32.mxu0 0.0
      %4050 = vmatmul.mubr.f32.gmra.mxu0 %v851
      %v4051 = vpop.f32.mrf.mxu0
      %v4052 = vadd.f32 %v3944, %v4051
      %v4053 = vpop.f32.mrf.mxu0
      %4054 = vmatprep.mubr.f32.mxu0 0.0
      %4055 = vmatmul.mubr.f32.gmra.mxu0 %v854
      %v4056 = vpop.f32.mrf.mxu0
      %v4057 = vadd.f32 %v3949, %v4056
      %v4058 = vpop.f32.mrf.mxu0
      %4059 = vmatprep.mubr.f32.mxu0 0.0
      %4060 = vmatmul.mubr.f32.gmra.mxu0 %v857
      %v4061 = vpop.f32.mrf.mxu0
      %v4062 = vadd.f32 %v3954, %v4061
      %v4063 = vpop.f32.mrf.mxu0
      %4064 = vdwg.mxu0
      %v4065 = vld [vmem:[%s3 + $0x68] sm:$0xf]
      %v4067 = vsel %vm568, %v394, 0
      %v4070 = vsel %vm568, %v395, 0
      %v4073 = vsel %vm568, %v396, 0
      %v4076 = vsel %vm568, %v397, 0
      %v4079 = vsel %vm568, %v398, 0
      %v4082 = vsel %vm568, %v399, 0
      %v4085 = vsel %vm568, %v400, 0
      %v4088 = vsel %vm568, %v401, 0
      %v4091 = vsel %vm593, %v4065, 0
      %4093 = vmatprep.subr.mxu0 0.0
      %4094 = vmatpush1.msra.mxu0 0.0
      %4095 = vmatprep.subr.mxu0 0.0
      %4096 = vmatpush1.msra.mxu0 0.0
      %4097 = vmatprep.subr.mxu0 0.0
      %4098 = vmatpush1.msra.mxu0 0.0
      %4099 = vmatprep.subr.mxu0 0.0
      %4100 = vmatpush1.msra.mxu0 0.0
      %4101 = vmatprep.subr.mxu0 0.0
      %4102 = vmatpush1.msra.mxu0 0.0
      %4103 = vmatprep.subr.mxu0 0.0
      %4104 = vmatpush1.msra.mxu0 0.0
      %4105 = vmatprep.subr.mxu0 0.0
      %4106 = vmatpush1.msra.mxu0 0.0
      %4107 = vmatprep.subr.mxu0 0.0
      %4108 = vmatpush1.msra.mxu0 0.0
      %4109 = vmatprep.subr.mxu0 0.0
      %4110 = vmatpush1.msra.mxu0 0.0
      %4111 = vmatprep.subr.mxu0 0.0
      %4112 = vmatpush1.msra.mxu0 0.0
      %4113 = vmatprep.subr.mxu0 0.0
      %4114 = vmatpush1.msra.mxu0 0.0
      %4115 = vmatprep.subr.mxu0 0.0
      %4116 = vmatpush1.msra.mxu0 0.0
      %4117 = vmatprep.subr.mxu0 0.0
      %4118 = vmatpush1.msra.mxu0 0.0
      %4119 = vmatprep.subr.mxu0 0.0
      %4120 = vmatpush1.msra.mxu0 0.0
      %4121 = vmatprep.subr.mxu0 0.0
      %4122 = vmatpush1.msra.mxu0 0.0
      %4123 = vmatprep.subr.mxu0 0.0
      %4124 = vmatpush1.msra.mxu0 %v4091
      %4125 = vmatprep.subr.mxu0 0.0
      %4126 = vmatpush2.msra.mxu0 0.0
      %4127 = vmatprep.subr.mxu0 0.0
      %4128 = vmatpush2.msra.mxu0 0.0
      %4129 = vmatprep.subr.mxu0 0.0
      %4130 = vmatpush2.msra.mxu0 0.0
      %4131 = vmatprep.subr.mxu0 0.0
      %4132 = vmatpush2.msra.mxu0 0.0
      %4133 = vmatprep.subr.mxu0 0.0
      %4134 = vmatpush2.msra.mxu0 0.0
      %4135 = vmatprep.subr.mxu0 0.0
      %4136 = vmatpush2.msra.mxu0 0.0
      %4137 = vmatprep.subr.mxu0 0.0
      %4138 = vmatpush2.msra.mxu0 0.0
      %4139 = vmatprep.subr.mxu0 0.0
      %4140 = vmatpush2.msra.mxu0 0.0
      %4141 = vmatprep.subr.mxu0 0.0
      %4142 = vmatpush2.msra.mxu0 0.0
      %4143 = vmatprep.subr.mxu0 0.0
      %4144 = vmatpush2.msra.mxu0 0.0
      %4145 = vmatprep.subr.mxu0 0.0
      %4146 = vmatpush2.msra.mxu0 0.0
      %4147 = vmatprep.subr.mxu0 0.0
      %4148 = vmatpush2.msra.mxu0 0.0
      %4149 = vmatprep.subr.mxu0 0.0
      %4150 = vmatpush2.msra.mxu0 0.0
      %4151 = vmatprep.subr.mxu0 0.0
      %4152 = vmatpush2.msra.mxu0 0.0
      %4153 = vmatprep.subr.mxu0 0.0
      %4154 = vmatpush2.msra.mxu0 0.0
      %4155 = vmatprep.subr.mxu0 0.0
      %4156 = vmatpush2.msra.mxu0 0.0
      %4157 = vmatprep.mubr.f32.mxu0 0.0
      %4158 = vmatmul.mubr.f32.gmra.mxu0 %v4067
      %v4159 = vpop.f32.mrf.mxu0
      %v4160 = vadd.f32 0.0, %v4159
      %v4161 = vpop.f32.mrf.mxu0
      %4162 = vmatprep.mubr.f32.mxu0 0.0
      %4163 = vmatmul.mubr.f32.gmra.mxu0 %v4070
      %v4164 = vpop.f32.mrf.mxu0
      %v4165 = vadd.f32 0.0, %v4164
      %v4166 = vpop.f32.mrf.mxu0
      %4167 = vmatprep.mubr.f32.mxu0 0.0
      %4168 = vmatmul.mubr.f32.gmra.mxu0 %v4073
      %v4169 = vpop.f32.mrf.mxu0
      %v4170 = vadd.f32 0.0, %v4169
      %v4171 = vpop.f32.mrf.mxu0
      %4172 = vmatprep.mubr.f32.mxu0 0.0
      %4173 = vmatmul.mubr.f32.gmra.mxu0 %v4076
      %v4174 = vpop.f32.mrf.mxu0
      %v4175 = vadd.f32 0.0, %v4174
      %v4176 = vpop.f32.mrf.mxu0
      %4177 = vmatprep.mubr.f32.mxu0 0.0
      %4178 = vmatmul.mubr.f32.gmra.mxu0 %v4079
      %v4179 = vpop.f32.mrf.mxu0
      %v4180 = vadd.f32 0.0, %v4179
      %v4181 = vpop.f32.mrf.mxu0
      %4182 = vmatprep.mubr.f32.mxu0 0.0
      %4183 = vmatmul.mubr.f32.gmra.mxu0 %v4082
      %v4184 = vpop.f32.mrf.mxu0
      %v4185 = vadd.f32 0.0, %v4184
      %v4186 = vpop.f32.mrf.mxu0
      %4187 = vmatprep.mubr.f32.mxu0 0.0
      %4188 = vmatmul.mubr.f32.gmra.mxu0 %v4085
      %v4189 = vpop.f32.mrf.mxu0
      %v4190 = vadd.f32 0.0, %v4189
      %v4191 = vpop.f32.mrf.mxu0
      %4192 = vmatprep.mubr.f32.mxu0 0.0
      %4193 = vmatmul.mubr.f32.gmra.mxu0 %v4088
      %v4194 = vpop.f32.mrf.mxu0
      %v4195 = vadd.f32 0.0, %v4194
      %v4196 = vpop.f32.mrf.mxu0
      %4197 = vdwg.mxu0
      %v4198 = vadd.f32 %v4027, %v4160
      %v4199 = vadd.f32 %v4032, %v4165
      %v4200 = vadd.f32 %v4037, %v4170
      %v4201 = vadd.f32 %v4042, %v4175
      %v4202 = vadd.f32 %v4047, %v4180
      %v4203 = vadd.f32 %v4052, %v4185
      %v4204 = vadd.f32 %v4057, %v4190
      %v4205 = vadd.f32 %v4062, %v4195
      %v4206 = vld [vmem:[%s3 + $0x6c] sm:$0xf]
      %v4208 = vsel %vm568, %v402, 0
      %v4211 = vsel %vm568, %v403, 0
      %v4214 = vsel %vm568, %v404, 0
      %v4217 = vsel %vm568, %v405, 0
      %v4220 = vsel %vm568, %v406, 0
      %v4223 = vsel %vm568, %v407, 0
      %v4226 = vsel %vm568, %v408, 0
      %v4229 = vsel %vm568, %v409, 0
      %v4232 = vsel %vm593, %v4206, 0
      %4234 = vmatprep.subr.mxu0 0.0
      %4235 = vmatpush1.msra.mxu0 0.0
      %4236 = vmatprep.subr.mxu0 0.0
      %4237 = vmatpush1.msra.mxu0 0.0
      %4238 = vmatprep.subr.mxu0 0.0
      %4239 = vmatpush1.msra.mxu0 0.0
      %4240 = vmatprep.subr.mxu0 0.0
      %4241 = vmatpush1.msra.mxu0 0.0
      %4242 = vmatprep.subr.mxu0 0.0
      %4243 = vmatpush1.msra.mxu0 0.0
      %4244 = vmatprep.subr.mxu0 0.0
      %4245 = vmatpush1.msra.mxu0 0.0
      %4246 = vmatprep.subr.mxu0 0.0
      %4247 = vmatpush1.msra.mxu0 0.0
      %4248 = vmatprep.subr.mxu0 0.0
      %4249 = vmatpush1.msra.mxu0 0.0
      %4250 = vmatprep.subr.mxu0 0.0
      %4251 = vmatpush1.msra.mxu0 0.0
      %4252 = vmatprep.subr.mxu0 0.0
      %4253 = vmatpush1.msra.mxu0 0.0
      %4254 = vmatprep.subr.mxu0 0.0
      %4255 = vmatpush1.msra.mxu0 0.0
      %4256 = vmatprep.subr.mxu0 0.0
      %4257 = vmatpush1.msra.mxu0 0.0
      %4258 = vmatprep.subr.mxu0 0.0
      %4259 = vmatpush1.msra.mxu0 0.0
      %4260 = vmatprep.subr.mxu0 0.0
      %4261 = vmatpush1.msra.mxu0 0.0
      %4262 = vmatprep.subr.mxu0 0.0
      %4263 = vmatpush1.msra.mxu0 0.0
      %4264 = vmatprep.subr.mxu0 0.0
      %4265 = vmatpush1.msra.mxu0 %v4232
      %4266 = vmatprep.subr.mxu0 0.0
      %4267 = vmatpush2.msra.mxu0 0.0
      %4268 = vmatprep.subr.mxu0 0.0
      %4269 = vmatpush2.msra.mxu0 0.0
      %4270 = vmatprep.subr.mxu0 0.0
      %4271 = vmatpush2.msra.mxu0 0.0
      %4272 = vmatprep.subr.mxu0 0.0
      %4273 = vmatpush2.msra.mxu0 0.0
      %4274 = vmatprep.subr.mxu0 0.0
      %4275 = vmatpush2.msra.mxu0 0.0
      %4276 = vmatprep.subr.mxu0 0.0
      %4277 = vmatpush2.msra.mxu0 0.0
      %4278 = vmatprep.subr.mxu0 0.0
      %4279 = vmatpush2.msra.mxu0 0.0
      %4280 = vmatprep.subr.mxu0 0.0
      %4281 = vmatpush2.msra.mxu0 0.0
      %4282 = vmatprep.subr.mxu0 0.0
      %4283 = vmatpush2.msra.mxu0 0.0
      %4284 = vmatprep.subr.mxu0 0.0
      %4285 = vmatpush2.msra.mxu0 0.0
      %4286 = vmatprep.subr.mxu0 0.0
      %4287 = vmatpush2.msra.mxu0 0.0
      %4288 = vmatprep.subr.mxu0 0.0
      %4289 = vmatpush2.msra.mxu0 0.0
      %4290 = vmatprep.subr.mxu0 0.0
      %4291 = vmatpush2.msra.mxu0 0.0
      %4292 = vmatprep.subr.mxu0 0.0
      %4293 = vmatpush2.msra.mxu0 0.0
      %4294 = vmatprep.subr.mxu0 0.0
      %4295 = vmatpush2.msra.mxu0 0.0
      %4296 = vmatprep.subr.mxu0 0.0
      %4297 = vmatpush2.msra.mxu0 0.0
      %4298 = vmatprep.mubr.f32.mxu0 0.0
      %4299 = vmatmul.mubr.f32.gmra.mxu0 %v4208
      %v4300 = vpop.f32.mrf.mxu0
      %v4301 = vadd.f32 0.0, %v4300
      %v4302 = vpop.f32.mrf.mxu0
      %4303 = vmatprep.mubr.f32.mxu0 0.0
      %4304 = vmatmul.mubr.f32.gmra.mxu0 %v4211
      %v4305 = vpop.f32.mrf.mxu0
      %v4306 = vadd.f32 0.0, %v4305
      %v4307 = vpop.f32.mrf.mxu0
      %4308 = vmatprep.mubr.f32.mxu0 0.0
      %4309 = vmatmul.mubr.f32.gmra.mxu0 %v4214
      %v4310 = vpop.f32.mrf.mxu0
      %v4311 = vadd.f32 0.0, %v4310
      %v4312 = vpop.f32.mrf.mxu0
      %4313 = vmatprep.mubr.f32.mxu0 0.0
      %4314 = vmatmul.mubr.f32.gmra.mxu0 %v4217
      %v4315 = vpop.f32.mrf.mxu0
      %v4316 = vadd.f32 0.0, %v4315
      %v4317 = vpop.f32.mrf.mxu0
      %4318 = vmatprep.mubr.f32.mxu0 0.0
      %4319 = vmatmul.mubr.f32.gmra.mxu0 %v4220
      %v4320 = vpop.f32.mrf.mxu0
      %v4321 = vadd.f32 0.0, %v4320
      %v4322 = vpop.f32.mrf.mxu0
      %4323 = vmatprep.mubr.f32.mxu0 0.0
      %4324 = vmatmul.mubr.f32.gmra.mxu0 %v4223
      %v4325 = vpop.f32.mrf.mxu0
      %v4326 = vadd.f32 0.0, %v4325
      %v4327 = vpop.f32.mrf.mxu0
      %4328 = vmatprep.mubr.f32.mxu0 0.0
      %4329 = vmatmul.mubr.f32.gmra.mxu0 %v4226
      %v4330 = vpop.f32.mrf.mxu0
      %v4331 = vadd.f32 0.0, %v4330
      %v4332 = vpop.f32.mrf.mxu0
      %4333 = vmatprep.mubr.f32.mxu0 0.0
      %4334 = vmatmul.mubr.f32.gmra.mxu0 %v4229
      %v4335 = vpop.f32.mrf.mxu0
      %v4336 = vadd.f32 0.0, %v4335
      %v4337 = vpop.f32.mrf.mxu0
      %4338 = vdwg.mxu0
      %v4339 = vadd.f32 %v4198, %v4301
      %v4340 = vadd.f32 %v4199, %v4306
      %v4341 = vadd.f32 %v4200, %v4311
      %v4342 = vadd.f32 %v4201, %v4316
      %v4343 = vadd.f32 %v4202, %v4321
      %v4344 = vadd.f32 %v4203, %v4326
      %v4345 = vadd.f32 %v4204, %v4331
      %v4346 = vadd.f32 %v4205, %v4336
      %v4347 = vld [vmem:[%s3 + $0x70] sm:$0xf]
      %v4349 = vsel %vm593, %v4347, 0
      %4351 = vmatprep.subr.mxu0 0.0
      %4352 = vmatpush1.msra.mxu0 0.0
      %4353 = vmatprep.subr.mxu0 0.0
      %4354 = vmatpush1.msra.mxu0 0.0
      %4355 = vmatprep.subr.mxu0 0.0
      %4356 = vmatpush1.msra.mxu0 0.0
      %4357 = vmatprep.subr.mxu0 0.0
      %4358 = vmatpush1.msra.mxu0 0.0
      %4359 = vmatprep.subr.mxu0 0.0
      %4360 = vmatpush1.msra.mxu0 0.0
      %4361 = vmatprep.subr.mxu0 0.0
      %4362 = vmatpush1.msra.mxu0 0.0
      %4363 = vmatprep.subr.mxu0 0.0
      %4364 = vmatpush1.msra.mxu0 0.0
      %4365 = vmatprep.subr.mxu0 0.0
      %4366 = vmatpush1.msra.mxu0 0.0
      %4367 = vmatprep.subr.mxu0 0.0
      %4368 = vmatpush1.msra.mxu0 0.0
      %4369 = vmatprep.subr.mxu0 0.0
      %4370 = vmatpush1.msra.mxu0 0.0
      %4371 = vmatprep.subr.mxu0 0.0
      %4372 = vmatpush1.msra.mxu0 0.0
      %4373 = vmatprep.subr.mxu0 0.0
      %4374 = vmatpush1.msra.mxu0 0.0
      %4375 = vmatprep.subr.mxu0 0.0
      %4376 = vmatpush1.msra.mxu0 0.0
      %4377 = vmatprep.subr.mxu0 0.0
      %4378 = vmatpush1.msra.mxu0 0.0
      %4379 = vmatprep.subr.mxu0 0.0
      %4380 = vmatpush1.msra.mxu0 0.0
      %4381 = vmatprep.subr.mxu0 0.0
      %4382 = vmatpush1.msra.mxu0 %v4349
      %4383 = vmatprep.subr.mxu0 0.0
      %4384 = vmatpush2.msra.mxu0 0.0
      %4385 = vmatprep.subr.mxu0 0.0
      %4386 = vmatpush2.msra.mxu0 0.0
      %4387 = vmatprep.subr.mxu0 0.0
      %4388 = vmatpush2.msra.mxu0 0.0
      %4389 = vmatprep.subr.mxu0 0.0
      %4390 = vmatpush2.msra.mxu0 0.0
      %4391 = vmatprep.subr.mxu0 0.0
      %4392 = vmatpush2.msra.mxu0 0.0
      %4393 = vmatprep.subr.mxu0 0.0
      %4394 = vmatpush2.msra.mxu0 0.0
      %4395 = vmatprep.subr.mxu0 0.0
      %4396 = vmatpush2.msra.mxu0 0.0
      %4397 = vmatprep.subr.mxu0 0.0
      %4398 = vmatpush2.msra.mxu0 0.0
      %4399 = vmatprep.subr.mxu0 0.0
      %4400 = vmatpush2.msra.mxu0 0.0
      %4401 = vmatprep.subr.mxu0 0.0
      %4402 = vmatpush2.msra.mxu0 0.0
      %4403 = vmatprep.subr.mxu0 0.0
      %4404 = vmatpush2.msra.mxu0 0.0
      %4405 = vmatprep.subr.mxu0 0.0
      %4406 = vmatpush2.msra.mxu0 0.0
      %4407 = vmatprep.subr.mxu0 0.0
      %4408 = vmatpush2.msra.mxu0 0.0
      %4409 = vmatprep.subr.mxu0 0.0
      %4410 = vmatpush2.msra.mxu0 0.0
      %4411 = vmatprep.subr.mxu0 0.0
      %4412 = vmatpush2.msra.mxu0 0.0
      %4413 = vmatprep.subr.mxu0 0.0
      %4414 = vmatpush2.msra.mxu0 0.0
      %4415 = vmatprep.mubr.f32.mxu0 0.0
      %4416 = vmatmul.mubr.f32.gmra.mxu0 %v1400
      %v4417 = vpop.f32.mrf.mxu0
      %v4418 = vadd.f32 0.0, %v4417
      %v4419 = vpop.f32.mrf.mxu0
      %4420 = vmatprep.mubr.f32.mxu0 0.0
      %4421 = vmatmul.mubr.f32.gmra.mxu0 %v1403
      %v4422 = vpop.f32.mrf.mxu0
      %v4423 = vadd.f32 0.0, %v4422
      %v4424 = vpop.f32.mrf.mxu0
      %4425 = vmatprep.mubr.f32.mxu0 0.0
      %4426 = vmatmul.mubr.f32.gmra.mxu0 %v1406
      %v4427 = vpop.f32.mrf.mxu0
      %v4428 = vadd.f32 0.0, %v4427
      %v4429 = vpop.f32.mrf.mxu0
      %4430 = vmatprep.mubr.f32.mxu0 0.0
      %4431 = vmatmul.mubr.f32.gmra.mxu0 %v1409
      %v4432 = vpop.f32.mrf.mxu0
      %v4433 = vadd.f32 0.0, %v4432
      %v4434 = vpop.f32.mrf.mxu0
      %4435 = vmatprep.mubr.f32.mxu0 0.0
      %4436 = vmatmul.mubr.f32.gmra.mxu0 %v1412
      %v4437 = vpop.f32.mrf.mxu0
      %v4438 = vadd.f32 0.0, %v4437
      %v4439 = vpop.f32.mrf.mxu0
      %4440 = vmatprep.mubr.f32.mxu0 0.0
      %4441 = vmatmul.mubr.f32.gmra.mxu0 %v1415
      %v4442 = vpop.f32.mrf.mxu0
      %v4443 = vadd.f32 0.0, %v4442
      %v4444 = vpop.f32.mrf.mxu0
      %4445 = vmatprep.mubr.f32.mxu0 0.0
      %4446 = vmatmul.mubr.f32.gmra.mxu0 %v1418
      %v4447 = vpop.f32.mrf.mxu0
      %v4448 = vadd.f32 0.0, %v4447
      %v4449 = vpop.f32.mrf.mxu0
      %4450 = vmatprep.mubr.f32.mxu0 0.0
      %4451 = vmatmul.mubr.f32.gmra.mxu0 %v1421
      %v4452 = vpop.f32.mrf.mxu0
      %v4453 = vadd.f32 0.0, %v4452
      %v4454 = vpop.f32.mrf.mxu0
      %4455 = vdwg.mxu0
      %v4456 = vadd.f32 %v4339, %v4418
      %v4457 = vadd.f32 %v4340, %v4423
      %v4458 = vadd.f32 %v4341, %v4428
      %v4459 = vadd.f32 %v4342, %v4433
      %v4460 = vadd.f32 %v4343, %v4438
      %v4461 = vadd.f32 %v4344, %v4443
      %v4462 = vadd.f32 %v4345, %v4448
      %v4463 = vadd.f32 %v4346, %v4453
      %v4464 = vld [vmem:[%s3 + $0x74] sm:$0xf]
      %v4466 = vsel %vm593, %v4464, 0
      %4468 = vmatprep.subr.mxu0 0.0
      %4469 = vmatpush1.msra.mxu0 0.0
      %4470 = vmatprep.subr.mxu0 0.0
      %4471 = vmatpush1.msra.mxu0 0.0
      %4472 = vmatprep.subr.mxu0 0.0
      %4473 = vmatpush1.msra.mxu0 0.0
      %4474 = vmatprep.subr.mxu0 0.0
      %4475 = vmatpush1.msra.mxu0 0.0
      %4476 = vmatprep.subr.mxu0 0.0
      %4477 = vmatpush1.msra.mxu0 0.0
      %4478 = vmatprep.subr.mxu0 0.0
      %4479 = vmatpush1.msra.mxu0 0.0
      %4480 = vmatprep.subr.mxu0 0.0
      %4481 = vmatpush1.msra.mxu0 0.0
      %4482 = vmatprep.subr.mxu0 0.0
      %4483 = vmatpush1.msra.mxu0 0.0
      %4484 = vmatprep.subr.mxu0 0.0
      %4485 = vmatpush1.msra.mxu0 0.0
      %4486 = vmatprep.subr.mxu0 0.0
      %4487 = vmatpush1.msra.mxu0 0.0
      %4488 = vmatprep.subr.mxu0 0.0
      %4489 = vmatpush1.msra.mxu0 0.0
      %4490 = vmatprep.subr.mxu0 0.0
      %4491 = vmatpush1.msra.mxu0 0.0
      %4492 = vmatprep.subr.mxu0 0.0
      %4493 = vmatpush1.msra.mxu0 0.0
      %4494 = vmatprep.subr.mxu0 0.0
      %4495 = vmatpush1.msra.mxu0 0.0
      %4496 = vmatprep.subr.mxu0 0.0
      %4497 = vmatpush1.msra.mxu0 0.0
      %4498 = vmatprep.subr.mxu0 0.0
      %4499 = vmatpush1.msra.mxu0 %v4466
      %4500 = vmatprep.subr.mxu0 0.0
      %4501 = vmatpush2.msra.mxu0 0.0
      %4502 = vmatprep.subr.mxu0 0.0
      %4503 = vmatpush2.msra.mxu0 0.0
      %4504 = vmatprep.subr.mxu0 0.0
      %4505 = vmatpush2.msra.mxu0 0.0
      %4506 = vmatprep.subr.mxu0 0.0
      %4507 = vmatpush2.msra.mxu0 0.0
      %4508 = vmatprep.subr.mxu0 0.0
      %4509 = vmatpush2.msra.mxu0 0.0
      %4510 = vmatprep.subr.mxu0 0.0
      %4511 = vmatpush2.msra.mxu0 0.0
      %4512 = vmatprep.subr.mxu0 0.0
      %4513 = vmatpush2.msra.mxu0 0.0
      %4514 = vmatprep.subr.mxu0 0.0
      %4515 = vmatpush2.msra.mxu0 0.0
      %4516 = vmatprep.subr.mxu0 0.0
      %4517 = vmatpush2.msra.mxu0 0.0
      %4518 = vmatprep.subr.mxu0 0.0
      %4519 = vmatpush2.msra.mxu0 0.0
      %4520 = vmatprep.subr.mxu0 0.0
      %4521 = vmatpush2.msra.mxu0 0.0
      %4522 = vmatprep.subr.mxu0 0.0
      %4523 = vmatpush2.msra.mxu0 0.0
      %4524 = vmatprep.subr.mxu0 0.0
      %4525 = vmatpush2.msra.mxu0 0.0
      %4526 = vmatprep.subr.mxu0 0.0
      %4527 = vmatpush2.msra.mxu0 0.0
      %4528 = vmatprep.subr.mxu0 0.0
      %4529 = vmatpush2.msra.mxu0 0.0
      %4530 = vmatprep.subr.mxu0 0.0
      %4531 = vmatpush2.msra.mxu0 0.0
      %4532 = vmatprep.mubr.f32.mxu0 0.0
      %4533 = vmatmul.mubr.f32.gmra.mxu0 %v1541
      %v4534 = vpop.f32.mrf.mxu0
      %v4535 = vadd.f32 0.0, %v4534
      %v4536 = vpop.f32.mrf.mxu0
      %4537 = vmatprep.mubr.f32.mxu0 0.0
      %4538 = vmatmul.mubr.f32.gmra.mxu0 %v1544
      %v4539 = vpop.f32.mrf.mxu0
      %v4540 = vadd.f32 0.0, %v4539
      %v4541 = vpop.f32.mrf.mxu0
      %4542 = vmatprep.mubr.f32.mxu0 0.0
      %4543 = vmatmul.mubr.f32.gmra.mxu0 %v1547
      %v4544 = vpop.f32.mrf.mxu0
      %v4545 = vadd.f32 0.0, %v4544
      %v4546 = vpop.f32.mrf.mxu0
      %4547 = vmatprep.mubr.f32.mxu0 0.0
      %4548 = vmatmul.mubr.f32.gmra.mxu0 %v1550
      %v4549 = vpop.f32.mrf.mxu0
      %v4550 = vadd.f32 0.0, %v4549
      %v4551 = vpop.f32.mrf.mxu0
      %4552 = vmatprep.mubr.f32.mxu0 0.0
      %4553 = vmatmul.mubr.f32.gmra.mxu0 %v1553
      %v4554 = vpop.f32.mrf.mxu0
      %v4555 = vadd.f32 0.0, %v4554
      %v4556 = vpop.f32.mrf.mxu0
      %4557 = vmatprep.mubr.f32.mxu0 0.0
      %4558 = vmatmul.mubr.f32.gmra.mxu0 %v1556
      %v4559 = vpop.f32.mrf.mxu0
      %v4560 = vadd.f32 0.0, %v4559
      %v4561 = vpop.f32.mrf.mxu0
      %4562 = vmatprep.mubr.f32.mxu0 0.0
      %4563 = vmatmul.mubr.f32.gmra.mxu0 %v1559
      %v4564 = vpop.f32.mrf.mxu0
      %v4565 = vadd.f32 0.0, %v4564
      %v4566 = vpop.f32.mrf.mxu0
      %4567 = vmatprep.mubr.f32.mxu0 0.0
      %4568 = vmatmul.mubr.f32.gmra.mxu0 %v1562
      %v4569 = vpop.f32.mrf.mxu0
      %v4570 = vadd.f32 0.0, %v4569
      %v4571 = vpop.f32.mrf.mxu0
      %4572 = vdwg.mxu0
      %v4573 = vadd.f32 %v4456, %v4535
      %v4574 = vadd.f32 %v4457, %v4540
      %v4575 = vadd.f32 %v4458, %v4545
      %v4576 = vadd.f32 %v4459, %v4550
      %v4577 = vadd.f32 %v4460, %v4555
      %v4578 = vadd.f32 %v4461, %v4560
      %v4579 = vadd.f32 %v4462, %v4565
      %v4580 = vadd.f32 %v4463, %v4570
      %v4581 = vld [vmem:[%s3 + $0x78] sm:$0xf]
      %v4583 = vsel %vm568, %v468, 0
      %v4586 = vsel %vm568, %v469, 0
      %v4589 = vsel %vm568, %v470, 0
      %v4592 = vsel %vm568, %v471, 0
      %v4595 = vsel %vm568, %v472, 0
      %v4598 = vsel %vm568, %v473, 0
      %v4601 = vsel %vm568, %v474, 0
      %v4604 = vsel %vm568, %v475, 0
      %v4607 = vsel %vm593, %v4581, 0
      %4609 = vmatprep.subr.mxu0 0.0
      %4610 = vmatpush1.msra.mxu0 0.0
      %4611 = vmatprep.subr.mxu0 0.0
      %4612 = vmatpush1.msra.mxu0 0.0
      %4613 = vmatprep.subr.mxu0 0.0
      %4614 = vmatpush1.msra.mxu0 0.0
      %4615 = vmatprep.subr.mxu0 0.0
      %4616 = vmatpush1.msra.mxu0 0.0
      %4617 = vmatprep.subr.mxu0 0.0
      %4618 = vmatpush1.msra.mxu0 0.0
      %4619 = vmatprep.subr.mxu0 0.0
      %4620 = vmatpush1.msra.mxu0 0.0
      %4621 = vmatprep.subr.mxu0 0.0
      %4622 = vmatpush1.msra.mxu0 0.0
      %4623 = vmatprep.subr.mxu0 0.0
      %4624 = vmatpush1.msra.mxu0 0.0
      %4625 = vmatprep.subr.mxu0 0.0
      %4626 = vmatpush1.msra.mxu0 0.0
      %4627 = vmatprep.subr.mxu0 0.0
      %4628 = vmatpush1.msra.mxu0 0.0
      %4629 = vmatprep.subr.mxu0 0.0
      %4630 = vmatpush1.msra.mxu0 0.0
      %4631 = vmatprep.subr.mxu0 0.0
      %4632 = vmatpush1.msra.mxu0 0.0
      %4633 = vmatprep.subr.mxu0 0.0
      %4634 = vmatpush1.msra.mxu0 0.0
      %4635 = vmatprep.subr.mxu0 0.0
      %4636 = vmatpush1.msra.mxu0 0.0
      %4637 = vmatprep.subr.mxu0 0.0
      %4638 = vmatpush1.msra.mxu0 0.0
      %4639 = vmatprep.subr.mxu0 0.0
      %4640 = vmatpush1.msra.mxu0 %v4607
      %4641 = vmatprep.subr.mxu0 0.0
      %4642 = vmatpush2.msra.mxu0 0.0
      %4643 = vmatprep.subr.mxu0 0.0
      %4644 = vmatpush2.msra.mxu0 0.0
      %4645 = vmatprep.subr.mxu0 0.0
      %4646 = vmatpush2.msra.mxu0 0.0
      %4647 = vmatprep.subr.mxu0 0.0
      %4648 = vmatpush2.msra.mxu0 0.0
      %4649 = vmatprep.subr.mxu0 0.0
      %4650 = vmatpush2.msra.mxu0 0.0
      %4651 = vmatprep.subr.mxu0 0.0
      %4652 = vmatpush2.msra.mxu0 0.0
      %4653 = vmatprep.subr.mxu0 0.0
      %4654 = vmatpush2.msra.mxu0 0.0
      %4655 = vmatprep.subr.mxu0 0.0
      %4656 = vmatpush2.msra.mxu0 0.0
      %4657 = vmatprep.subr.mxu0 0.0
      %4658 = vmatpush2.msra.mxu0 0.0
      %4659 = vmatprep.subr.mxu0 0.0
      %4660 = vmatpush2.msra.mxu0 0.0
      %4661 = vmatprep.subr.mxu0 0.0
      %4662 = vmatpush2.msra.mxu0 0.0
      %4663 = vmatprep.subr.mxu0 0.0
      %4664 = vmatpush2.msra.mxu0 0.0
      %4665 = vmatprep.subr.mxu0 0.0
      %4666 = vmatpush2.msra.mxu0 0.0
      %4667 = vmatprep.subr.mxu0 0.0
      %4668 = vmatpush2.msra.mxu0 0.0
      %4669 = vmatprep.subr.mxu0 0.0
      %4670 = vmatpush2.msra.mxu0 0.0
      %4671 = vmatprep.subr.mxu0 0.0
      %4672 = vmatpush2.msra.mxu0 0.0
      %4673 = vmatprep.mubr.f32.mxu0 0.0
      %4674 = vmatmul.mubr.f32.gmra.mxu0 %v4583
      %v4675 = vpop.f32.mrf.mxu0
      %v4676 = vadd.f32 0.0, %v4675
      %v4677 = vpop.f32.mrf.mxu0
      %4678 = vmatprep.mubr.f32.mxu0 0.0
      %4679 = vmatmul.mubr.f32.gmra.mxu0 %v4586
      %v4680 = vpop.f32.mrf.mxu0
      %v4681 = vadd.f32 0.0, %v4680
      %v4682 = vpop.f32.mrf.mxu0
      %4683 = vmatprep.mubr.f32.mxu0 0.0
      %4684 = vmatmul.mubr.f32.gmra.mxu0 %v4589
      %v4685 = vpop.f32.mrf.mxu0
      %v4686 = vadd.f32 0.0, %v4685
      %v4687 = vpop.f32.mrf.mxu0
      %4688 = vmatprep.mubr.f32.mxu0 0.0
      %4689 = vmatmul.mubr.f32.gmra.mxu0 %v4592
      %v4690 = vpop.f32.mrf.mxu0
      %v4691 = vadd.f32 0.0, %v4690
      %v4692 = vpop.f32.mrf.mxu0
      %4693 = vmatprep.mubr.f32.mxu0 0.0
      %4694 = vmatmul.mubr.f32.gmra.mxu0 %v4595
      %v4695 = vpop.f32.mrf.mxu0
      %v4696 = vadd.f32 0.0, %v4695
      %v4697 = vpop.f32.mrf.mxu0
      %4698 = vmatprep.mubr.f32.mxu0 0.0
      %4699 = vmatmul.mubr.f32.gmra.mxu0 %v4598
      %v4700 = vpop.f32.mrf.mxu0
      %v4701 = vadd.f32 0.0, %v4700
      %v4702 = vpop.f32.mrf.mxu0
      %4703 = vmatprep.mubr.f32.mxu0 0.0
      %4704 = vmatmul.mubr.f32.gmra.mxu0 %v4601
      %v4705 = vpop.f32.mrf.mxu0
      %v4706 = vadd.f32 0.0, %v4705
      %v4707 = vpop.f32.mrf.mxu0
      %4708 = vmatprep.mubr.f32.mxu0 0.0
      %4709 = vmatmul.mubr.f32.gmra.mxu0 %v4604
      %v4710 = vpop.f32.mrf.mxu0
      %v4711 = vadd.f32 0.0, %v4710
      %v4712 = vpop.f32.mrf.mxu0
      %4713 = vdwg.mxu0
      %v4714 = vadd.f32 %v4573, %v4676
      %v4715 = vadd.f32 %v4574, %v4681
      %v4716 = vadd.f32 %v4575, %v4686
      %v4717 = vadd.f32 %v4576, %v4691
      %v4718 = vadd.f32 %v4577, %v4696
      %v4719 = vadd.f32 %v4578, %v4701
      %v4720 = vadd.f32 %v4579, %v4706
      %v4721 = vadd.f32 %v4580, %v4711
      %v4722 = vld [vmem:[%s3 + $0x7c] sm:$0xf]
      %v4724 = vsel %vm568, %v476, 0
      %v4727 = vsel %vm568, %v477, 0
      %v4730 = vsel %vm568, %v478, 0
      %v4733 = vsel %vm568, %v479, 0
      %v4736 = vsel %vm568, %v480, 0
      %v4739 = vsel %vm568, %v481, 0
      %v4742 = vsel %vm568, %v482, 0
      %v4745 = vsel %vm568, %v483, 0
      %v4748 = vsel %vm593, %v4722, 0
      %4750 = vmatprep.subr.mxu0 0.0
      %4751 = vmatpush1.msra.mxu0 0.0
      %4752 = vmatprep.subr.mxu0 0.0
      %4753 = vmatpush1.msra.mxu0 0.0
      %4754 = vmatprep.subr.mxu0 0.0
      %4755 = vmatpush1.msra.mxu0 0.0
      %4756 = vmatprep.subr.mxu0 0.0
      %4757 = vmatpush1.msra.mxu0 0.0
      %4758 = vmatprep.subr.mxu0 0.0
      %4759 = vmatpush1.msra.mxu0 0.0
      %4760 = vmatprep.subr.mxu0 0.0
      %4761 = vmatpush1.msra.mxu0 0.0
      %4762 = vmatprep.subr.mxu0 0.0
      %4763 = vmatpush1.msra.mxu0 0.0
      %4764 = vmatprep.subr.mxu0 0.0
      %4765 = vmatpush1.msra.mxu0 0.0
      %4766 = vmatprep.subr.mxu0 0.0
      %4767 = vmatpush1.msra.mxu0 0.0
      %4768 = vmatprep.subr.mxu0 0.0
      %4769 = vmatpush1.msra.mxu0 0.0
      %4770 = vmatprep.subr.mxu0 0.0
      %4771 = vmatpush1.msra.mxu0 0.0
      %4772 = vmatprep.subr.mxu0 0.0
      %4773 = vmatpush1.msra.mxu0 0.0
      %4774 = vmatprep.subr.mxu0 0.0
      %4775 = vmatpush1.msra.mxu0 0.0
      %4776 = vmatprep.subr.mxu0 0.0
      %4777 = vmatpush1.msra.mxu0 0.0
      %4778 = vmatprep.subr.mxu0 0.0
      %4779 = vmatpush1.msra.mxu0 0.0
      %4780 = vmatprep.subr.mxu0 0.0
      %4781 = vmatpush1.msra.mxu0 %v4748
      %4782 = vmatprep.subr.mxu0 0.0
      %4783 = vmatpush2.msra.mxu0 0.0
      %4784 = vmatprep.subr.mxu0 0.0
      %4785 = vmatpush2.msra.mxu0 0.0
      %4786 = vmatprep.subr.mxu0 0.0
      %4787 = vmatpush2.msra.mxu0 0.0
      %4788 = vmatprep.subr.mxu0 0.0
      %4789 = vmatpush2.msra.mxu0 0.0
      %4790 = vmatprep.subr.mxu0 0.0
      %4791 = vmatpush2.msra.mxu0 0.0
      %4792 = vmatprep.subr.mxu0 0.0
      %4793 = vmatpush2.msra.mxu0 0.0
      %4794 = vmatprep.subr.mxu0 0.0
      %4795 = vmatpush2.msra.mxu0 0.0
      %4796 = vmatprep.subr.mxu0 0.0
      %4797 = vmatpush2.msra.mxu0 0.0
      %4798 = vmatprep.subr.mxu0 0.0
      %4799 = vmatpush2.msra.mxu0 0.0
      %4800 = vmatprep.subr.mxu0 0.0
      %4801 = vmatpush2.msra.mxu0 0.0
      %4802 = vmatprep.subr.mxu0 0.0
      %4803 = vmatpush2.msra.mxu0 0.0
      %4804 = vmatprep.subr.mxu0 0.0
      %4805 = vmatpush2.msra.mxu0 0.0
      %4806 = vmatprep.subr.mxu0 0.0
      %4807 = vmatpush2.msra.mxu0 0.0
      %4808 = vmatprep.subr.mxu0 0.0
      %4809 = vmatpush2.msra.mxu0 0.0
      %4810 = vmatprep.subr.mxu0 0.0
      %4811 = vmatpush2.msra.mxu0 0.0
      %4812 = vmatprep.subr.mxu0 0.0
      %4813 = vmatpush2.msra.mxu0 0.0
      %4814 = vmatprep.mubr.f32.mxu0 0.0
      %4815 = vmatmul.mubr.f32.gmra.mxu0 %v4724
      %v4816 = vpop.f32.mrf.mxu0
      %v4817 = vadd.f32 0.0, %v4816
      %v4818 = vpop.f32.mrf.mxu0
      %4819 = vmatprep.mubr.f32.mxu0 0.0
      %4820 = vmatmul.mubr.f32.gmra.mxu0 %v4727
      %v4821 = vpop.f32.mrf.mxu0
      %v4822 = vadd.f32 0.0, %v4821
      %v4823 = vpop.f32.mrf.mxu0
      %4824 = vmatprep.mubr.f32.mxu0 0.0
      %4825 = vmatmul.mubr.f32.gmra.mxu0 %v4730
      %v4826 = vpop.f32.mrf.mxu0
      %v4827 = vadd.f32 0.0, %v4826
      %v4828 = vpop.f32.mrf.mxu0
      %4829 = vmatprep.mubr.f32.mxu0 0.0
      %4830 = vmatmul.mubr.f32.gmra.mxu0 %v4733
      %v4831 = vpop.f32.mrf.mxu0
      %v4832 = vadd.f32 0.0, %v4831
      %v4833 = vpop.f32.mrf.mxu0
      %4834 = vmatprep.mubr.f32.mxu0 0.0
      %4835 = vmatmul.mubr.f32.gmra.mxu0 %v4736
      %v4836 = vpop.f32.mrf.mxu0
      %v4837 = vadd.f32 0.0, %v4836
      %v4838 = vpop.f32.mrf.mxu0
      %4839 = vmatprep.mubr.f32.mxu0 0.0
      %4840 = vmatmul.mubr.f32.gmra.mxu0 %v4739
      %v4841 = vpop.f32.mrf.mxu0
      %v4842 = vadd.f32 0.0, %v4841
      %v4843 = vpop.f32.mrf.mxu0
      %4844 = vmatprep.mubr.f32.mxu0 0.0
      %4845 = vmatmul.mubr.f32.gmra.mxu0 %v4742
      %v4846 = vpop.f32.mrf.mxu0
      %v4847 = vadd.f32 0.0, %v4846
      %v4848 = vpop.f32.mrf.mxu0
      %4849 = vmatprep.mubr.f32.mxu0 0.0
      %4850 = vmatmul.mubr.f32.gmra.mxu0 %v4745
      %v4851 = vpop.f32.mrf.mxu0
      %v4852 = vadd.f32 0.0, %v4851
      %v4853 = vpop.f32.mrf.mxu0
      %4854 = vdwg.mxu0
      %v4855 = vadd.f32 %v4714, %v4817
      %v4856 = vadd.f32 %v4715, %v4822
      %v4857 = vadd.f32 %v4716, %v4827
      %v4858 = vadd.f32 %v4717, %v4832
      %v4859 = vadd.f32 %v4718, %v4837
      %v4860 = vadd.f32 %v4719, %v4842
      %v4861 = vadd.f32 %v4720, %v4847
      %v4862 = vadd.f32 %v4721, %v4852
      %v4863 = vld [vmem:[%s3 + $0x80] sm:$0xf]
      %v4865 = vsel %vm593, %v4863, 0
      %4867 = vmatprep.subr.mxu0 0.0
      %4868 = vmatpush1.msra.mxu0 0.0
      %4869 = vmatprep.subr.mxu0 0.0
      %4870 = vmatpush1.msra.mxu0 0.0
      %4871 = vmatprep.subr.mxu0 0.0
      %4872 = vmatpush1.msra.mxu0 0.0
      %4873 = vmatprep.subr.mxu0 0.0
      %4874 = vmatpush1.msra.mxu0 0.0
      %4875 = vmatprep.subr.mxu0 0.0
      %4876 = vmatpush1.msra.mxu0 0.0
      %4877 = vmatprep.subr.mxu0 0.0
      %4878 = vmatpush1.msra.mxu0 0.0
      %4879 = vmatprep.subr.mxu0 0.0
      %4880 = vmatpush1.msra.mxu0 0.0
      %4881 = vmatprep.subr.mxu0 0.0
      %4882 = vmatpush1.msra.mxu0 0.0
      %4883 = vmatprep.subr.mxu0 0.0
      %4884 = vmatpush1.msra.mxu0 0.0
      %4885 = vmatprep.subr.mxu0 0.0
      %4886 = vmatpush1.msra.mxu0 0.0
      %4887 = vmatprep.subr.mxu0 0.0
      %4888 = vmatpush1.msra.mxu0 0.0
      %4889 = vmatprep.subr.mxu0 0.0
      %4890 = vmatpush1.msra.mxu0 0.0
      %4891 = vmatprep.subr.mxu0 0.0
      %4892 = vmatpush1.msra.mxu0 0.0
      %4893 = vmatprep.subr.mxu0 0.0
      %4894 = vmatpush1.msra.mxu0 0.0
      %4895 = vmatprep.subr.mxu0 0.0
      %4896 = vmatpush1.msra.mxu0 0.0
      %4897 = vmatprep.subr.mxu0 0.0
      %4898 = vmatpush1.msra.mxu0 %v4865
      %4899 = vmatprep.subr.mxu0 0.0
      %4900 = vmatpush2.msra.mxu0 0.0
      %4901 = vmatprep.subr.mxu0 0.0
      %4902 = vmatpush2.msra.mxu0 0.0
      %4903 = vmatprep.subr.mxu0 0.0
      %4904 = vmatpush2.msra.mxu0 0.0
      %4905 = vmatprep.subr.mxu0 0.0
      %4906 = vmatpush2.msra.mxu0 0.0
      %4907 = vmatprep.subr.mxu0 0.0
      %4908 = vmatpush2.msra.mxu0 0.0
      %4909 = vmatprep.subr.mxu0 0.0
      %4910 = vmatpush2.msra.mxu0 0.0
      %4911 = vmatprep.subr.mxu0 0.0
      %4912 = vmatpush2.msra.mxu0 0.0
      %4913 = vmatprep.subr.mxu0 0.0
      %4914 = vmatpush2.msra.mxu0 0.0
      %4915 = vmatprep.subr.mxu0 0.0
      %4916 = vmatpush2.msra.mxu0 0.0
      %4917 = vmatprep.subr.mxu0 0.0
      %4918 = vmatpush2.msra.mxu0 0.0
      %4919 = vmatprep.subr.mxu0 0.0
      %4920 = vmatpush2.msra.mxu0 0.0
      %4921 = vmatprep.subr.mxu0 0.0
      %4922 = vmatpush2.msra.mxu0 0.0
      %4923 = vmatprep.subr.mxu0 0.0
      %4924 = vmatpush2.msra.mxu0 0.0
      %4925 = vmatprep.subr.mxu0 0.0
      %4926 = vmatpush2.msra.mxu0 0.0
      %4927 = vmatprep.subr.mxu0 0.0
      %4928 = vmatpush2.msra.mxu0 0.0
      %4929 = vmatprep.subr.mxu0 0.0
      %4930 = vmatpush2.msra.mxu0 0.0
      %4931 = vmatprep.mubr.f32.mxu0 0.0
      %4932 = vmatmul.mubr.f32.gmra.mxu0 %v1964
      %v4933 = vpop.f32.mrf.mxu0
      %v4934 = vadd.f32 0.0, %v4933
      %v4935 = vpop.f32.mrf.mxu0
      %4936 = vmatprep.mubr.f32.mxu0 0.0
      %4937 = vmatmul.mubr.f32.gmra.mxu0 %v1967
      %v4938 = vpop.f32.mrf.mxu0
      %v4939 = vadd.f32 0.0, %v4938
      %v4940 = vpop.f32.mrf.mxu0
      %4941 = vmatprep.mubr.f32.mxu0 0.0
      %4942 = vmatmul.mubr.f32.gmra.mxu0 %v1970
      %v4943 = vpop.f32.mrf.mxu0
      %v4944 = vadd.f32 0.0, %v4943
      %v4945 = vpop.f32.mrf.mxu0
      %4946 = vmatprep.mubr.f32.mxu0 0.0
      %4947 = vmatmul.mubr.f32.gmra.mxu0 %v1973
      %v4948 = vpop.f32.mrf.mxu0
      %v4949 = vadd.f32 0.0, %v4948
      %v4950 = vpop.f32.mrf.mxu0
      %4951 = vmatprep.mubr.f32.mxu0 0.0
      %4952 = vmatmul.mubr.f32.gmra.mxu0 %v1976
      %v4953 = vpop.f32.mrf.mxu0
      %v4954 = vadd.f32 0.0, %v4953
      %v4955 = vpop.f32.mrf.mxu0
      %4956 = vmatprep.mubr.f32.mxu0 0.0
      %4957 = vmatmul.mubr.f32.gmra.mxu0 %v1979
      %v4958 = vpop.f32.mrf.mxu0
      %v4959 = vadd.f32 0.0, %v4958
      %v4960 = vpop.f32.mrf.mxu0
      %4961 = vmatprep.mubr.f32.mxu0 0.0
      %4962 = vmatmul.mubr.f32.gmra.mxu0 %v1982
      %v4963 = vpop.f32.mrf.mxu0
      %v4964 = vadd.f32 0.0, %v4963
      %v4965 = vpop.f32.mrf.mxu0
      %4966 = vmatprep.mubr.f32.mxu0 0.0
      %4967 = vmatmul.mubr.f32.gmra.mxu0 %v1985
      %v4968 = vpop.f32.mrf.mxu0
      %v4969 = vadd.f32 0.0, %v4968
      %v4970 = vpop.f32.mrf.mxu0
      %4971 = vdwg.mxu0
      %v4972 = vadd.f32 %v4855, %v4934
      %v4973 = vadd.f32 %v4856, %v4939
      %v4974 = vadd.f32 %v4857, %v4944
      %v4975 = vadd.f32 %v4858, %v4949
      %v4976 = vadd.f32 %v4859, %v4954
      %v4977 = vadd.f32 %v4860, %v4959
      %v4978 = vadd.f32 %v4861, %v4964
      %v4979 = vadd.f32 %v4862, %v4969
      %v4980 = vld [vmem:[%s3 + $0x84] sm:$0xf]
      %v4982 = vsel %vm593, %v4980, 0
      %4984 = vmatprep.subr.mxu0 0.0
      %4985 = vmatpush1.msra.mxu0 0.0
      %4986 = vmatprep.subr.mxu0 0.0
      %4987 = vmatpush1.msra.mxu0 0.0
      %4988 = vmatprep.subr.mxu0 0.0
      %4989 = vmatpush1.msra.mxu0 0.0
      %4990 = vmatprep.subr.mxu0 0.0
      %4991 = vmatpush1.msra.mxu0 0.0
      %4992 = vmatprep.subr.mxu0 0.0
      %4993 = vmatpush1.msra.mxu0 0.0
      %4994 = vmatprep.subr.mxu0 0.0
      %4995 = vmatpush1.msra.mxu0 0.0
      %4996 = vmatprep.subr.mxu0 0.0
      %4997 = vmatpush1.msra.mxu0 0.0
      %4998 = vmatprep.subr.mxu0 0.0
      %4999 = vmatpush1.msra.mxu0 0.0
      %5000 = vmatprep.subr.mxu0 0.0
      %5001 = vmatpush1.msra.mxu0 0.0
      %5002 = vmatprep.subr.mxu0 0.0
      %5003 = vmatpush1.msra.mxu0 0.0
      %5004 = vmatprep.subr.mxu0 0.0
      %5005 = vmatpush1.msra.mxu0 0.0
      %5006 = vmatprep.subr.mxu0 0.0
      %5007 = vmatpush1.msra.mxu0 0.0
      %5008 = vmatprep.subr.mxu0 0.0
      %5009 = vmatpush1.msra.mxu0 0.0
      %5010 = vmatprep.subr.mxu0 0.0
      %5011 = vmatpush1.msra.mxu0 0.0
      %5012 = vmatprep.subr.mxu0 0.0
      %5013 = vmatpush1.msra.mxu0 0.0
      %5014 = vmatprep.subr.mxu0 0.0
      %5015 = vmatpush1.msra.mxu0 %v4982
      %5016 = vmatprep.subr.mxu0 0.0
      %5017 = vmatpush2.msra.mxu0 0.0
      %5018 = vmatprep.subr.mxu0 0.0
      %5019 = vmatpush2.msra.mxu0 0.0
      %5020 = vmatprep.subr.mxu0 0.0
      %5021 = vmatpush2.msra.mxu0 0.0
      %5022 = vmatprep.subr.mxu0 0.0
      %5023 = vmatpush2.msra.mxu0 0.0
      %5024 = vmatprep.subr.mxu0 0.0
      %5025 = vmatpush2.msra.mxu0 0.0
      %5026 = vmatprep.subr.mxu0 0.0
      %5027 = vmatpush2.msra.mxu0 0.0
      %5028 = vmatprep.subr.mxu0 0.0
      %5029 = vmatpush2.msra.mxu0 0.0
      %5030 = vmatprep.subr.mxu0 0.0
      %5031 = vmatpush2.msra.mxu0 0.0
      %5032 = vmatprep.subr.mxu0 0.0
      %5033 = vmatpush2.msra.mxu0 0.0
      %5034 = vmatprep.subr.mxu0 0.0
      %5035 = vmatpush2.msra.mxu0 0.0
      %5036 = vmatprep.subr.mxu0 0.0
      %5037 = vmatpush2.msra.mxu0 0.0
      %5038 = vmatprep.subr.mxu0 0.0
      %5039 = vmatpush2.msra.mxu0 0.0
      %5040 = vmatprep.subr.mxu0 0.0
      %5041 = vmatpush2.msra.mxu0 0.0
      %5042 = vmatprep.subr.mxu0 0.0
      %5043 = vmatpush2.msra.mxu0 0.0
      %5044 = vmatprep.subr.mxu0 0.0
      %5045 = vmatpush2.msra.mxu0 0.0
      %5046 = vmatprep.subr.mxu0 0.0
      %5047 = vmatpush2.msra.mxu0 0.0
      %5048 = vmatprep.mubr.f32.mxu0 0.0
      %5049 = vmatmul.mubr.f32.gmra.mxu0 %v2105
      %v5050 = vpop.f32.mrf.mxu0
      %v5051 = vadd.f32 0.0, %v5050
      %v5052 = vpop.f32.mrf.mxu0
      %5053 = vmatprep.mubr.f32.mxu0 0.0
      %5054 = vmatmul.mubr.f32.gmra.mxu0 %v2108
      %v5055 = vpop.f32.mrf.mxu0
      %v5056 = vadd.f32 0.0, %v5055
      %v5057 = vpop.f32.mrf.mxu0
      %5058 = vmatprep.mubr.f32.mxu0 0.0
      %5059 = vmatmul.mubr.f32.gmra.mxu0 %v2111
      %v5060 = vpop.f32.mrf.mxu0
      %v5061 = vadd.f32 0.0, %v5060
      %v5062 = vpop.f32.mrf.mxu0
      %5063 = vmatprep.mubr.f32.mxu0 0.0
      %5064 = vmatmul.mubr.f32.gmra.mxu0 %v2114
      %v5065 = vpop.f32.mrf.mxu0
      %v5066 = vadd.f32 0.0, %v5065
      %v5067 = vpop.f32.mrf.mxu0
      %5068 = vmatprep.mubr.f32.mxu0 0.0
      %5069 = vmatmul.mubr.f32.gmra.mxu0 %v2117
      %v5070 = vpop.f32.mrf.mxu0
      %v5071 = vadd.f32 0.0, %v5070
      %v5072 = vpop.f32.mrf.mxu0
      %5073 = vmatprep.mubr.f32.mxu0 0.0
      %5074 = vmatmul.mubr.f32.gmra.mxu0 %v2120
      %v5075 = vpop.f32.mrf.mxu0
      %v5076 = vadd.f32 0.0, %v5075
      %v5077 = vpop.f32.mrf.mxu0
      %5078 = vmatprep.mubr.f32.mxu0 0.0
      %5079 = vmatmul.mubr.f32.gmra.mxu0 %v2123
      %v5080 = vpop.f32.mrf.mxu0
      %v5081 = vadd.f32 0.0, %v5080
      %v5082 = vpop.f32.mrf.mxu0
      %5083 = vmatprep.mubr.f32.mxu0 0.0
      %5084 = vmatmul.mubr.f32.gmra.mxu0 %v2126
      %v5085 = vpop.f32.mrf.mxu0
      %v5086 = vadd.f32 0.0, %v5085
      %v5087 = vpop.f32.mrf.mxu0
      %5088 = vdwg.mxu0
      %v5089 = vadd.f32 %v4972, %v5051
      %v5090 = vadd.f32 %v4973, %v5056
      %v5091 = vadd.f32 %v4974, %v5061
      %v5092 = vadd.f32 %v4975, %v5066
      %v5093 = vadd.f32 %v4976, %v5071
      %v5094 = vadd.f32 %v4977, %v5076
      %v5095 = vadd.f32 %v4978, %v5081
      %v5096 = vadd.f32 %v4979, %v5086
      %v5097 = vld [vmem:[%s3 + $0x88] sm:$0xf]
      %v5099 = vsel %vm568, %v542, 0
      %v5102 = vsel %vm568, %v543, 0
      %v5105 = vsel %vm568, %v544, 0
      %v5108 = vsel %vm568, %v545, 0
      %v5111 = vsel %vm568, %v546, 0
      %v5114 = vsel %vm568, %v547, 0
      %v5117 = vsel %vm568, %v548, 0
      %v5120 = vsel %vm568, %v549, 0
      %v5123 = vsel %vm593, %v5097, 0
      %5125 = vmatprep.subr.mxu0 0.0
      %5126 = vmatpush1.msra.mxu0 0.0
      %5127 = vmatprep.subr.mxu0 0.0
      %5128 = vmatpush1.msra.mxu0 0.0
      %5129 = vmatprep.subr.mxu0 0.0
      %5130 = vmatpush1.msra.mxu0 0.0
      %5131 = vmatprep.subr.mxu0 0.0
      %5132 = vmatpush1.msra.mxu0 0.0
      %5133 = vmatprep.subr.mxu0 0.0
      %5134 = vmatpush1.msra.mxu0 0.0
      %5135 = vmatprep.subr.mxu0 0.0
      %5136 = vmatpush1.msra.mxu0 0.0
      %5137 = vmatprep.subr.mxu0 0.0
      %5138 = vmatpush1.msra.mxu0 0.0
      %5139 = vmatprep.subr.mxu0 0.0
      %5140 = vmatpush1.msra.mxu0 0.0
      %5141 = vmatprep.subr.mxu0 0.0
      %5142 = vmatpush1.msra.mxu0 0.0
      %5143 = vmatprep.subr.mxu0 0.0
      %5144 = vmatpush1.msra.mxu0 0.0
      %5145 = vmatprep.subr.mxu0 0.0
      %5146 = vmatpush1.msra.mxu0 0.0
      %5147 = vmatprep.subr.mxu0 0.0
      %5148 = vmatpush1.msra.mxu0 0.0
      %5149 = vmatprep.subr.mxu0 0.0
      %5150 = vmatpush1.msra.mxu0 0.0
      %5151 = vmatprep.subr.mxu0 0.0
      %5152 = vmatpush1.msra.mxu0 0.0
      %5153 = vmatprep.subr.mxu0 0.0
      %5154 = vmatpush1.msra.mxu0 0.0
      %5155 = vmatprep.subr.mxu0 0.0
      %5156 = vmatpush1.msra.mxu0 %v5123
      %5157 = vmatprep.subr.mxu0 0.0
      %5158 = vmatpush2.msra.mxu0 0.0
      %5159 = vmatprep.subr.mxu0 0.0
      %5160 = vmatpush2.msra.mxu0 0.0
      %5161 = vmatprep.subr.mxu0 0.0
      %5162 = vmatpush2.msra.mxu0 0.0
      %5163 = vmatprep.subr.mxu0 0.0
      %5164 = vmatpush2.msra.mxu0 0.0
      %5165 = vmatprep.subr.mxu0 0.0
      %5166 = vmatpush2.msra.mxu0 0.0
      %5167 = vmatprep.subr.mxu0 0.0
      %5168 = vmatpush2.msra.mxu0 0.0
      %5169 = vmatprep.subr.mxu0 0.0
      %5170 = vmatpush2.msra.mxu0 0.0
      %5171 = vmatprep.subr.mxu0 0.0
      %5172 = vmatpush2.msra.mxu0 0.0
      %5173 = vmatprep.subr.mxu0 0.0
      %5174 = vmatpush2.msra.mxu0 0.0
      %5175 = vmatprep.subr.mxu0 0.0
      %5176 = vmatpush2.msra.mxu0 0.0
      %5177 = vmatprep.subr.mxu0 0.0
      %5178 = vmatpush2.msra.mxu0 0.0
      %5179 = vmatprep.subr.mxu0 0.0
      %5180 = vmatpush2.msra.mxu0 0.0
      %5181 = vmatprep.subr.mxu0 0.0
      %5182 = vmatpush2.msra.mxu0 0.0
      %5183 = vmatprep.subr.mxu0 0.0
      %5184 = vmatpush2.msra.mxu0 0.0
      %5185 = vmatprep.subr.mxu0 0.0
      %5186 = vmatpush2.msra.mxu0 0.0
      %5187 = vmatprep.subr.mxu0 0.0
      %5188 = vmatpush2.msra.mxu0 0.0
      %5189 = vmatprep.mubr.f32.mxu0 0.0
      %5190 = vmatmul.mubr.f32.gmra.mxu0 %v5099
      %v5191 = vpop.f32.mrf.mxu0
      %v5192 = vadd.f32 0.0, %v5191
      %v5193 = vpop.f32.mrf.mxu0
      %5194 = vmatprep.mubr.f32.mxu0 0.0
      %5195 = vmatmul.mubr.f32.gmra.mxu0 %v5102
      %v5196 = vpop.f32.mrf.mxu0
      %v5197 = vadd.f32 0.0, %v5196
      %v5198 = vpop.f32.mrf.mxu0
      %5199 = vmatprep.mubr.f32.mxu0 0.0
      %5200 = vmatmul.mubr.f32.gmra.mxu0 %v5105
      %v5201 = vpop.f32.mrf.mxu0
      %v5202 = vadd.f32 0.0, %v5201
      %v5203 = vpop.f32.mrf.mxu0
      %5204 = vmatprep.mubr.f32.mxu0 0.0
      %5205 = vmatmul.mubr.f32.gmra.mxu0 %v5108
      %v5206 = vpop.f32.mrf.mxu0
      %v5207 = vadd.f32 0.0, %v5206
      %v5208 = vpop.f32.mrf.mxu0
      %5209 = vmatprep.mubr.f32.mxu0 0.0
      %5210 = vmatmul.mubr.f32.gmra.mxu0 %v5111
      %v5211 = vpop.f32.mrf.mxu0
      %v5212 = vadd.f32 0.0, %v5211
      %v5213 = vpop.f32.mrf.mxu0
      %5214 = vmatprep.mubr.f32.mxu0 0.0
      %5215 = vmatmul.mubr.f32.gmra.mxu0 %v5114
      %v5216 = vpop.f32.mrf.mxu0
      %v5217 = vadd.f32 0.0, %v5216
      %v5218 = vpop.f32.mrf.mxu0
      %5219 = vmatprep.mubr.f32.mxu0 0.0
      %5220 = vmatmul.mubr.f32.gmra.mxu0 %v5117
      %v5221 = vpop.f32.mrf.mxu0
      %v5222 = vadd.f32 0.0, %v5221
      %v5223 = vpop.f32.mrf.mxu0
      %5224 = vmatprep.mubr.f32.mxu0 0.0
      %5225 = vmatmul.mubr.f32.gmra.mxu0 %v5120
      %v5226 = vpop.f32.mrf.mxu0
      %v5227 = vadd.f32 0.0, %v5226
      %v5228 = vpop.f32.mrf.mxu0
      %5229 = vdwg.mxu0
      %v5230 = vadd.f32 %v5089, %v5192
      %v5231 = vadd.f32 %v5090, %v5197
      %v5232 = vadd.f32 %v5091, %v5202
      %v5233 = vadd.f32 %v5092, %v5207
      %v5234 = vadd.f32 %v5093, %v5212
      %v5235 = vadd.f32 %v5094, %v5217
      %v5236 = vadd.f32 %v5095, %v5222
      %v5237 = vadd.f32 %v5096, %v5227
      %v5238 = vld [vmem:[%s3 + $0x8c] sm:$0xf]
      %v5240 = vsel %vm568, %v550, 0
      %v5243 = vsel %vm568, %v551, 0
      %v5246 = vsel %vm568, %v552, 0
      %v5249 = vsel %vm568, %v553, 0
      %v5252 = vsel %vm568, %v554, 0
      %v5255 = vsel %vm568, %v555, 0
      %v5258 = vsel %vm568, %v556, 0
      %v5261 = vsel %vm568, %v557, 0
      %v5264 = vsel %vm593, %v5238, 0
      %5266 = vmatprep.subr.mxu0 0.0
      %5267 = vmatpush1.msra.mxu0 0.0
      %5268 = vmatprep.subr.mxu0 0.0
      %5269 = vmatpush1.msra.mxu0 0.0
      %5270 = vmatprep.subr.mxu0 0.0
      %5271 = vmatpush1.msra.mxu0 0.0
      %5272 = vmatprep.subr.mxu0 0.0
      %5273 = vmatpush1.msra.mxu0 0.0
      %5274 = vmatprep.subr.mxu0 0.0
      %5275 = vmatpush1.msra.mxu0 0.0
      %5276 = vmatprep.subr.mxu0 0.0
      %5277 = vmatpush1.msra.mxu0 0.0
      %5278 = vmatprep.subr.mxu0 0.0
      %5279 = vmatpush1.msra.mxu0 0.0
      %5280 = vmatprep.subr.mxu0 0.0
      %5281 = vmatpush1.msra.mxu0 0.0
      %5282 = vmatprep.subr.mxu0 0.0
      %5283 = vmatpush1.msra.mxu0 0.0
      %5284 = vmatprep.subr.mxu0 0.0
      %5285 = vmatpush1.msra.mxu0 0.0
      %5286 = vmatprep.subr.mxu0 0.0
      %5287 = vmatpush1.msra.mxu0 0.0
      %5288 = vmatprep.subr.mxu0 0.0
      %5289 = vmatpush1.msra.mxu0 0.0
      %5290 = vmatprep.subr.mxu0 0.0
      %5291 = vmatpush1.msra.mxu0 0.0
      %5292 = vmatprep.subr.mxu0 0.0
      %5293 = vmatpush1.msra.mxu0 0.0
      %5294 = vmatprep.subr.mxu0 0.0
      %5295 = vmatpush1.msra.mxu0 0.0
      %5296 = vmatprep.subr.mxu0 0.0
      %5297 = vmatpush1.msra.mxu0 %v5264
      %5298 = vmatprep.subr.mxu0 0.0
      %5299 = vmatpush2.msra.mxu0 0.0
      %5300 = vmatprep.subr.mxu0 0.0
      %5301 = vmatpush2.msra.mxu0 0.0
      %5302 = vmatprep.subr.mxu0 0.0
      %5303 = vmatpush2.msra.mxu0 0.0
      %5304 = vmatprep.subr.mxu0 0.0
      %5305 = vmatpush2.msra.mxu0 0.0
      %5306 = vmatprep.subr.mxu0 0.0
      %5307 = vmatpush2.msra.mxu0 0.0
      %5308 = vmatprep.subr.mxu0 0.0
      %5309 = vmatpush2.msra.mxu0 0.0
      %5310 = vmatprep.subr.mxu0 0.0
      %5311 = vmatpush2.msra.mxu0 0.0
      %5312 = vmatprep.subr.mxu0 0.0
      %5313 = vmatpush2.msra.mxu0 0.0
      %5314 = vmatprep.subr.mxu0 0.0
      %5315 = vmatpush2.msra.mxu0 0.0
      %5316 = vmatprep.subr.mxu0 0.0
      %5317 = vmatpush2.msra.mxu0 0.0
      %5318 = vmatprep.subr.mxu0 0.0
      %5319 = vmatpush2.msra.mxu0 0.0
      %5320 = vmatprep.subr.mxu0 0.0
      %5321 = vmatpush2.msra.mxu0 0.0
      %5322 = vmatprep.subr.mxu0 0.0
      %5323 = vmatpush2.msra.mxu0 0.0
      %5324 = vmatprep.subr.mxu0 0.0
      %5325 = vmatpush2.msra.mxu0 0.0
      %5326 = vmatprep.subr.mxu0 0.0
      %5327 = vmatpush2.msra.mxu0 0.0
      %5328 = vmatprep.subr.mxu0 0.0
      %5329 = vmatpush2.msra.mxu0 0.0
      %5330 = vmatprep.mubr.f32.mxu0 0.0
      %5331 = vmatmul.mubr.f32.gmra.mxu0 %v5240
      %v5332 = vpop.f32.mrf.mxu0
      %v5333 = vadd.f32 0.0, %v5332
      %v5334 = vpop.f32.mrf.mxu0
      %5335 = vmatprep.mubr.f32.mxu0 0.0
      %5336 = vmatmul.mubr.f32.gmra.mxu0 %v5243
      %v5337 = vpop.f32.mrf.mxu0
      %v5338 = vadd.f32 0.0, %v5337
      %v5339 = vpop.f32.mrf.mxu0
      %5340 = vmatprep.mubr.f32.mxu0 0.0
      %5341 = vmatmul.mubr.f32.gmra.mxu0 %v5246
      %v5342 = vpop.f32.mrf.mxu0
      %v5343 = vadd.f32 0.0, %v5342
      %v5344 = vpop.f32.mrf.mxu0
      %5345 = vmatprep.mubr.f32.mxu0 0.0
      %5346 = vmatmul.mubr.f32.gmra.mxu0 %v5249
      %v5347 = vpop.f32.mrf.mxu0
      %v5348 = vadd.f32 0.0, %v5347
      %v5349 = vpop.f32.mrf.mxu0
      %5350 = vmatprep.mubr.f32.mxu0 0.0
      %5351 = vmatmul.mubr.f32.gmra.mxu0 %v5252
      %v5352 = vpop.f32.mrf.mxu0
      %v5353 = vadd.f32 0.0, %v5352
      %v5354 = vpop.f32.mrf.mxu0
      %5355 = vmatprep.mubr.f32.mxu0 0.0
      %5356 = vmatmul.mubr.f32.gmra.mxu0 %v5255
      %v5357 = vpop.f32.mrf.mxu0
      %v5358 = vadd.f32 0.0, %v5357
      %v5359 = vpop.f32.mrf.mxu0
      %5360 = vmatprep.mubr.f32.mxu0 0.0
      %5361 = vmatmul.mubr.f32.gmra.mxu0 %v5258
      %v5362 = vpop.f32.mrf.mxu0
      %v5363 = vadd.f32 0.0, %v5362
      %v5364 = vpop.f32.mrf.mxu0
      %5365 = vmatprep.mubr.f32.mxu0 0.0
      %5366 = vmatmul.mubr.f32.gmra.mxu0 %v5261
      %v5367 = vpop.f32.mrf.mxu0
      %v5368 = vadd.f32 0.0, %v5367
      %v5369 = vpop.f32.mrf.mxu0
      %5370 = vdwg.mxu0
      %v5371 = vadd.f32 %v5230, %v5333
      %v5372 = vadd.f32 %v5231, %v5338
      %v5373 = vadd.f32 %v5232, %v5343
      %v5374 = vadd.f32 %v5233, %v5348
      %v5375 = vadd.f32 %v5234, %v5353
      %v5376 = vadd.f32 %v5235, %v5358
      %v5377 = vadd.f32 %v5236, %v5363
      %v5378 = vadd.f32 %v5237, %v5368
      %v5379 = vadd.f32 %v5371, %v2248
      %v5380 = vadd.f32 %v5372, %v2248
      %v5381 = vadd.f32 %v5373, %v2248
      %v5382 = vadd.f32 %v5374, %v2248
      %v5383 = vadd.f32 %v5375, %v2248
      %v5384 = vadd.f32 %v5376, %v2248
      %v5385 = vadd.f32 %v5377, %v2248
      %v5386 = vadd.f32 %v5378, %v2248
      %s5387 = scalar_lea.vmem %s342, 8
      %5388 = vst.msk [vmem:[%s5387] sm:$0xff] %vm568, %v5379
      %5389 = vst.msk [vmem:[%s5387 + $0x10] sm:$0xff] %vm568, %v5380
      %5390 = vst.msk [vmem:[%s5387 + $0x20] sm:$0xff] %vm568, %v5381
      %5391 = vst.msk [vmem:[%s5387 + $0x30] sm:$0xff] %vm568, %v5382
      %5392 = vst.msk [vmem:[%s5387 + $0x40] sm:$0xff] %vm568, %v5383
      %5393 = vst.msk [vmem:[%s5387 + $0x50] sm:$0xff] %vm568, %v5384
      %5394 = vst.msk [vmem:[%s5387 + $0x60] sm:$0xff] %vm568, %v5385
      %5395 = vst.msk [vmem:[%s5387 + $0x70] sm:$0xff] %vm568, %v5386
      %v5396 = vld [vmem:[%s3 + $0x90] sm:$0xf]
      %v5397 = vld [vmem:[%s3 + $0x94] sm:$0xf]
      %v5399 = vsel %vm593, %v5397, 0
      %5401 = vmatprep.subr.mxu0 0.0
      %5402 = vmatpush1.msra.mxu0 0.0
      %5403 = vmatprep.subr.mxu0 0.0
      %5404 = vmatpush1.msra.mxu0 0.0
      %5405 = vmatprep.subr.mxu0 0.0
      %5406 = vmatpush1.msra.mxu0 0.0
      %5407 = vmatprep.subr.mxu0 0.0
      %5408 = vmatpush1.msra.mxu0 0.0
      %5409 = vmatprep.subr.mxu0 0.0
      %5410 = vmatpush1.msra.mxu0 0.0
      %5411 = vmatprep.subr.mxu0 0.0
      %5412 = vmatpush1.msra.mxu0 0.0
      %5413 = vmatprep.subr.mxu0 0.0
      %5414 = vmatpush1.msra.mxu0 0.0
      %5415 = vmatprep.subr.mxu0 0.0
      %5416 = vmatpush1.msra.mxu0 0.0
      %5417 = vmatprep.subr.mxu0 0.0
      %5418 = vmatpush1.msra.mxu0 0.0
      %5419 = vmatprep.subr.mxu0 0.0
      %5420 = vmatpush1.msra.mxu0 0.0
      %5421 = vmatprep.subr.mxu0 0.0
      %5422 = vmatpush1.msra.mxu0 0.0
      %5423 = vmatprep.subr.mxu0 0.0
      %5424 = vmatpush1.msra.mxu0 0.0
      %5425 = vmatprep.subr.mxu0 0.0
      %5426 = vmatpush1.msra.mxu0 0.0
      %5427 = vmatprep.subr.mxu0 0.0
      %5428 = vmatpush1.msra.mxu0 0.0
      %5429 = vmatprep.subr.mxu0 0.0
      %5430 = vmatpush1.msra.mxu0 0.0
      %5431 = vmatprep.subr.mxu0 0.0
      %5432 = vmatpush1.msra.mxu0 %v5399
      %5433 = vmatprep.subr.mxu0 0.0
      %5434 = vmatpush2.msra.mxu0 0.0
      %5435 = vmatprep.subr.mxu0 0.0
      %5436 = vmatpush2.msra.mxu0 0.0
      %5437 = vmatprep.subr.mxu0 0.0
      %5438 = vmatpush2.msra.mxu0 0.0
      %5439 = vmatprep.subr.mxu0 0.0
      %5440 = vmatpush2.msra.mxu0 0.0
      %5441 = vmatprep.subr.mxu0 0.0
      %5442 = vmatpush2.msra.mxu0 0.0
      %5443 = vmatprep.subr.mxu0 0.0
      %5444 = vmatpush2.msra.mxu0 0.0
      %5445 = vmatprep.subr.mxu0 0.0
      %5446 = vmatpush2.msra.mxu0 0.0
      %5447 = vmatprep.subr.mxu0 0.0
      %5448 = vmatpush2.msra.mxu0 0.0
      %5449 = vmatprep.subr.mxu0 0.0
      %5450 = vmatpush2.msra.mxu0 0.0
      %5451 = vmatprep.subr.mxu0 0.0
      %5452 = vmatpush2.msra.mxu0 0.0
      %5453 = vmatprep.subr.mxu0 0.0
      %5454 = vmatpush2.msra.mxu0 0.0
      %5455 = vmatprep.subr.mxu0 0.0
      %5456 = vmatpush2.msra.mxu0 0.0
      %5457 = vmatprep.subr.mxu0 0.0
      %5458 = vmatpush2.msra.mxu0 0.0
      %5459 = vmatprep.subr.mxu0 0.0
      %5460 = vmatpush2.msra.mxu0 0.0
      %5461 = vmatprep.subr.mxu0 0.0
      %5462 = vmatpush2.msra.mxu0 0.0
      %5463 = vmatprep.subr.mxu0 0.0
      %5464 = vmatpush2.msra.mxu0 0.0
      %5465 = vmatprep.mubr.f32.mxu0 0.0
      %5466 = vmatmul.mubr.f32.gmra.mxu0 %v2627
      %v5467 = vpop.f32.mrf.mxu0
      %v5468 = vadd.f32 0.0, %v5467
      %v5469 = vpop.f32.mrf.mxu0
      %5470 = vmatprep.mubr.f32.mxu0 0.0
      %5471 = vmatmul.mubr.f32.gmra.mxu0 %v2630
      %v5472 = vpop.f32.mrf.mxu0
      %v5473 = vadd.f32 0.0, %v5472
      %v5474 = vpop.f32.mrf.mxu0
      %5475 = vmatprep.mubr.f32.mxu0 0.0
      %5476 = vmatmul.mubr.f32.gmra.mxu0 %v2633
      %v5477 = vpop.f32.mrf.mxu0
      %v5478 = vadd.f32 0.0, %v5477
      %v5479 = vpop.f32.mrf.mxu0
      %5480 = vmatprep.mubr.f32.mxu0 0.0
      %5481 = vmatmul.mubr.f32.gmra.mxu0 %v2636
      %v5482 = vpop.f32.mrf.mxu0
      %v5483 = vadd.f32 0.0, %v5482
      %v5484 = vpop.f32.mrf.mxu0
      %5485 = vmatprep.mubr.f32.mxu0 0.0
      %5486 = vmatmul.mubr.f32.gmra.mxu0 %v2639
      %v5487 = vpop.f32.mrf.mxu0
      %v5488 = vadd.f32 0.0, %v5487
      %v5489 = vpop.f32.mrf.mxu0
      %5490 = vmatprep.mubr.f32.mxu0 0.0
      %5491 = vmatmul.mubr.f32.gmra.mxu0 %v2642
      %v5492 = vpop.f32.mrf.mxu0
      %v5493 = vadd.f32 0.0, %v5492
      %v5494 = vpop.f32.mrf.mxu0
      %5495 = vmatprep.mubr.f32.mxu0 0.0
      %5496 = vmatmul.mubr.f32.gmra.mxu0 %v2645
      %v5497 = vpop.f32.mrf.mxu0
      %v5498 = vadd.f32 0.0, %v5497
      %v5499 = vpop.f32.mrf.mxu0
      %5500 = vmatprep.mubr.f32.mxu0 0.0
      %5501 = vmatmul.mubr.f32.gmra.mxu0 %v2648
      %v5502 = vpop.f32.mrf.mxu0
      %v5503 = vadd.f32 0.0, %v5502
      %v5504 = vpop.f32.mrf.mxu0
      %5505 = vdwg.mxu0
      %v5507 = vsel %vm593, %v5396, 0
      %5509 = vmatprep.subr.mxu0 0.0
      %5510 = vmatpush1.msra.mxu0 0.0
      %5511 = vmatprep.subr.mxu0 0.0
      %5512 = vmatpush1.msra.mxu0 0.0
      %5513 = vmatprep.subr.mxu0 0.0
      %5514 = vmatpush1.msra.mxu0 0.0
      %5515 = vmatprep.subr.mxu0 0.0
      %5516 = vmatpush1.msra.mxu0 0.0
      %5517 = vmatprep.subr.mxu0 0.0
      %5518 = vmatpush1.msra.mxu0 0.0
      %5519 = vmatprep.subr.mxu0 0.0
      %5520 = vmatpush1.msra.mxu0 0.0
      %5521 = vmatprep.subr.mxu0 0.0
      %5522 = vmatpush1.msra.mxu0 0.0
      %5523 = vmatprep.subr.mxu0 0.0
      %5524 = vmatpush1.msra.mxu0 0.0
      %5525 = vmatprep.subr.mxu0 0.0
      %5526 = vmatpush1.msra.mxu0 0.0
      %5527 = vmatprep.subr.mxu0 0.0
      %5528 = vmatpush1.msra.mxu0 0.0
      %5529 = vmatprep.subr.mxu0 0.0
      %5530 = vmatpush1.msra.mxu0 0.0
      %5531 = vmatprep.subr.mxu0 0.0
      %5532 = vmatpush1.msra.mxu0 0.0
      %5533 = vmatprep.subr.mxu0 0.0
      %5534 = vmatpush1.msra.mxu0 0.0
      %5535 = vmatprep.subr.mxu0 0.0
      %5536 = vmatpush1.msra.mxu0 0.0
      %5537 = vmatprep.subr.mxu0 0.0
      %5538 = vmatpush1.msra.mxu0 0.0
      %5539 = vmatprep.subr.mxu0 0.0
      %5540 = vmatpush1.msra.mxu0 %v5507
      %5541 = vmatprep.subr.mxu0 0.0
      %5542 = vmatpush2.msra.mxu0 0.0
      %5543 = vmatprep.subr.mxu0 0.0
      %5544 = vmatpush2.msra.mxu0 0.0
      %5545 = vmatprep.subr.mxu0 0.0
      %5546 = vmatpush2.msra.mxu0 0.0
      %5547 = vmatprep.subr.mxu0 0.0
      %5548 = vmatpush2.msra.mxu0 0.0
      %5549 = vmatprep.subr.mxu0 0.0
      %5550 = vmatpush2.msra.mxu0 0.0
      %5551 = vmatprep.subr.mxu0 0.0
      %5552 = vmatpush2.msra.mxu0 0.0
      %5553 = vmatprep.subr.mxu0 0.0
      %5554 = vmatpush2.msra.mxu0 0.0
      %5555 = vmatprep.subr.mxu0 0.0
      %5556 = vmatpush2.msra.mxu0 0.0
      %5557 = vmatprep.subr.mxu0 0.0
      %5558 = vmatpush2.msra.mxu0 0.0
      %5559 = vmatprep.subr.mxu0 0.0
      %5560 = vmatpush2.msra.mxu0 0.0
      %5561 = vmatprep.subr.mxu0 0.0
      %5562 = vmatpush2.msra.mxu0 0.0
      %5563 = vmatprep.subr.mxu0 0.0
      %5564 = vmatpush2.msra.mxu0 0.0
      %5565 = vmatprep.subr.mxu0 0.0
      %5566 = vmatpush2.msra.mxu0 0.0
      %5567 = vmatprep.subr.mxu0 0.0
      %5568 = vmatpush2.msra.mxu0 0.0
      %5569 = vmatprep.subr.mxu0 0.0
      %5570 = vmatpush2.msra.mxu0 0.0
      %5571 = vmatprep.subr.mxu0 0.0
      %5572 = vmatpush2.msra.mxu0 0.0
      %5573 = vmatprep.mubr.f32.mxu0 0.0
      %5574 = vmatmul.mubr.f32.gmra.mxu0 %v977
      %v5575 = vpop.f32.mrf.mxu0
      %v5576 = vadd.f32 %v5468, %v5575
      %v5577 = vpop.f32.mrf.mxu0
      %5578 = vmatprep.mubr.f32.mxu0 0.0
      %5579 = vmatmul.mubr.f32.gmra.mxu0 %v980
      %v5580 = vpop.f32.mrf.mxu0
      %v5581 = vadd.f32 %v5473, %v5580
      %v5582 = vpop.f32.mrf.mxu0
      %5583 = vmatprep.mubr.f32.mxu0 0.0
      %5584 = vmatmul.mubr.f32.gmra.mxu0 %v983
      %v5585 = vpop.f32.mrf.mxu0
      %v5586 = vadd.f32 %v5478, %v5585
      %v5587 = vpop.f32.mrf.mxu0
      %5588 = vmatprep.mubr.f32.mxu0 0.0
      %5589 = vmatmul.mubr.f32.gmra.mxu0 %v986
      %v5590 = vpop.f32.mrf.mxu0
      %v5591 = vadd.f32 %v5483, %v5590
      %v5592 = vpop.f32.mrf.mxu0
      %5593 = vmatprep.mubr.f32.mxu0 0.0
      %5594 = vmatmul.mubr.f32.gmra.mxu0 %v989
      %v5595 = vpop.f32.mrf.mxu0
      %v5596 = vadd.f32 %v5488, %v5595
      %v5597 = vpop.f32.mrf.mxu0
      %5598 = vmatprep.mubr.f32.mxu0 0.0
      %5599 = vmatmul.mubr.f32.gmra.mxu0 %v992
      %v5600 = vpop.f32.mrf.mxu0
      %v5601 = vadd.f32 %v5493, %v5600
      %v5602 = vpop.f32.mrf.mxu0
      %5603 = vmatprep.mubr.f32.mxu0 0.0
      %5604 = vmatmul.mubr.f32.gmra.mxu0 %v995
      %v5605 = vpop.f32.mrf.mxu0
      %v5606 = vadd.f32 %v5498, %v5605
      %v5607 = vpop.f32.mrf.mxu0
      %5608 = vmatprep.mubr.f32.mxu0 0.0
      %5609 = vmatmul.mubr.f32.gmra.mxu0 %v998
      %v5610 = vpop.f32.mrf.mxu0
      %v5611 = vadd.f32 %v5503, %v5610
      %v5612 = vpop.f32.mrf.mxu0
      %5613 = vdwg.mxu0
      %v5614 = vld [vmem:[%s3 + $0x98] sm:$0xf]
      %v5616 = vsel %vm593, %v5614, 0
      %5618 = vmatprep.subr.mxu0 0.0
      %5619 = vmatpush1.msra.mxu0 0.0
      %5620 = vmatprep.subr.mxu0 0.0
      %5621 = vmatpush1.msra.mxu0 0.0
      %5622 = vmatprep.subr.mxu0 0.0
      %5623 = vmatpush1.msra.mxu0 0.0
      %5624 = vmatprep.subr.mxu0 0.0
      %5625 = vmatpush1.msra.mxu0 0.0
      %5626 = vmatprep.subr.mxu0 0.0
      %5627 = vmatpush1.msra.mxu0 0.0
      %5628 = vmatprep.subr.mxu0 0.0
      %5629 = vmatpush1.msra.mxu0 0.0
      %5630 = vmatprep.subr.mxu0 0.0
      %5631 = vmatpush1.msra.mxu0 0.0
      %5632 = vmatprep.subr.mxu0 0.0
      %5633 = vmatpush1.msra.mxu0 0.0
      %5634 = vmatprep.subr.mxu0 0.0
      %5635 = vmatpush1.msra.mxu0 0.0
      %5636 = vmatprep.subr.mxu0 0.0
      %5637 = vmatpush1.msra.mxu0 0.0
      %5638 = vmatprep.subr.mxu0 0.0
      %5639 = vmatpush1.msra.mxu0 0.0
      %5640 = vmatprep.subr.mxu0 0.0
      %5641 = vmatpush1.msra.mxu0 0.0
      %5642 = vmatprep.subr.mxu0 0.0
      %5643 = vmatpush1.msra.mxu0 0.0
      %5644 = vmatprep.subr.mxu0 0.0
      %5645 = vmatpush1.msra.mxu0 0.0
      %5646 = vmatprep.subr.mxu0 0.0
      %5647 = vmatpush1.msra.mxu0 0.0
      %5648 = vmatprep.subr.mxu0 0.0
      %5649 = vmatpush1.msra.mxu0 %v5616
      %5650 = vmatprep.subr.mxu0 0.0
      %5651 = vmatpush2.msra.mxu0 0.0
      %5652 = vmatprep.subr.mxu0 0.0
      %5653 = vmatpush2.msra.mxu0 0.0
      %5654 = vmatprep.subr.mxu0 0.0
      %5655 = vmatpush2.msra.mxu0 0.0
      %5656 = vmatprep.subr.mxu0 0.0
      %5657 = vmatpush2.msra.mxu0 0.0
      %5658 = vmatprep.subr.mxu0 0.0
      %5659 = vmatpush2.msra.mxu0 0.0
      %5660 = vmatprep.subr.mxu0 0.0
      %5661 = vmatpush2.msra.mxu0 0.0
      %5662 = vmatprep.subr.mxu0 0.0
      %5663 = vmatpush2.msra.mxu0 0.0
      %5664 = vmatprep.subr.mxu0 0.0
      %5665 = vmatpush2.msra.mxu0 0.0
      %5666 = vmatprep.subr.mxu0 0.0
      %5667 = vmatpush2.msra.mxu0 0.0
      %5668 = vmatprep.subr.mxu0 0.0
      %5669 = vmatpush2.msra.mxu0 0.0
      %5670 = vmatprep.subr.mxu0 0.0
      %5671 = vmatpush2.msra.mxu0 0.0
      %5672 = vmatprep.subr.mxu0 0.0
      %5673 = vmatpush2.msra.mxu0 0.0
      %5674 = vmatprep.subr.mxu0 0.0
      %5675 = vmatpush2.msra.mxu0 0.0
      %5676 = vmatprep.subr.mxu0 0.0
      %5677 = vmatpush2.msra.mxu0 0.0
      %5678 = vmatprep.subr.mxu0 0.0
      %5679 = vmatpush2.msra.mxu0 0.0
      %5680 = vmatprep.subr.mxu0 0.0
      %5681 = vmatpush2.msra.mxu0 0.0
      %5682 = vmatprep.mubr.f32.mxu0 0.0
      %5683 = vmatmul.mubr.f32.gmra.mxu0 %v4208
      %v5684 = vpop.f32.mrf.mxu0
      %v5685 = vadd.f32 0.0, %v5684
      %v5686 = vpop.f32.mrf.mxu0
      %5687 = vmatprep.mubr.f32.mxu0 0.0
      %5688 = vmatmul.mubr.f32.gmra.mxu0 %v4211
      %v5689 = vpop.f32.mrf.mxu0
      %v5690 = vadd.f32 0.0, %v5689
      %v5691 = vpop.f32.mrf.mxu0
      %5692 = vmatprep.mubr.f32.mxu0 0.0
      %5693 = vmatmul.mubr.f32.gmra.mxu0 %v4214
      %v5694 = vpop.f32.mrf.mxu0
      %v5695 = vadd.f32 0.0, %v5694
      %v5696 = vpop.f32.mrf.mxu0
      %5697 = vmatprep.mubr.f32.mxu0 0.0
      %5698 = vmatmul.mubr.f32.gmra.mxu0 %v4217
      %v5699 = vpop.f32.mrf.mxu0
      %v5700 = vadd.f32 0.0, %v5699
      %v5701 = vpop.f32.mrf.mxu0
      %5702 = vmatprep.mubr.f32.mxu0 0.0
      %5703 = vmatmul.mubr.f32.gmra.mxu0 %v4220
      %v5704 = vpop.f32.mrf.mxu0
      %v5705 = vadd.f32 0.0, %v5704
      %v5706 = vpop.f32.mrf.mxu0
      %5707 = vmatprep.mubr.f32.mxu0 0.0
      %5708 = vmatmul.mubr.f32.gmra.mxu0 %v4223
      %v5709 = vpop.f32.mrf.mxu0
      %v5710 = vadd.f32 0.0, %v5709
      %v5711 = vpop.f32.mrf.mxu0
      %5712 = vmatprep.mubr.f32.mxu0 0.0
      %5713 = vmatmul.mubr.f32.gmra.mxu0 %v4226
      %v5714 = vpop.f32.mrf.mxu0
      %v5715 = vadd.f32 0.0, %v5714
      %v5716 = vpop.f32.mrf.mxu0
      %5717 = vmatprep.mubr.f32.mxu0 0.0
      %5718 = vmatmul.mubr.f32.gmra.mxu0 %v4229
      %v5719 = vpop.f32.mrf.mxu0
      %v5720 = vadd.f32 0.0, %v5719
      %v5721 = vpop.f32.mrf.mxu0
      %5722 = vdwg.mxu0
      %v5723 = vadd.f32 %v5576, %v5685
      %v5724 = vadd.f32 %v5581, %v5690
      %v5725 = vadd.f32 %v5586, %v5695
      %v5726 = vadd.f32 %v5591, %v5700
      %v5727 = vadd.f32 %v5596, %v5705
      %v5728 = vadd.f32 %v5601, %v5710
      %v5729 = vadd.f32 %v5606, %v5715
      %v5730 = vadd.f32 %v5611, %v5720
      %v5731 = vld [vmem:[%s3 + $0x9c] sm:$0xf]
      %v5733 = vsel %vm568, %v410, 0
      %v5736 = vsel %vm568, %v411, 0
      %v5739 = vsel %vm568, %v412, 0
      %v5742 = vsel %vm568, %v413, 0
      %v5745 = vsel %vm568, %v414, 0
      %v5748 = vsel %vm568, %v415, 0
      %v5751 = vsel %vm568, %v416, 0
      %v5754 = vsel %vm568, %v417, 0
      %v5757 = vsel %vm593, %v5731, 0
      %5759 = vmatprep.subr.mxu0 0.0
      %5760 = vmatpush1.msra.mxu0 0.0
      %5761 = vmatprep.subr.mxu0 0.0
      %5762 = vmatpush1.msra.mxu0 0.0
      %5763 = vmatprep.subr.mxu0 0.0
      %5764 = vmatpush1.msra.mxu0 0.0
      %5765 = vmatprep.subr.mxu0 0.0
      %5766 = vmatpush1.msra.mxu0 0.0
      %5767 = vmatprep.subr.mxu0 0.0
      %5768 = vmatpush1.msra.mxu0 0.0
      %5769 = vmatprep.subr.mxu0 0.0
      %5770 = vmatpush1.msra.mxu0 0.0
      %5771 = vmatprep.subr.mxu0 0.0
      %5772 = vmatpush1.msra.mxu0 0.0
      %5773 = vmatprep.subr.mxu0 0.0
      %5774 = vmatpush1.msra.mxu0 0.0
      %5775 = vmatprep.subr.mxu0 0.0
      %5776 = vmatpush1.msra.mxu0 0.0
      %5777 = vmatprep.subr.mxu0 0.0
      %5778 = vmatpush1.msra.mxu0 0.0
      %5779 = vmatprep.subr.mxu0 0.0
      %5780 = vmatpush1.msra.mxu0 0.0
      %5781 = vmatprep.subr.mxu0 0.0
      %5782 = vmatpush1.msra.mxu0 0.0
      %5783 = vmatprep.subr.mxu0 0.0
      %5784 = vmatpush1.msra.mxu0 0.0
      %5785 = vmatprep.subr.mxu0 0.0
      %5786 = vmatpush1.msra.mxu0 0.0
      %5787 = vmatprep.subr.mxu0 0.0
      %5788 = vmatpush1.msra.mxu0 0.0
      %5789 = vmatprep.subr.mxu0 0.0
      %5790 = vmatpush1.msra.mxu0 %v5757
      %5791 = vmatprep.subr.mxu0 0.0
      %5792 = vmatpush2.msra.mxu0 0.0
      %5793 = vmatprep.subr.mxu0 0.0
      %5794 = vmatpush2.msra.mxu0 0.0
      %5795 = vmatprep.subr.mxu0 0.0
      %5796 = vmatpush2.msra.mxu0 0.0
      %5797 = vmatprep.subr.mxu0 0.0
      %5798 = vmatpush2.msra.mxu0 0.0
      %5799 = vmatprep.subr.mxu0 0.0
      %5800 = vmatpush2.msra.mxu0 0.0
      %5801 = vmatprep.subr.mxu0 0.0
      %5802 = vmatpush2.msra.mxu0 0.0
      %5803 = vmatprep.subr.mxu0 0.0
      %5804 = vmatpush2.msra.mxu0 0.0
      %5805 = vmatprep.subr.mxu0 0.0
      %5806 = vmatpush2.msra.mxu0 0.0
      %5807 = vmatprep.subr.mxu0 0.0
      %5808 = vmatpush2.msra.mxu0 0.0
      %5809 = vmatprep.subr.mxu0 0.0
      %5810 = vmatpush2.msra.mxu0 0.0
      %5811 = vmatprep.subr.mxu0 0.0
      %5812 = vmatpush2.msra.mxu0 0.0
      %5813 = vmatprep.subr.mxu0 0.0
      %5814 = vmatpush2.msra.mxu0 0.0
      %5815 = vmatprep.subr.mxu0 0.0
      %5816 = vmatpush2.msra.mxu0 0.0
      %5817 = vmatprep.subr.mxu0 0.0
      %5818 = vmatpush2.msra.mxu0 0.0
      %5819 = vmatprep.subr.mxu0 0.0
      %5820 = vmatpush2.msra.mxu0 0.0
      %5821 = vmatprep.subr.mxu0 0.0
      %5822 = vmatpush2.msra.mxu0 0.0
      %5823 = vmatprep.mubr.f32.mxu0 0.0
      %5824 = vmatmul.mubr.f32.gmra.mxu0 %v5733
      %v5825 = vpop.f32.mrf.mxu0
      %v5826 = vadd.f32 0.0, %v5825
      %v5827 = vpop.f32.mrf.mxu0
      %5828 = vmatprep.mubr.f32.mxu0 0.0
      %5829 = vmatmul.mubr.f32.gmra.mxu0 %v5736
      %v5830 = vpop.f32.mrf.mxu0
      %v5831 = vadd.f32 0.0, %v5830
      %v5832 = vpop.f32.mrf.mxu0
      %5833 = vmatprep.mubr.f32.mxu0 0.0
      %5834 = vmatmul.mubr.f32.gmra.mxu0 %v5739
      %v5835 = vpop.f32.mrf.mxu0
      %v5836 = vadd.f32 0.0, %v5835
      %v5837 = vpop.f32.mrf.mxu0
      %5838 = vmatprep.mubr.f32.mxu0 0.0
      %5839 = vmatmul.mubr.f32.gmra.mxu0 %v5742
      %v5840 = vpop.f32.mrf.mxu0
      %v5841 = vadd.f32 0.0, %v5840
      %v5842 = vpop.f32.mrf.mxu0
      %5843 = vmatprep.mubr.f32.mxu0 0.0
      %5844 = vmatmul.mubr.f32.gmra.mxu0 %v5745
      %v5845 = vpop.f32.mrf.mxu0
      %v5846 = vadd.f32 0.0, %v5845
      %v5847 = vpop.f32.mrf.mxu0
      %5848 = vmatprep.mubr.f32.mxu0 0.0
      %5849 = vmatmul.mubr.f32.gmra.mxu0 %v5748
      %v5850 = vpop.f32.mrf.mxu0
      %v5851 = vadd.f32 0.0, %v5850
      %v5852 = vpop.f32.mrf.mxu0
      %5853 = vmatprep.mubr.f32.mxu0 0.0
      %5854 = vmatmul.mubr.f32.gmra.mxu0 %v5751
      %v5855 = vpop.f32.mrf.mxu0
      %v5856 = vadd.f32 0.0, %v5855
      %v5857 = vpop.f32.mrf.mxu0
      %5858 = vmatprep.mubr.f32.mxu0 0.0
      %5859 = vmatmul.mubr.f32.gmra.mxu0 %v5754
      %v5860 = vpop.f32.mrf.mxu0
      %v5861 = vadd.f32 0.0, %v5860
      %v5862 = vpop.f32.mrf.mxu0
      %5863 = vdwg.mxu0
      %v5864 = vadd.f32 %v5723, %v5826
      %v5865 = vadd.f32 %v5724, %v5831
      %v5866 = vadd.f32 %v5725, %v5836
      %v5867 = vadd.f32 %v5726, %v5841
      %v5868 = vadd.f32 %v5727, %v5846
      %v5869 = vadd.f32 %v5728, %v5851
      %v5870 = vadd.f32 %v5729, %v5856
      %v5871 = vadd.f32 %v5730, %v5861
      %v5872 = vld [vmem:[%s3 + $0xa0] sm:$0xf]
      %v5874 = vsel %vm593, %v5872, 0
      %5876 = vmatprep.subr.mxu0 0.0
      %5877 = vmatpush1.msra.mxu0 0.0
      %5878 = vmatprep.subr.mxu0 0.0
      %5879 = vmatpush1.msra.mxu0 0.0
      %5880 = vmatprep.subr.mxu0 0.0
      %5881 = vmatpush1.msra.mxu0 0.0
      %5882 = vmatprep.subr.mxu0 0.0
      %5883 = vmatpush1.msra.mxu0 0.0
      %5884 = vmatprep.subr.mxu0 0.0
      %5885 = vmatpush1.msra.mxu0 0.0
      %5886 = vmatprep.subr.mxu0 0.0
      %5887 = vmatpush1.msra.mxu0 0.0
      %5888 = vmatprep.subr.mxu0 0.0
      %5889 = vmatpush1.msra.mxu0 0.0
      %5890 = vmatprep.subr.mxu0 0.0
      %5891 = vmatpush1.msra.mxu0 0.0
      %5892 = vmatprep.subr.mxu0 0.0
      %5893 = vmatpush1.msra.mxu0 0.0
      %5894 = vmatprep.subr.mxu0 0.0
      %5895 = vmatpush1.msra.mxu0 0.0
      %5896 = vmatprep.subr.mxu0 0.0
      %5897 = vmatpush1.msra.mxu0 0.0
      %5898 = vmatprep.subr.mxu0 0.0
      %5899 = vmatpush1.msra.mxu0 0.0
      %5900 = vmatprep.subr.mxu0 0.0
      %5901 = vmatpush1.msra.mxu0 0.0
      %5902 = vmatprep.subr.mxu0 0.0
      %5903 = vmatpush1.msra.mxu0 0.0
      %5904 = vmatprep.subr.mxu0 0.0
      %5905 = vmatpush1.msra.mxu0 0.0
      %5906 = vmatprep.subr.mxu0 0.0
      %5907 = vmatpush1.msra.mxu0 %v5874
      %5908 = vmatprep.subr.mxu0 0.0
      %5909 = vmatpush2.msra.mxu0 0.0
      %5910 = vmatprep.subr.mxu0 0.0
      %5911 = vmatpush2.msra.mxu0 0.0
      %5912 = vmatprep.subr.mxu0 0.0
      %5913 = vmatpush2.msra.mxu0 0.0
      %5914 = vmatprep.subr.mxu0 0.0
      %5915 = vmatpush2.msra.mxu0 0.0
      %5916 = vmatprep.subr.mxu0 0.0
      %5917 = vmatpush2.msra.mxu0 0.0
      %5918 = vmatprep.subr.mxu0 0.0
      %5919 = vmatpush2.msra.mxu0 0.0
      %5920 = vmatprep.subr.mxu0 0.0
      %5921 = vmatpush2.msra.mxu0 0.0
      %5922 = vmatprep.subr.mxu0 0.0
      %5923 = vmatpush2.msra.mxu0 0.0
      %5924 = vmatprep.subr.mxu0 0.0
      %5925 = vmatpush2.msra.mxu0 0.0
      %5926 = vmatprep.subr.mxu0 0.0
      %5927 = vmatpush2.msra.mxu0 0.0
      %5928 = vmatprep.subr.mxu0 0.0
      %5929 = vmatpush2.msra.mxu0 0.0
      %5930 = vmatprep.subr.mxu0 0.0
      %5931 = vmatpush2.msra.mxu0 0.0
      %5932 = vmatprep.subr.mxu0 0.0
      %5933 = vmatpush2.msra.mxu0 0.0
      %5934 = vmatprep.subr.mxu0 0.0
      %5935 = vmatpush2.msra.mxu0 0.0
      %5936 = vmatprep.subr.mxu0 0.0
      %5937 = vmatpush2.msra.mxu0 0.0
      %5938 = vmatprep.subr.mxu0 0.0
      %5939 = vmatpush2.msra.mxu0 0.0
      %5940 = vmatprep.mubr.f32.mxu0 0.0
      %5941 = vmatmul.mubr.f32.gmra.mxu0 %v1541
      %v5942 = vpop.f32.mrf.mxu0
      %v5943 = vadd.f32 0.0, %v5942
      %v5944 = vpop.f32.mrf.mxu0
      %5945 = vmatprep.mubr.f32.mxu0 0.0
      %5946 = vmatmul.mubr.f32.gmra.mxu0 %v1544
      %v5947 = vpop.f32.mrf.mxu0
      %v5948 = vadd.f32 0.0, %v5947
      %v5949 = vpop.f32.mrf.mxu0
      %5950 = vmatprep.mubr.f32.mxu0 0.0
      %5951 = vmatmul.mubr.f32.gmra.mxu0 %v1547
      %v5952 = vpop.f32.mrf.mxu0
      %v5953 = vadd.f32 0.0, %v5952
      %v5954 = vpop.f32.mrf.mxu0
      %5955 = vmatprep.mubr.f32.mxu0 0.0
      %5956 = vmatmul.mubr.f32.gmra.mxu0 %v1550
      %v5957 = vpop.f32.mrf.mxu0
      %v5958 = vadd.f32 0.0, %v5957
      %v5959 = vpop.f32.mrf.mxu0
      %5960 = vmatprep.mubr.f32.mxu0 0.0
      %5961 = vmatmul.mubr.f32.gmra.mxu0 %v1553
      %v5962 = vpop.f32.mrf.mxu0
      %v5963 = vadd.f32 0.0, %v5962
      %v5964 = vpop.f32.mrf.mxu0
      %5965 = vmatprep.mubr.f32.mxu0 0.0
      %5966 = vmatmul.mubr.f32.gmra.mxu0 %v1556
      %v5967 = vpop.f32.mrf.mxu0
      %v5968 = vadd.f32 0.0, %v5967
      %v5969 = vpop.f32.mrf.mxu0
      %5970 = vmatprep.mubr.f32.mxu0 0.0
      %5971 = vmatmul.mubr.f32.gmra.mxu0 %v1559
      %v5972 = vpop.f32.mrf.mxu0
      %v5973 = vadd.f32 0.0, %v5972
      %v5974 = vpop.f32.mrf.mxu0
      %5975 = vmatprep.mubr.f32.mxu0 0.0
      %5976 = vmatmul.mubr.f32.gmra.mxu0 %v1562
      %v5977 = vpop.f32.mrf.mxu0
      %v5978 = vadd.f32 0.0, %v5977
      %v5979 = vpop.f32.mrf.mxu0
      %5980 = vdwg.mxu0
      %v5981 = vadd.f32 %v5864, %v5943
      %v5982 = vadd.f32 %v5865, %v5948
      %v5983 = vadd.f32 %v5866, %v5953
      %v5984 = vadd.f32 %v5867, %v5958
      %v5985 = vadd.f32 %v5868, %v5963
      %v5986 = vadd.f32 %v5869, %v5968
      %v5987 = vadd.f32 %v5870, %v5973
      %v5988 = vadd.f32 %v5871, %v5978
      %v5989 = vld [vmem:[%s3 + $0xa4] sm:$0xf]
      %v5991 = vsel %vm593, %v5989, 0
      %5993 = vmatprep.subr.mxu0 0.0
      %5994 = vmatpush1.msra.mxu0 0.0
      %5995 = vmatprep.subr.mxu0 0.0
      %5996 = vmatpush1.msra.mxu0 0.0
      %5997 = vmatprep.subr.mxu0 0.0
      %5998 = vmatpush1.msra.mxu0 0.0
      %5999 = vmatprep.subr.mxu0 0.0
      %6000 = vmatpush1.msra.mxu0 0.0
      %6001 = vmatprep.subr.mxu0 0.0
      %6002 = vmatpush1.msra.mxu0 0.0
      %6003 = vmatprep.subr.mxu0 0.0
      %6004 = vmatpush1.msra.mxu0 0.0
      %6005 = vmatprep.subr.mxu0 0.0
      %6006 = vmatpush1.msra.mxu0 0.0
      %6007 = vmatprep.subr.mxu0 0.0
      %6008 = vmatpush1.msra.mxu0 0.0
      %6009 = vmatprep.subr.mxu0 0.0
      %6010 = vmatpush1.msra.mxu0 0.0
      %6011 = vmatprep.subr.mxu0 0.0
      %6012 = vmatpush1.msra.mxu0 0.0
      %6013 = vmatprep.subr.mxu0 0.0
      %6014 = vmatpush1.msra.mxu0 0.0
      %6015 = vmatprep.subr.mxu0 0.0
      %6016 = vmatpush1.msra.mxu0 0.0
      %6017 = vmatprep.subr.mxu0 0.0
      %6018 = vmatpush1.msra.mxu0 0.0
      %6019 = vmatprep.subr.mxu0 0.0
      %6020 = vmatpush1.msra.mxu0 0.0
      %6021 = vmatprep.subr.mxu0 0.0
      %6022 = vmatpush1.msra.mxu0 0.0
      %6023 = vmatprep.subr.mxu0 0.0
      %6024 = vmatpush1.msra.mxu0 %v5991
      %6025 = vmatprep.subr.mxu0 0.0
      %6026 = vmatpush2.msra.mxu0 0.0
      %6027 = vmatprep.subr.mxu0 0.0
      %6028 = vmatpush2.msra.mxu0 0.0
      %6029 = vmatprep.subr.mxu0 0.0
      %6030 = vmatpush2.msra.mxu0 0.0
      %6031 = vmatprep.subr.mxu0 0.0
      %6032 = vmatpush2.msra.mxu0 0.0
      %6033 = vmatprep.subr.mxu0 0.0
      %6034 = vmatpush2.msra.mxu0 0.0
      %6035 = vmatprep.subr.mxu0 0.0
      %6036 = vmatpush2.msra.mxu0 0.0
      %6037 = vmatprep.subr.mxu0 0.0
      %6038 = vmatpush2.msra.mxu0 0.0
      %6039 = vmatprep.subr.mxu0 0.0
      %6040 = vmatpush2.msra.mxu0 0.0
      %6041 = vmatprep.subr.mxu0 0.0
      %6042 = vmatpush2.msra.mxu0 0.0
      %6043 = vmatprep.subr.mxu0 0.0
      %6044 = vmatpush2.msra.mxu0 0.0
      %6045 = vmatprep.subr.mxu0 0.0
      %6046 = vmatpush2.msra.mxu0 0.0
      %6047 = vmatprep.subr.mxu0 0.0
      %6048 = vmatpush2.msra.mxu0 0.0
      %6049 = vmatprep.subr.mxu0 0.0
      %6050 = vmatpush2.msra.mxu0 0.0
      %6051 = vmatprep.subr.mxu0 0.0
      %6052 = vmatpush2.msra.mxu0 0.0
      %6053 = vmatprep.subr.mxu0 0.0
      %6054 = vmatpush2.msra.mxu0 0.0
      %6055 = vmatprep.subr.mxu0 0.0
      %6056 = vmatpush2.msra.mxu0 0.0
      %6057 = vmatprep.mubr.f32.mxu0 0.0
      %6058 = vmatmul.mubr.f32.gmra.mxu0 %v3143
      %v6059 = vpop.f32.mrf.mxu0
      %v6060 = vadd.f32 0.0, %v6059
      %v6061 = vpop.f32.mrf.mxu0
      %6062 = vmatprep.mubr.f32.mxu0 0.0
      %6063 = vmatmul.mubr.f32.gmra.mxu0 %v3146
      %v6064 = vpop.f32.mrf.mxu0
      %v6065 = vadd.f32 0.0, %v6064
      %v6066 = vpop.f32.mrf.mxu0
      %6067 = vmatprep.mubr.f32.mxu0 0.0
      %6068 = vmatmul.mubr.f32.gmra.mxu0 %v3149
      %v6069 = vpop.f32.mrf.mxu0
      %v6070 = vadd.f32 0.0, %v6069
      %v6071 = vpop.f32.mrf.mxu0
      %6072 = vmatprep.mubr.f32.mxu0 0.0
      %6073 = vmatmul.mubr.f32.gmra.mxu0 %v3152
      %v6074 = vpop.f32.mrf.mxu0
      %v6075 = vadd.f32 0.0, %v6074
      %v6076 = vpop.f32.mrf.mxu0
      %6077 = vmatprep.mubr.f32.mxu0 0.0
      %6078 = vmatmul.mubr.f32.gmra.mxu0 %v3155
      %v6079 = vpop.f32.mrf.mxu0
      %v6080 = vadd.f32 0.0, %v6079
      %v6081 = vpop.f32.mrf.mxu0
      %6082 = vmatprep.mubr.f32.mxu0 0.0
      %6083 = vmatmul.mubr.f32.gmra.mxu0 %v3158
      %v6084 = vpop.f32.mrf.mxu0
      %v6085 = vadd.f32 0.0, %v6084
      %v6086 = vpop.f32.mrf.mxu0
      %6087 = vmatprep.mubr.f32.mxu0 0.0
      %6088 = vmatmul.mubr.f32.gmra.mxu0 %v3161
      %v6089 = vpop.f32.mrf.mxu0
      %v6090 = vadd.f32 0.0, %v6089
      %v6091 = vpop.f32.mrf.mxu0
      %6092 = vmatprep.mubr.f32.mxu0 0.0
      %6093 = vmatmul.mubr.f32.gmra.mxu0 %v3164
      %v6094 = vpop.f32.mrf.mxu0
      %v6095 = vadd.f32 0.0, %v6094
      %v6096 = vpop.f32.mrf.mxu0
      %6097 = vdwg.mxu0
      %v6098 = vadd.f32 %v5981, %v6060
      %v6099 = vadd.f32 %v5982, %v6065
      %v6100 = vadd.f32 %v5983, %v6070
      %v6101 = vadd.f32 %v5984, %v6075
      %v6102 = vadd.f32 %v5985, %v6080
      %v6103 = vadd.f32 %v5986, %v6085
      %v6104 = vadd.f32 %v5987, %v6090
      %v6105 = vadd.f32 %v5988, %v6095
      %v6106 = vld [vmem:[%s3 + $0xa8] sm:$0xf]
      %v6108 = vsel %vm593, %v6106, 0
      %6110 = vmatprep.subr.mxu0 0.0
      %6111 = vmatpush1.msra.mxu0 0.0
      %6112 = vmatprep.subr.mxu0 0.0
      %6113 = vmatpush1.msra.mxu0 0.0
      %6114 = vmatprep.subr.mxu0 0.0
      %6115 = vmatpush1.msra.mxu0 0.0
      %6116 = vmatprep.subr.mxu0 0.0
      %6117 = vmatpush1.msra.mxu0 0.0
      %6118 = vmatprep.subr.mxu0 0.0
      %6119 = vmatpush1.msra.mxu0 0.0
      %6120 = vmatprep.subr.mxu0 0.0
      %6121 = vmatpush1.msra.mxu0 0.0
      %6122 = vmatprep.subr.mxu0 0.0
      %6123 = vmatpush1.msra.mxu0 0.0
      %6124 = vmatprep.subr.mxu0 0.0
      %6125 = vmatpush1.msra.mxu0 0.0
      %6126 = vmatprep.subr.mxu0 0.0
      %6127 = vmatpush1.msra.mxu0 0.0
      %6128 = vmatprep.subr.mxu0 0.0
      %6129 = vmatpush1.msra.mxu0 0.0
      %6130 = vmatprep.subr.mxu0 0.0
      %6131 = vmatpush1.msra.mxu0 0.0
      %6132 = vmatprep.subr.mxu0 0.0
      %6133 = vmatpush1.msra.mxu0 0.0
      %6134 = vmatprep.subr.mxu0 0.0
      %6135 = vmatpush1.msra.mxu0 0.0
      %6136 = vmatprep.subr.mxu0 0.0
      %6137 = vmatpush1.msra.mxu0 0.0
      %6138 = vmatprep.subr.mxu0 0.0
      %6139 = vmatpush1.msra.mxu0 0.0
      %6140 = vmatprep.subr.mxu0 0.0
      %6141 = vmatpush1.msra.mxu0 %v6108
      %6142 = vmatprep.subr.mxu0 0.0
      %6143 = vmatpush2.msra.mxu0 0.0
      %6144 = vmatprep.subr.mxu0 0.0
      %6145 = vmatpush2.msra.mxu0 0.0
      %6146 = vmatprep.subr.mxu0 0.0
      %6147 = vmatpush2.msra.mxu0 0.0
      %6148 = vmatprep.subr.mxu0 0.0
      %6149 = vmatpush2.msra.mxu0 0.0
      %6150 = vmatprep.subr.mxu0 0.0
      %6151 = vmatpush2.msra.mxu0 0.0
      %6152 = vmatprep.subr.mxu0 0.0
      %6153 = vmatpush2.msra.mxu0 0.0
      %6154 = vmatprep.subr.mxu0 0.0
      %6155 = vmatpush2.msra.mxu0 0.0
      %6156 = vmatprep.subr.mxu0 0.0
      %6157 = vmatpush2.msra.mxu0 0.0
      %6158 = vmatprep.subr.mxu0 0.0
      %6159 = vmatpush2.msra.mxu0 0.0
      %6160 = vmatprep.subr.mxu0 0.0
      %6161 = vmatpush2.msra.mxu0 0.0
      %6162 = vmatprep.subr.mxu0 0.0
      %6163 = vmatpush2.msra.mxu0 0.0
      %6164 = vmatprep.subr.mxu0 0.0
      %6165 = vmatpush2.msra.mxu0 0.0
      %6166 = vmatprep.subr.mxu0 0.0
      %6167 = vmatpush2.msra.mxu0 0.0
      %6168 = vmatprep.subr.mxu0 0.0
      %6169 = vmatpush2.msra.mxu0 0.0
      %6170 = vmatprep.subr.mxu0 0.0
      %6171 = vmatpush2.msra.mxu0 0.0
      %6172 = vmatprep.subr.mxu0 0.0
      %6173 = vmatpush2.msra.mxu0 0.0
      %6174 = vmatprep.mubr.f32.mxu0 0.0
      %6175 = vmatmul.mubr.f32.gmra.mxu0 %v4724
      %v6176 = vpop.f32.mrf.mxu0
      %v6177 = vadd.f32 0.0, %v6176
      %v6178 = vpop.f32.mrf.mxu0
      %6179 = vmatprep.mubr.f32.mxu0 0.0
      %6180 = vmatmul.mubr.f32.gmra.mxu0 %v4727
      %v6181 = vpop.f32.mrf.mxu0
      %v6182 = vadd.f32 0.0, %v6181
      %v6183 = vpop.f32.mrf.mxu0
      %6184 = vmatprep.mubr.f32.mxu0 0.0
      %6185 = vmatmul.mubr.f32.gmra.mxu0 %v4730
      %v6186 = vpop.f32.mrf.mxu0
      %v6187 = vadd.f32 0.0, %v6186
      %v6188 = vpop.f32.mrf.mxu0
      %6189 = vmatprep.mubr.f32.mxu0 0.0
      %6190 = vmatmul.mubr.f32.gmra.mxu0 %v4733
      %v6191 = vpop.f32.mrf.mxu0
      %v6192 = vadd.f32 0.0, %v6191
      %v6193 = vpop.f32.mrf.mxu0
      %6194 = vmatprep.mubr.f32.mxu0 0.0
      %6195 = vmatmul.mubr.f32.gmra.mxu0 %v4736
      %v6196 = vpop.f32.mrf.mxu0
      %v6197 = vadd.f32 0.0, %v6196
      %v6198 = vpop.f32.mrf.mxu0
      %6199 = vmatprep.mubr.f32.mxu0 0.0
      %6200 = vmatmul.mubr.f32.gmra.mxu0 %v4739
      %v6201 = vpop.f32.mrf.mxu0
      %v6202 = vadd.f32 0.0, %v6201
      %v6203 = vpop.f32.mrf.mxu0
      %6204 = vmatprep.mubr.f32.mxu0 0.0
      %6205 = vmatmul.mubr.f32.gmra.mxu0 %v4742
      %v6206 = vpop.f32.mrf.mxu0
      %v6207 = vadd.f32 0.0, %v6206
      %v6208 = vpop.f32.mrf.mxu0
      %6209 = vmatprep.mubr.f32.mxu0 0.0
      %6210 = vmatmul.mubr.f32.gmra.mxu0 %v4745
      %v6211 = vpop.f32.mrf.mxu0
      %v6212 = vadd.f32 0.0, %v6211
      %v6213 = vpop.f32.mrf.mxu0
      %6214 = vdwg.mxu0
      %v6215 = vadd.f32 %v6098, %v6177
      %v6216 = vadd.f32 %v6099, %v6182
      %v6217 = vadd.f32 %v6100, %v6187
      %v6218 = vadd.f32 %v6101, %v6192
      %v6219 = vadd.f32 %v6102, %v6197
      %v6220 = vadd.f32 %v6103, %v6202
      %v6221 = vadd.f32 %v6104, %v6207
      %v6222 = vadd.f32 %v6105, %v6212
      %v6223 = vld [vmem:[%s3 + $0xac] sm:$0xf]
      %v6225 = vsel %vm568, %v484, 0
      %v6228 = vsel %vm568, %v485, 0
      %v6231 = vsel %vm568, %v486, 0
      %v6234 = vsel %vm568, %v487, 0
      %v6237 = vsel %vm568, %v488, 0
      %v6240 = vsel %vm568, %v489, 0
      %v6243 = vsel %vm568, %v490, 0
      %v6246 = vsel %vm568, %v491, 0
      %v6249 = vsel %vm593, %v6223, 0
      %6251 = vmatprep.subr.mxu0 0.0
      %6252 = vmatpush1.msra.mxu0 0.0
      %6253 = vmatprep.subr.mxu0 0.0
      %6254 = vmatpush1.msra.mxu0 0.0
      %6255 = vmatprep.subr.mxu0 0.0
      %6256 = vmatpush1.msra.mxu0 0.0
      %6257 = vmatprep.subr.mxu0 0.0
      %6258 = vmatpush1.msra.mxu0 0.0
      %6259 = vmatprep.subr.mxu0 0.0
      %6260 = vmatpush1.msra.mxu0 0.0
      %6261 = vmatprep.subr.mxu0 0.0
      %6262 = vmatpush1.msra.mxu0 0.0
      %6263 = vmatprep.subr.mxu0 0.0
      %6264 = vmatpush1.msra.mxu0 0.0
      %6265 = vmatprep.subr.mxu0 0.0
      %6266 = vmatpush1.msra.mxu0 0.0
      %6267 = vmatprep.subr.mxu0 0.0
      %6268 = vmatpush1.msra.mxu0 0.0
      %6269 = vmatprep.subr.mxu0 0.0
      %6270 = vmatpush1.msra.mxu0 0.0
      %6271 = vmatprep.subr.mxu0 0.0
      %6272 = vmatpush1.msra.mxu0 0.0
      %6273 = vmatprep.subr.mxu0 0.0
      %6274 = vmatpush1.msra.mxu0 0.0
      %6275 = vmatprep.subr.mxu0 0.0
      %6276 = vmatpush1.msra.mxu0 0.0
      %6277 = vmatprep.subr.mxu0 0.0
      %6278 = vmatpush1.msra.mxu0 0.0
      %6279 = vmatprep.subr.mxu0 0.0
      %6280 = vmatpush1.msra.mxu0 0.0
      %6281 = vmatprep.subr.mxu0 0.0
      %6282 = vmatpush1.msra.mxu0 %v6249
      %6283 = vmatprep.subr.mxu0 0.0
      %6284 = vmatpush2.msra.mxu0 0.0
      %6285 = vmatprep.subr.mxu0 0.0
      %6286 = vmatpush2.msra.mxu0 0.0
      %6287 = vmatprep.subr.mxu0 0.0
      %6288 = vmatpush2.msra.mxu0 0.0
      %6289 = vmatprep.subr.mxu0 0.0
      %6290 = vmatpush2.msra.mxu0 0.0
      %6291 = vmatprep.subr.mxu0 0.0
      %6292 = vmatpush2.msra.mxu0 0.0
      %6293 = vmatprep.subr.mxu0 0.0
      %6294 = vmatpush2.msra.mxu0 0.0
      %6295 = vmatprep.subr.mxu0 0.0
      %6296 = vmatpush2.msra.mxu0 0.0
      %6297 = vmatprep.subr.mxu0 0.0
      %6298 = vmatpush2.msra.mxu0 0.0
      %6299 = vmatprep.subr.mxu0 0.0
      %6300 = vmatpush2.msra.mxu0 0.0
      %6301 = vmatprep.subr.mxu0 0.0
      %6302 = vmatpush2.msra.mxu0 0.0
      %6303 = vmatprep.subr.mxu0 0.0
      %6304 = vmatpush2.msra.mxu0 0.0
      %6305 = vmatprep.subr.mxu0 0.0
      %6306 = vmatpush2.msra.mxu0 0.0
      %6307 = vmatprep.subr.mxu0 0.0
      %6308 = vmatpush2.msra.mxu0 0.0
      %6309 = vmatprep.subr.mxu0 0.0
      %6310 = vmatpush2.msra.mxu0 0.0
      %6311 = vmatprep.subr.mxu0 0.0
      %6312 = vmatpush2.msra.mxu0 0.0
      %6313 = vmatprep.subr.mxu0 0.0
      %6314 = vmatpush2.msra.mxu0 0.0
      %6315 = vmatprep.mubr.f32.mxu0 0.0
      %6316 = vmatmul.mubr.f32.gmra.mxu0 %v6225
      %v6317 = vpop.f32.mrf.mxu0
      %v6318 = vadd.f32 0.0, %v6317
      %v6319 = vpop.f32.mrf.mxu0
      %6320 = vmatprep.mubr.f32.mxu0 0.0
      %6321 = vmatmul.mubr.f32.gmra.mxu0 %v6228
      %v6322 = vpop.f32.mrf.mxu0
      %v6323 = vadd.f32 0.0, %v6322
      %v6324 = vpop.f32.mrf.mxu0
      %6325 = vmatprep.mubr.f32.mxu0 0.0
      %6326 = vmatmul.mubr.f32.gmra.mxu0 %v6231
      %v6327 = vpop.f32.mrf.mxu0
      %v6328 = vadd.f32 0.0, %v6327
      %v6329 = vpop.f32.mrf.mxu0
      %6330 = vmatprep.mubr.f32.mxu0 0.0
      %6331 = vmatmul.mubr.f32.gmra.mxu0 %v6234
      %v6332 = vpop.f32.mrf.mxu0
      %v6333 = vadd.f32 0.0, %v6332
      %v6334 = vpop.f32.mrf.mxu0
      %6335 = vmatprep.mubr.f32.mxu0 0.0
      %6336 = vmatmul.mubr.f32.gmra.mxu0 %v6237
      %v6337 = vpop.f32.mrf.mxu0
      %v6338 = vadd.f32 0.0, %v6337
      %v6339 = vpop.f32.mrf.mxu0
      %6340 = vmatprep.mubr.f32.mxu0 0.0
      %6341 = vmatmul.mubr.f32.gmra.mxu0 %v6240
      %v6342 = vpop.f32.mrf.mxu0
      %v6343 = vadd.f32 0.0, %v6342
      %v6344 = vpop.f32.mrf.mxu0
      %6345 = vmatprep.mubr.f32.mxu0 0.0
      %6346 = vmatmul.mubr.f32.gmra.mxu0 %v6243
      %v6347 = vpop.f32.mrf.mxu0
      %v6348 = vadd.f32 0.0, %v6347
      %v6349 = vpop.f32.mrf.mxu0
      %6350 = vmatprep.mubr.f32.mxu0 0.0
      %6351 = vmatmul.mubr.f32.gmra.mxu0 %v6246
      %v6352 = vpop.f32.mrf.mxu0
      %v6353 = vadd.f32 0.0, %v6352
      %v6354 = vpop.f32.mrf.mxu0
      %6355 = vdwg.mxu0
      %v6356 = vadd.f32 %v6215, %v6318
      %v6357 = vadd.f32 %v6216, %v6323
      %v6358 = vadd.f32 %v6217, %v6328
      %v6359 = vadd.f32 %v6218, %v6333
      %v6360 = vadd.f32 %v6219, %v6338
      %v6361 = vadd.f32 %v6220, %v6343
      %v6362 = vadd.f32 %v6221, %v6348
      %v6363 = vadd.f32 %v6222, %v6353
      %v6364 = vld [vmem:[%s3 + $0xb0] sm:$0xf]
      %v6366 = vsel %vm593, %v6364, 0
      %6368 = vmatprep.subr.mxu0 0.0
      %6369 = vmatpush1.msra.mxu0 0.0
      %6370 = vmatprep.subr.mxu0 0.0
      %6371 = vmatpush1.msra.mxu0 0.0
      %6372 = vmatprep.subr.mxu0 0.0
      %6373 = vmatpush1.msra.mxu0 0.0
      %6374 = vmatprep.subr.mxu0 0.0
      %6375 = vmatpush1.msra.mxu0 0.0
      %6376 = vmatprep.subr.mxu0 0.0
      %6377 = vmatpush1.msra.mxu0 0.0
      %6378 = vmatprep.subr.mxu0 0.0
      %6379 = vmatpush1.msra.mxu0 0.0
      %6380 = vmatprep.subr.mxu0 0.0
      %6381 = vmatpush1.msra.mxu0 0.0
      %6382 = vmatprep.subr.mxu0 0.0
      %6383 = vmatpush1.msra.mxu0 0.0
      %6384 = vmatprep.subr.mxu0 0.0
      %6385 = vmatpush1.msra.mxu0 0.0
      %6386 = vmatprep.subr.mxu0 0.0
      %6387 = vmatpush1.msra.mxu0 0.0
      %6388 = vmatprep.subr.mxu0 0.0
      %6389 = vmatpush1.msra.mxu0 0.0
      %6390 = vmatprep.subr.mxu0 0.0
      %6391 = vmatpush1.msra.mxu0 0.0
      %6392 = vmatprep.subr.mxu0 0.0
      %6393 = vmatpush1.msra.mxu0 0.0
      %6394 = vmatprep.subr.mxu0 0.0
      %6395 = vmatpush1.msra.mxu0 0.0
      %6396 = vmatprep.subr.mxu0 0.0
      %6397 = vmatpush1.msra.mxu0 0.0
      %6398 = vmatprep.subr.mxu0 0.0
      %6399 = vmatpush1.msra.mxu0 %v6366
      %6400 = vmatprep.subr.mxu0 0.0
      %6401 = vmatpush2.msra.mxu0 0.0
      %6402 = vmatprep.subr.mxu0 0.0
      %6403 = vmatpush2.msra.mxu0 0.0
      %6404 = vmatprep.subr.mxu0 0.0
      %6405 = vmatpush2.msra.mxu0 0.0
      %6406 = vmatprep.subr.mxu0 0.0
      %6407 = vmatpush2.msra.mxu0 0.0
      %6408 = vmatprep.subr.mxu0 0.0
      %6409 = vmatpush2.msra.mxu0 0.0
      %6410 = vmatprep.subr.mxu0 0.0
      %6411 = vmatpush2.msra.mxu0 0.0
      %6412 = vmatprep.subr.mxu0 0.0
      %6413 = vmatpush2.msra.mxu0 0.0
      %6414 = vmatprep.subr.mxu0 0.0
      %6415 = vmatpush2.msra.mxu0 0.0
      %6416 = vmatprep.subr.mxu0 0.0
      %6417 = vmatpush2.msra.mxu0 0.0
      %6418 = vmatprep.subr.mxu0 0.0
      %6419 = vmatpush2.msra.mxu0 0.0
      %6420 = vmatprep.subr.mxu0 0.0
      %6421 = vmatpush2.msra.mxu0 0.0
      %6422 = vmatprep.subr.mxu0 0.0
      %6423 = vmatpush2.msra.mxu0 0.0
      %6424 = vmatprep.subr.mxu0 0.0
      %6425 = vmatpush2.msra.mxu0 0.0
      %6426 = vmatprep.subr.mxu0 0.0
      %6427 = vmatpush2.msra.mxu0 0.0
      %6428 = vmatprep.subr.mxu0 0.0
      %6429 = vmatpush2.msra.mxu0 0.0
      %6430 = vmatprep.subr.mxu0 0.0
      %6431 = vmatpush2.msra.mxu0 0.0
      %6432 = vmatprep.mubr.f32.mxu0 0.0
      %6433 = vmatmul.mubr.f32.gmra.mxu0 %v2105
      %v6434 = vpop.f32.mrf.mxu0
      %v6435 = vadd.f32 0.0, %v6434
      %v6436 = vpop.f32.mrf.mxu0
      %6437 = vmatprep.mubr.f32.mxu0 0.0
      %6438 = vmatmul.mubr.f32.gmra.mxu0 %v2108
      %v6439 = vpop.f32.mrf.mxu0
      %v6440 = vadd.f32 0.0, %v6439
      %v6441 = vpop.f32.mrf.mxu0
      %6442 = vmatprep.mubr.f32.mxu0 0.0
      %6443 = vmatmul.mubr.f32.gmra.mxu0 %v2111
      %v6444 = vpop.f32.mrf.mxu0
      %v6445 = vadd.f32 0.0, %v6444
      %v6446 = vpop.f32.mrf.mxu0
      %6447 = vmatprep.mubr.f32.mxu0 0.0
      %6448 = vmatmul.mubr.f32.gmra.mxu0 %v2114
      %v6449 = vpop.f32.mrf.mxu0
      %v6450 = vadd.f32 0.0, %v6449
      %v6451 = vpop.f32.mrf.mxu0
      %6452 = vmatprep.mubr.f32.mxu0 0.0
      %6453 = vmatmul.mubr.f32.gmra.mxu0 %v2117
      %v6454 = vpop.f32.mrf.mxu0
      %v6455 = vadd.f32 0.0, %v6454
      %v6456 = vpop.f32.mrf.mxu0
      %6457 = vmatprep.mubr.f32.mxu0 0.0
      %6458 = vmatmul.mubr.f32.gmra.mxu0 %v2120
      %v6459 = vpop.f32.mrf.mxu0
      %v6460 = vadd.f32 0.0, %v6459
      %v6461 = vpop.f32.mrf.mxu0
      %6462 = vmatprep.mubr.f32.mxu0 0.0
      %6463 = vmatmul.mubr.f32.gmra.mxu0 %v2123
      %v6464 = vpop.f32.mrf.mxu0
      %v6465 = vadd.f32 0.0, %v6464
      %v6466 = vpop.f32.mrf.mxu0
      %6467 = vmatprep.mubr.f32.mxu0 0.0
      %6468 = vmatmul.mubr.f32.gmra.mxu0 %v2126
      %v6469 = vpop.f32.mrf.mxu0
      %v6470 = vadd.f32 0.0, %v6469
      %v6471 = vpop.f32.mrf.mxu0
      %6472 = vdwg.mxu0
      %v6473 = vadd.f32 %v6356, %v6435
      %v6474 = vadd.f32 %v6357, %v6440
      %v6475 = vadd.f32 %v6358, %v6445
      %v6476 = vadd.f32 %v6359, %v6450
      %v6477 = vadd.f32 %v6360, %v6455
      %v6478 = vadd.f32 %v6361, %v6460
      %v6479 = vadd.f32 %v6362, %v6465
      %v6480 = vadd.f32 %v6363, %v6470
      %v6481 = vld [vmem:[%s3 + $0xb4] sm:$0xf]
      %v6483 = vsel %vm593, %v6481, 0
      %6485 = vmatprep.subr.mxu0 0.0
      %6486 = vmatpush1.msra.mxu0 0.0
      %6487 = vmatprep.subr.mxu0 0.0
      %6488 = vmatpush1.msra.mxu0 0.0
      %6489 = vmatprep.subr.mxu0 0.0
      %6490 = vmatpush1.msra.mxu0 0.0
      %6491 = vmatprep.subr.mxu0 0.0
      %6492 = vmatpush1.msra.mxu0 0.0
      %6493 = vmatprep.subr.mxu0 0.0
      %6494 = vmatpush1.msra.mxu0 0.0
      %6495 = vmatprep.subr.mxu0 0.0
      %6496 = vmatpush1.msra.mxu0 0.0
      %6497 = vmatprep.subr.mxu0 0.0
      %6498 = vmatpush1.msra.mxu0 0.0
      %6499 = vmatprep.subr.mxu0 0.0
      %6500 = vmatpush1.msra.mxu0 0.0
      %6501 = vmatprep.subr.mxu0 0.0
      %6502 = vmatpush1.msra.mxu0 0.0
      %6503 = vmatprep.subr.mxu0 0.0
      %6504 = vmatpush1.msra.mxu0 0.0
      %6505 = vmatprep.subr.mxu0 0.0
      %6506 = vmatpush1.msra.mxu0 0.0
      %6507 = vmatprep.subr.mxu0 0.0
      %6508 = vmatpush1.msra.mxu0 0.0
      %6509 = vmatprep.subr.mxu0 0.0
      %6510 = vmatpush1.msra.mxu0 0.0
      %6511 = vmatprep.subr.mxu0 0.0
      %6512 = vmatpush1.msra.mxu0 0.0
      %6513 = vmatprep.subr.mxu0 0.0
      %6514 = vmatpush1.msra.mxu0 0.0
      %6515 = vmatprep.subr.mxu0 0.0
      %6516 = vmatpush1.msra.mxu0 %v6483
      %6517 = vmatprep.subr.mxu0 0.0
      %6518 = vmatpush2.msra.mxu0 0.0
      %6519 = vmatprep.subr.mxu0 0.0
      %6520 = vmatpush2.msra.mxu0 0.0
      %6521 = vmatprep.subr.mxu0 0.0
      %6522 = vmatpush2.msra.mxu0 0.0
      %6523 = vmatprep.subr.mxu0 0.0
      %6524 = vmatpush2.msra.mxu0 0.0
      %6525 = vmatprep.subr.mxu0 0.0
      %6526 = vmatpush2.msra.mxu0 0.0
      %6527 = vmatprep.subr.mxu0 0.0
      %6528 = vmatpush2.msra.mxu0 0.0
      %6529 = vmatprep.subr.mxu0 0.0
      %6530 = vmatpush2.msra.mxu0 0.0
      %6531 = vmatprep.subr.mxu0 0.0
      %6532 = vmatpush2.msra.mxu0 0.0
      %6533 = vmatprep.subr.mxu0 0.0
      %6534 = vmatpush2.msra.mxu0 0.0
      %6535 = vmatprep.subr.mxu0 0.0
      %6536 = vmatpush2.msra.mxu0 0.0
      %6537 = vmatprep.subr.mxu0 0.0
      %6538 = vmatpush2.msra.mxu0 0.0
      %6539 = vmatprep.subr.mxu0 0.0
      %6540 = vmatpush2.msra.mxu0 0.0
      %6541 = vmatprep.subr.mxu0 0.0
      %6542 = vmatpush2.msra.mxu0 0.0
      %6543 = vmatprep.subr.mxu0 0.0
      %6544 = vmatpush2.msra.mxu0 0.0
      %6545 = vmatprep.subr.mxu0 0.0
      %6546 = vmatpush2.msra.mxu0 0.0
      %6547 = vmatprep.subr.mxu0 0.0
      %6548 = vmatpush2.msra.mxu0 0.0
      %6549 = vmatprep.mubr.f32.mxu0 0.0
      %6550 = vmatmul.mubr.f32.gmra.mxu0 %v3659
      %v6551 = vpop.f32.mrf.mxu0
      %v6552 = vadd.f32 0.0, %v6551
      %v6553 = vpop.f32.mrf.mxu0
      %6554 = vmatprep.mubr.f32.mxu0 0.0
      %6555 = vmatmul.mubr.f32.gmra.mxu0 %v3662
      %v6556 = vpop.f32.mrf.mxu0
      %v6557 = vadd.f32 0.0, %v6556
      %v6558 = vpop.f32.mrf.mxu0
      %6559 = vmatprep.mubr.f32.mxu0 0.0
      %6560 = vmatmul.mubr.f32.gmra.mxu0 %v3665
      %v6561 = vpop.f32.mrf.mxu0
      %v6562 = vadd.f32 0.0, %v6561
      %v6563 = vpop.f32.mrf.mxu0
      %6564 = vmatprep.mubr.f32.mxu0 0.0
      %6565 = vmatmul.mubr.f32.gmra.mxu0 %v3668
      %v6566 = vpop.f32.mrf.mxu0
      %v6567 = vadd.f32 0.0, %v6566
      %v6568 = vpop.f32.mrf.mxu0
      %6569 = vmatprep.mubr.f32.mxu0 0.0
      %6570 = vmatmul.mubr.f32.gmra.mxu0 %v3671
      %v6571 = vpop.f32.mrf.mxu0
      %v6572 = vadd.f32 0.0, %v6571
      %v6573 = vpop.f32.mrf.mxu0
      %6574 = vmatprep.mubr.f32.mxu0 0.0
      %6575 = vmatmul.mubr.f32.gmra.mxu0 %v3674
      %v6576 = vpop.f32.mrf.mxu0
      %v6577 = vadd.f32 0.0, %v6576
      %v6578 = vpop.f32.mrf.mxu0
      %6579 = vmatprep.mubr.f32.mxu0 0.0
      %6580 = vmatmul.mubr.f32.gmra.mxu0 %v3677
      %v6581 = vpop.f32.mrf.mxu0
      %v6582 = vadd.f32 0.0, %v6581
      %v6583 = vpop.f32.mrf.mxu0
      %6584 = vmatprep.mubr.f32.mxu0 0.0
      %6585 = vmatmul.mubr.f32.gmra.mxu0 %v3680
      %v6586 = vpop.f32.mrf.mxu0
      %v6587 = vadd.f32 0.0, %v6586
      %v6588 = vpop.f32.mrf.mxu0
      %6589 = vdwg.mxu0
      %v6590 = vadd.f32 %v6473, %v6552
      %v6591 = vadd.f32 %v6474, %v6557
      %v6592 = vadd.f32 %v6475, %v6562
      %v6593 = vadd.f32 %v6476, %v6567
      %v6594 = vadd.f32 %v6477, %v6572
      %v6595 = vadd.f32 %v6478, %v6577
      %v6596 = vadd.f32 %v6479, %v6582
      %v6597 = vadd.f32 %v6480, %v6587
      %v6598 = vld [vmem:[%s3 + $0xb8] sm:$0xf]
      %v6600 = vsel %vm593, %v6598, 0
      %6602 = vmatprep.subr.mxu0 0.0
      %6603 = vmatpush1.msra.mxu0 0.0
      %6604 = vmatprep.subr.mxu0 0.0
      %6605 = vmatpush1.msra.mxu0 0.0
      %6606 = vmatprep.subr.mxu0 0.0
      %6607 = vmatpush1.msra.mxu0 0.0
      %6608 = vmatprep.subr.mxu0 0.0
      %6609 = vmatpush1.msra.mxu0 0.0
      %6610 = vmatprep.subr.mxu0 0.0
      %6611 = vmatpush1.msra.mxu0 0.0
      %6612 = vmatprep.subr.mxu0 0.0
      %6613 = vmatpush1.msra.mxu0 0.0
      %6614 = vmatprep.subr.mxu0 0.0
      %6615 = vmatpush1.msra.mxu0 0.0
      %6616 = vmatprep.subr.mxu0 0.0
      %6617 = vmatpush1.msra.mxu0 0.0
      %6618 = vmatprep.subr.mxu0 0.0
      %6619 = vmatpush1.msra.mxu0 0.0
      %6620 = vmatprep.subr.mxu0 0.0
      %6621 = vmatpush1.msra.mxu0 0.0
      %6622 = vmatprep.subr.mxu0 0.0
      %6623 = vmatpush1.msra.mxu0 0.0
      %6624 = vmatprep.subr.mxu0 0.0
      %6625 = vmatpush1.msra.mxu0 0.0
      %6626 = vmatprep.subr.mxu0 0.0
      %6627 = vmatpush1.msra.mxu0 0.0
      %6628 = vmatprep.subr.mxu0 0.0
      %6629 = vmatpush1.msra.mxu0 0.0
      %6630 = vmatprep.subr.mxu0 0.0
      %6631 = vmatpush1.msra.mxu0 0.0
      %6632 = vmatprep.subr.mxu0 0.0
      %6633 = vmatpush1.msra.mxu0 %v6600
      %6634 = vmatprep.subr.mxu0 0.0
      %6635 = vmatpush2.msra.mxu0 0.0
      %6636 = vmatprep.subr.mxu0 0.0
      %6637 = vmatpush2.msra.mxu0 0.0
      %6638 = vmatprep.subr.mxu0 0.0
      %6639 = vmatpush2.msra.mxu0 0.0
      %6640 = vmatprep.subr.mxu0 0.0
      %6641 = vmatpush2.msra.mxu0 0.0
      %6642 = vmatprep.subr.mxu0 0.0
      %6643 = vmatpush2.msra.mxu0 0.0
      %6644 = vmatprep.subr.mxu0 0.0
      %6645 = vmatpush2.msra.mxu0 0.0
      %6646 = vmatprep.subr.mxu0 0.0
      %6647 = vmatpush2.msra.mxu0 0.0
      %6648 = vmatprep.subr.mxu0 0.0
      %6649 = vmatpush2.msra.mxu0 0.0
      %6650 = vmatprep.subr.mxu0 0.0
      %6651 = vmatpush2.msra.mxu0 0.0
      %6652 = vmatprep.subr.mxu0 0.0
      %6653 = vmatpush2.msra.mxu0 0.0
      %6654 = vmatprep.subr.mxu0 0.0
      %6655 = vmatpush2.msra.mxu0 0.0
      %6656 = vmatprep.subr.mxu0 0.0
      %6657 = vmatpush2.msra.mxu0 0.0
      %6658 = vmatprep.subr.mxu0 0.0
      %6659 = vmatpush2.msra.mxu0 0.0
      %6660 = vmatprep.subr.mxu0 0.0
      %6661 = vmatpush2.msra.mxu0 0.0
      %6662 = vmatprep.subr.mxu0 0.0
      %6663 = vmatpush2.msra.mxu0 0.0
      %6664 = vmatprep.subr.mxu0 0.0
      %6665 = vmatpush2.msra.mxu0 0.0
      %6666 = vmatprep.mubr.f32.mxu0 0.0
      %6667 = vmatmul.mubr.f32.gmra.mxu0 %v5240
      %v6668 = vpop.f32.mrf.mxu0
      %v6669 = vadd.f32 0.0, %v6668
      %v6670 = vpop.f32.mrf.mxu0
      %6671 = vmatprep.mubr.f32.mxu0 0.0
      %6672 = vmatmul.mubr.f32.gmra.mxu0 %v5243
      %v6673 = vpop.f32.mrf.mxu0
      %v6674 = vadd.f32 0.0, %v6673
      %v6675 = vpop.f32.mrf.mxu0
      %6676 = vmatprep.mubr.f32.mxu0 0.0
      %6677 = vmatmul.mubr.f32.gmra.mxu0 %v5246
      %v6678 = vpop.f32.mrf.mxu0
      %v6679 = vadd.f32 0.0, %v6678
      %v6680 = vpop.f32.mrf.mxu0
      %6681 = vmatprep.mubr.f32.mxu0 0.0
      %6682 = vmatmul.mubr.f32.gmra.mxu0 %v5249
      %v6683 = vpop.f32.mrf.mxu0
      %v6684 = vadd.f32 0.0, %v6683
      %v6685 = vpop.f32.mrf.mxu0
      %6686 = vmatprep.mubr.f32.mxu0 0.0
      %6687 = vmatmul.mubr.f32.gmra.mxu0 %v5252
      %v6688 = vpop.f32.mrf.mxu0
      %v6689 = vadd.f32 0.0, %v6688
      %v6690 = vpop.f32.mrf.mxu0
      %6691 = vmatprep.mubr.f32.mxu0 0.0
      %6692 = vmatmul.mubr.f32.gmra.mxu0 %v5255
      %v6693 = vpop.f32.mrf.mxu0
      %v6694 = vadd.f32 0.0, %v6693
      %v6695 = vpop.f32.mrf.mxu0
      %6696 = vmatprep.mubr.f32.mxu0 0.0
      %6697 = vmatmul.mubr.f32.gmra.mxu0 %v5258
      %v6698 = vpop.f32.mrf.mxu0
      %v6699 = vadd.f32 0.0, %v6698
      %v6700 = vpop.f32.mrf.mxu0
      %6701 = vmatprep.mubr.f32.mxu0 0.0
      %6702 = vmatmul.mubr.f32.gmra.mxu0 %v5261
      %v6703 = vpop.f32.mrf.mxu0
      %v6704 = vadd.f32 0.0, %v6703
      %v6705 = vpop.f32.mrf.mxu0
      %6706 = vdwg.mxu0
      %v6707 = vadd.f32 %v6590, %v6669
      %v6708 = vadd.f32 %v6591, %v6674
      %v6709 = vadd.f32 %v6592, %v6679
      %v6710 = vadd.f32 %v6593, %v6684
      %v6711 = vadd.f32 %v6594, %v6689
      %v6712 = vadd.f32 %v6595, %v6694
      %v6713 = vadd.f32 %v6596, %v6699
      %v6714 = vadd.f32 %v6597, %v6704
      %v6715 = vld [vmem:[%s3 + $0xbc] sm:$0xf]
      %v6717 = vsel %vm568, %v558, 0
      %v6720 = vsel %vm568, %v559, 0
      %v6723 = vsel %vm568, %v560, 0
      %v6726 = vsel %vm568, %v561, 0
      %v6729 = vsel %vm568, %v562, 0
      %v6732 = vsel %vm568, %v563, 0
      %v6735 = vsel %vm568, %v564, 0
      %v6738 = vsel %vm568, %v565, 0
      %v6741 = vsel %vm593, %v6715, 0
      %6743 = vmatprep.subr.mxu0 0.0
      %6744 = vmatpush1.msra.mxu0 0.0
      %6745 = vmatprep.subr.mxu0 0.0
      %6746 = vmatpush1.msra.mxu0 0.0
      %6747 = vmatprep.subr.mxu0 0.0
      %6748 = vmatpush1.msra.mxu0 0.0
      %6749 = vmatprep.subr.mxu0 0.0
      %6750 = vmatpush1.msra.mxu0 0.0
      %6751 = vmatprep.subr.mxu0 0.0
      %6752 = vmatpush1.msra.mxu0 0.0
      %6753 = vmatprep.subr.mxu0 0.0
      %6754 = vmatpush1.msra.mxu0 0.0
      %6755 = vmatprep.subr.mxu0 0.0
      %6756 = vmatpush1.msra.mxu0 0.0
      %6757 = vmatprep.subr.mxu0 0.0
      %6758 = vmatpush1.msra.mxu0 0.0
      %6759 = vmatprep.subr.mxu0 0.0
      %6760 = vmatpush1.msra.mxu0 0.0
      %6761 = vmatprep.subr.mxu0 0.0
      %6762 = vmatpush1.msra.mxu0 0.0
      %6763 = vmatprep.subr.mxu0 0.0
      %6764 = vmatpush1.msra.mxu0 0.0
      %6765 = vmatprep.subr.mxu0 0.0
      %6766 = vmatpush1.msra.mxu0 0.0
      %6767 = vmatprep.subr.mxu0 0.0
      %6768 = vmatpush1.msra.mxu0 0.0
      %6769 = vmatprep.subr.mxu0 0.0
      %6770 = vmatpush1.msra.mxu0 0.0
      %6771 = vmatprep.subr.mxu0 0.0
      %6772 = vmatpush1.msra.mxu0 0.0
      %6773 = vmatprep.subr.mxu0 0.0
      %6774 = vmatpush1.msra.mxu0 %v6741
      %6775 = vmatprep.subr.mxu0 0.0
      %6776 = vmatpush2.msra.mxu0 0.0
      %6777 = vmatprep.subr.mxu0 0.0
      %6778 = vmatpush2.msra.mxu0 0.0
      %6779 = vmatprep.subr.mxu0 0.0
      %6780 = vmatpush2.msra.mxu0 0.0
      %6781 = vmatprep.subr.mxu0 0.0
      %6782 = vmatpush2.msra.mxu0 0.0
      %6783 = vmatprep.subr.mxu0 0.0
      %6784 = vmatpush2.msra.mxu0 0.0
      %6785 = vmatprep.subr.mxu0 0.0
      %6786 = vmatpush2.msra.mxu0 0.0
      %6787 = vmatprep.subr.mxu0 0.0
      %6788 = vmatpush2.msra.mxu0 0.0
      %6789 = vmatprep.subr.mxu0 0.0
      %6790 = vmatpush2.msra.mxu0 0.0
      %6791 = vmatprep.subr.mxu0 0.0
      %6792 = vmatpush2.msra.mxu0 0.0
      %6793 = vmatprep.subr.mxu0 0.0
      %6794 = vmatpush2.msra.mxu0 0.0
      %6795 = vmatprep.subr.mxu0 0.0
      %6796 = vmatpush2.msra.mxu0 0.0
      %6797 = vmatprep.subr.mxu0 0.0
      %6798 = vmatpush2.msra.mxu0 0.0
      %6799 = vmatprep.subr.mxu0 0.0
      %6800 = vmatpush2.msra.mxu0 0.0
      %6801 = vmatprep.subr.mxu0 0.0
      %6802 = vmatpush2.msra.mxu0 0.0
      %6803 = vmatprep.subr.mxu0 0.0
      %6804 = vmatpush2.msra.mxu0 0.0
      %6805 = vmatprep.subr.mxu0 0.0
      %6806 = vmatpush2.msra.mxu0 0.0
      %6807 = vmatprep.mubr.f32.mxu0 0.0
      %6808 = vmatmul.mubr.f32.gmra.mxu0 %v6717
      %v6809 = vpop.f32.mrf.mxu0
      %v6810 = vadd.f32 0.0, %v6809
      %v6811 = vpop.f32.mrf.mxu0
      %6812 = vmatprep.mubr.f32.mxu0 0.0
      %6813 = vmatmul.mubr.f32.gmra.mxu0 %v6720
      %v6814 = vpop.f32.mrf.mxu0
      %v6815 = vadd.f32 0.0, %v6814
      %v6816 = vpop.f32.mrf.mxu0
      %6817 = vmatprep.mubr.f32.mxu0 0.0
      %6818 = vmatmul.mubr.f32.gmra.mxu0 %v6723
      %v6819 = vpop.f32.mrf.mxu0
      %v6820 = vadd.f32 0.0, %v6819
      %v6821 = vpop.f32.mrf.mxu0
      %6822 = vmatprep.mubr.f32.mxu0 0.0
      %6823 = vmatmul.mubr.f32.gmra.mxu0 %v6726
      %v6824 = vpop.f32.mrf.mxu0
      %v6825 = vadd.f32 0.0, %v6824
      %v6826 = vpop.f32.mrf.mxu0
      %6827 = vmatprep.mubr.f32.mxu0 0.0
      %6828 = vmatmul.mubr.f32.gmra.mxu0 %v6729
      %v6829 = vpop.f32.mrf.mxu0
      %v6830 = vadd.f32 0.0, %v6829
      %v6831 = vpop.f32.mrf.mxu0
      %6832 = vmatprep.mubr.f32.mxu0 0.0
      %6833 = vmatmul.mubr.f32.gmra.mxu0 %v6732
      %v6834 = vpop.f32.mrf.mxu0
      %v6835 = vadd.f32 0.0, %v6834
      %v6836 = vpop.f32.mrf.mxu0
      %6837 = vmatprep.mubr.f32.mxu0 0.0
      %6838 = vmatmul.mubr.f32.gmra.mxu0 %v6735
      %v6839 = vpop.f32.mrf.mxu0
      %v6840 = vadd.f32 0.0, %v6839
      %v6841 = vpop.f32.mrf.mxu0
      %6842 = vmatprep.mubr.f32.mxu0 0.0
      %6843 = vmatmul.mubr.f32.gmra.mxu0 %v6738
      %v6844 = vpop.f32.mrf.mxu0
      %v6845 = vadd.f32 0.0, %v6844
      %v6846 = vpop.f32.mrf.mxu0
      %6847 = vdwg.mxu0
      %v6848 = vadd.f32 %v6707, %v6810
      %v6849 = vadd.f32 %v6708, %v6815
      %v6850 = vadd.f32 %v6709, %v6820
      %v6851 = vadd.f32 %v6710, %v6825
      %v6852 = vadd.f32 %v6711, %v6830
      %v6853 = vadd.f32 %v6712, %v6835
      %v6854 = vadd.f32 %v6713, %v6840
      %v6855 = vadd.f32 %v6714, %v6845
      %v6856 = vadd.f32 %v6848, %v2248
      %v6857 = vadd.f32 %v6849, %v2248
      %v6858 = vadd.f32 %v6850, %v2248
      %v6859 = vadd.f32 %v6851, %v2248
      %v6860 = vadd.f32 %v6852, %v2248
      %v6861 = vadd.f32 %v6853, %v2248
      %v6862 = vadd.f32 %v6854, %v2248
      %v6863 = vadd.f32 %v6855, %v2248
      %6872 = vrot.lane.b32.xlu0 %v6856, 4
      %v6873 = vpop.permute.xlu0 %6872
      %6874 = vrot.lane.b32.xlu0 %v6857, 4
      %v6875 = vpop.permute.xlu0 %6874
      %6876 = vrot.lane.b32.xlu0 %v6858, 4
      %v6877 = vpop.permute.xlu0 %6876
      %6878 = vrot.lane.b32.xlu0 %v6859, 4
      %v6879 = vpop.permute.xlu0 %6878
      %6880 = vrot.lane.b32.xlu0 %v6860, 4
      %v6881 = vpop.permute.xlu0 %6880
      %6882 = vrot.lane.b32.xlu0 %v6861, 4
      %v6883 = vpop.permute.xlu0 %6882
      %6884 = vrot.lane.b32.xlu0 %v6862, 4
      %v6885 = vpop.permute.xlu0 %6884
      %6886 = vrot.lane.b32.xlu0 %v6863, 4
      %v6887 = vpop.permute.xlu0 %6886
      %6896 = vst.msk [vmem:[%s5387] sm:$0xff] %vm3838, %v6873
      %6897 = vst.msk [vmem:[%s5387 + $0x10] sm:$0xff] %vm3838, %v6875
      %6898 = vst.msk [vmem:[%s5387 + $0x20] sm:$0xff] %vm3838, %v6877
      %6899 = vst.msk [vmem:[%s5387 + $0x30] sm:$0xff] %vm3838, %v6879
      %6900 = vst.msk [vmem:[%s5387 + $0x40] sm:$0xff] %vm3838, %v6881
      %6901 = vst.msk [vmem:[%s5387 + $0x50] sm:$0xff] %vm3838, %v6883
      %6902 = vst.msk [vmem:[%s5387 + $0x60] sm:$0xff] %vm3838, %v6885
      %6903 = vst.msk [vmem:[%s5387 + $0x70] sm:$0xff] %vm3838, %v6887
      %p6904 = scmp.lt.s32.totalorder %s20, 1
      %s6905 = scalar_select %p6904, %s20, 1
      %p6906 = scmp.lt.s32.totalorder %s21, 3
      %s6907 = scalar_select %p6906, %s21, 3
      %s6908 = smul.addr %s6907, 16
      %s6909 = smul.addr %s6905, 64
      %s6910 = sadd.s32 %s6908, %s6909
      %s6911 = smul.addr %s6910, 8
      %s6912 = scalar_lea.vmem %s5, %s6911
      // Predicated region
      $region41: #{upsample2d_forward.1} parent=39 // pred_check
        %p6913 = pneg %p178
      $region42: #{upsample2d_forward.1} parent=39 // pred_check_branch
        %6915 = sbr.rel (%p6913) target = $region44
      $region43: #{upsample2d_forward.1} parent=39 // pred_region
        _
      $region44: #{upsample2d_forward.1} parent=39 // pred_fallthru
        _
    $region40: #{upsample2d_forward.1} parent=5 // pred_fallthru
      _
    %p6916 = scmp.le.s32.totalorder 2, %s11
    // Predicated region
    $region45: #{upsample2d_forward.1} parent=5 // pred_check
      %p6917 = pneg %p6916
    $region46: #{upsample2d_forward.1} parent=5 // pred_check_branch
      %6919 = sbr.rel (%p6917) target = $region48
    $region47: #{upsample2d_forward.1} parent=5 // pred_region
      %s6920 = ssub.s32 %s11, 2
      // Predicated region
      $region49: #{upsample2d_forward.1} parent=47 // pred_check
        %p6921 = pneg %p184
      $region50: #{upsample2d_forward.1} parent=47 // pred_check_branch
        %6923 = sbr.rel (%p6921) target = $region52
      $region51: #{upsample2d_forward.1} parent=47 // pred_region
        %p6924 = scmp.lt.s32.totalorder %s22, 1
        %s6925 = scalar_select %p6924, %s22, 1
        %p6926 = scmp.lt.s32.totalorder %s23, 3
        %s6927 = scalar_select %p6926, %s23, 3
        %s6928 = smul.addr %s6927, 16
        %s6929 = smul.addr %s6925, 64
        %s6930 = sadd.s32 %s6928, %s6929
        %s6931 = smul.addr %s6930, 8
        %s6932 = scalar_lea.vmem %s5, %s6931
      $region52: #{upsample2d_forward.1} parent=47 // pred_fallthru
        _
    $region48: #{upsample2d_forward.1} parent=5 // pred_fallthru
      _
  $region6: #{upsample2d_forward.1} parent=0 // loop_footer
    %s15 = sadd.s32 1, %s11
  $region7: #{upsample2d_forward.1} parent=0 // loop_footer_branch
    %10 = sbr.rel target = $region3
  $region8: #{upsample2d_forward.1} parent=0 // loop_exit
    _

</llo_original>
